<compile_context>
chip_gen: v7x
topology: tpu7x:2x2x1
jax: 0.10.0
libtpu: 0.0.40
codegen_flags: <defaults>
</compile_context>

<pallas_src>
import functools

import numpy as np
import jax
import jax.numpy as jnp
from jax.experimental import pallas as pl
from jax.experimental.pallas import tpu as pltpu


def _round_up(a, m):
    return -(-a // m) * m


# ----------------------------- Pallas kernel --------------------------------
def kan_layer_kernel(x_ref, grid_ref, fold_ref, base_w_ref, sp_w_ref,
                     out_ref, bases_ref, *,
                     sp_order, n_knots, inc, scale_base, matmul_dtype):
    nb = n_knots - 1
    n_bases = nb - sp_order

    x = x_ref[...]                                            # (TB, inc) f32

    # ---- Cox-de Boor recursion: compute ONCE per batch tile, cache in VMEM ----
    @pl.when(pl.program_id(1) == 0)
    def _compute_bases():
        xb = x[None, :, :]                                    # (1, TB, inc)
        lo = grid_ref[0:nb]                                   # (nb, 1, inc)
        hi = grid_ref[1:n_knots]
        bases = jnp.where((xb >= lo) & (xb < hi), 1.0, 0.0)   # (nb, TB, inc)
        # TODO(synk): for strictly uniform knots right_l == 1 - left_{l+1} could halve this.
        for k in range(1, sp_order + 1):                      # small static unroll
            L = nb - k
            off = (k - 1) * 4 * nb
            a_l = fold_ref[off + 0 * nb: off + 0 * nb + L]    # 1/(g[k:-1]-g[:-(k+1)])
            b_l = fold_ref[off + 1 * nb: off + 1 * nb + L]    # g[:-(k+1)] * a_l
            a_r = fold_ref[off + 2 * nb: off + 2 * nb + L]    # 1/(g[k+1:]-g[1:-k])
            b_r = fold_ref[off + 3 * nb: off + 3 * nb + L]    # g[k+1:]  * a_r
            left = xb * a_l - b_l                             # (L, TB, inc)
            right = b_r - xb * a_r                            # (L, TB, inc)
            bases = bases[0:L] * left + bases[1:L + 1] * right
        # Flatten (s, TB, inc) -> (TB, S*inc) with static, 128-aligned lane stores.
        for s in range(n_bases):
            bases_ref[:, s * inc:(s + 1) * inc] = bases[s].astype(bases_ref.dtype)

    # ---- base path: scale_base * SiLU(x @ base_w^T) --------------------------
    z = jnp.dot(x.astype(matmul_dtype), base_w_ref[...],
                preferred_element_type=jnp.float32)           # (TB, TN)
    base_y = z * pl.reciprocal(1.0 + jnp.exp(-z), approx=True)  # exp + recip on EUP

    # ---- spline path: single fat-K matmul, K = n_bases * inc -----------------
    spline_y = jnp.dot(bases_ref[...], sp_w_ref[...],
                       preferred_element_type=jnp.float32)    # (TB, TN)

    out_ref[...] = (scale_base * base_y + spline_y).astype(out_ref.dtype)


# ------------------------------- wrapper -------------------------------------
def kan_layer_forward(x, grid, base_w, sp_weight, sp_scale, *,
                      sp_order=3, scale_base=1.0, scale_spline=1.0,
                      block_b=512, block_n=None,
                      matmul_dtype=jnp.bfloat16,
                      vmem_budget_bytes=40 * 1024 * 1024):
    """x: (..., inc); grid: (inc, NG); base_w: (ouc, inc);
       sp_weight: (ouc, inc, S); sp_scale: (ouc, inc)."""
    x = jnp.asarray(x, jnp.float32)
    orig_shape = x.shape
    inc = orig_shape[-1]
    x = x.reshape(-1, inc)
    batch = x.shape[0]

    grid_np = np.asarray(grid, np.float32)                    # (inc, n_knots)
    n_knots = grid_np.shape[1]
    nb = n_knots - 1
    n_bases = nb - sp_order
    base_w_np = np.asarray(base_w, np.float32)                # (ouc, inc)
    ouc = base_w_np.shape[0]
    sp_weight_np = np.asarray(sp_weight, np.float32)          # (ouc, inc, S)
    sp_scale_np = np.asarray(sp_scale, np.float32)            # (ouc, inc)
    mm_bytes = np.dtype(matmul_dtype).itemsize

    # ---- pad channel dims to multiples of 128 (lane-dense vregs & DMAs) -------
    inc_p = _round_up(inc, 128)
    ouc_p = _round_up(ouc, 128)
    if inc_p != inc:
        x = jnp.pad(x, ((0, 0), (0, inc_p - inc)))
        grid_np = np.pad(grid_np, ((0, inc_p - inc), (0, 0)))
        base_w_np = np.pad(base_w_np, ((0, 0), (0, inc_p - inc)))
        sp_weight_np = np.pad(sp_weight_np, ((0, 0), (0, inc_p - inc), (0, 0)))
        sp_scale_np = np.pad(sp_scale_np, ((0, 0), (0, inc_p - inc)))
    if ouc_p != ouc:
        base_w_np = np.pad(base_w_np, ((0, ouc_p - ouc), (0, 0)))
        sp_weight_np = np.pad(sp_weight_np, ((0, ouc_p - ouc), (0, 0), (0, 0)))
        sp_scale_np = np.pad(sp_scale_np, ((0, ouc_p - ouc), (0, 0)))

    # ---- host-side parameter prep (once per parameter update) -----------------
    grid3 = jnp.asarray(grid_np.T[:, None, :])                # (n_knots, 1, inc_p)

    # per recursion level: a = 1/dx (zero-guarded), b = g * a  — no in-kernel divides
    folds = []
    for k in range(1, sp_order + 1):
        L = nb - k
        g_l = grid_np[:, 0:L]
        g_k = grid_np[:, k:k + L]
        g_1 = grid_np[:, 1:1 + L]
        g_r = grid_np[:, k + 1:k + 1 + L]
        d_l = g_k - g_l
        d_r = g_r - g_1
        a_l = np.where(d_l == 0.0, 0.0, 1.0 / np.where(d_l == 0.0, 1.0, d_l))
        a_r = np.where(d_r == 0.0, 0.0, 1.0 / np.where(d_r == 0.0, 1.0, d_r))
        b_l = g_l * a_l
        b_r = g_r * a_r
        for arr in (a_l, b_l, a_r, b_r):                      # each (inc_p, L)
            padded = np.zeros((inc_p, nb), np.float32)
            padded[:, :L] = arr
            folds.append(padded.T)                            # (nb, inc_p)
    fold = jnp.asarray(np.stack(folds).reshape(4 * sp_order * nb, 1, inc_p))

    base_w_t = jnp.asarray(base_w_np.T).astype(matmul_dtype)  # (inc_p, ouc_p)
    w = (sp_weight_np * sp_scale_np[:, :, None]) * float(scale_spline)   # (ouc_p, inc_p, S)
    sp_w = jnp.asarray(np.ascontiguousarray(np.transpose(w, (2, 1, 0)))
                       .reshape(n_bases * inc_p, ouc_p)).astype(matmul_dtype)  # (S*inc, ouc)

    # ---- tile selection against an explicit VMEM budget ------------------------
    def vmem_estimate(tb_, tn_):
        est = 2 * tb_ * inc_p * 4                             # x (double-buffered)
        est += 2 * tb_ * tn_ * 4                              # out
        est += 2 * inc_p * tn_ * mm_bytes                     # base weights
        est += 2 * n_bases * inc_p * tn_ * mm_bytes           # spline weights (fat-K)
        est += 2 * (n_knots + 4 * sp_order * nb) * 8 * inc_p * 4   # knots + folded recips
        est += tb_ * n_bases * inc_p * mm_bytes               # bases cache (scratch)
        est += 3 * nb * tb_ * inc_p * 4                       # recursion temporaries
        return est

    batch_a = _round_up(batch, 8)
    tb = min(_round_up(block_b, 8), batch_a)
    # keep >= 2 tiles on the parallel batch axis when possible (v7x: 2 TensorCores/chip)
    if batch_a // tb < 2 and batch_a >= 16:
        tb = _round_up(-(-batch_a // 2), 8)

    if block_n is not None:
        assert ouc_p % block_n == 0
        tn_candidates = [block_n]
    else:
        tn_candidates = [ouc_p] + [t for t in (2048, 1024, 512, 256, 128)
                                   if t < ouc_p and ouc_p % t == 0]
    tn = None
    while True:
        for cand in tn_candidates:
            if vmem_estimate(tb, cand) <= vmem_budget_bytes:
                tn = cand
                break
        if tn is not None or tb <= 8:
            break
        tb = max(8, _round_up(tb // 2, 8))
    if tn is None:
        tn = tn_candidates[-1]

    batch_p = _round_up(batch, tb)
    if batch_p != batch:
        x = jnp.pad(x, ((0, batch_p - batch), (0, 0)))

    vmem_limit = int(min(max(vmem_estimate(tb, tn) * 5 // 4, 32 * 1024 * 1024),
                         48 * 1024 * 1024))

    kernel = functools.partial(
        kan_layer_kernel, sp_order=sp_order, n_knots=n_knots, inc=inc_p,
        scale_base=float(scale_base), matmul_dtype=matmul_dtype)

    out = pl.pallas_call(
        kernel,
        out_shape=jax.ShapeDtypeStruct((batch_p, ouc_p), jnp.float32),
        grid_spec=pltpu.PrefetchScalarGridSpec(
            num_scalar_prefetch=0,
            grid=(batch_p // tb, ouc_p // tn),
            in_specs=[
                pl.BlockSpec((tb, inc_p), lambda b, j: (b, 0)),                    # x tile
                pl.BlockSpec((n_knots, 1, inc_p), lambda b, j: (0, 0, 0)),         # knots
                pl.BlockSpec((4 * sp_order * nb, 1, inc_p), lambda b, j: (0, 0, 0)),  # a,b
                pl.BlockSpec((inc_p, tn), lambda b, j: (0, j)),                    # base W
                pl.BlockSpec((n_bases * inc_p, tn), lambda b, j: (0, j)),          # spline W
            ],
            out_specs=pl.BlockSpec((tb, tn), lambda b, j: (b, j)),
            scratch_shapes=[pltpu.VMEM((tb, n_bases * inc_p), matmul_dtype)],      # bases
        ),
        compiler_params=pltpu.CompilerParams(
            dimension_semantics=("parallel", "arbitrary"),     # j inner/arbitrary: cache valid
            vmem_limit_bytes=vmem_limit),
    )(x, grid3, fold, base_w_t, sp_w)

    return out[:batch, :ouc].reshape(*orig_shape[:-1], ouc)


# ------------------- deterministic init + NumPy reference --------------------
def np_b_spline(x, grid, sp_order):
    # x: (N, inc), grid: (inc, NG) -> (N, inc, grid_size + sp_order)
    x = x[..., None]
    bases = ((x >= grid[None, :, :-1]) & (x < grid[None, :, 1:])).astype(np.float32)
    for k in range(1, sp_order + 1):
        bases = (bases[:, :, :-1] * (x - grid[None, :, :-(k + 1)])
                 / (grid[None, :, k:-1] - grid[None, :, :-(k + 1)])
                 + bases[:, :, 1:] * (grid[None, :, (k + 1):] - x)
                 / (grid[None, :, (k + 1):] - grid[None, :, 1:-k]))
    return bases


def init_kan_params(inc, ouc, grid_size=5, sp_order=3, scale_noise=0.1,
                    grid_range=(-1.0, 1.0), seed=0):
    """Deterministic parameter init mirroring KANLayer.__init__ (curve2coeff via lstsq)."""
    # TODO(synk): curve2coeff / update_grid (lstsq grid refitting) are host-side utilities,
    # not part of the forward pass, so they stay in NumPy.
    rng = np.random.default_rng(seed)
    n_grid = grid_size + 1 + 2 * sp_order
    grid = np.broadcast_to(
        np.linspace(grid_range[0], grid_range[1], n_grid, dtype=np.float32),
        (inc, n_grid)).copy()
    b = 1.0 / np.sqrt(inc)
    base_w = rng.uniform(-b, b, size=(ouc, inc)).astype(np.float32)
    bs = np.sqrt(6.0 / inc)
    sp_scale = rng.uniform(-bs, bs, size=(ouc, inc)).astype(np.float32)
    noise = ((rng.uniform(size=(grid_size + 1, inc, ouc)) - 0.5)
             * scale_noise / grid_size).astype(np.float32)
    xs = grid.T[sp_order:-sp_order]                               # (grid_size+1, inc)
    A = np.transpose(np_b_spline(xs, grid, sp_order), (1, 0, 2))  # (inc, G+1, S)
    B = np.transpose(noise, (1, 0, 2))                            # (inc, G+1, ouc)
    sol = np.stack([np.linalg.lstsq(A[i], B[i], rcond=None)[0] for i in range(inc)])
    sp_weight = np.transpose(sol, (2, 0, 1)).astype(np.float32)   # (ouc, inc, S)
    return grid, base_w, sp_weight, sp_scale


def reference_forward(x, grid, base_w, sp_weight, sp_scale, sp_order,
                      scale_base=1.0, scale_spline=1.0):
    z = x @ base_w.T
    base_y = z / (1.0 + np.exp(-z))                               # SiLU
    bases = np_b_spline(x, grid, sp_order)                        # (B, inc, S)
    scaled_w = sp_weight * sp_scale[..., None]                    # (ouc, inc, S)
    spline_y = bases.reshape(x.shape[0], -1) @ scaled_w.reshape(scaled_w.shape[0], -1).T
    return scale_base * base_y + scale_spline * spline_y


if __name__ == "__main__":
    batch, inc, ouc = 256, 128, 256
    grid_size, sp_order = 5, 3

    grid_np, base_w_np, sp_weight_np, sp_scale_np = init_kan_params(
        inc, ouc, grid_size=grid_size, sp_order=sp_order, seed=0)

    key = jax.random.PRNGKey(0)
    x = jax.random.uniform(key, (batch, inc), dtype=jnp.float32, minval=-1.0, maxval=1.0)

    ref = reference_forward(np.asarray(x), grid_np, base_w_np, sp_weight_np,
                            sp_scale_np, sp_order)

    # f32 MXU operands (tighter numerics)
    out_f32 = jax.block_until_ready(kan_layer_forward(
        x, grid_np, base_w_np, sp_weight_np, sp_scale_np,
        sp_order=sp_order, scale_base=1.0, scale_spline=1.0,
        matmul_dtype=jnp.float32))
    np.testing.assert_allclose(np.asarray(out_f32), ref, rtol=1e-2, atol=5e-3)

    # bf16 MXU operands (default fast path on v5e/v6e/v7x), f32 accumulation
    out_bf16 = jax.block_until_ready(kan_layer_forward(
        x, grid_np, base_w_np, sp_weight_np, sp_scale_np,
        sp_order=sp_order, scale_base=1.0, scale_spline=1.0,
        matmul_dtype=jnp.bfloat16))
    np.testing.assert_allclose(np.asarray(out_bf16), ref, rtol=5e-2, atol=3e-2)

    print("KERNEL_OK")
</pallas_src>

<mosaic_0001>
module attributes {stable_mosaic.version = 11 : i64} {
  func.func @kan_layer_kernel(%arg0: i32, %arg1: i32, %arg2: memref<128x128xf32, #tpu.memory_space<vmem>>, %arg3: memref<12x1x128xf32, #tpu.memory_space<vmem>>, %arg4: memref<132x1x128xf32, #tpu.memory_space<vmem>>, %arg5: memref<128x256xf32, #tpu.memory_space<vmem>>, %arg6: memref<1024x256xf32, #tpu.memory_space<vmem>>, %arg7: memref<128x256xf32, #tpu.memory_space<vmem>>, %arg8: memref<128x1024xf32, #tpu.memory_space<vmem>>) attributes {dimension_semantics = [#tpu.dimension_semantics<parallel>, #tpu.dimension_semantics<arbitrary>], iteration_bounds = array<i64: 2, 1>, scalar_prefetch = 0 : i64, scratch_operands = 1 : i64, tpu.core_type = #tpu.core_type<tc>, window_params = [{transform_indices = @transform_0, window_bounds = array<i64: 128, 128>}, {pipeline_mode = #tpu.pipeline_mode<synchronous>, transform_indices = @transform_1, window_bounds = array<i64: 12, 1, 128>}, {pipeline_mode = #tpu.pipeline_mode<synchronous>, transform_indices = @transform_2, window_bounds = array<i64: 132, 1, 128>}, {transform_indices = @transform_3, window_bounds = array<i64: 128, 256>}, {transform_indices = @transform_4, window_bounds = array<i64: 1024, 256>}, {transform_indices = @transform_5, window_bounds = array<i64: 128, 256>}]} {
    %c0 = arith.constant 0 : index
    %c0_0 = arith.constant 0 : index
    %0 = vector.load %arg2[%c0, %c0_0] : memref<128x128xf32, #tpu.memory_space<vmem>>, vector<128x128xf32>
    %c0_i32 = arith.constant 0 : i32
    %1 = arith.cmpi eq, %arg1, %c0_i32 : i32
    %2 = arith.extui %1 : i1 to i32
    %c0_i32_1 = arith.constant 0 : i32
    %3 = arith.cmpi ne, %2, %c0_i32_1 : i32
    scf.if %3 {
      %20 = vector.shape_cast %0 : vector<128x128xf32> to vector<1x128x128xf32>
      %c0_14 = arith.constant 0 : index
      %c0_15 = arith.constant 0 : index
      %c0_16 = arith.constant 0 : index
      %21 = vector.load %arg3[%c0_14, %c0_15, %c0_16] : memref<12x1x128xf32, #tpu.memory_space<vmem>>, vector<11x1x128xf32>
      %c1 = arith.constant 1 : index
      %c0_17 = arith.constant 0 : index
      %c0_18 = arith.constant 0 : index
      %22 = vector.load %arg3[%c1, %c0_17, %c0_18] : memref<12x1x128xf32, #tpu.memory_space<vmem>>, vector<11x1x128xf32>
      %23 = vector.broadcast %20 : vector<1x128x128xf32> to vector<11x128x128xf32>
      %24 = vector.broadcast %21 : vector<11x1x128xf32> to vector<11x128x128xf32>
      %25 = arith.cmpf oge, %23, %24 : vector<11x128x128xf32>
      %26 = vector.broadcast %20 : vector<1x128x128xf32> to vector<11x128x128xf32>
      %27 = vector.broadcast %22 : vector<11x1x128xf32> to vector<11x128x128xf32>
      %28 = arith.cmpf olt, %26, %27 : vector<11x128x128xf32>
      %29 = arith.andi %25, %28 : vector<11x128x128xi1>
      %cst_19 = arith.constant 1.000000e+00 : f32
      %cst_20 = arith.constant 0.000000e+00 : f32
      %30 = vector.broadcast %cst_19 : f32 to vector<11x128x128xf32>
      %31 = vector.broadcast %cst_20 : f32 to vector<11x128x128xf32>
      %32 = arith.select %29, %30, %31 : vector<11x128x128xi1>, vector<11x128x128xf32>
      %c0_21 = arith.constant 0 : index
      %c0_22 = arith.constant 0 : index
      %c0_23 = arith.constant 0 : index
      %33 = vector.load %arg4[%c0_21, %c0_22, %c0_23] : memref<132x1x128xf32, #tpu.memory_space<vmem>>, vector<10x1x128xf32>
      %c11 = arith.constant 11 : index
      %c0_24 = arith.constant 0 : index
      %c0_25 = arith.constant 0 : index
      %34 = vector.load %arg4[%c11, %c0_24, %c0_25] : memref<132x1x128xf32, #tpu.memory_space<vmem>>, vector<10x1x128xf32>
      %c22 = arith.constant 22 : index
      %c0_26 = arith.constant 0 : index
      %c0_27 = arith.constant 0 : index
      %35 = vector.load %arg4[%c22, %c0_26, %c0_27] : memref<132x1x128xf32, #tpu.memory_space<vmem>>, vector<10x1x128xf32>
      %c33 = arith.constant 33 : index
      %c0_28 = arith.constant 0 : index
      %c0_29 = arith.constant 0 : index
      %36 = vector.load %arg4[%c33, %c0_28, %c0_29] : memref<132x1x128xf32, #tpu.memory_space<vmem>>, vector<10x1x128xf32>
      %37 = vector.broadcast %20 : vector<1x128x128xf32> to vector<10x128x128xf32>
      %38 = vector.broadcast %33 : vector<10x1x128xf32> to vector<10x128x128xf32>
      %39 = arith.mulf %37, %38 : vector<10x128x128xf32>
      %40 = vector.broadcast %34 : vector<10x1x128xf32> to vector<10x128x128xf32>
      %41 = arith.subf %39, %40 : vector<10x128x128xf32>
      %42 = vector.broadcast %20 : vector<1x128x128xf32> to vector<10x128x128xf32>
      %43 = vector.broadcast %35 : vector<10x1x128xf32> to vector<10x128x128xf32>
      %44 = arith.mulf %42, %43 : vector<10x128x128xf32>
      %45 = vector.broadcast %36 : vector<10x1x128xf32> to vector<10x128x128xf32>
      %46 = arith.subf %45, %44 : vector<10x128x128xf32>
      %47 = vector.extract_strided_slice %32 {offsets = [0, 0, 0], sizes = [10, 128, 128], strides = [1, 1, 1]} : vector<11x128x128xf32> to vector<10x128x128xf32>
      %48 = arith.mulf %47, %41 : vector<10x128x128xf32>
      %49 = vector.extract_strided_slice %32 {offsets = [1, 0, 0], sizes = [10, 128, 128], strides = [1, 1, 1]} : vector<11x128x128xf32> to vector<10x128x128xf32>
      %50 = arith.mulf %49, %46 : vector<10x128x128xf32>
      %51 = arith.addf %48, %50 : vector<10x128x128xf32>
      %c44 = arith.constant 44 : index
      %c0_30 = arith.constant 0 : index
      %c0_31 = arith.constant 0 : index
      %52 = vector.load %arg4[%c44, %c0_30, %c0_31] : memref<132x1x128xf32, #tpu.memory_space<vmem>>, vector<9x1x128xf32>
      %c55 = arith.constant 55 : index
      %c0_32 = arith.constant 0 : index
      %c0_33 = arith.constant 0 : index
      %53 = vector.load %arg4[%c55, %c0_32, %c0_33] : memref<132x1x128xf32, #tpu.memory_space<vmem>>, vector<9x1x128xf32>
      %c66 = arith.constant 66 : index
      %c0_34 = arith.constant 0 : index
      %c0_35 = arith.constant 0 : index
      %54 = vector.load %arg4[%c66, %c0_34, %c0_35] : memref<132x1x128xf32, #tpu.memory_space<vmem>>, vector<9x1x128xf32>
      %c77 = arith.constant 77 : index
      %c0_36 = arith.constant 0 : index
      %c0_37 = arith.constant 0 : index
      %55 = vector.load %arg4[%c77, %c0_36, %c0_37] : memref<132x1x128xf32, #tpu.memory_space<vmem>>, vector<9x1x128xf32>
      %56 = vector.broadcast %20 : vector<1x128x128xf32> to vector<9x128x128xf32>
      %57 = vector.broadcast %52 : vector<9x1x128xf32> to vector<9x128x128xf32>
      %58 = arith.mulf %56, %57 : vector<9x128x128xf32>
      %59 = vector.broadcast %53 : vector<9x1x128xf32> to vector<9x128x128xf32>
      %60 = arith.subf %58, %59 : vector<9x128x128xf32>
      %61 = vector.broadcast %20 : vector<1x128x128xf32> to vector<9x128x128xf32>
      %62 = vector.broadcast %54 : vector<9x1x128xf32> to vector<9x128x128xf32>
      %63 = arith.mulf %61, %62 : vector<9x128x128xf32>
      %64 = vector.broadcast %55 : vector<9x1x128xf32> to vector<9x128x128xf32>
      %65 = arith.subf %64, %63 : vector<9x128x128xf32>
      %66 = vector.extract_strided_slice %51 {offsets = [0, 0, 0], sizes = [9, 128, 128], strides = [1, 1, 1]} : vector<10x128x128xf32> to vector<9x128x128xf32>
      %67 = arith.mulf %66, %60 : vector<9x128x128xf32>
      %68 = vector.extract_strided_slice %51 {offsets = [1, 0, 0], sizes = [9, 128, 128], strides = [1, 1, 1]} : vector<10x128x128xf32> to vector<9x128x128xf32>
      %69 = arith.mulf %68, %65 : vector<9x128x128xf32>
      %70 = arith.addf %67, %69 : vector<9x128x128xf32>
      %c88 = arith.constant 88 : index
      %c0_38 = arith.constant 0 : index
      %c0_39 = arith.constant 0 : index
      %71 = vector.load %arg4[%c88, %c0_38, %c0_39] : memref<132x1x128xf32, #tpu.memory_space<vmem>>, vector<8x1x128xf32>
      %c99 = arith.constant 99 : index
      %c0_40 = arith.constant 0 : index
      %c0_41 = arith.constant 0 : index
      %72 = vector.load %arg4[%c99, %c0_40, %c0_41] : memref<132x1x128xf32, #tpu.memory_space<vmem>>, vector<8x1x128xf32>
      %c110 = arith.constant 110 : index
      %c0_42 = arith.constant 0 : index
      %c0_43 = arith.constant 0 : index
      %73 = vector.load %arg4[%c110, %c0_42, %c0_43] : memref<132x1x128xf32, #tpu.memory_space<vmem>>, vector<8x1x128xf32>
      %c121 = arith.constant 121 : index
      %c0_44 = arith.constant 0 : index
      %c0_45 = arith.constant 0 : index
      %74 = vector.load %arg4[%c121, %c0_44, %c0_45] : memref<132x1x128xf32, #tpu.memory_space<vmem>>, vector<8x1x128xf32>
      %75 = vector.broadcast %20 : vector<1x128x128xf32> to vector<8x128x128xf32>
      %76 = vector.broadcast %71 : vector<8x1x128xf32> to vector<8x128x128xf32>
      %77 = arith.mulf %75, %76 : vector<8x128x128xf32>
      %78 = vector.broadcast %72 : vector<8x1x128xf32> to vector<8x128x128xf32>
      %79 = arith.subf %77, %78 : vector<8x128x128xf32>
      %80 = vector.broadcast %20 : vector<1x128x128xf32> to vector<8x128x128xf32>
      %81 = vector.broadcast %73 : vector<8x1x128xf32> to vector<8x128x128xf32>
      %82 = arith.mulf %80, %81 : vector<8x128x128xf32>
      %83 = vector.broadcast %74 : vector<8x1x128xf32> to vector<8x128x128xf32>
      %84 = arith.subf %83, %82 : vector<8x128x128xf32>
      %85 = vector.extract_strided_slice %70 {offsets = [0, 0, 0], sizes = [8, 128, 128], strides = [1, 1, 1]} : vector<9x128x128xf32> to vector<8x128x128xf32>
      %86 = arith.mulf %85, %79 : vector<8x128x128xf32>
      %87 = vector.extract_strided_slice %70 {offsets = [1, 0, 0], sizes = [8, 128, 128], strides = [1, 1, 1]} : vector<9x128x128xf32> to vector<8x128x128xf32>
      %88 = arith.mulf %87, %84 : vector<8x128x128xf32>
      %89 = arith.addf %86, %88 : vector<8x128x128xf32>
      %90 = vector.extract_strided_slice %89 {offsets = [0, 0, 0], sizes = [1, 128, 128], strides = [1, 1, 1]} : vector<8x128x128xf32> to vector<1x128x128xf32>
      %91 = vector.shape_cast %90 : vector<1x128x128xf32> to vector<128x128xf32>
      %c0_46 = arith.constant 0 : index
      %c0_47 = arith.constant 0 : index
      %92 = vector.load %arg8[%c0_46, %c0_47] : memref<128x1024xf32, #tpu.memory_space<vmem>>, vector<128x128xf32>
      tpu.vector_store %arg8[%c0_46, %c0_47], %91 {strides = array<i32>} : memref<128x1024xf32, #tpu.memory_space<vmem>>, vector<128x128xf32>,
      %93 = vector.extract_strided_slice %89 {offsets = [1, 0, 0], sizes = [1, 128, 128], strides = [1, 1, 1]} : vector<8x128x128xf32> to vector<1x128x128xf32>
      %94 = vector.shape_cast %93 : vector<1x128x128xf32> to vector<128x128xf32>
      %c0_48 = arith.constant 0 : index
      %c128 = arith.constant 128 : index
      %95 = vector.load %arg8[%c0_48, %c128] : memref<128x1024xf32, #tpu.memory_space<vmem>>, vector<128x128xf32>
      tpu.vector_store %arg8[%c0_48, %c128], %94 {strides = array<i32>} : memref<128x1024xf32, #tpu.memory_space<vmem>>, vector<128x128xf32>,
      %96 = vector.extract_strided_slice %89 {offsets = [2, 0, 0], sizes = [1, 128, 128], strides = [1, 1, 1]} : vector<8x128x128xf32> to vector<1x128x128xf32>
      %97 = vector.shape_cast %96 : vector<1x128x128xf32> to vector<128x128xf32>
      %c0_49 = arith.constant 0 : index
      %c256 = arith.constant 256 : index
      %98 = vector.load %arg8[%c0_49, %c256] : memref<128x1024xf32, #tpu.memory_space<vmem>>, vector<128x128xf32>
      tpu.vector_store %arg8[%c0_49, %c256], %97 {strides = array<i32>} : memref<128x1024xf32, #tpu.memory_space<vmem>>, vector<128x128xf32>,
      %99 = vector.extract_strided_slice %89 {offsets = [3, 0, 0], sizes = [1, 128, 128], strides = [1, 1, 1]} : vector<8x128x128xf32> to vector<1x128x128xf32>
      %100 = vector.shape_cast %99 : vector<1x128x128xf32> to vector<128x128xf32>
      %c0_50 = arith.constant 0 : index
      %c384 = arith.constant 384 : index
      %101 = vector.load %arg8[%c0_50, %c384] : memref<128x1024xf32, #tpu.memory_space<vmem>>, vector<128x128xf32>
      tpu.vector_store %arg8[%c0_50, %c384], %100 {strides = array<i32>} : memref<128x1024xf32, #tpu.memory_space<vmem>>, vector<128x128xf32>,
      %102 = vector.extract_strided_slice %89 {offsets = [4, 0, 0], sizes = [1, 128, 128], strides = [1, 1, 1]} : vector<8x128x128xf32> to vector<1x128x128xf32>
      %103 = vector.shape_cast %102 : vector<1x128x128xf32> to vector<128x128xf32>
      %c0_51 = arith.constant 0 : index
      %c512 = arith.constant 512 : index
      %104 = vector.load %arg8[%c0_51, %c512] : memref<128x1024xf32, #tpu.memory_space<vmem>>, vector<128x128xf32>
      tpu.vector_store %arg8[%c0_51, %c512], %103 {strides = array<i32>} : memref<128x1024xf32, #tpu.memory_space<vmem>>, vector<128x128xf32>,
      %105 = vector.extract_strided_slice %89 {offsets = [5, 0, 0], sizes = [1, 128, 128], strides = [1, 1, 1]} : vector<8x128x128xf32> to vector<1x128x128xf32>
      %106 = vector.shape_cast %105 : vector<1x128x128xf32> to vector<128x128xf32>
      %c0_52 = arith.constant 0 : index
      %c640 = arith.constant 640 : index
      %107 = vector.load %arg8[%c0_52, %c640] : memref<128x1024xf32, #tpu.memory_space<vmem>>, vector<128x128xf32>
      tpu.vector_store %arg8[%c0_52, %c640], %106 {strides = array<i32>} : memref<128x1024xf32, #tpu.memory_space<vmem>>, vector<128x128xf32>,
      %108 = vector.extract_strided_slice %89 {offsets = [6, 0, 0], sizes = [1, 128, 128], strides = [1, 1, 1]} : vector<8x128x128xf32> to vector<1x128x128xf32>
      %109 = vector.shape_cast %108 : vector<1x128x128xf32> to vector<128x128xf32>
      %c0_53 = arith.constant 0 : index
      %c768 = arith.constant 768 : index
      %110 = vector.load %arg8[%c0_53, %c768] : memref<128x1024xf32, #tpu.memory_space<vmem>>, vector<128x128xf32>
      tpu.vector_store %arg8[%c0_53, %c768], %109 {strides = array<i32>} : memref<128x1024xf32, #tpu.memory_space<vmem>>, vector<128x128xf32>,
      %111 = vector.extract_strided_slice %89 {offsets = [7, 0, 0], sizes = [1, 128, 128], strides = [1, 1, 1]} : vector<8x128x128xf32> to vector<1x128x128xf32>
      %112 = vector.shape_cast %111 : vector<1x128x128xf32> to vector<128x128xf32>
      %c0_54 = arith.constant 0 : index
      %c896 = arith.constant 896 : index
      %113 = vector.load %arg8[%c0_54, %c896] : memref<128x1024xf32, #tpu.memory_space<vmem>>, vector<128x128xf32>
      tpu.vector_store %arg8[%c0_54, %c896], %112 {strides = array<i32>} : memref<128x1024xf32, #tpu.memory_space<vmem>>, vector<128x128xf32>,
    } else {
    }
    %c0_2 = arith.constant 0 : index
    %c0_3 = arith.constant 0 : index
    %4 = vector.load %arg5[%c0_2, %c0_3] : memref<128x256xf32, #tpu.memory_space<vmem>>, vector<128x256xf32>
    %cst = arith.constant dense<0.000000e+00> : vector<128x256xf32>
    %5 = tpu.matmul %0, %4, %cst {dimension_numbers = #tpu.dot_dimension_numbers<[1], [0], [0], [1], [0, 0, 1, 1], [], []>} : vector<128x128xf32>, vector<128x256xf32>, vector<128x256xf32> -> vector<128x256xf32>
    %cst_4 = arith.constant 0.000000e+00 : f32
    %6 = vector.broadcast %cst_4 : f32 to vector<128x256xf32>
    %7 = arith.subf %6, %5 : vector<128x256xf32>
    %8 = math.exp %7 : vector<128x256xf32>
    %cst_5 = arith.constant 1.000000e+00 : f32
    %9 = vector.broadcast %cst_5 : f32 to vector<128x256xf32>
    %10 = arith.addf %9, %8 : vector<128x256xf32>
    %11 = tpu.reciprocal %10 {approx = true} : vector<128x256xf32> -> vector<128x256xf32>
    %12 = arith.mulf %5, %11 : vector<128x256xf32>
    %c0_6 = arith.constant 0 : index
    %c0_7 = arith.constant 0 : index
    %13 = vector.load %arg8[%c0_6, %c0_7] : memref<128x1024xf32, #tpu.memory_space<vmem>>, vector<128x1024xf32>
    %c0_8 = arith.constant 0 : index
    %c0_9 = arith.constant 0 : index
    %14 = vector.load %arg6[%c0_8, %c0_9] : memref<1024x256xf32, #tpu.memory_space<vmem>>, vector<1024x256xf32>
    %cst_10 = arith.constant dense<0.000000e+00> : vector<128x256xf32>
    %15 = tpu.matmul %13, %14, %cst_10 {dimension_numbers = #tpu.dot_dimension_numbers<[1], [0], [0], [1], [0, 0, 1, 1], [], []>} : vector<128x1024xf32>, vector<1024x256xf32>, vector<128x256xf32> -> vector<128x256xf32>
    %cst_11 = arith.constant 1.000000e+00 : f32
    %16 = vector.broadcast %cst_11 : f32 to vector<128x256xf32>
    %17 = arith.mulf %16, %12 : vector<128x256xf32>
    %18 = arith.addf %17, %15 : vector<128x256xf32>
    %c0_12 = arith.constant 0 : index
    %c0_13 = arith.constant 0 : index
    %19 = vector.load %arg7[%c0_12, %c0_13] : memref<128x256xf32, #tpu.memory_space<vmem>>, vector<128x256xf32>
    tpu.vector_store %arg7[%c0_12, %c0_13], %18 {strides = array<i32>} : memref<128x256xf32, #tpu.memory_space<vmem>>, vector<128x256xf32>,
    return
  }
  func.func @transform_0(%arg0: i32, %arg1: i32) -> (i32, i32) {
    %c0_i32 = arith.constant 0 : i32
    %c0_i32_0 = arith.constant 0 : i32
    return %arg0, %c0_i32 : i32, i32
  }
  func.func @transform_1(%arg0: i32, %arg1: i32) -> (i32, i32, i32) {
    %c0_i32 = arith.constant 0 : i32
    %c0_i32_0 = arith.constant 0 : i32
    %c0_i32_1 = arith.constant 0 : i32
    %c0_i32_2 = arith.constant 0 : i32
    return %c0_i32, %c0_i32_0, %c0_i32_1 : i32, i32, i32
  }
  func.func @transform_2(%arg0: i32, %arg1: i32) -> (i32, i32, i32) {
    %c0_i32 = arith.constant 0 : i32
    %c0_i32_0 = arith.constant 0 : i32
    %c0_i32_1 = arith.constant 0 : i32
    %c0_i32_2 = arith.constant 0 : i32
    return %c0_i32, %c0_i32_0, %c0_i32_1 : i32, i32, i32
  }
  func.func @transform_3(%arg0: i32, %arg1: i32) -> (i32, i32) {
    %c0_i32 = arith.constant 0 : i32
    %c0_i32_0 = arith.constant 0 : i32
    return %c0_i32, %arg1 : i32, i32
  }
  func.func @transform_4(%arg0: i32, %arg1: i32) -> (i32, i32) {
    %c0_i32 = arith.constant 0 : i32
    %c0_i32_0 = arith.constant 0 : i32
    return %c0_i32, %arg1 : i32, i32
  }
  func.func @transform_5(%arg0: i32, %arg1: i32) -> (i32, i32) {
    %c0_i32 = arith.constant 0 : i32
    return %arg0, %arg1 : i32, i32
  }
}

</mosaic_0001>

<llo_original>
// kernel: tpu_custom_call.1
$region0: #{tpu_custom_call.1}
  #allocation0 [shape = 'u32[]', space=smem, size = 0x4, offset = 0x4, fixed_abs, tag = 'smem constant byte address 0x4 - core index']
  #allocation1 [shape = 'u32[144,128]{1,0:T(1,128)}', space=vmem, size = 0x12000, scoped, tag = 'internal scratch']
  #allocation2 [shape = 'f32[128,1024]{1,0:T(8,128)}', space=vmem, size = 0x80000, scoped, tag = 'scratch operand']
  %s0 = inlined_call_operand.hbm [shape: f32[256,128], index: 0, kind: input, shape index: {}]
  %s1 = inlined_call_operand.hbm [shape: f32[12,1,128], index: 1, kind: input, shape index: {}]
  %s2 = inlined_call_operand.hbm [shape: f32[132,1,128], index: 2, kind: input, shape index: {}]
  %s3 = inlined_call_operand.hbm [shape: f32[128,256], index: 3, kind: input, shape index: {}]
  %s4 = inlined_call_operand.hbm [shape: f32[1024,256], index: 4, kind: input, shape index: {}]
  %s5 = inlined_call_operand.hbm [shape: f32[256,256], index: 5, kind: output, shape index: {}]
  %s6 = sld [smem:[#allocation0]]
  $region77: #{tpu_custom_call.1} parent=0
    _
  %s8 = ssub.s32 1, %s6
  %s9 = scalar_select 0, %s8, %s6
  $region1: #{tpu_custom_call.1} parent=0
    #allocation3 [shape = 'u8[131072]{0}', space=vmem, size = 0x20000, scoped, tag = 'input window, operand 0']
    #allocation4 [shape = 's32[2]{0}', space=sflag, size = 0x8, scoped, tag = 'scoped memory for tpu_custom_call.1']
    #allocation5 [shape = 's32[2]{0}', space=sflag, size = 0x8, scoped, tag = 'scoped memory for tpu_custom_call.1']
    #allocation6 [shape = 'u8[6144]{0}', space=vmem, size = 0x1800, scoped, tag = 'input window, operand 1, single buffered']
    #allocation7 [shape = 's32[1]{0}', space=sflag, size = 0x4, scoped, tag = 'scoped memory for tpu_custom_call.1']
    #allocation8 [shape = 'u8[67584]{0}', space=vmem, size = 0x10800, scoped, tag = 'input window, operand 2, single buffered']
    #allocation9 [shape = 'u8[131072]{0}', space=vmem, size = 0x20000, scoped, tag = 'input window, operand 3, single buffered']
    #allocation10 [shape = 's32[1]{0}', space=sflag, size = 0x4, scoped, tag = 'scoped memory for tpu_custom_call.1']
    #allocation11 [shape = 'u8[1048576]{0}', space=vmem, size = 0x100000, scoped, tag = 'input window, operand 4, single buffered']
    #allocation12 [shape = 'u8[262144]{0}', space=vmem, size = 0x40000, scoped, tag = 'output window, operand 0']
    %10 = vsyncpa [#allocation4], 0
    %s11 = scalar_lea.sflag [#allocation4], 1
    %12 = vsyncpa %s11, 0
    %13 = vsyncpa [#allocation7], 0
    %14 = vsyncpa [#allocation10], 0
    %15 = vsyncpa [#allocation5], 0
    %s16 = scalar_lea.sflag [#allocation5], 1
    %17 = vsyncpa %s16, 0
    loop: start=0, step=1, limit=4
    $region2: #{tpu_custom_call.1} parent=1 // loop_pre_header
      _
    $region3: #{tpu_custom_call.1} parent=1 // loop_header
      %s19 = sphi 0, %s23
      %p20 = scmp.ge.s32.totalorder %s19, 4
      %s26 = sphi 0, %s38
      %s27 = sphi 0, %s34
      %s28 = sphi 0, %s26
      %s29 = sphi 0, %s27
      %s30 = sphi 0, %s28
      %s31 = sphi 0, %s29
      %s41 = sphi 0, %s43
      %s44 = sphi 0, %s41
      %s45 = sphi 0, %s44
      %s61 = sphi 0, %s45
      %s65 = sphi 0, %s65
      %s67 = sphi 0, %s65
      %s68 = sphi 0, %s67
      %s82 = sphi 0, %s68
      %s86 = sphi 0, %s86
      %s88 = sphi 0, %s86
      %s89 = sphi 0, %s88
      %s103 = sphi 0, %s89
      %s109 = sphi 0, %s111
      %s112 = sphi 0, %s109
      %s113 = sphi 0, %s112
      %s129 = sphi 0, %s113
      %s135 = sphi 0, %s137
      %s138 = sphi 0, %s135
      %s139 = sphi 0, %s138
      %s155 = sphi 0, %s139
      %s163 = sphi 0, %s165
      %s166 = sphi 0, %s163
      %s167 = sphi 0, %s166
      %s183 = sphi 0, %s167
    $region4: #{tpu_custom_call.1} parent=1 // loop_header_branch
      %22 = sbr.rel (%p20) target = $region8
    $region5: #{tpu_custom_call.1} parent=1 // loop_body
      %s24 = ssub.s32 %s19, 1
      %s25 = ssub.s32 %s19, 2
      %s32 = sadd.s32 1, %s27
      %p33 = scmp.ge.s32.totalorder %s32, 1
      %s34 = scalar_select %p33, 0, %s32
      %s35 = sadd.s32 1, %s26
      %s36 = scalar_select %p33, %s35, %s26
      %p37 = scmp.ge.s32.totalorder %s36, 2
      %s38 = scalar_select %p37, 0, %s36
      %s39 = ssub.s32 %s26, %s38
      %p40 = scmp.eq.s32.totalorder %s39, 0
      %s42 = sadd.s32 %s41, 1
      %s43 = scalar_select %p40, %s41, %s42
      %p46 = pneg %p40
      %p47 = scmp.eq.s32.totalorder %s19, 1
      %p48 = por %p46, %p47
      %p49 = scmp.ne.s32.totalorder %s41, %s44
      %p50 = scmp.eq.s32.totalorder %s19, 0
      %p51 = por %p49, %p50
      %p52 = scmp.ne.s32.totalorder %s41, %s44
      %p53 = scmp.eq.s32.totalorder %s24, 1
      %p54 = por %p52, %p53
      %p55 = scmp.ne.s32.totalorder %s44, %s45
      %p56 = scmp.eq.s32.totalorder %s24, 0
      %p57 = por %p55, %p56
      %p58 = scmp.ne.s32.totalorder %s44, %s45
      %p59 = scmp.eq.s32.totalorder %s25, 1
      %p60 = por %p58, %p59
      %p62 = scmp.ne.s32.totalorder %s45, %s61
      %p63 = scmp.eq.s32.totalorder %s25, 0
      %p64 = por %p62, %p63
      %s66 = sadd.s32 %s65, 1
      %p69 = scmp.eq.s32.totalorder %s19, 1
      %p70 = scmp.ne.s32.totalorder %s65, %s67
      %p71 = scmp.eq.s32.totalorder %s19, 0
      %p72 = por %p70, %p71
      %p73 = scmp.ne.s32.totalorder %s65, %s67
      %p74 = scmp.eq.s32.totalorder %s24, 1
      %p75 = por %p73, %p74
      %p76 = scmp.ne.s32.totalorder %s67, %s68
      %p77 = scmp.eq.s32.totalorder %s24, 0
      %p78 = por %p76, %p77
      %p79 = scmp.ne.s32.totalorder %s67, %s68
      %p80 = scmp.eq.s32.totalorder %s25, 1
      %p81 = por %p79, %p80
      %p83 = scmp.ne.s32.totalorder %s68, %s82
      %p84 = scmp.eq.s32.totalorder %s25, 0
      %p85 = por %p83, %p84
      %s87 = sadd.s32 %s86, 1
      %p90 = scmp.eq.s32.totalorder %s19, 1
      %p91 = scmp.ne.s32.totalorder %s86, %s88
      %p92 = scmp.eq.s32.totalorder %s19, 0
      %p93 = por %p91, %p92
      %p94 = scmp.ne.s32.totalorder %s86, %s88
      %p95 = scmp.eq.s32.totalorder %s24, 1
      %p96 = por %p94, %p95
      %p97 = scmp.ne.s32.totalorder %s88, %s89
      %p98 = scmp.eq.s32.totalorder %s24, 0
      %p99 = por %p97, %p98
      %p100 = scmp.ne.s32.totalorder %s88, %s89
      %p101 = scmp.eq.s32.totalorder %s25, 1
      %p102 = por %p100, %p101
      %p104 = scmp.ne.s32.totalorder %s89, %s103
      %p105 = scmp.eq.s32.totalorder %s25, 0
      %p106 = por %p104, %p105
      %s107 = ssub.s32 %s27, %s34
      %p108 = scmp.eq.s32.totalorder %s107, 0
      %s110 = sadd.s32 %s109, 1
      %s111 = scalar_select %p108, %s109, %s110
      %p114 = pneg %p108
      %p115 = scmp.eq.s32.totalorder %s19, 1
      %p116 = por %p114, %p115
      %p117 = scmp.ne.s32.totalorder %s109, %s112
      %p118 = scmp.eq.s32.totalorder %s19, 0
      %p119 = por %p117, %p118
      %p120 = scmp.ne.s32.totalorder %s109, %s112
      %p121 = scmp.eq.s32.totalorder %s24, 1
      %p122 = por %p120, %p121
      %p123 = scmp.ne.s32.totalorder %s112, %s113
      %p124 = scmp.eq.s32.totalorder %s24, 0
      %p125 = por %p123, %p124
      %p126 = scmp.ne.s32.totalorder %s112, %s113
      %p127 = scmp.eq.s32.totalorder %s25, 1
      %p128 = por %p126, %p127
      %p130 = scmp.ne.s32.totalorder %s113, %s129
      %p131 = scmp.eq.s32.totalorder %s25, 0
      %p132 = por %p130, %p131
      %s133 = ssub.s32 %s27, %s34
      %p134 = scmp.eq.s32.totalorder %s133, 0
      %s136 = sadd.s32 %s135, 1
      %s137 = scalar_select %p134, %s135, %s136
      %p140 = pneg %p134
      %p141 = scmp.eq.s32.totalorder %s19, 1
      %p142 = por %p140, %p141
      %p143 = scmp.ne.s32.totalorder %s135, %s138
      %p144 = scmp.eq.s32.totalorder %s19, 0
      %p145 = por %p143, %p144
      %p146 = scmp.ne.s32.totalorder %s135, %s138
      %p147 = scmp.eq.s32.totalorder %s24, 1
      %p148 = por %p146, %p147
      %p149 = scmp.ne.s32.totalorder %s138, %s139
      %p150 = scmp.eq.s32.totalorder %s24, 0
      %p151 = por %p149, %p150
      %p152 = scmp.ne.s32.totalorder %s138, %s139
      %p153 = scmp.eq.s32.totalorder %s25, 1
      %p154 = por %p152, %p153
      %p156 = scmp.ne.s32.totalorder %s139, %s155
      %p157 = scmp.eq.s32.totalorder %s25, 0
      %p158 = por %p156, %p157
      %s159 = ssub.s32 %s26, %s38
      %s160 = ssub.s32 %s27, %s34
      %s161 = sor.u32 %s159, %s160
      %p162 = scmp.eq.s32.totalorder %s161, 0
      %s164 = sadd.s32 %s163, 1
      %s165 = scalar_select %p162, %s163, %s164
      %p168 = pneg %p162
      %p169 = scmp.eq.s32.totalorder %s19, 1
      %p170 = por %p168, %p169
      %p171 = scmp.ne.s32.totalorder %s163, %s166
      %p172 = scmp.eq.s32.totalorder %s19, 0
      %p173 = por %p171, %p172
      %p174 = scmp.ne.s32.totalorder %s163, %s166
      %p175 = scmp.eq.s32.totalorder %s24, 1
      %p176 = por %p174, %p175
      %p177 = scmp.ne.s32.totalorder %s166, %s167
      %p178 = scmp.eq.s32.totalorder %s24, 0
      %p179 = por %p177, %p178
      %p180 = scmp.ne.s32.totalorder %s166, %s167
      %p181 = scmp.eq.s32.totalorder %s25, 1
      %p182 = por %p180, %p181
      %p184 = scmp.ne.s32.totalorder %s167, %s183
      %p185 = scmp.eq.s32.totalorder %s25, 0
      %p186 = por %p184, %p185
      %p187 = scmp.le.s32.totalorder 1, %s19
      %p188 = scmp.lt.s32.totalorder %s19, 3
      %p189 = pnand %p187, %p188
      %p190 = pneg %p189
      // Predicated region
      $region9: #{tpu_custom_call.1} parent=5 // pred_check
        _
      $region10: #{tpu_custom_call.1} parent=5 // pred_check_branch
        %192 = sbr.rel (%p189) target = $region12
      $region11: #{tpu_custom_call.1} parent=5 // pred_region
        %s193 = ssub.s32 %s19, 1
        // Predicated region
        $region13: #{tpu_custom_call.1} parent=11 // pred_check
          %p194 = pneg %p78
        $region14: #{tpu_custom_call.1} parent=11 // pred_check_branch
          %196 = sbr.rel (%p194) target = $region16
        $region15: #{tpu_custom_call.1} parent=11 // pred_region
          %s198 = ssub.s32 192, 192
          %199 = vsyncadd [#allocation7], %s198
          %s200 = sshll.u32 [#allocation6], 4
          %s201 = int_to_ptr.vmem [resolvable:$true] %s200
          %206 = dma.hbm_to_vmem [thread:$0]  %s1, 192, %s201, [#allocation7], 16, 16, 1
        $region16: #{tpu_custom_call.1} parent=11 // pred_fallthru
          _
        // Predicated region
        $region17: #{tpu_custom_call.1} parent=11 // pred_check
          %p207 = pneg %p99
        $region18: #{tpu_custom_call.1} parent=11 // pred_check_branch
          %209 = sbr.rel (%p207) target = $region20
        $region19: #{tpu_custom_call.1} parent=11 // pred_region
          %s211 = ssub.s32 2112, 2112
          %212 = vsyncadd [#allocation7], %s211
          %s213 = sshll.u32 [#allocation8], 4
          %s214 = int_to_ptr.vmem [resolvable:$true] %s213
          %219 = dma.hbm_to_vmem [thread:$0]  %s2, 2112, %s214, [#allocation7], 16, 16, 1
        $region20: #{tpu_custom_call.1} parent=11 // pred_fallthru
          _
        // Predicated region
        $region21: #{tpu_custom_call.1} parent=11 // pred_check
          %p220 = pneg %p125
        $region22: #{tpu_custom_call.1} parent=11 // pred_check_branch
          %222 = sbr.rel (%p220) target = $region24
        $region23: #{tpu_custom_call.1} parent=11 // pred_region
          %s223 = smul.u32 2, %s29
          %s225 = ssub.s32 4096, 4096
          %226 = vsyncadd [#allocation10], %s225
          %s227 = smul.addr %s223, 128
          %s228 = scalar_lea.hbm %s3, %s227
          %s229 = sshll.u32 [#allocation9], 4
          %s230 = int_to_ptr.vmem [resolvable:$true] %s229
          %235 = dma.hbm_to_vmem [thread:$0]  %s228, 4096, %s230, [#allocation10], 256, 256, 16
        $region24: #{tpu_custom_call.1} parent=11 // pred_fallthru
          _
        // Predicated region
        $region25: #{tpu_custom_call.1} parent=11 // pred_check
          %p236 = pneg %p151
        $region26: #{tpu_custom_call.1} parent=11 // pred_check_branch
          %238 = sbr.rel (%p236) target = $region28
        $region27: #{tpu_custom_call.1} parent=11 // pred_region
          %s239 = smul.u32 2, %s29
          %s241 = ssub.s32 32768, 32768
          %242 = vsyncadd [#allocation10], %s241
          %s243 = smul.addr %s239, 128
          %s244 = scalar_lea.hbm %s4, %s243
          %s245 = sshll.u32 [#allocation11], 4
          %s246 = int_to_ptr.vmem [resolvable:$true] %s245
          %251 = dma.hbm_to_vmem [thread:$0]  %s244, 32768, %s246, [#allocation10], 256, 256, 16
        $region28: #{tpu_custom_call.1} parent=11 // pred_fallthru
          _
      $region12: #{tpu_custom_call.1} parent=5 // pred_fallthru
        _
      %p252 = scmp.lt.s32.totalorder %s19, 2
      // Predicated region
      $region29: #{tpu_custom_call.1} parent=5 // pred_check
        %p253 = pneg %p252
      $region30: #{tpu_custom_call.1} parent=5 // pred_check_branch
        %255 = sbr.rel (%p253) target = $region32
      $region31: #{tpu_custom_call.1} parent=5 // pred_region
        // Predicated region
        $region33: #{tpu_custom_call.1} parent=31 // pred_check
          %p256 = pneg %p51
        $region34: #{tpu_custom_call.1} parent=31 // pred_check_branch
          %258 = sbr.rel (%p256) target = $region36
        $region35: #{tpu_custom_call.1} parent=31 // pred_region
          %s259 = sand.u32 %s41, 1
          %s260 = scalar_lea.sflag [#allocation4], %s259
          %s261 = sand.u32 %s41, 1
          %s262 = smul.addr %s261, 128
          %s263 = scalar_lea.vmem [#allocation3], %s262
          %s264 = smul.u32 16, %s26
          %s266 = ssub.s32 2048, 2048
          %267 = vsyncadd %s260, %s266
          %s268 = smul.addr %s264, 128
          %s269 = scalar_lea.hbm %s0, %s268
          %s270 = sshll.u32 %s263, 4
          %s271 = int_to_ptr.vmem [resolvable:$true] %s270
          %276 = dma.hbm_to_vmem [thread:$0]  %s269, 2048, %s271, %s260, 128, 128, 8
        $region36: #{tpu_custom_call.1} parent=31 // pred_fallthru
          _
      $region32: #{tpu_custom_call.1} parent=5 // pred_fallthru
        _
      %p277 = scmp.le.s32.totalorder 1, %s19
      %p278 = scmp.lt.s32.totalorder %s19, 3
      %p279 = pnand %p277, %p278
      %p280 = pneg %p279
      // Predicated region
      $region37: #{tpu_custom_call.1} parent=5 // pred_check
        _
      $region38: #{tpu_custom_call.1} parent=5 // pred_check_branch
        %282 = sbr.rel (%p279) target = $region40
      $region39: #{tpu_custom_call.1} parent=5 // pred_region
        %s283 = ssub.s32 %s19, 1
        %s284 = sand.u32 %s44, 1
        %s285 = scalar_lea.sflag [#allocation4], %s284
        %s286 = sand.u32 %s44, 1
        %s287 = smul.addr %s286, 128
        %s288 = scalar_lea.vmem [#allocation3], %s287
        // Predicated region
        $region41: #{tpu_custom_call.1} parent=39 // pred_check
          %p289 = pneg %p57
        $region42: #{tpu_custom_call.1} parent=39 // pred_check_branch
          %291 = sbr.rel (%p289) target = $region44
        $region43: #{tpu_custom_call.1} parent=39 // pred_region
          %292 = dma.done %s285, 2048
        $region44: #{tpu_custom_call.1} parent=39 // pred_fallthru
          _
        // Predicated region
        $region45: #{tpu_custom_call.1} parent=39 // pred_check
          %p293 = pneg %p78
        $region46: #{tpu_custom_call.1} parent=39 // pred_check_branch
          %295 = sbr.rel (%p293) target = $region48
        $region47: #{tpu_custom_call.1} parent=39 // pred_region
          %296 = dma.done [#allocation7], 192
        $region48: #{tpu_custom_call.1} parent=39 // pred_fallthru
          _
        // Predicated region
        $region49: #{tpu_custom_call.1} parent=39 // pred_check
          %p297 = pneg %p99
        $region50: #{tpu_custom_call.1} parent=39 // pred_check_branch
          %299 = sbr.rel (%p297) target = $region52
        $region51: #{tpu_custom_call.1} parent=39 // pred_region
          %300 = dma.done [#allocation7], 2112
        $region52: #{tpu_custom_call.1} parent=39 // pred_fallthru
          _
        // Predicated region
        $region53: #{tpu_custom_call.1} parent=39 // pred_check
          %p301 = pneg %p125
        $region54: #{tpu_custom_call.1} parent=39 // pred_check_branch
          %303 = sbr.rel (%p301) target = $region56
        $region55: #{tpu_custom_call.1} parent=39 // pred_region
          %304 = dma.done [#allocation10], 4096
        $region56: #{tpu_custom_call.1} parent=39 // pred_fallthru
          _
        // Predicated region
        $region57: #{tpu_custom_call.1} parent=39 // pred_check
          %p305 = pneg %p151
        $region58: #{tpu_custom_call.1} parent=39 // pred_check_branch
          %307 = sbr.rel (%p305) target = $region60
        $region59: #{tpu_custom_call.1} parent=39 // pred_region
          %308 = dma.done [#allocation10], 32768
        $region60: #{tpu_custom_call.1} parent=39 // pred_fallthru
          _
        %s309 = sand.u32 %s44, 1
        %s310 = scalar_lea.sflag [#allocation4], %s309
        %s311 = sand.u32 %s44, 1
        %s312 = smul.addr %s311, 128
        %s313 = scalar_lea.vmem [#allocation3], %s312
        %p314 = pneg %p57
        %p315 = pneg %p54
        %p316 = pneg %p78
        %p317 = pneg %p75
        %p318 = pneg %p99
        %p319 = pneg %p96
        %p320 = pneg %p125
        %p321 = pneg %p122
        %p322 = pneg %p151
        %p323 = pneg %p148
        %p324 = pneg %p179
        %p325 = pneg %p176
        %s326 = sand.u32 %s166, 1
        %s327 = scalar_lea.sflag [#allocation5], %s326
        %s328 = sand.u32 %s166, 1
        %s329 = smul.addr %s328, 256
        %s330 = scalar_lea.vmem [#allocation12], %s329
        %s331 = smul.u32 16, %s28
        %s332 = smul.u32 2, %s29
        %s333 = smul.u32 2, %s29
        %s334 = smul.u32 16, %s28
        %s335 = smul.u32 2, %s29
        %v336 = vld [vmem:[%s288] sm:$0xff]
        %v337 = vld [vmem:[%s288 + $0x8] sm:$0xff]
        %v338 = vld [vmem:[%s288 + $0x10] sm:$0xff]
        %v339 = vld [vmem:[%s288 + $0x18] sm:$0xff]
        %v340 = vld [vmem:[%s288 + $0x20] sm:$0xff]
        %v341 = vld [vmem:[%s288 + $0x28] sm:$0xff]
        %v342 = vld [vmem:[%s288 + $0x30] sm:$0xff]
        %v343 = vld [vmem:[%s288 + $0x38] sm:$0xff]
        %v344 = vld [vmem:[%s288 + $0x40] sm:$0xff]
        %v345 = vld [vmem:[%s288 + $0x48] sm:$0xff]
        %v346 = vld [vmem:[%s288 + $0x50] sm:$0xff]
        %v347 = vld [vmem:[%s288 + $0x58] sm:$0xff]
        %v348 = vld [vmem:[%s288 + $0x60] sm:$0xff]
        %v349 = vld [vmem:[%s288 + $0x68] sm:$0xff]
        %v350 = vld [vmem:[%s288 + $0x70] sm:$0xff]
        %v351 = vld [vmem:[%s288 + $0x78] sm:$0xff]
        %p352 = scmp.eq.s32.totalorder %s29, 0
        // Predicated region
        $region61: #{tpu_custom_call.1} parent=39 // pred_check
          %p353 = pneg %p352
        $region62: #{tpu_custom_call.1} parent=39 // pred_check_branch
          %355 = sbr.rel (%p353) target = $region64
        $region63: #{tpu_custom_call.1} parent=39 // pred_region
          %v356 = vld [vmem:[#allocation6] sm:$0x1]
          %v357 = vld [vmem:[#allocation6 + $0x1] sm:$0x1]
          %v358 = vld [vmem:[#allocation6 + $0x2] sm:$0x1]
          %v359 = vld [vmem:[#allocation6 + $0x3] sm:$0x1]
          %v360 = vld [vmem:[#allocation6 + $0x4] sm:$0x1]
          %v361 = vld [vmem:[#allocation6 + $0x5] sm:$0x1]
          %v362 = vld [vmem:[#allocation6 + $0x6] sm:$0x1]
          %v363 = vld [vmem:[#allocation6 + $0x7] sm:$0x1]
          %v364 = vld [vmem:[#allocation6 + $0x8] sm:$0x1]
          %v365 = vld [vmem:[#allocation6 + $0x9] sm:$0x1]
          %v366 = vld [vmem:[#allocation6 + $0xa] sm:$0x1]
          %s367 = scalar_lea.vmem [#allocation6], 1
          %v368 = vld [vmem:[%s367] sm:$0x1]
          %v369 = vld [vmem:[%s367 + $0x1] sm:$0x1]
          %v370 = vld [vmem:[%s367 + $0x2] sm:$0x1]
          %v371 = vld [vmem:[%s367 + $0x3] sm:$0x1]
          %v372 = vld [vmem:[%s367 + $0x4] sm:$0x1]
          %v373 = vld [vmem:[%s367 + $0x5] sm:$0x1]
          %v374 = vld [vmem:[%s367 + $0x6] sm:$0x1]
          %v375 = vld [vmem:[%s367 + $0x7] sm:$0x1]
          %v376 = vld [vmem:[%s367 + $0x8] sm:$0x1]
          %v377 = vld [vmem:[%s367 + $0x9] sm:$0x1]
          %v378 = vld [vmem:[%s367 + $0xa] sm:$0x1]
          %v390 = vlaneseq
          %v391 = vshrl.u32 %v390, 7
          %v392 = vsub.s32 0, %v391
          %v393 = vrot.slane %v356, %v392
          %v394 = vlaneseq
          %v395 = vshrl.u32 %v394, 7
          %v396 = vsub.s32 0, %v395
          %v397 = vrot.slane %v357, %v396
          %v398 = vlaneseq
          %v399 = vshrl.u32 %v398, 7
          %v400 = vsub.s32 0, %v399
          %v401 = vrot.slane %v358, %v400
          %v402 = vlaneseq
          %v403 = vshrl.u32 %v402, 7
          %v404 = vsub.s32 0, %v403
          %v405 = vrot.slane %v359, %v404
          %v406 = vlaneseq
          %v407 = vshrl.u32 %v406, 7
          %v408 = vsub.s32 0, %v407
          %v409 = vrot.slane %v360, %v408
          %v410 = vlaneseq
          %v411 = vshrl.u32 %v410, 7
          %v412 = vsub.s32 0, %v411
          %v413 = vrot.slane %v361, %v412
          %v414 = vlaneseq
          %v415 = vshrl.u32 %v414, 7
          %v416 = vsub.s32 0, %v415
          %v417 = vrot.slane %v362, %v416
          %v418 = vlaneseq
          %v419 = vshrl.u32 %v418, 7
          %v420 = vsub.s32 0, %v419
          %v421 = vrot.slane %v363, %v420
          %v422 = vlaneseq
          %v423 = vshrl.u32 %v422, 7
          %v424 = vsub.s32 0, %v423
          %v425 = vrot.slane %v364, %v424
          %v426 = vlaneseq
          %v427 = vshrl.u32 %v426, 7
          %v428 = vsub.s32 0, %v427
          %v429 = vrot.slane %v365, %v428
          %v430 = vlaneseq
          %v431 = vshrl.u32 %v430, 7
          %v432 = vsub.s32 0, %v431
          %v433 = vrot.slane %v366, %v432
          %vm445 = vcmp.ge.f32.partialorder %v336, %v393
          %vm446 = vcmp.ge.f32.partialorder %v337, %v393
          %vm447 = vcmp.ge.f32.partialorder %v338, %v393
          %vm448 = vcmp.ge.f32.partialorder %v339, %v393
          %vm449 = vcmp.ge.f32.partialorder %v340, %v393
          %vm450 = vcmp.ge.f32.partialorder %v341, %v393
          %vm451 = vcmp.ge.f32.partialorder %v342, %v393
          %vm452 = vcmp.ge.f32.partialorder %v343, %v393
          %vm453 = vcmp.ge.f32.partialorder %v344, %v393
          %vm454 = vcmp.ge.f32.partialorder %v345, %v393
          %vm455 = vcmp.ge.f32.partialorder %v346, %v393
          %vm456 = vcmp.ge.f32.partialorder %v347, %v393
          %vm457 = vcmp.ge.f32.partialorder %v348, %v393
          %vm458 = vcmp.ge.f32.partialorder %v349, %v393
          %vm459 = vcmp.ge.f32.partialorder %v350, %v393
          %vm460 = vcmp.ge.f32.partialorder %v351, %v393
          %vm461 = vcmp.ge.f32.partialorder %v336, %v397
          %vm462 = vcmp.ge.f32.partialorder %v337, %v397
          %vm463 = vcmp.ge.f32.partialorder %v338, %v397
          %vm464 = vcmp.ge.f32.partialorder %v339, %v397
          %vm465 = vcmp.ge.f32.partialorder %v340, %v397
          %vm466 = vcmp.ge.f32.partialorder %v341, %v397
          %vm467 = vcmp.ge.f32.partialorder %v342, %v397
          %vm468 = vcmp.ge.f32.partialorder %v343, %v397
          %vm469 = vcmp.ge.f32.partialorder %v344, %v397
          %vm470 = vcmp.ge.f32.partialorder %v345, %v397
          %vm471 = vcmp.ge.f32.partialorder %v346, %v397
          %vm472 = vcmp.ge.f32.partialorder %v347, %v397
          %vm473 = vcmp.ge.f32.partialorder %v348, %v397
          %vm474 = vcmp.ge.f32.partialorder %v349, %v397
          %vm475 = vcmp.ge.f32.partialorder %v350, %v397
          %vm476 = vcmp.ge.f32.partialorder %v351, %v397
          %vm477 = vcmp.ge.f32.partialorder %v336, %v401
          %vm478 = vcmp.ge.f32.partialorder %v337, %v401
          %vm479 = vcmp.ge.f32.partialorder %v338, %v401
          %vm480 = vcmp.ge.f32.partialorder %v339, %v401
          %vm481 = vcmp.ge.f32.partialorder %v340, %v401
          %vm482 = vcmp.ge.f32.partialorder %v341, %v401
          %vm483 = vcmp.ge.f32.partialorder %v342, %v401
          %vm484 = vcmp.ge.f32.partialorder %v343, %v401
          %vm485 = vcmp.ge.f32.partialorder %v344, %v401
          %vm486 = vcmp.ge.f32.partialorder %v345, %v401
          %vm487 = vcmp.ge.f32.partialorder %v346, %v401
          %vm488 = vcmp.ge.f32.partialorder %v347, %v401
          %vm489 = vcmp.ge.f32.partialorder %v348, %v401
          %vm490 = vcmp.ge.f32.partialorder %v349, %v401
          %vm491 = vcmp.ge.f32.partialorder %v350, %v401
          %vm492 = vcmp.ge.f32.partialorder %v351, %v401
          %vm493 = vcmp.ge.f32.partialorder %v336, %v405
          %vm494 = vcmp.ge.f32.partialorder %v337, %v405
          %vm495 = vcmp.ge.f32.partialorder %v338, %v405
          %vm496 = vcmp.ge.f32.partialorder %v339, %v405
          %vm497 = vcmp.ge.f32.partialorder %v340, %v405
          %vm498 = vcmp.ge.f32.partialorder %v341, %v405
          %vm499 = vcmp.ge.f32.partialorder %v342, %v405
          %vm500 = vcmp.ge.f32.partialorder %v343, %v405
          %vm501 = vcmp.ge.f32.partialorder %v344, %v405
          %vm502 = vcmp.ge.f32.partialorder %v345, %v405
          %vm503 = vcmp.ge.f32.partialorder %v346, %v405
          %vm504 = vcmp.ge.f32.partialorder %v347, %v405
          %vm505 = vcmp.ge.f32.partialorder %v348, %v405
          %vm506 = vcmp.ge.f32.partialorder %v349, %v405
          %vm507 = vcmp.ge.f32.partialorder %v350, %v405
          %vm508 = vcmp.ge.f32.partialorder %v351, %v405
          %vm509 = vcmp.ge.f32.partialorder %v336, %v409
          %vm510 = vcmp.ge.f32.partialorder %v337, %v409
          %vm511 = vcmp.ge.f32.partialorder %v338, %v409
          %vm512 = vcmp.ge.f32.partialorder %v339, %v409
          %vm513 = vcmp.ge.f32.partialorder %v340, %v409
          %vm514 = vcmp.ge.f32.partialorder %v341, %v409
          %vm515 = vcmp.ge.f32.partialorder %v342, %v409
          %vm516 = vcmp.ge.f32.partialorder %v343, %v409
          %vm517 = vcmp.ge.f32.partialorder %v344, %v409
          %vm518 = vcmp.ge.f32.partialorder %v345, %v409
          %vm519 = vcmp.ge.f32.partialorder %v346, %v409
          %vm520 = vcmp.ge.f32.partialorder %v347, %v409
          %vm521 = vcmp.ge.f32.partialorder %v348, %v409
          %vm522 = vcmp.ge.f32.partialorder %v349, %v409
          %vm523 = vcmp.ge.f32.partialorder %v350, %v409
          %vm524 = vcmp.ge.f32.partialorder %v351, %v409
          %vm525 = vcmp.ge.f32.partialorder %v336, %v413
          %vm526 = vcmp.ge.f32.partialorder %v337, %v413
          %vm527 = vcmp.ge.f32.partialorder %v338, %v413
          %vm528 = vcmp.ge.f32.partialorder %v339, %v413
          %vm529 = vcmp.ge.f32.partialorder %v340, %v413
          %vm530 = vcmp.ge.f32.partialorder %v341, %v413
          %vm531 = vcmp.ge.f32.partialorder %v342, %v413
          %vm532 = vcmp.ge.f32.partialorder %v343, %v413
          %vm533 = vcmp.ge.f32.partialorder %v344, %v413
          %vm534 = vcmp.ge.f32.partialorder %v345, %v413
          %vm535 = vcmp.ge.f32.partialorder %v346, %v413
          %vm536 = vcmp.ge.f32.partialorder %v347, %v413
          %vm537 = vcmp.ge.f32.partialorder %v348, %v413
          %vm538 = vcmp.ge.f32.partialorder %v349, %v413
          %vm539 = vcmp.ge.f32.partialorder %v350, %v413
          %vm540 = vcmp.ge.f32.partialorder %v351, %v413
          %vm541 = vcmp.ge.f32.partialorder %v336, %v417
          %vm542 = vcmp.ge.f32.partialorder %v337, %v417
          %vm543 = vcmp.ge.f32.partialorder %v338, %v417
          %vm544 = vcmp.ge.f32.partialorder %v339, %v417
          %vm545 = vcmp.ge.f32.partialorder %v340, %v417
          %vm546 = vcmp.ge.f32.partialorder %v341, %v417
          %vm547 = vcmp.ge.f32.partialorder %v342, %v417
          %vm548 = vcmp.ge.f32.partialorder %v343, %v417
          %vm549 = vcmp.ge.f32.partialorder %v344, %v417
          %vm550 = vcmp.ge.f32.partialorder %v345, %v417
          %vm551 = vcmp.ge.f32.partialorder %v346, %v417
          %vm552 = vcmp.ge.f32.partialorder %v347, %v417
          %vm553 = vcmp.ge.f32.partialorder %v348, %v417
          %vm554 = vcmp.ge.f32.partialorder %v349, %v417
          %vm555 = vcmp.ge.f32.partialorder %v350, %v417
          %vm556 = vcmp.ge.f32.partialorder %v351, %v417
          %vm557 = vcmp.ge.f32.partialorder %v336, %v421
          %vm558 = vcmp.ge.f32.partialorder %v337, %v421
          %vm559 = vcmp.ge.f32.partialorder %v338, %v421
          %vm560 = vcmp.ge.f32.partialorder %v339, %v421
          %vm561 = vcmp.ge.f32.partialorder %v340, %v421
          %vm562 = vcmp.ge.f32.partialorder %v341, %v421
          %vm563 = vcmp.ge.f32.partialorder %v342, %v421
          %vm564 = vcmp.ge.f32.partialorder %v343, %v421
          %vm565 = vcmp.ge.f32.partialorder %v344, %v421
          %vm566 = vcmp.ge.f32.partialorder %v345, %v421
          %vm567 = vcmp.ge.f32.partialorder %v346, %v421
          %vm568 = vcmp.ge.f32.partialorder %v347, %v421
          %vm569 = vcmp.ge.f32.partialorder %v348, %v421
          %vm570 = vcmp.ge.f32.partialorder %v349, %v421
          %vm571 = vcmp.ge.f32.partialorder %v350, %v421
          %vm572 = vcmp.ge.f32.partialorder %v351, %v421
          %vm573 = vcmp.ge.f32.partialorder %v336, %v425
          %vm574 = vcmp.ge.f32.partialorder %v337, %v425
          %vm575 = vcmp.ge.f32.partialorder %v338, %v425
          %vm576 = vcmp.ge.f32.partialorder %v339, %v425
          %vm577 = vcmp.ge.f32.partialorder %v340, %v425
          %vm578 = vcmp.ge.f32.partialorder %v341, %v425
          %vm579 = vcmp.ge.f32.partialorder %v342, %v425
          %vm580 = vcmp.ge.f32.partialorder %v343, %v425
          %vm581 = vcmp.ge.f32.partialorder %v344, %v425
          %vm582 = vcmp.ge.f32.partialorder %v345, %v425
          %vm583 = vcmp.ge.f32.partialorder %v346, %v425
          %vm584 = vcmp.ge.f32.partialorder %v347, %v425
          %vm585 = vcmp.ge.f32.partialorder %v348, %v425
          %vm586 = vcmp.ge.f32.partialorder %v349, %v425
          %vm587 = vcmp.ge.f32.partialorder %v350, %v425
          %vm588 = vcmp.ge.f32.partialorder %v351, %v425
          %vm589 = vcmp.ge.f32.partialorder %v336, %v429
          %vm590 = vcmp.ge.f32.partialorder %v337, %v429
          %vm591 = vcmp.ge.f32.partialorder %v338, %v429
          %vm592 = vcmp.ge.f32.partialorder %v339, %v429
          %vm593 = vcmp.ge.f32.partialorder %v340, %v429
          %vm594 = vcmp.ge.f32.partialorder %v341, %v429
          %vm595 = vcmp.ge.f32.partialorder %v342, %v429
          %vm596 = vcmp.ge.f32.partialorder %v343, %v429
          %vm597 = vcmp.ge.f32.partialorder %v344, %v429
          %vm598 = vcmp.ge.f32.partialorder %v345, %v429
          %vm599 = vcmp.ge.f32.partialorder %v346, %v429
          %vm600 = vcmp.ge.f32.partialorder %v347, %v429
          %vm601 = vcmp.ge.f32.partialorder %v348, %v429
          %vm602 = vcmp.ge.f32.partialorder %v349, %v429
          %vm603 = vcmp.ge.f32.partialorder %v350, %v429
          %vm604 = vcmp.ge.f32.partialorder %v351, %v429
          %vm605 = vcmp.ge.f32.partialorder %v336, %v433
          %vm606 = vcmp.ge.f32.partialorder %v337, %v433
          %vm607 = vcmp.ge.f32.partialorder %v338, %v433
          %vm608 = vcmp.ge.f32.partialorder %v339, %v433
          %vm609 = vcmp.ge.f32.partialorder %v340, %v433
          %vm610 = vcmp.ge.f32.partialorder %v341, %v433
          %vm611 = vcmp.ge.f32.partialorder %v342, %v433
          %vm612 = vcmp.ge.f32.partialorder %v343, %v433
          %vm613 = vcmp.ge.f32.partialorder %v344, %v433
          %vm614 = vcmp.ge.f32.partialorder %v345, %v433
          %vm615 = vcmp.ge.f32.partialorder %v346, %v433
          %vm616 = vcmp.ge.f32.partialorder %v347, %v433
          %vm617 = vcmp.ge.f32.partialorder %v348, %v433
          %vm618 = vcmp.ge.f32.partialorder %v349, %v433
          %vm619 = vcmp.ge.f32.partialorder %v350, %v433
          %vm620 = vcmp.ge.f32.partialorder %v351, %v433
          %v632 = vlaneseq
          %v633 = vshrl.u32 %v632, 7
          %v634 = vsub.s32 0, %v633
          %v635 = vrot.slane %v368, %v634
          %v636 = vlaneseq
          %v637 = vshrl.u32 %v636, 7
          %v638 = vsub.s32 0, %v637
          %v639 = vrot.slane %v369, %v638
          %v640 = vlaneseq
          %v641 = vshrl.u32 %v640, 7
          %v642 = vsub.s32 0, %v641
          %v643 = vrot.slane %v370, %v642
          %v644 = vlaneseq
          %v645 = vshrl.u32 %v644, 7
          %v646 = vsub.s32 0, %v645
          %v647 = vrot.slane %v371, %v646
          %v648 = vlaneseq
          %v649 = vshrl.u32 %v648, 7
          %v650 = vsub.s32 0, %v649
          %v651 = vrot.slane %v372, %v650
          %v652 = vlaneseq
          %v653 = vshrl.u32 %v652, 7
          %v654 = vsub.s32 0, %v653
          %v655 = vrot.slane %v373, %v654
          %v656 = vlaneseq
          %v657 = vshrl.u32 %v656, 7
          %v658 = vsub.s32 0, %v657
          %v659 = vrot.slane %v374, %v658
          %v660 = vlaneseq
          %v661 = vshrl.u32 %v660, 7
          %v662 = vsub.s32 0, %v661
          %v663 = vrot.slane %v375, %v662
          %v664 = vlaneseq
          %v665 = vshrl.u32 %v664, 7
          %v666 = vsub.s32 0, %v665
          %v667 = vrot.slane %v376, %v666
          %v668 = vlaneseq
          %v669 = vshrl.u32 %v668, 7
          %v670 = vsub.s32 0, %v669
          %v671 = vrot.slane %v377, %v670
          %v672 = vlaneseq
          %v673 = vshrl.u32 %v672, 7
          %v674 = vsub.s32 0, %v673
          %v675 = vrot.slane %v378, %v674
          %vm687 = vcmp.lt.f32.partialorder %v336, %v635
          %vm688 = vcmp.lt.f32.partialorder %v337, %v635
          %vm689 = vcmp.lt.f32.partialorder %v338, %v635
          %vm690 = vcmp.lt.f32.partialorder %v339, %v635
          %vm691 = vcmp.lt.f32.partialorder %v340, %v635
          %vm692 = vcmp.lt.f32.partialorder %v341, %v635
          %vm693 = vcmp.lt.f32.partialorder %v342, %v635
          %vm694 = vcmp.lt.f32.partialorder %v343, %v635
          %vm695 = vcmp.lt.f32.partialorder %v344, %v635
          %vm696 = vcmp.lt.f32.partialorder %v345, %v635
          %vm697 = vcmp.lt.f32.partialorder %v346, %v635
          %vm698 = vcmp.lt.f32.partialorder %v347, %v635
          %vm699 = vcmp.lt.f32.partialorder %v348, %v635
          %vm700 = vcmp.lt.f32.partialorder %v349, %v635
          %vm701 = vcmp.lt.f32.partialorder %v350, %v635
          %vm702 = vcmp.lt.f32.partialorder %v351, %v635
          %vm703 = vcmp.lt.f32.partialorder %v336, %v639
          %vm704 = vcmp.lt.f32.partialorder %v337, %v639
          %vm705 = vcmp.lt.f32.partialorder %v338, %v639
          %vm706 = vcmp.lt.f32.partialorder %v339, %v639
          %vm707 = vcmp.lt.f32.partialorder %v340, %v639
          %vm708 = vcmp.lt.f32.partialorder %v341, %v639
          %vm709 = vcmp.lt.f32.partialorder %v342, %v639
          %vm710 = vcmp.lt.f32.partialorder %v343, %v639
          %vm711 = vcmp.lt.f32.partialorder %v344, %v639
          %vm712 = vcmp.lt.f32.partialorder %v345, %v639
          %vm713 = vcmp.lt.f32.partialorder %v346, %v639
          %vm714 = vcmp.lt.f32.partialorder %v347, %v639
          %vm715 = vcmp.lt.f32.partialorder %v348, %v639
          %vm716 = vcmp.lt.f32.partialorder %v349, %v639
          %vm717 = vcmp.lt.f32.partialorder %v350, %v639
          %vm718 = vcmp.lt.f32.partialorder %v351, %v639
          %vm719 = vcmp.lt.f32.partialorder %v336, %v643
          %vm720 = vcmp.lt.f32.partialorder %v337, %v643
          %vm721 = vcmp.lt.f32.partialorder %v338, %v643
          %vm722 = vcmp.lt.f32.partialorder %v339, %v643
          %vm723 = vcmp.lt.f32.partialorder %v340, %v643
          %vm724 = vcmp.lt.f32.partialorder %v341, %v643
          %vm725 = vcmp.lt.f32.partialorder %v342, %v643
          %vm726 = vcmp.lt.f32.partialorder %v343, %v643
          %vm727 = vcmp.lt.f32.partialorder %v344, %v643
          %vm728 = vcmp.lt.f32.partialorder %v345, %v643
          %vm729 = vcmp.lt.f32.partialorder %v346, %v643
          %vm730 = vcmp.lt.f32.partialorder %v347, %v643
          %vm731 = vcmp.lt.f32.partialorder %v348, %v643
          %vm732 = vcmp.lt.f32.partialorder %v349, %v643
          %vm733 = vcmp.lt.f32.partialorder %v350, %v643
          %vm734 = vcmp.lt.f32.partialorder %v351, %v643
          %vm735 = vcmp.lt.f32.partialorder %v336, %v647
          %vm736 = vcmp.lt.f32.partialorder %v337, %v647
          %vm737 = vcmp.lt.f32.partialorder %v338, %v647
          %vm738 = vcmp.lt.f32.partialorder %v339, %v647
          %vm739 = vcmp.lt.f32.partialorder %v340, %v647
          %vm740 = vcmp.lt.f32.partialorder %v341, %v647
          %vm741 = vcmp.lt.f32.partialorder %v342, %v647
          %vm742 = vcmp.lt.f32.partialorder %v343, %v647
          %vm743 = vcmp.lt.f32.partialorder %v344, %v647
          %vm744 = vcmp.lt.f32.partialorder %v345, %v647
          %vm745 = vcmp.lt.f32.partialorder %v346, %v647
          %vm746 = vcmp.lt.f32.partialorder %v347, %v647
          %vm747 = vcmp.lt.f32.partialorder %v348, %v647
          %vm748 = vcmp.lt.f32.partialorder %v349, %v647
          %vm749 = vcmp.lt.f32.partialorder %v350, %v647
          %vm750 = vcmp.lt.f32.partialorder %v351, %v647
          %vm751 = vcmp.lt.f32.partialorder %v336, %v651
          %vm752 = vcmp.lt.f32.partialorder %v337, %v651
          %vm753 = vcmp.lt.f32.partialorder %v338, %v651
          %vm754 = vcmp.lt.f32.partialorder %v339, %v651
          %vm755 = vcmp.lt.f32.partialorder %v340, %v651
          %vm756 = vcmp.lt.f32.partialorder %v341, %v651
          %vm757 = vcmp.lt.f32.partialorder %v342, %v651
          %vm758 = vcmp.lt.f32.partialorder %v343, %v651
          %vm759 = vcmp.lt.f32.partialorder %v344, %v651
          %vm760 = vcmp.lt.f32.partialorder %v345, %v651
          %vm761 = vcmp.lt.f32.partialorder %v346, %v651
          %vm762 = vcmp.lt.f32.partialorder %v347, %v651
          %vm763 = vcmp.lt.f32.partialorder %v348, %v651
          %vm764 = vcmp.lt.f32.partialorder %v349, %v651
          %vm765 = vcmp.lt.f32.partialorder %v350, %v651
          %vm766 = vcmp.lt.f32.partialorder %v351, %v651
          %vm767 = vcmp.lt.f32.partialorder %v336, %v655
          %vm768 = vcmp.lt.f32.partialorder %v337, %v655
          %vm769 = vcmp.lt.f32.partialorder %v338, %v655
          %vm770 = vcmp.lt.f32.partialorder %v339, %v655
          %vm771 = vcmp.lt.f32.partialorder %v340, %v655
          %vm772 = vcmp.lt.f32.partialorder %v341, %v655
          %vm773 = vcmp.lt.f32.partialorder %v342, %v655
          %vm774 = vcmp.lt.f32.partialorder %v343, %v655
          %vm775 = vcmp.lt.f32.partialorder %v344, %v655
          %vm776 = vcmp.lt.f32.partialorder %v345, %v655
          %vm777 = vcmp.lt.f32.partialorder %v346, %v655
          %vm778 = vcmp.lt.f32.partialorder %v347, %v655
          %vm779 = vcmp.lt.f32.partialorder %v348, %v655
          %vm780 = vcmp.lt.f32.partialorder %v349, %v655
          %vm781 = vcmp.lt.f32.partialorder %v350, %v655
          %vm782 = vcmp.lt.f32.partialorder %v351, %v655
          %vm783 = vcmp.lt.f32.partialorder %v336, %v659
          %vm784 = vcmp.lt.f32.partialorder %v337, %v659
          %vm785 = vcmp.lt.f32.partialorder %v338, %v659
          %vm786 = vcmp.lt.f32.partialorder %v339, %v659
          %vm787 = vcmp.lt.f32.partialorder %v340, %v659
          %vm788 = vcmp.lt.f32.partialorder %v341, %v659
          %vm789 = vcmp.lt.f32.partialorder %v342, %v659
          %vm790 = vcmp.lt.f32.partialorder %v343, %v659
          %vm791 = vcmp.lt.f32.partialorder %v344, %v659
          %vm792 = vcmp.lt.f32.partialorder %v345, %v659
          %vm793 = vcmp.lt.f32.partialorder %v346, %v659
          %vm794 = vcmp.lt.f32.partialorder %v347, %v659
          %vm795 = vcmp.lt.f32.partialorder %v348, %v659
          %vm796 = vcmp.lt.f32.partialorder %v349, %v659
          %vm797 = vcmp.lt.f32.partialorder %v350, %v659
          %vm798 = vcmp.lt.f32.partialorder %v351, %v659
          %vm799 = vcmp.lt.f32.partialorder %v336, %v663
          %vm800 = vcmp.lt.f32.partialorder %v337, %v663
          %vm801 = vcmp.lt.f32.partialorder %v338, %v663
          %vm802 = vcmp.lt.f32.partialorder %v339, %v663
          %vm803 = vcmp.lt.f32.partialorder %v340, %v663
          %vm804 = vcmp.lt.f32.partialorder %v341, %v663
          %vm805 = vcmp.lt.f32.partialorder %v342, %v663
          %vm806 = vcmp.lt.f32.partialorder %v343, %v663
          %vm807 = vcmp.lt.f32.partialorder %v344, %v663
          %vm808 = vcmp.lt.f32.partialorder %v345, %v663
          %vm809 = vcmp.lt.f32.partialorder %v346, %v663
          %vm810 = vcmp.lt.f32.partialorder %v347, %v663
          %vm811 = vcmp.lt.f32.partialorder %v348, %v663
          %vm812 = vcmp.lt.f32.partialorder %v349, %v663
          %vm813 = vcmp.lt.f32.partialorder %v350, %v663
          %vm814 = vcmp.lt.f32.partialorder %v351, %v663
          %vm815 = vcmp.lt.f32.partialorder %v336, %v667
          %vm816 = vcmp.lt.f32.partialorder %v337, %v667
          %vm817 = vcmp.lt.f32.partialorder %v338, %v667
          %vm818 = vcmp.lt.f32.partialorder %v339, %v667
          %vm819 = vcmp.lt.f32.partialorder %v340, %v667
          %vm820 = vcmp.lt.f32.partialorder %v341, %v667
          %vm821 = vcmp.lt.f32.partialorder %v342, %v667
          %vm822 = vcmp.lt.f32.partialorder %v343, %v667
          %vm823 = vcmp.lt.f32.partialorder %v344, %v667
          %vm824 = vcmp.lt.f32.partialorder %v345, %v667
          %vm825 = vcmp.lt.f32.partialorder %v346, %v667
          %vm826 = vcmp.lt.f32.partialorder %v347, %v667
          %vm827 = vcmp.lt.f32.partialorder %v348, %v667
          %vm828 = vcmp.lt.f32.partialorder %v349, %v667
          %vm829 = vcmp.lt.f32.partialorder %v350, %v667
          %vm830 = vcmp.lt.f32.partialorder %v351, %v667
          %vm831 = vcmp.lt.f32.partialorder %v336, %v671
          %vm832 = vcmp.lt.f32.partialorder %v337, %v671
          %vm833 = vcmp.lt.f32.partialorder %v338, %v671
          %vm834 = vcmp.lt.f32.partialorder %v339, %v671
          %vm835 = vcmp.lt.f32.partialorder %v340, %v671
          %vm836 = vcmp.lt.f32.partialorder %v341, %v671
          %vm837 = vcmp.lt.f32.partialorder %v342, %v671
          %vm838 = vcmp.lt.f32.partialorder %v343, %v671
          %vm839 = vcmp.lt.f32.partialorder %v344, %v671
          %vm840 = vcmp.lt.f32.partialorder %v345, %v671
          %vm841 = vcmp.lt.f32.partialorder %v346, %v671
          %vm842 = vcmp.lt.f32.partialorder %v347, %v671
          %vm843 = vcmp.lt.f32.partialorder %v348, %v671
          %vm844 = vcmp.lt.f32.partialorder %v349, %v671
          %vm845 = vcmp.lt.f32.partialorder %v350, %v671
          %vm846 = vcmp.lt.f32.partialorder %v351, %v671
          %vm847 = vcmp.lt.f32.partialorder %v336, %v675
          %vm848 = vcmp.lt.f32.partialorder %v337, %v675
          %vm849 = vcmp.lt.f32.partialorder %v338, %v675
          %vm850 = vcmp.lt.f32.partialorder %v339, %v675
          %vm851 = vcmp.lt.f32.partialorder %v340, %v675
          %vm852 = vcmp.lt.f32.partialorder %v341, %v675
          %vm853 = vcmp.lt.f32.partialorder %v342, %v675
          %vm854 = vcmp.lt.f32.partialorder %v343, %v675
          %vm855 = vcmp.lt.f32.partialorder %v344, %v675
          %vm856 = vcmp.lt.f32.partialorder %v345, %v675
          %vm857 = vcmp.lt.f32.partialorder %v346, %v675
          %vm858 = vcmp.lt.f32.partialorder %v347, %v675
          %vm859 = vcmp.lt.f32.partialorder %v348, %v675
          %vm860 = vcmp.lt.f32.partialorder %v349, %v675
          %vm861 = vcmp.lt.f32.partialorder %v350, %v675
          %vm862 = vcmp.lt.f32.partialorder %v351, %v675
          %vm863 = vmand %vm445, %vm687
          %vm864 = vmand %vm446, %vm688
          %vm865 = vmand %vm447, %vm689
          %vm866 = vmand %vm448, %vm690
          %vm867 = vmand %vm449, %vm691
          %vm868 = vmand %vm450, %vm692
          %vm869 = vmand %vm451, %vm693
          %vm870 = vmand %vm452, %vm694
          %vm871 = vmand %vm453, %vm695
          %vm872 = vmand %vm454, %vm696
          %vm873 = vmand %vm455, %vm697
          %vm874 = vmand %vm456, %vm698
          %vm875 = vmand %vm457, %vm699
          %vm876 = vmand %vm458, %vm700
          %vm877 = vmand %vm459, %vm701
          %vm878 = vmand %vm460, %vm702
          %vm879 = vmand %vm461, %vm703
          %vm880 = vmand %vm462, %vm704
          %vm881 = vmand %vm463, %vm705
          %vm882 = vmand %vm464, %vm706
          %vm883 = vmand %vm465, %vm707
          %vm884 = vmand %vm466, %vm708
          %vm885 = vmand %vm467, %vm709
          %vm886 = vmand %vm468, %vm710
          %vm887 = vmand %vm469, %vm711
          %vm888 = vmand %vm470, %vm712
          %vm889 = vmand %vm471, %vm713
          %vm890 = vmand %vm472, %vm714
          %vm891 = vmand %vm473, %vm715
          %vm892 = vmand %vm474, %vm716
          %vm893 = vmand %vm475, %vm717
          %vm894 = vmand %vm476, %vm718
          %vm895 = vmand %vm477, %vm719
          %vm896 = vmand %vm478, %vm720
          %vm897 = vmand %vm479, %vm721
          %vm898 = vmand %vm480, %vm722
          %vm899 = vmand %vm481, %vm723
          %vm900 = vmand %vm482, %vm724
          %vm901 = vmand %vm483, %vm725
          %vm902 = vmand %vm484, %vm726
          %vm903 = vmand %vm485, %vm727
          %vm904 = vmand %vm486, %vm728
          %vm905 = vmand %vm487, %vm729
          %vm906 = vmand %vm488, %vm730
          %vm907 = vmand %vm489, %vm731
          %vm908 = vmand %vm490, %vm732
          %vm909 = vmand %vm491, %vm733
          %vm910 = vmand %vm492, %vm734
          %vm911 = vmand %vm493, %vm735
          %vm912 = vmand %vm494, %vm736
          %vm913 = vmand %vm495, %vm737
          %vm914 = vmand %vm496, %vm738
          %vm915 = vmand %vm497, %vm739
          %vm916 = vmand %vm498, %vm740
          %vm917 = vmand %vm499, %vm741
          %vm918 = vmand %vm500, %vm742
          %vm919 = vmand %vm501, %vm743
          %vm920 = vmand %vm502, %vm744
          %vm921 = vmand %vm503, %vm745
          %vm922 = vmand %vm504, %vm746
          %vm923 = vmand %vm505, %vm747
          %vm924 = vmand %vm506, %vm748
          %vm925 = vmand %vm507, %vm749
          %vm926 = vmand %vm508, %vm750
          %vm927 = vmand %vm509, %vm751
          %vm928 = vmand %vm510, %vm752
          %vm929 = vmand %vm511, %vm753
          %vm930 = vmand %vm512, %vm754
          %vm931 = vmand %vm513, %vm755
          %vm932 = vmand %vm514, %vm756
          %vm933 = vmand %vm515, %vm757
          %vm934 = vmand %vm516, %vm758
          %vm935 = vmand %vm517, %vm759
          %vm936 = vmand %vm518, %vm760
          %vm937 = vmand %vm519, %vm761
          %vm938 = vmand %vm520, %vm762
          %vm939 = vmand %vm521, %vm763
          %vm940 = vmand %vm522, %vm764
          %vm941 = vmand %vm523, %vm765
          %vm942 = vmand %vm524, %vm766
          %vm943 = vmand %vm525, %vm767
          %vm944 = vmand %vm526, %vm768
          %vm945 = vmand %vm527, %vm769
          %vm946 = vmand %vm528, %vm770
          %vm947 = vmand %vm529, %vm771
          %vm948 = vmand %vm530, %vm772
          %vm949 = vmand %vm531, %vm773
          %vm950 = vmand %vm532, %vm774
          %vm951 = vmand %vm533, %vm775
          %vm952 = vmand %vm534, %vm776
          %vm953 = vmand %vm535, %vm777
          %vm954 = vmand %vm536, %vm778
          %vm955 = vmand %vm537, %vm779
          %vm956 = vmand %vm538, %vm780
          %vm957 = vmand %vm539, %vm781
          %vm958 = vmand %vm540, %vm782
          %vm959 = vmand %vm541, %vm783
          %vm960 = vmand %vm542, %vm784
          %vm961 = vmand %vm543, %vm785
          %vm962 = vmand %vm544, %vm786
          %vm963 = vmand %vm545, %vm787
          %vm964 = vmand %vm546, %vm788
          %vm965 = vmand %vm547, %vm789
          %vm966 = vmand %vm548, %vm790
          %vm967 = vmand %vm549, %vm791
          %vm968 = vmand %vm550, %vm792
          %vm969 = vmand %vm551, %vm793
          %vm970 = vmand %vm552, %vm794
          %vm971 = vmand %vm553, %vm795
          %vm972 = vmand %vm554, %vm796
          %vm973 = vmand %vm555, %vm797
          %vm974 = vmand %vm556, %vm798
          %vm975 = vmand %vm557, %vm799
          %vm976 = vmand %vm558, %vm800
          %vm977 = vmand %vm559, %vm801
          %vm978 = vmand %vm560, %vm802
          %vm979 = vmand %vm561, %vm803
          %vm980 = vmand %vm562, %vm804
          %vm981 = vmand %vm563, %vm805
          %vm982 = vmand %vm564, %vm806
          %vm983 = vmand %vm565, %vm807
          %vm984 = vmand %vm566, %vm808
          %vm985 = vmand %vm567, %vm809
          %vm986 = vmand %vm568, %vm810
          %vm987 = vmand %vm569, %vm811
          %vm988 = vmand %vm570, %vm812
          %vm989 = vmand %vm571, %vm813
          %vm990 = vmand %vm572, %vm814
          %vm991 = vmand %vm573, %vm815
          %vm992 = vmand %vm574, %vm816
          %vm993 = vmand %vm575, %vm817
          %vm994 = vmand %vm576, %vm818
          %vm995 = vmand %vm577, %vm819
          %vm996 = vmand %vm578, %vm820
          %vm997 = vmand %vm579, %vm821
          %vm998 = vmand %vm580, %vm822
          %vm999 = vmand %vm581, %vm823
          %vm1000 = vmand %vm582, %vm824
          %vm1001 = vmand %vm583, %vm825
          %vm1002 = vmand %vm584, %vm826
          %vm1003 = vmand %vm585, %vm827
          %vm1004 = vmand %vm586, %vm828
          %vm1005 = vmand %vm587, %vm829
          %vm1006 = vmand %vm588, %vm830
          %vm1007 = vmand %vm589, %vm831
          %vm1008 = vmand %vm590, %vm832
          %vm1009 = vmand %vm591, %vm833
          %vm1010 = vmand %vm592, %vm834
          %vm1011 = vmand %vm593, %vm835
          %vm1012 = vmand %vm594, %vm836
          %vm1013 = vmand %vm595, %vm837
          %vm1014 = vmand %vm596, %vm838
          %vm1015 = vmand %vm597, %vm839
          %vm1016 = vmand %vm598, %vm840
          %vm1017 = vmand %vm599, %vm841
          %vm1018 = vmand %vm600, %vm842
          %vm1019 = vmand %vm601, %vm843
          %vm1020 = vmand %vm602, %vm844
          %vm1021 = vmand %vm603, %vm845
          %vm1022 = vmand %vm604, %vm846
          %vm1023 = vmand %vm605, %vm847
          %vm1024 = vmand %vm606, %vm848
          %vm1025 = vmand %vm607, %vm849
          %vm1026 = vmand %vm608, %vm850
          %vm1027 = vmand %vm609, %vm851
          %vm1028 = vmand %vm610, %vm852
          %vm1029 = vmand %vm611, %vm853
          %vm1030 = vmand %vm612, %vm854
          %vm1031 = vmand %vm613, %vm855
          %vm1032 = vmand %vm614, %vm856
          %vm1033 = vmand %vm615, %vm857
          %vm1034 = vmand %vm616, %vm858
          %vm1035 = vmand %vm617, %vm859
          %vm1036 = vmand %vm618, %vm860
          %vm1037 = vmand %vm619, %vm861
          %vm1038 = vmand %vm620, %vm862
          %v1039 = vsel %vm863, 1.0, 0.0
          %v1040 = vsel %vm864, 1.0, 0.0
          %v1041 = vsel %vm865, 1.0, 0.0
          %v1042 = vsel %vm866, 1.0, 0.0
          %v1043 = vsel %vm867, 1.0, 0.0
          %v1044 = vsel %vm868, 1.0, 0.0
          %v1045 = vsel %vm869, 1.0, 0.0
          %v1046 = vsel %vm870, 1.0, 0.0
          %v1047 = vsel %vm871, 1.0, 0.0
          %v1048 = vsel %vm872, 1.0, 0.0
          %v1049 = vsel %vm873, 1.0, 0.0
          %v1050 = vsel %vm874, 1.0, 0.0
          %v1051 = vsel %vm875, 1.0, 0.0
          %v1052 = vsel %vm876, 1.0, 0.0
          %v1053 = vsel %vm877, 1.0, 0.0
          %v1054 = vsel %vm878, 1.0, 0.0
          %v1055 = vsel %vm879, 1.0, 0.0
          %v1056 = vsel %vm880, 1.0, 0.0
          %v1057 = vsel %vm881, 1.0, 0.0
          %v1058 = vsel %vm882, 1.0, 0.0
          %v1059 = vsel %vm883, 1.0, 0.0
          %v1060 = vsel %vm884, 1.0, 0.0
          %v1061 = vsel %vm885, 1.0, 0.0
          %v1062 = vsel %vm886, 1.0, 0.0
          %v1063 = vsel %vm887, 1.0, 0.0
          %v1064 = vsel %vm888, 1.0, 0.0
          %v1065 = vsel %vm889, 1.0, 0.0
          %v1066 = vsel %vm890, 1.0, 0.0
          %v1067 = vsel %vm891, 1.0, 0.0
          %v1068 = vsel %vm892, 1.0, 0.0
          %v1069 = vsel %vm893, 1.0, 0.0
          %v1070 = vsel %vm894, 1.0, 0.0
          %v1071 = vsel %vm895, 1.0, 0.0
          %v1072 = vsel %vm896, 1.0, 0.0
          %v1073 = vsel %vm897, 1.0, 0.0
          %v1074 = vsel %vm898, 1.0, 0.0
          %v1075 = vsel %vm899, 1.0, 0.0
          %v1076 = vsel %vm900, 1.0, 0.0
          %v1077 = vsel %vm901, 1.0, 0.0
          %v1078 = vsel %vm902, 1.0, 0.0
          %v1079 = vsel %vm903, 1.0, 0.0
          %v1080 = vsel %vm904, 1.0, 0.0
          %v1081 = vsel %vm905, 1.0, 0.0
          %v1082 = vsel %vm906, 1.0, 0.0
          %v1083 = vsel %vm907, 1.0, 0.0
          %v1084 = vsel %vm908, 1.0, 0.0
          %v1085 = vsel %vm909, 1.0, 0.0
          %v1086 = vsel %vm910, 1.0, 0.0
          %v1087 = vsel %vm911, 1.0, 0.0
          %v1088 = vsel %vm912, 1.0, 0.0
          %v1089 = vsel %vm913, 1.0, 0.0
          %v1090 = vsel %vm914, 1.0, 0.0
          %v1091 = vsel %vm915, 1.0, 0.0
          %v1092 = vsel %vm916, 1.0, 0.0
          %v1093 = vsel %vm917, 1.0, 0.0
          %v1094 = vsel %vm918, 1.0, 0.0
          %v1095 = vsel %vm919, 1.0, 0.0
          %v1096 = vsel %vm920, 1.0, 0.0
          %v1097 = vsel %vm921, 1.0, 0.0
          %v1098 = vsel %vm922, 1.0, 0.0
          %v1099 = vsel %vm923, 1.0, 0.0
          %v1100 = vsel %vm924, 1.0, 0.0
          %v1101 = vsel %vm925, 1.0, 0.0
          %v1102 = vsel %vm926, 1.0, 0.0
          %v1103 = vsel %vm927, 1.0, 0.0
          %v1104 = vsel %vm928, 1.0, 0.0
          %v1105 = vsel %vm929, 1.0, 0.0
          %v1106 = vsel %vm930, 1.0, 0.0
          %v1107 = vsel %vm931, 1.0, 0.0
          %v1108 = vsel %vm932, 1.0, 0.0
          %v1109 = vsel %vm933, 1.0, 0.0
          %v1110 = vsel %vm934, 1.0, 0.0
          %v1111 = vsel %vm935, 1.0, 0.0
          %v1112 = vsel %vm936, 1.0, 0.0
          %v1113 = vsel %vm937, 1.0, 0.0
          %v1114 = vsel %vm938, 1.0, 0.0
          %v1115 = vsel %vm939, 1.0, 0.0
          %v1116 = vsel %vm940, 1.0, 0.0
          %v1117 = vsel %vm941, 1.0, 0.0
          %v1118 = vsel %vm942, 1.0, 0.0
          %v1119 = vsel %vm943, 1.0, 0.0
          %v1120 = vsel %vm944, 1.0, 0.0
          %v1121 = vsel %vm945, 1.0, 0.0
          %v1122 = vsel %vm946, 1.0, 0.0
          %v1123 = vsel %vm947, 1.0, 0.0
          %v1124 = vsel %vm948, 1.0, 0.0
          %v1125 = vsel %vm949, 1.0, 0.0
          %v1126 = vsel %vm950, 1.0, 0.0
          %v1127 = vsel %vm951, 1.0, 0.0
          %v1128 = vsel %vm952, 1.0, 0.0
          %v1129 = vsel %vm953, 1.0, 0.0
          %v1130 = vsel %vm954, 1.0, 0.0
          %v1131 = vsel %vm955, 1.0, 0.0
          %v1132 = vsel %vm956, 1.0, 0.0
          %v1133 = vsel %vm957, 1.0, 0.0
          %v1134 = vsel %vm958, 1.0, 0.0
          %v1135 = vsel %vm959, 1.0, 0.0
          %v1136 = vsel %vm960, 1.0, 0.0
          %v1137 = vsel %vm961, 1.0, 0.0
          %v1138 = vsel %vm962, 1.0, 0.0
          %v1139 = vsel %vm963, 1.0, 0.0
          %v1140 = vsel %vm964, 1.0, 0.0
          %v1141 = vsel %vm965, 1.0, 0.0
          %v1142 = vsel %vm966, 1.0, 0.0
          %v1143 = vsel %vm967, 1.0, 0.0
          %v1144 = vsel %vm968, 1.0, 0.0
          %v1145 = vsel %vm969, 1.0, 0.0
          %v1146 = vsel %vm970, 1.0, 0.0
          %v1147 = vsel %vm971, 1.0, 0.0
          %v1148 = vsel %vm972, 1.0, 0.0
          %v1149 = vsel %vm973, 1.0, 0.0
          %v1150 = vsel %vm974, 1.0, 0.0
          %v1151 = vsel %vm975, 1.0, 0.0
          %v1152 = vsel %vm976, 1.0, 0.0
          %v1153 = vsel %vm977, 1.0, 0.0
          %v1154 = vsel %vm978, 1.0, 0.0
          %v1155 = vsel %vm979, 1.0, 0.0
          %v1156 = vsel %vm980, 1.0, 0.0
          %v1157 = vsel %vm981, 1.0, 0.0
          %v1158 = vsel %vm982, 1.0, 0.0
          %v1159 = vsel %vm983, 1.0, 0.0
          %v1160 = vsel %vm984, 1.0, 0.0
          %v1161 = vsel %vm985, 1.0, 0.0
          %v1162 = vsel %vm986, 1.0, 0.0
          %v1163 = vsel %vm987, 1.0, 0.0
          %v1164 = vsel %vm988, 1.0, 0.0
          %v1165 = vsel %vm989, 1.0, 0.0
          %v1166 = vsel %vm990, 1.0, 0.0
          %v1167 = vsel %vm991, 1.0, 0.0
          %v1168 = vsel %vm992, 1.0, 0.0
          %v1169 = vsel %vm993, 1.0, 0.0
          %v1170 = vsel %vm994, 1.0, 0.0
          %v1171 = vsel %vm995, 1.0, 0.0
          %v1172 = vsel %vm996, 1.0, 0.0
          %v1173 = vsel %vm997, 1.0, 0.0
          %v1174 = vsel %vm998, 1.0, 0.0
          %v1175 = vsel %vm999, 1.0, 0.0
          %v1176 = vsel %vm1000, 1.0, 0.0
          %v1177 = vsel %vm1001, 1.0, 0.0
          %v1178 = vsel %vm1002, 1.0, 0.0
          %v1179 = vsel %vm1003, 1.0, 0.0
          %v1180 = vsel %vm1004, 1.0, 0.0
          %v1181 = vsel %vm1005, 1.0, 0.0
          %v1182 = vsel %vm1006, 1.0, 0.0
          %v1183 = vsel %vm1007, 1.0, 0.0
          %v1184 = vsel %vm1008, 1.0, 0.0
          %v1185 = vsel %vm1009, 1.0, 0.0
          %v1186 = vsel %vm1010, 1.0, 0.0
          %v1187 = vsel %vm1011, 1.0, 0.0
          %v1188 = vsel %vm1012, 1.0, 0.0
          %v1189 = vsel %vm1013, 1.0, 0.0
          %v1190 = vsel %vm1014, 1.0, 0.0
          %v1191 = vsel %vm1015, 1.0, 0.0
          %v1192 = vsel %vm1016, 1.0, 0.0
          %v1193 = vsel %vm1017, 1.0, 0.0
          %v1194 = vsel %vm1018, 1.0, 0.0
          %v1195 = vsel %vm1019, 1.0, 0.0
          %v1196 = vsel %vm1020, 1.0, 0.0
          %v1197 = vsel %vm1021, 1.0, 0.0
          %v1198 = vsel %vm1022, 1.0, 0.0
          %v1199 = vsel %vm1023, 1.0, 0.0
          %v1200 = vsel %vm1024, 1.0, 0.0
          %v1201 = vsel %vm1025, 1.0, 0.0
          %v1202 = vsel %vm1026, 1.0, 0.0
          %v1203 = vsel %vm1027, 1.0, 0.0
          %v1204 = vsel %vm1028, 1.0, 0.0
          %v1205 = vsel %vm1029, 1.0, 0.0
          %v1206 = vsel %vm1030, 1.0, 0.0
          %v1207 = vsel %vm1031, 1.0, 0.0
          %v1208 = vsel %vm1032, 1.0, 0.0
          %v1209 = vsel %vm1033, 1.0, 0.0
          %v1210 = vsel %vm1034, 1.0, 0.0
          %v1211 = vsel %vm1035, 1.0, 0.0
          %v1212 = vsel %vm1036, 1.0, 0.0
          %v1213 = vsel %vm1037, 1.0, 0.0
          %v1214 = vsel %vm1038, 1.0, 0.0
          %v1215 = vld [vmem:[#allocation8] sm:$0x1]
          %v1216 = vld [vmem:[#allocation8 + $0x1] sm:$0x1]
          %v1217 = vld [vmem:[#allocation8 + $0x2] sm:$0x1]
          %v1218 = vld [vmem:[#allocation8 + $0x3] sm:$0x1]
          %v1219 = vld [vmem:[#allocation8 + $0x4] sm:$0x1]
          %v1220 = vld [vmem:[#allocation8 + $0x5] sm:$0x1]
          %v1221 = vld [vmem:[#allocation8 + $0x6] sm:$0x1]
          %v1222 = vld [vmem:[#allocation8 + $0x7] sm:$0x1]
          %v1223 = vld [vmem:[#allocation8 + $0x8] sm:$0x1]
          %v1224 = vld [vmem:[#allocation8 + $0x9] sm:$0x1]
          %s1225 = scalar_lea.vmem [#allocation8], 11
          %v1226 = vld [vmem:[%s1225] sm:$0x1]
          %v1227 = vld [vmem:[%s1225 + $0x1] sm:$0x1]
          %v1228 = vld [vmem:[%s1225 + $0x2] sm:$0x1]
          %v1229 = vld [vmem:[%s1225 + $0x3] sm:$0x1]
          %v1230 = vld [vmem:[%s1225 + $0x4] sm:$0x1]
          %v1231 = vld [vmem:[%s1225 + $0x5] sm:$0x1]
          %v1232 = vld [vmem:[%s1225 + $0x6] sm:$0x1]
          %v1233 = vld [vmem:[%s1225 + $0x7] sm:$0x1]
          %v1234 = vld [vmem:[%s1225 + $0x8] sm:$0x1]
          %v1235 = vld [vmem:[%s1225 + $0x9] sm:$0x1]
          %s1236 = scalar_lea.vmem [#allocation8], 22
          %v1237 = vld [vmem:[%s1236] sm:$0x1]
          %v1238 = vld [vmem:[%s1236 + $0x1] sm:$0x1]
          %v1239 = vld [vmem:[%s1236 + $0x2] sm:$0x1]
          %v1240 = vld [vmem:[%s1236 + $0x3] sm:$0x1]
          %v1241 = vld [vmem:[%s1236 + $0x4] sm:$0x1]
          %v1242 = vld [vmem:[%s1236 + $0x5] sm:$0x1]
          %v1243 = vld [vmem:[%s1236 + $0x6] sm:$0x1]
          %v1244 = vld [vmem:[%s1236 + $0x7] sm:$0x1]
          %v1245 = vld [vmem:[%s1236 + $0x8] sm:$0x1]
          %v1246 = vld [vmem:[%s1236 + $0x9] sm:$0x1]
          %s1247 = scalar_lea.vmem [#allocation8], 33
          %v1248 = vld [vmem:[%s1247] sm:$0x1]
          %v1249 = vld [vmem:[%s1247 + $0x1] sm:$0x1]
          %v1250 = vld [vmem:[%s1247 + $0x2] sm:$0x1]
          %v1251 = vld [vmem:[%s1247 + $0x3] sm:$0x1]
          %v1252 = vld [vmem:[%s1247 + $0x4] sm:$0x1]
          %v1253 = vld [vmem:[%s1247 + $0x5] sm:$0x1]
          %v1254 = vld [vmem:[%s1247 + $0x6] sm:$0x1]
          %v1255 = vld [vmem:[%s1247 + $0x7] sm:$0x1]
          %v1256 = vld [vmem:[%s1247 + $0x8] sm:$0x1]
          %v1257 = vld [vmem:[%s1247 + $0x9] sm:$0x1]
          %v1268 = vlaneseq
          %v1269 = vshrl.u32 %v1268, 7
          %v1270 = vsub.s32 0, %v1269
          %v1271 = vrot.slane %v1215, %v1270
          %v1272 = vlaneseq
          %v1273 = vshrl.u32 %v1272, 7
          %v1274 = vsub.s32 0, %v1273
          %v1275 = vrot.slane %v1216, %v1274
          %v1276 = vlaneseq
          %v1277 = vshrl.u32 %v1276, 7
          %v1278 = vsub.s32 0, %v1277
          %v1279 = vrot.slane %v1217, %v1278
          %v1280 = vlaneseq
          %v1281 = vshrl.u32 %v1280, 7
          %v1282 = vsub.s32 0, %v1281
          %v1283 = vrot.slane %v1218, %v1282
          %v1284 = vlaneseq
          %v1285 = vshrl.u32 %v1284, 7
          %v1286 = vsub.s32 0, %v1285
          %v1287 = vrot.slane %v1219, %v1286
          %v1288 = vlaneseq
          %v1289 = vshrl.u32 %v1288, 7
          %v1290 = vsub.s32 0, %v1289
          %v1291 = vrot.slane %v1220, %v1290
          %v1292 = vlaneseq
          %v1293 = vshrl.u32 %v1292, 7
          %v1294 = vsub.s32 0, %v1293
          %v1295 = vrot.slane %v1221, %v1294
          %v1296 = vlaneseq
          %v1297 = vshrl.u32 %v1296, 7
          %v1298 = vsub.s32 0, %v1297
          %v1299 = vrot.slane %v1222, %v1298
          %v1300 = vlaneseq
          %v1301 = vshrl.u32 %v1300, 7
          %v1302 = vsub.s32 0, %v1301
          %v1303 = vrot.slane %v1223, %v1302
          %v1304 = vlaneseq
          %v1305 = vshrl.u32 %v1304, 7
          %v1306 = vsub.s32 0, %v1305
          %v1307 = vrot.slane %v1224, %v1306
          %v1318 = vmul.f32 %v336, %v1271
          %v1319 = vmul.f32 %v337, %v1271
          %v1320 = vmul.f32 %v338, %v1271
          %v1321 = vmul.f32 %v339, %v1271
          %v1322 = vmul.f32 %v340, %v1271
          %v1323 = vmul.f32 %v341, %v1271
          %v1324 = vmul.f32 %v342, %v1271
          %v1325 = vmul.f32 %v343, %v1271
          %v1326 = vmul.f32 %v344, %v1271
          %v1327 = vmul.f32 %v345, %v1271
          %v1328 = vmul.f32 %v346, %v1271
          %v1329 = vmul.f32 %v347, %v1271
          %v1330 = vmul.f32 %v348, %v1271
          %v1331 = vmul.f32 %v349, %v1271
          %v1332 = vmul.f32 %v350, %v1271
          %v1333 = vmul.f32 %v351, %v1271
          %v1334 = vmul.f32 %v336, %v1275
          %v1335 = vmul.f32 %v337, %v1275
          %v1336 = vmul.f32 %v338, %v1275
          %v1337 = vmul.f32 %v339, %v1275
          %v1338 = vmul.f32 %v340, %v1275
          %v1339 = vmul.f32 %v341, %v1275
          %v1340 = vmul.f32 %v342, %v1275
          %v1341 = vmul.f32 %v343, %v1275
          %v1342 = vmul.f32 %v344, %v1275
          %v1343 = vmul.f32 %v345, %v1275
          %v1344 = vmul.f32 %v346, %v1275
          %v1345 = vmul.f32 %v347, %v1275
          %v1346 = vmul.f32 %v348, %v1275
          %v1347 = vmul.f32 %v349, %v1275
          %v1348 = vmul.f32 %v350, %v1275
          %v1349 = vmul.f32 %v351, %v1275
          %v1350 = vmul.f32 %v336, %v1279
          %v1351 = vmul.f32 %v337, %v1279
          %v1352 = vmul.f32 %v338, %v1279
          %v1353 = vmul.f32 %v339, %v1279
          %v1354 = vmul.f32 %v340, %v1279
          %v1355 = vmul.f32 %v341, %v1279
          %v1356 = vmul.f32 %v342, %v1279
          %v1357 = vmul.f32 %v343, %v1279
          %v1358 = vmul.f32 %v344, %v1279
          %v1359 = vmul.f32 %v345, %v1279
          %v1360 = vmul.f32 %v346, %v1279
          %v1361 = vmul.f32 %v347, %v1279
          %v1362 = vmul.f32 %v348, %v1279
          %v1363 = vmul.f32 %v349, %v1279
          %v1364 = vmul.f32 %v350, %v1279
          %v1365 = vmul.f32 %v351, %v1279
          %v1366 = vmul.f32 %v336, %v1283
          %v1367 = vmul.f32 %v337, %v1283
          %v1368 = vmul.f32 %v338, %v1283
          %v1369 = vmul.f32 %v339, %v1283
          %v1370 = vmul.f32 %v340, %v1283
          %v1371 = vmul.f32 %v341, %v1283
          %v1372 = vmul.f32 %v342, %v1283
          %v1373 = vmul.f32 %v343, %v1283
          %v1374 = vmul.f32 %v344, %v1283
          %v1375 = vmul.f32 %v345, %v1283
          %v1376 = vmul.f32 %v346, %v1283
          %v1377 = vmul.f32 %v347, %v1283
          %v1378 = vmul.f32 %v348, %v1283
          %v1379 = vmul.f32 %v349, %v1283
          %v1380 = vmul.f32 %v350, %v1283
          %v1381 = vmul.f32 %v351, %v1283
          %v1382 = vmul.f32 %v336, %v1287
          %v1383 = vmul.f32 %v337, %v1287
          %v1384 = vmul.f32 %v338, %v1287
          %v1385 = vmul.f32 %v339, %v1287
          %v1386 = vmul.f32 %v340, %v1287
          %v1387 = vmul.f32 %v341, %v1287
          %v1388 = vmul.f32 %v342, %v1287
          %v1389 = vmul.f32 %v343, %v1287
          %v1390 = vmul.f32 %v344, %v1287
          %v1391 = vmul.f32 %v345, %v1287
          %v1392 = vmul.f32 %v346, %v1287
          %v1393 = vmul.f32 %v347, %v1287
          %v1394 = vmul.f32 %v348, %v1287
          %v1395 = vmul.f32 %v349, %v1287
          %v1396 = vmul.f32 %v350, %v1287
          %v1397 = vmul.f32 %v351, %v1287
          %v1398 = vmul.f32 %v336, %v1291
          %v1399 = vmul.f32 %v337, %v1291
          %v1400 = vmul.f32 %v338, %v1291
          %v1401 = vmul.f32 %v339, %v1291
          %v1402 = vmul.f32 %v340, %v1291
          %v1403 = vmul.f32 %v341, %v1291
          %v1404 = vmul.f32 %v342, %v1291
          %v1405 = vmul.f32 %v343, %v1291
          %v1406 = vmul.f32 %v344, %v1291
          %v1407 = vmul.f32 %v345, %v1291
          %v1408 = vmul.f32 %v346, %v1291
          %v1409 = vmul.f32 %v347, %v1291
          %v1410 = vmul.f32 %v348, %v1291
          %v1411 = vmul.f32 %v349, %v1291
          %v1412 = vmul.f32 %v350, %v1291
          %v1413 = vmul.f32 %v351, %v1291
          %v1414 = vmul.f32 %v336, %v1295
          %v1415 = vmul.f32 %v337, %v1295
          %v1416 = vmul.f32 %v338, %v1295
          %v1417 = vmul.f32 %v339, %v1295
          %v1418 = vmul.f32 %v340, %v1295
          %v1419 = vmul.f32 %v341, %v1295
          %v1420 = vmul.f32 %v342, %v1295
          %v1421 = vmul.f32 %v343, %v1295
          %v1422 = vmul.f32 %v344, %v1295
          %v1423 = vmul.f32 %v345, %v1295
          %v1424 = vmul.f32 %v346, %v1295
          %v1425 = vmul.f32 %v347, %v1295
          %v1426 = vmul.f32 %v348, %v1295
          %v1427 = vmul.f32 %v349, %v1295
          %v1428 = vmul.f32 %v350, %v1295
          %v1429 = vmul.f32 %v351, %v1295
          %v1430 = vmul.f32 %v336, %v1299
          %v1431 = vmul.f32 %v337, %v1299
          %v1432 = vmul.f32 %v338, %v1299
          %v1433 = vmul.f32 %v339, %v1299
          %v1434 = vmul.f32 %v340, %v1299
          %v1435 = vmul.f32 %v341, %v1299
          %v1436 = vmul.f32 %v342, %v1299
          %v1437 = vmul.f32 %v343, %v1299
          %v1438 = vmul.f32 %v344, %v1299
          %v1439 = vmul.f32 %v345, %v1299
          %v1440 = vmul.f32 %v346, %v1299
          %v1441 = vmul.f32 %v347, %v1299
          %v1442 = vmul.f32 %v348, %v1299
          %v1443 = vmul.f32 %v349, %v1299
          %v1444 = vmul.f32 %v350, %v1299
          %v1445 = vmul.f32 %v351, %v1299
          %v1446 = vmul.f32 %v336, %v1303
          %v1447 = vmul.f32 %v337, %v1303
          %v1448 = vmul.f32 %v338, %v1303
          %v1449 = vmul.f32 %v339, %v1303
          %v1450 = vmul.f32 %v340, %v1303
          %v1451 = vmul.f32 %v341, %v1303
          %v1452 = vmul.f32 %v342, %v1303
          %v1453 = vmul.f32 %v343, %v1303
          %v1454 = vmul.f32 %v344, %v1303
          %v1455 = vmul.f32 %v345, %v1303
          %v1456 = vmul.f32 %v346, %v1303
          %v1457 = vmul.f32 %v347, %v1303
          %v1458 = vmul.f32 %v348, %v1303
          %v1459 = vmul.f32 %v349, %v1303
          %v1460 = vmul.f32 %v350, %v1303
          %v1461 = vmul.f32 %v351, %v1303
          %v1462 = vmul.f32 %v336, %v1307
          %v1463 = vmul.f32 %v337, %v1307
          %v1464 = vmul.f32 %v338, %v1307
          %v1465 = vmul.f32 %v339, %v1307
          %v1466 = vmul.f32 %v340, %v1307
          %v1467 = vmul.f32 %v341, %v1307
          %v1468 = vmul.f32 %v342, %v1307
          %v1469 = vmul.f32 %v343, %v1307
          %v1470 = vmul.f32 %v344, %v1307
          %v1471 = vmul.f32 %v345, %v1307
          %v1472 = vmul.f32 %v346, %v1307
          %v1473 = vmul.f32 %v347, %v1307
          %v1474 = vmul.f32 %v348, %v1307
          %v1475 = vmul.f32 %v349, %v1307
          %v1476 = vmul.f32 %v350, %v1307
          %v1477 = vmul.f32 %v351, %v1307
          %v1488 = vlaneseq
          %v1489 = vshrl.u32 %v1488, 7
          %v1490 = vsub.s32 0, %v1489
          %v1491 = vrot.slane %v1226, %v1490
          %v1492 = vlaneseq
          %v1493 = vshrl.u32 %v1492, 7
          %v1494 = vsub.s32 0, %v1493
          %v1495 = vrot.slane %v1227, %v1494
          %v1496 = vlaneseq
          %v1497 = vshrl.u32 %v1496, 7
          %v1498 = vsub.s32 0, %v1497
          %v1499 = vrot.slane %v1228, %v1498
          %v1500 = vlaneseq
          %v1501 = vshrl.u32 %v1500, 7
          %v1502 = vsub.s32 0, %v1501
          %v1503 = vrot.slane %v1229, %v1502
          %v1504 = vlaneseq
          %v1505 = vshrl.u32 %v1504, 7
          %v1506 = vsub.s32 0, %v1505
          %v1507 = vrot.slane %v1230, %v1506
          %v1508 = vlaneseq
          %v1509 = vshrl.u32 %v1508, 7
          %v1510 = vsub.s32 0, %v1509
          %v1511 = vrot.slane %v1231, %v1510
          %v1512 = vlaneseq
          %v1513 = vshrl.u32 %v1512, 7
          %v1514 = vsub.s32 0, %v1513
          %v1515 = vrot.slane %v1232, %v1514
          %v1516 = vlaneseq
          %v1517 = vshrl.u32 %v1516, 7
          %v1518 = vsub.s32 0, %v1517
          %v1519 = vrot.slane %v1233, %v1518
          %v1520 = vlaneseq
          %v1521 = vshrl.u32 %v1520, 7
          %v1522 = vsub.s32 0, %v1521
          %v1523 = vrot.slane %v1234, %v1522
          %v1524 = vlaneseq
          %v1525 = vshrl.u32 %v1524, 7
          %v1526 = vsub.s32 0, %v1525
          %v1527 = vrot.slane %v1235, %v1526
          %v1538 = vsub.f32 %v1318, %v1491
          %v1539 = vsub.f32 %v1319, %v1491
          %v1540 = vsub.f32 %v1320, %v1491
          %v1541 = vsub.f32 %v1321, %v1491
          %v1542 = vsub.f32 %v1322, %v1491
          %v1543 = vsub.f32 %v1323, %v1491
          %v1544 = vsub.f32 %v1324, %v1491
          %v1545 = vsub.f32 %v1325, %v1491
          %v1546 = vsub.f32 %v1326, %v1491
          %v1547 = vsub.f32 %v1327, %v1491
          %v1548 = vsub.f32 %v1328, %v1491
          %v1549 = vsub.f32 %v1329, %v1491
          %v1550 = vsub.f32 %v1330, %v1491
          %v1551 = vsub.f32 %v1331, %v1491
          %v1552 = vsub.f32 %v1332, %v1491
          %v1553 = vsub.f32 %v1333, %v1491
          %v1554 = vsub.f32 %v1334, %v1495
          %v1555 = vsub.f32 %v1335, %v1495
          %v1556 = vsub.f32 %v1336, %v1495
          %v1557 = vsub.f32 %v1337, %v1495
          %v1558 = vsub.f32 %v1338, %v1495
          %v1559 = vsub.f32 %v1339, %v1495
          %v1560 = vsub.f32 %v1340, %v1495
          %v1561 = vsub.f32 %v1341, %v1495
          %v1562 = vsub.f32 %v1342, %v1495
          %v1563 = vsub.f32 %v1343, %v1495
          %v1564 = vsub.f32 %v1344, %v1495
          %v1565 = vsub.f32 %v1345, %v1495
          %v1566 = vsub.f32 %v1346, %v1495
          %v1567 = vsub.f32 %v1347, %v1495
          %v1568 = vsub.f32 %v1348, %v1495
          %v1569 = vsub.f32 %v1349, %v1495
          %v1570 = vsub.f32 %v1350, %v1499
          %v1571 = vsub.f32 %v1351, %v1499
          %v1572 = vsub.f32 %v1352, %v1499
          %v1573 = vsub.f32 %v1353, %v1499
          %v1574 = vsub.f32 %v1354, %v1499
          %v1575 = vsub.f32 %v1355, %v1499
          %v1576 = vsub.f32 %v1356, %v1499
          %v1577 = vsub.f32 %v1357, %v1499
          %v1578 = vsub.f32 %v1358, %v1499
          %v1579 = vsub.f32 %v1359, %v1499
          %v1580 = vsub.f32 %v1360, %v1499
          %v1581 = vsub.f32 %v1361, %v1499
          %v1582 = vsub.f32 %v1362, %v1499
          %v1583 = vsub.f32 %v1363, %v1499
          %v1584 = vsub.f32 %v1364, %v1499
          %v1585 = vsub.f32 %v1365, %v1499
          %v1586 = vsub.f32 %v1366, %v1503
          %v1587 = vsub.f32 %v1367, %v1503
          %v1588 = vsub.f32 %v1368, %v1503
          %v1589 = vsub.f32 %v1369, %v1503
          %v1590 = vsub.f32 %v1370, %v1503
          %v1591 = vsub.f32 %v1371, %v1503
          %v1592 = vsub.f32 %v1372, %v1503
          %v1593 = vsub.f32 %v1373, %v1503
          %v1594 = vsub.f32 %v1374, %v1503
          %v1595 = vsub.f32 %v1375, %v1503
          %v1596 = vsub.f32 %v1376, %v1503
          %v1597 = vsub.f32 %v1377, %v1503
          %v1598 = vsub.f32 %v1378, %v1503
          %v1599 = vsub.f32 %v1379, %v1503
          %v1600 = vsub.f32 %v1380, %v1503
          %v1601 = vsub.f32 %v1381, %v1503
          %v1602 = vsub.f32 %v1382, %v1507
          %v1603 = vsub.f32 %v1383, %v1507
          %v1604 = vsub.f32 %v1384, %v1507
          %v1605 = vsub.f32 %v1385, %v1507
          %v1606 = vsub.f32 %v1386, %v1507
          %v1607 = vsub.f32 %v1387, %v1507
          %v1608 = vsub.f32 %v1388, %v1507
          %v1609 = vsub.f32 %v1389, %v1507
          %v1610 = vsub.f32 %v1390, %v1507
          %v1611 = vsub.f32 %v1391, %v1507
          %v1612 = vsub.f32 %v1392, %v1507
          %v1613 = vsub.f32 %v1393, %v1507
          %v1614 = vsub.f32 %v1394, %v1507
          %v1615 = vsub.f32 %v1395, %v1507
          %v1616 = vsub.f32 %v1396, %v1507
          %v1617 = vsub.f32 %v1397, %v1507
          %v1618 = vsub.f32 %v1398, %v1511
          %v1619 = vsub.f32 %v1399, %v1511
          %v1620 = vsub.f32 %v1400, %v1511
          %v1621 = vsub.f32 %v1401, %v1511
          %v1622 = vsub.f32 %v1402, %v1511
          %v1623 = vsub.f32 %v1403, %v1511
          %v1624 = vsub.f32 %v1404, %v1511
          %v1625 = vsub.f32 %v1405, %v1511
          %v1626 = vsub.f32 %v1406, %v1511
          %v1627 = vsub.f32 %v1407, %v1511
          %v1628 = vsub.f32 %v1408, %v1511
          %v1629 = vsub.f32 %v1409, %v1511
          %v1630 = vsub.f32 %v1410, %v1511
          %v1631 = vsub.f32 %v1411, %v1511
          %v1632 = vsub.f32 %v1412, %v1511
          %v1633 = vsub.f32 %v1413, %v1511
          %v1634 = vsub.f32 %v1414, %v1515
          %v1635 = vsub.f32 %v1415, %v1515
          %v1636 = vsub.f32 %v1416, %v1515
          %v1637 = vsub.f32 %v1417, %v1515
          %v1638 = vsub.f32 %v1418, %v1515
          %v1639 = vsub.f32 %v1419, %v1515
          %v1640 = vsub.f32 %v1420, %v1515
          %v1641 = vsub.f32 %v1421, %v1515
          %v1642 = vsub.f32 %v1422, %v1515
          %v1643 = vsub.f32 %v1423, %v1515
          %v1644 = vsub.f32 %v1424, %v1515
          %v1645 = vsub.f32 %v1425, %v1515
          %v1646 = vsub.f32 %v1426, %v1515
          %v1647 = vsub.f32 %v1427, %v1515
          %v1648 = vsub.f32 %v1428, %v1515
          %v1649 = vsub.f32 %v1429, %v1515
          %v1650 = vsub.f32 %v1430, %v1519
          %v1651 = vsub.f32 %v1431, %v1519
          %v1652 = vsub.f32 %v1432, %v1519
          %v1653 = vsub.f32 %v1433, %v1519
          %v1654 = vsub.f32 %v1434, %v1519
          %v1655 = vsub.f32 %v1435, %v1519
          %v1656 = vsub.f32 %v1436, %v1519
          %v1657 = vsub.f32 %v1437, %v1519
          %v1658 = vsub.f32 %v1438, %v1519
          %v1659 = vsub.f32 %v1439, %v1519
          %v1660 = vsub.f32 %v1440, %v1519
          %v1661 = vsub.f32 %v1441, %v1519
          %v1662 = vsub.f32 %v1442, %v1519
          %v1663 = vsub.f32 %v1443, %v1519
          %v1664 = vsub.f32 %v1444, %v1519
          %v1665 = vsub.f32 %v1445, %v1519
          %v1666 = vsub.f32 %v1446, %v1523
          %v1667 = vsub.f32 %v1447, %v1523
          %v1668 = vsub.f32 %v1448, %v1523
          %v1669 = vsub.f32 %v1449, %v1523
          %v1670 = vsub.f32 %v1450, %v1523
          %v1671 = vsub.f32 %v1451, %v1523
          %v1672 = vsub.f32 %v1452, %v1523
          %v1673 = vsub.f32 %v1453, %v1523
          %v1674 = vsub.f32 %v1454, %v1523
          %v1675 = vsub.f32 %v1455, %v1523
          %v1676 = vsub.f32 %v1456, %v1523
          %v1677 = vsub.f32 %v1457, %v1523
          %v1678 = vsub.f32 %v1458, %v1523
          %v1679 = vsub.f32 %v1459, %v1523
          %v1680 = vsub.f32 %v1460, %v1523
          %v1681 = vsub.f32 %v1461, %v1523
          %v1682 = vsub.f32 %v1462, %v1527
          %v1683 = vsub.f32 %v1463, %v1527
          %v1684 = vsub.f32 %v1464, %v1527
          %v1685 = vsub.f32 %v1465, %v1527
          %v1686 = vsub.f32 %v1466, %v1527
          %v1687 = vsub.f32 %v1467, %v1527
          %v1688 = vsub.f32 %v1468, %v1527
          %v1689 = vsub.f32 %v1469, %v1527
          %v1690 = vsub.f32 %v1470, %v1527
          %v1691 = vsub.f32 %v1471, %v1527
          %v1692 = vsub.f32 %v1472, %v1527
          %v1693 = vsub.f32 %v1473, %v1527
          %v1694 = vsub.f32 %v1474, %v1527
          %v1695 = vsub.f32 %v1475, %v1527
          %v1696 = vsub.f32 %v1476, %v1527
          %v1697 = vsub.f32 %v1477, %v1527
          %v1708 = vlaneseq
          %v1709 = vshrl.u32 %v1708, 7
          %v1710 = vsub.s32 0, %v1709
          %v1711 = vrot.slane %v1237, %v1710
          %v1712 = vlaneseq
          %v1713 = vshrl.u32 %v1712, 7
          %v1714 = vsub.s32 0, %v1713
          %v1715 = vrot.slane %v1238, %v1714
          %v1716 = vlaneseq
          %v1717 = vshrl.u32 %v1716, 7
          %v1718 = vsub.s32 0, %v1717
          %v1719 = vrot.slane %v1239, %v1718
          %v1720 = vlaneseq
          %v1721 = vshrl.u32 %v1720, 7
          %v1722 = vsub.s32 0, %v1721
          %v1723 = vrot.slane %v1240, %v1722
          %v1724 = vlaneseq
          %v1725 = vshrl.u32 %v1724, 7
          %v1726 = vsub.s32 0, %v1725
          %v1727 = vrot.slane %v1241, %v1726
          %v1728 = vlaneseq
          %v1729 = vshrl.u32 %v1728, 7
          %v1730 = vsub.s32 0, %v1729
          %v1731 = vrot.slane %v1242, %v1730
          %v1732 = vlaneseq
          %v1733 = vshrl.u32 %v1732, 7
          %v1734 = vsub.s32 0, %v1733
          %v1735 = vrot.slane %v1243, %v1734
          %v1736 = vlaneseq
          %v1737 = vshrl.u32 %v1736, 7
          %v1738 = vsub.s32 0, %v1737
          %v1739 = vrot.slane %v1244, %v1738
          %v1740 = vlaneseq
          %v1741 = vshrl.u32 %v1740, 7
          %v1742 = vsub.s32 0, %v1741
          %v1743 = vrot.slane %v1245, %v1742
          %v1744 = vlaneseq
          %v1745 = vshrl.u32 %v1744, 7
          %v1746 = vsub.s32 0, %v1745
          %v1747 = vrot.slane %v1246, %v1746
          %v1758 = vmul.f32 %v336, %v1711
          %v1759 = vmul.f32 %v337, %v1711
          %v1760 = vmul.f32 %v338, %v1711
          %v1761 = vmul.f32 %v339, %v1711
          %v1762 = vmul.f32 %v340, %v1711
          %v1763 = vmul.f32 %v341, %v1711
          %v1764 = vmul.f32 %v342, %v1711
          %v1765 = vmul.f32 %v343, %v1711
          %v1766 = vmul.f32 %v344, %v1711
          %v1767 = vmul.f32 %v345, %v1711
          %v1768 = vmul.f32 %v346, %v1711
          %v1769 = vmul.f32 %v347, %v1711
          %v1770 = vmul.f32 %v348, %v1711
          %v1771 = vmul.f32 %v349, %v1711
          %v1772 = vmul.f32 %v350, %v1711
          %v1773 = vmul.f32 %v351, %v1711
          %v1774 = vmul.f32 %v336, %v1715
          %v1775 = vmul.f32 %v337, %v1715
          %v1776 = vmul.f32 %v338, %v1715
          %v1777 = vmul.f32 %v339, %v1715
          %v1778 = vmul.f32 %v340, %v1715
          %v1779 = vmul.f32 %v341, %v1715
          %v1780 = vmul.f32 %v342, %v1715
          %v1781 = vmul.f32 %v343, %v1715
          %v1782 = vmul.f32 %v344, %v1715
          %v1783 = vmul.f32 %v345, %v1715
          %v1784 = vmul.f32 %v346, %v1715
          %v1785 = vmul.f32 %v347, %v1715
          %v1786 = vmul.f32 %v348, %v1715
          %v1787 = vmul.f32 %v349, %v1715
          %v1788 = vmul.f32 %v350, %v1715
          %v1789 = vmul.f32 %v351, %v1715
          %v1790 = vmul.f32 %v336, %v1719
          %v1791 = vmul.f32 %v337, %v1719
          %v1792 = vmul.f32 %v338, %v1719
          %v1793 = vmul.f32 %v339, %v1719
          %v1794 = vmul.f32 %v340, %v1719
          %v1795 = vmul.f32 %v341, %v1719
          %v1796 = vmul.f32 %v342, %v1719
          %v1797 = vmul.f32 %v343, %v1719
          %v1798 = vmul.f32 %v344, %v1719
          %v1799 = vmul.f32 %v345, %v1719
          %v1800 = vmul.f32 %v346, %v1719
          %v1801 = vmul.f32 %v347, %v1719
          %v1802 = vmul.f32 %v348, %v1719
          %v1803 = vmul.f32 %v349, %v1719
          %v1804 = vmul.f32 %v350, %v1719
          %v1805 = vmul.f32 %v351, %v1719
          %v1806 = vmul.f32 %v336, %v1723
          %v1807 = vmul.f32 %v337, %v1723
          %v1808 = vmul.f32 %v338, %v1723
          %v1809 = vmul.f32 %v339, %v1723
          %v1810 = vmul.f32 %v340, %v1723
          %v1811 = vmul.f32 %v341, %v1723
          %v1812 = vmul.f32 %v342, %v1723
          %v1813 = vmul.f32 %v343, %v1723
          %v1814 = vmul.f32 %v344, %v1723
          %v1815 = vmul.f32 %v345, %v1723
          %v1816 = vmul.f32 %v346, %v1723
          %v1817 = vmul.f32 %v347, %v1723
          %v1818 = vmul.f32 %v348, %v1723
          %v1819 = vmul.f32 %v349, %v1723
          %v1820 = vmul.f32 %v350, %v1723
          %v1821 = vmul.f32 %v351, %v1723
          %v1822 = vmul.f32 %v336, %v1727
          %v1823 = vmul.f32 %v337, %v1727
          %v1824 = vmul.f32 %v338, %v1727
          %v1825 = vmul.f32 %v339, %v1727
          %v1826 = vmul.f32 %v340, %v1727
          %v1827 = vmul.f32 %v341, %v1727
          %v1828 = vmul.f32 %v342, %v1727
          %v1829 = vmul.f32 %v343, %v1727
          %v1830 = vmul.f32 %v344, %v1727
          %v1831 = vmul.f32 %v345, %v1727
          %v1832 = vmul.f32 %v346, %v1727
          %v1833 = vmul.f32 %v347, %v1727
          %v1834 = vmul.f32 %v348, %v1727
          %v1835 = vmul.f32 %v349, %v1727
          %v1836 = vmul.f32 %v350, %v1727
          %v1837 = vmul.f32 %v351, %v1727
          %v1838 = vmul.f32 %v336, %v1731
          %v1839 = vmul.f32 %v337, %v1731
          %v1840 = vmul.f32 %v338, %v1731
          %v1841 = vmul.f32 %v339, %v1731
          %v1842 = vmul.f32 %v340, %v1731
          %v1843 = vmul.f32 %v341, %v1731
          %v1844 = vmul.f32 %v342, %v1731
          %v1845 = vmul.f32 %v343, %v1731
          %v1846 = vmul.f32 %v344, %v1731
          %v1847 = vmul.f32 %v345, %v1731
          %v1848 = vmul.f32 %v346, %v1731
          %v1849 = vmul.f32 %v347, %v1731
          %v1850 = vmul.f32 %v348, %v1731
          %v1851 = vmul.f32 %v349, %v1731
          %v1852 = vmul.f32 %v350, %v1731
          %v1853 = vmul.f32 %v351, %v1731
          %v1854 = vmul.f32 %v336, %v1735
          %v1855 = vmul.f32 %v337, %v1735
          %v1856 = vmul.f32 %v338, %v1735
          %v1857 = vmul.f32 %v339, %v1735
          %v1858 = vmul.f32 %v340, %v1735
          %v1859 = vmul.f32 %v341, %v1735
          %v1860 = vmul.f32 %v342, %v1735
          %v1861 = vmul.f32 %v343, %v1735
          %v1862 = vmul.f32 %v344, %v1735
          %v1863 = vmul.f32 %v345, %v1735
          %v1864 = vmul.f32 %v346, %v1735
          %v1865 = vmul.f32 %v347, %v1735
          %v1866 = vmul.f32 %v348, %v1735
          %v1867 = vmul.f32 %v349, %v1735
          %v1868 = vmul.f32 %v350, %v1735
          %v1869 = vmul.f32 %v351, %v1735
          %v1870 = vmul.f32 %v336, %v1739
          %v1871 = vmul.f32 %v337, %v1739
          %v1872 = vmul.f32 %v338, %v1739
          %v1873 = vmul.f32 %v339, %v1739
          %v1874 = vmul.f32 %v340, %v1739
          %v1875 = vmul.f32 %v341, %v1739
          %v1876 = vmul.f32 %v342, %v1739
          %v1877 = vmul.f32 %v343, %v1739
          %v1878 = vmul.f32 %v344, %v1739
          %v1879 = vmul.f32 %v345, %v1739
          %v1880 = vmul.f32 %v346, %v1739
          %v1881 = vmul.f32 %v347, %v1739
          %v1882 = vmul.f32 %v348, %v1739
          %v1883 = vmul.f32 %v349, %v1739
          %v1884 = vmul.f32 %v350, %v1739
          %v1885 = vmul.f32 %v351, %v1739
          %v1886 = vmul.f32 %v336, %v1743
          %v1887 = vmul.f32 %v337, %v1743
          %v1888 = vmul.f32 %v338, %v1743
          %v1889 = vmul.f32 %v339, %v1743
          %v1890 = vmul.f32 %v340, %v1743
          %v1891 = vmul.f32 %v341, %v1743
          %v1892 = vmul.f32 %v342, %v1743
          %v1893 = vmul.f32 %v343, %v1743
          %v1894 = vmul.f32 %v344, %v1743
          %v1895 = vmul.f32 %v345, %v1743
          %v1896 = vmul.f32 %v346, %v1743
          %v1897 = vmul.f32 %v347, %v1743
          %v1898 = vmul.f32 %v348, %v1743
          %v1899 = vmul.f32 %v349, %v1743
          %v1900 = vmul.f32 %v350, %v1743
          %v1901 = vmul.f32 %v351, %v1743
          %v1902 = vmul.f32 %v336, %v1747
          %v1903 = vmul.f32 %v337, %v1747
          %v1904 = vmul.f32 %v338, %v1747
          %v1905 = vmul.f32 %v339, %v1747
          %v1906 = vmul.f32 %v340, %v1747
          %v1907 = vmul.f32 %v341, %v1747
          %v1908 = vmul.f32 %v342, %v1747
          %v1909 = vmul.f32 %v343, %v1747
          %v1910 = vmul.f32 %v344, %v1747
          %v1911 = vmul.f32 %v345, %v1747
          %v1912 = vmul.f32 %v346, %v1747
          %v1913 = vmul.f32 %v347, %v1747
          %v1914 = vmul.f32 %v348, %v1747
          %v1915 = vmul.f32 %v349, %v1747
          %v1916 = vmul.f32 %v350, %v1747
          %v1917 = vmul.f32 %v351, %v1747
          %v1928 = vlaneseq
          %v1929 = vshrl.u32 %v1928, 7
          %v1930 = vsub.s32 0, %v1929
          %v1931 = vrot.slane %v1248, %v1930
          %v1932 = vlaneseq
          %v1933 = vshrl.u32 %v1932, 7
          %v1934 = vsub.s32 0, %v1933
          %v1935 = vrot.slane %v1249, %v1934
          %v1936 = vlaneseq
          %v1937 = vshrl.u32 %v1936, 7
          %v1938 = vsub.s32 0, %v1937
          %v1939 = vrot.slane %v1250, %v1938
          %v1940 = vlaneseq
          %v1941 = vshrl.u32 %v1940, 7
          %v1942 = vsub.s32 0, %v1941
          %v1943 = vrot.slane %v1251, %v1942
          %v1944 = vlaneseq
          %v1945 = vshrl.u32 %v1944, 7
          %v1946 = vsub.s32 0, %v1945
          %v1947 = vrot.slane %v1252, %v1946
          %v1948 = vlaneseq
          %v1949 = vshrl.u32 %v1948, 7
          %v1950 = vsub.s32 0, %v1949
          %v1951 = vrot.slane %v1253, %v1950
          %v1952 = vlaneseq
          %v1953 = vshrl.u32 %v1952, 7
          %v1954 = vsub.s32 0, %v1953
          %v1955 = vrot.slane %v1254, %v1954
          %v1956 = vlaneseq
          %v1957 = vshrl.u32 %v1956, 7
          %v1958 = vsub.s32 0, %v1957
          %v1959 = vrot.slane %v1255, %v1958
          %v1960 = vlaneseq
          %v1961 = vshrl.u32 %v1960, 7
          %v1962 = vsub.s32 0, %v1961
          %v1963 = vrot.slane %v1256, %v1962
          %v1964 = vlaneseq
          %v1965 = vshrl.u32 %v1964, 7
          %v1966 = vsub.s32 0, %v1965
          %v1967 = vrot.slane %v1257, %v1966
          %v1978 = vsub.f32 %v1931, %v1758
          %v1979 = vsub.f32 %v1931, %v1759
          %v1980 = vsub.f32 %v1931, %v1760
          %v1981 = vsub.f32 %v1931, %v1761
          %v1982 = vsub.f32 %v1931, %v1762
          %v1983 = vsub.f32 %v1931, %v1763
          %v1984 = vsub.f32 %v1931, %v1764
          %v1985 = vsub.f32 %v1931, %v1765
          %v1986 = vsub.f32 %v1931, %v1766
          %v1987 = vsub.f32 %v1931, %v1767
          %v1988 = vsub.f32 %v1931, %v1768
          %v1989 = vsub.f32 %v1931, %v1769
          %v1990 = vsub.f32 %v1931, %v1770
          %v1991 = vsub.f32 %v1931, %v1771
          %v1992 = vsub.f32 %v1931, %v1772
          %v1993 = vsub.f32 %v1931, %v1773
          %v1994 = vsub.f32 %v1935, %v1774
          %v1995 = vsub.f32 %v1935, %v1775
          %v1996 = vsub.f32 %v1935, %v1776
          %v1997 = vsub.f32 %v1935, %v1777
          %v1998 = vsub.f32 %v1935, %v1778
          %v1999 = vsub.f32 %v1935, %v1779
          %v2000 = vsub.f32 %v1935, %v1780
          %v2001 = vsub.f32 %v1935, %v1781
          %v2002 = vsub.f32 %v1935, %v1782
          %v2003 = vsub.f32 %v1935, %v1783
          %v2004 = vsub.f32 %v1935, %v1784
          %v2005 = vsub.f32 %v1935, %v1785
          %v2006 = vsub.f32 %v1935, %v1786
          %v2007 = vsub.f32 %v1935, %v1787
          %v2008 = vsub.f32 %v1935, %v1788
          %v2009 = vsub.f32 %v1935, %v1789
          %v2010 = vsub.f32 %v1939, %v1790
          %v2011 = vsub.f32 %v1939, %v1791
          %v2012 = vsub.f32 %v1939, %v1792
          %v2013 = vsub.f32 %v1939, %v1793
          %v2014 = vsub.f32 %v1939, %v1794
          %v2015 = vsub.f32 %v1939, %v1795
          %v2016 = vsub.f32 %v1939, %v1796
          %v2017 = vsub.f32 %v1939, %v1797
          %v2018 = vsub.f32 %v1939, %v1798
          %v2019 = vsub.f32 %v1939, %v1799
          %v2020 = vsub.f32 %v1939, %v1800
          %v2021 = vsub.f32 %v1939, %v1801
          %v2022 = vsub.f32 %v1939, %v1802
          %v2023 = vsub.f32 %v1939, %v1803
          %v2024 = vsub.f32 %v1939, %v1804
          %v2025 = vsub.f32 %v1939, %v1805
          %v2026 = vsub.f32 %v1943, %v1806
          %v2027 = vsub.f32 %v1943, %v1807
          %v2028 = vsub.f32 %v1943, %v1808
          %v2029 = vsub.f32 %v1943, %v1809
          %v2030 = vsub.f32 %v1943, %v1810
          %v2031 = vsub.f32 %v1943, %v1811
          %v2032 = vsub.f32 %v1943, %v1812
          %v2033 = vsub.f32 %v1943, %v1813
          %v2034 = vsub.f32 %v1943, %v1814
          %v2035 = vsub.f32 %v1943, %v1815
          %v2036 = vsub.f32 %v1943, %v1816
          %v2037 = vsub.f32 %v1943, %v1817
          %v2038 = vsub.f32 %v1943, %v1818
          %v2039 = vsub.f32 %v1943, %v1819
          %v2040 = vsub.f32 %v1943, %v1820
          %v2041 = vsub.f32 %v1943, %v1821
          %v2042 = vsub.f32 %v1947, %v1822
          %v2043 = vsub.f32 %v1947, %v1823
          %v2044 = vsub.f32 %v1947, %v1824
          %v2045 = vsub.f32 %v1947, %v1825
          %v2046 = vsub.f32 %v1947, %v1826
          %v2047 = vsub.f32 %v1947, %v1827
          %v2048 = vsub.f32 %v1947, %v1828
          %v2049 = vsub.f32 %v1947, %v1829
          %v2050 = vsub.f32 %v1947, %v1830
          %v2051 = vsub.f32 %v1947, %v1831
          %v2052 = vsub.f32 %v1947, %v1832
          %v2053 = vsub.f32 %v1947, %v1833
          %v2054 = vsub.f32 %v1947, %v1834
          %v2055 = vsub.f32 %v1947, %v1835
          %v2056 = vsub.f32 %v1947, %v1836
          %v2057 = vsub.f32 %v1947, %v1837
          %v2058 = vsub.f32 %v1951, %v1838
          %v2059 = vsub.f32 %v1951, %v1839
          %v2060 = vsub.f32 %v1951, %v1840
          %v2061 = vsub.f32 %v1951, %v1841
          %v2062 = vsub.f32 %v1951, %v1842
          %v2063 = vsub.f32 %v1951, %v1843
          %v2064 = vsub.f32 %v1951, %v1844
          %v2065 = vsub.f32 %v1951, %v1845
          %v2066 = vsub.f32 %v1951, %v1846
          %v2067 = vsub.f32 %v1951, %v1847
          %v2068 = vsub.f32 %v1951, %v1848
          %v2069 = vsub.f32 %v1951, %v1849
          %v2070 = vsub.f32 %v1951, %v1850
          %v2071 = vsub.f32 %v1951, %v1851
          %v2072 = vsub.f32 %v1951, %v1852
          %v2073 = vsub.f32 %v1951, %v1853
          %v2074 = vsub.f32 %v1955, %v1854
          %v2075 = vsub.f32 %v1955, %v1855
          %v2076 = vsub.f32 %v1955, %v1856
          %v2077 = vsub.f32 %v1955, %v1857
          %v2078 = vsub.f32 %v1955, %v1858
          %v2079 = vsub.f32 %v1955, %v1859
          %v2080 = vsub.f32 %v1955, %v1860
          %v2081 = vsub.f32 %v1955, %v1861
          %v2082 = vsub.f32 %v1955, %v1862
          %v2083 = vsub.f32 %v1955, %v1863
          %v2084 = vsub.f32 %v1955, %v1864
          %v2085 = vsub.f32 %v1955, %v1865
          %v2086 = vsub.f32 %v1955, %v1866
          %v2087 = vsub.f32 %v1955, %v1867
          %v2088 = vsub.f32 %v1955, %v1868
          %v2089 = vsub.f32 %v1955, %v1869
          %v2090 = vsub.f32 %v1959, %v1870
          %v2091 = vsub.f32 %v1959, %v1871
          %v2092 = vsub.f32 %v1959, %v1872
          %v2093 = vsub.f32 %v1959, %v1873
          %v2094 = vsub.f32 %v1959, %v1874
          %v2095 = vsub.f32 %v1959, %v1875
          %v2096 = vsub.f32 %v1959, %v1876
          %v2097 = vsub.f32 %v1959, %v1877
          %v2098 = vsub.f32 %v1959, %v1878
          %v2099 = vsub.f32 %v1959, %v1879
          %v2100 = vsub.f32 %v1959, %v1880
          %v2101 = vsub.f32 %v1959, %v1881
          %v2102 = vsub.f32 %v1959, %v1882
          %v2103 = vsub.f32 %v1959, %v1883
          %v2104 = vsub.f32 %v1959, %v1884
          %v2105 = vsub.f32 %v1959, %v1885
          %v2106 = vsub.f32 %v1963, %v1886
          %v2107 = vsub.f32 %v1963, %v1887
          %v2108 = vsub.f32 %v1963, %v1888
          %v2109 = vsub.f32 %v1963, %v1889
          %v2110 = vsub.f32 %v1963, %v1890
          %v2111 = vsub.f32 %v1963, %v1891
          %v2112 = vsub.f32 %v1963, %v1892
          %v2113 = vsub.f32 %v1963, %v1893
          %v2114 = vsub.f32 %v1963, %v1894
          %v2115 = vsub.f32 %v1963, %v1895
          %v2116 = vsub.f32 %v1963, %v1896
          %v2117 = vsub.f32 %v1963, %v1897
          %v2118 = vsub.f32 %v1963, %v1898
          %v2119 = vsub.f32 %v1963, %v1899
          %v2120 = vsub.f32 %v1963, %v1900
          %v2121 = vsub.f32 %v1963, %v1901
          %v2122 = vsub.f32 %v1967, %v1902
          %v2123 = vsub.f32 %v1967, %v1903
          %v2124 = vsub.f32 %v1967, %v1904
          %v2125 = vsub.f32 %v1967, %v1905
          %v2126 = vsub.f32 %v1967, %v1906
          %v2127 = vsub.f32 %v1967, %v1907
          %v2128 = vsub.f32 %v1967, %v1908
          %v2129 = vsub.f32 %v1967, %v1909
          %v2130 = vsub.f32 %v1967, %v1910
          %v2131 = vsub.f32 %v1967, %v1911
          %v2132 = vsub.f32 %v1967, %v1912
          %v2133 = vsub.f32 %v1967, %v1913
          %v2134 = vsub.f32 %v1967, %v1914
          %v2135 = vsub.f32 %v1967, %v1915
          %v2136 = vsub.f32 %v1967, %v1916
          %v2137 = vsub.f32 %v1967, %v1917
          %v2138 = vmul.f32 %v1039, %v1538
          %v2139 = vmul.f32 %v1040, %v1539
          %v2140 = vmul.f32 %v1041, %v1540
          %v2141 = vmul.f32 %v1042, %v1541
          %v2142 = vmul.f32 %v1043, %v1542
          %v2143 = vmul.f32 %v1044, %v1543
          %v2144 = vmul.f32 %v1045, %v1544
          %v2145 = vmul.f32 %v1046, %v1545
          %v2146 = vmul.f32 %v1047, %v1546
          %v2147 = vmul.f32 %v1048, %v1547
          %v2148 = vmul.f32 %v1049, %v1548
          %v2149 = vmul.f32 %v1050, %v1549
          %v2150 = vmul.f32 %v1051, %v1550
          %v2151 = vmul.f32 %v1052, %v1551
          %v2152 = vmul.f32 %v1053, %v1552
          %v2153 = vmul.f32 %v1054, %v1553
          %v2154 = vmul.f32 %v1055, %v1554
          %v2155 = vmul.f32 %v1056, %v1555
          %v2156 = vmul.f32 %v1057, %v1556
          %v2157 = vmul.f32 %v1058, %v1557
          %v2158 = vmul.f32 %v1059, %v1558
          %v2159 = vmul.f32 %v1060, %v1559
          %v2160 = vmul.f32 %v1061, %v1560
          %v2161 = vmul.f32 %v1062, %v1561
          %v2162 = vmul.f32 %v1063, %v1562
          %v2163 = vmul.f32 %v1064, %v1563
          %v2164 = vmul.f32 %v1065, %v1564
          %v2165 = vmul.f32 %v1066, %v1565
          %v2166 = vmul.f32 %v1067, %v1566
          %v2167 = vmul.f32 %v1068, %v1567
          %v2168 = vmul.f32 %v1069, %v1568
          %v2169 = vmul.f32 %v1070, %v1569
          %v2170 = vmul.f32 %v1071, %v1570
          %v2171 = vmul.f32 %v1072, %v1571
          %v2172 = vmul.f32 %v1073, %v1572
          %v2173 = vmul.f32 %v1074, %v1573
          %v2174 = vmul.f32 %v1075, %v1574
          %v2175 = vmul.f32 %v1076, %v1575
          %v2176 = vmul.f32 %v1077, %v1576
          %v2177 = vmul.f32 %v1078, %v1577
          %v2178 = vmul.f32 %v1079, %v1578
          %v2179 = vmul.f32 %v1080, %v1579
          %v2180 = vmul.f32 %v1081, %v1580
          %v2181 = vmul.f32 %v1082, %v1581
          %v2182 = vmul.f32 %v1083, %v1582
          %v2183 = vmul.f32 %v1084, %v1583
          %v2184 = vmul.f32 %v1085, %v1584
          %v2185 = vmul.f32 %v1086, %v1585
          %v2186 = vmul.f32 %v1087, %v1586
          %v2187 = vmul.f32 %v1088, %v1587
          %v2188 = vmul.f32 %v1089, %v1588
          %v2189 = vmul.f32 %v1090, %v1589
          %v2190 = vmul.f32 %v1091, %v1590
          %v2191 = vmul.f32 %v1092, %v1591
          %v2192 = vmul.f32 %v1093, %v1592
          %v2193 = vmul.f32 %v1094, %v1593
          %v2194 = vmul.f32 %v1095, %v1594
          %v2195 = vmul.f32 %v1096, %v1595
          %v2196 = vmul.f32 %v1097, %v1596
          %v2197 = vmul.f32 %v1098, %v1597
          %v2198 = vmul.f32 %v1099, %v1598
          %v2199 = vmul.f32 %v1100, %v1599
          %v2200 = vmul.f32 %v1101, %v1600
          %v2201 = vmul.f32 %v1102, %v1601
          %v2202 = vmul.f32 %v1103, %v1602
          %v2203 = vmul.f32 %v1104, %v1603
          %v2204 = vmul.f32 %v1105, %v1604
          %v2205 = vmul.f32 %v1106, %v1605
          %v2206 = vmul.f32 %v1107, %v1606
          %v2207 = vmul.f32 %v1108, %v1607
          %v2208 = vmul.f32 %v1109, %v1608
          %v2209 = vmul.f32 %v1110, %v1609
          %v2210 = vmul.f32 %v1111, %v1610
          %v2211 = vmul.f32 %v1112, %v1611
          %v2212 = vmul.f32 %v1113, %v1612
          %v2213 = vmul.f32 %v1114, %v1613
          %v2214 = vmul.f32 %v1115, %v1614
          %v2215 = vmul.f32 %v1116, %v1615
          %v2216 = vmul.f32 %v1117, %v1616
          %v2217 = vmul.f32 %v1118, %v1617
          %v2218 = vmul.f32 %v1119, %v1618
          %v2219 = vmul.f32 %v1120, %v1619
          %v2220 = vmul.f32 %v1121, %v1620
          %v2221 = vmul.f32 %v1122, %v1621
          %v2222 = vmul.f32 %v1123, %v1622
          %v2223 = vmul.f32 %v1124, %v1623
          %v2224 = vmul.f32 %v1125, %v1624
          %v2225 = vmul.f32 %v1126, %v1625
          %v2226 = vmul.f32 %v1127, %v1626
          %v2227 = vmul.f32 %v1128, %v1627
          %v2228 = vmul.f32 %v1129, %v1628
          %v2229 = vmul.f32 %v1130, %v1629
          %v2230 = vmul.f32 %v1131, %v1630
          %v2231 = vmul.f32 %v1132, %v1631
          %v2232 = vmul.f32 %v1133, %v1632
          %v2233 = vmul.f32 %v1134, %v1633
          %v2234 = vmul.f32 %v1135, %v1634
          %v2235 = vmul.f32 %v1136, %v1635
          %v2236 = vmul.f32 %v1137, %v1636
          %v2237 = vmul.f32 %v1138, %v1637
          %v2238 = vmul.f32 %v1139, %v1638
          %v2239 = vmul.f32 %v1140, %v1639
          %v2240 = vmul.f32 %v1141, %v1640
          %v2241 = vmul.f32 %v1142, %v1641
          %v2242 = vmul.f32 %v1143, %v1642
          %v2243 = vmul.f32 %v1144, %v1643
          %v2244 = vmul.f32 %v1145, %v1644
          %v2245 = vmul.f32 %v1146, %v1645
          %v2246 = vmul.f32 %v1147, %v1646
          %v2247 = vmul.f32 %v1148, %v1647
          %v2248 = vmul.f32 %v1149, %v1648
          %v2249 = vmul.f32 %v1150, %v1649
          %v2250 = vmul.f32 %v1151, %v1650
          %v2251 = vmul.f32 %v1152, %v1651
          %v2252 = vmul.f32 %v1153, %v1652
          %v2253 = vmul.f32 %v1154, %v1653
          %v2254 = vmul.f32 %v1155, %v1654
          %v2255 = vmul.f32 %v1156, %v1655
          %v2256 = vmul.f32 %v1157, %v1656
          %v2257 = vmul.f32 %v1158, %v1657
          %v2258 = vmul.f32 %v1159, %v1658
          %v2259 = vmul.f32 %v1160, %v1659
          %v2260 = vmul.f32 %v1161, %v1660
          %v2261 = vmul.f32 %v1162, %v1661
          %v2262 = vmul.f32 %v1163, %v1662
          %v2263 = vmul.f32 %v1164, %v1663
          %v2264 = vmul.f32 %v1165, %v1664
          %v2265 = vmul.f32 %v1166, %v1665
          %v2266 = vmul.f32 %v1167, %v1666
          %v2267 = vmul.f32 %v1168, %v1667
          %v2268 = vmul.f32 %v1169, %v1668
          %v2269 = vmul.f32 %v1170, %v1669
          %v2270 = vmul.f32 %v1171, %v1670
          %v2271 = vmul.f32 %v1172, %v1671
          %v2272 = vmul.f32 %v1173, %v1672
          %v2273 = vmul.f32 %v1174, %v1673
          %v2274 = vmul.f32 %v1175, %v1674
          %v2275 = vmul.f32 %v1176, %v1675
          %v2276 = vmul.f32 %v1177, %v1676
          %v2277 = vmul.f32 %v1178, %v1677
          %v2278 = vmul.f32 %v1179, %v1678
          %v2279 = vmul.f32 %v1180, %v1679
          %v2280 = vmul.f32 %v1181, %v1680
          %v2281 = vmul.f32 %v1182, %v1681
          %v2282 = vmul.f32 %v1183, %v1682
          %v2283 = vmul.f32 %v1184, %v1683
          %v2284 = vmul.f32 %v1185, %v1684
          %v2285 = vmul.f32 %v1186, %v1685
          %v2286 = vmul.f32 %v1187, %v1686
          %v2287 = vmul.f32 %v1188, %v1687
          %v2288 = vmul.f32 %v1189, %v1688
          %v2289 = vmul.f32 %v1190, %v1689
          %v2290 = vmul.f32 %v1191, %v1690
          %v2291 = vmul.f32 %v1192, %v1691
          %v2292 = vmul.f32 %v1193, %v1692
          %v2293 = vmul.f32 %v1194, %v1693
          %v2294 = vmul.f32 %v1195, %v1694
          %v2295 = vmul.f32 %v1196, %v1695
          %v2296 = vmul.f32 %v1197, %v1696
          %v2297 = vmul.f32 %v1198, %v1697
          %v2298 = vmul.f32 %v1055, %v1978
          %v2299 = vmul.f32 %v1056, %v1979
          %v2300 = vmul.f32 %v1057, %v1980
          %v2301 = vmul.f32 %v1058, %v1981
          %v2302 = vmul.f32 %v1059, %v1982
          %v2303 = vmul.f32 %v1060, %v1983
          %v2304 = vmul.f32 %v1061, %v1984
          %v2305 = vmul.f32 %v1062, %v1985
          %v2306 = vmul.f32 %v1063, %v1986
          %v2307 = vmul.f32 %v1064, %v1987
          %v2308 = vmul.f32 %v1065, %v1988
          %v2309 = vmul.f32 %v1066, %v1989
          %v2310 = vmul.f32 %v1067, %v1990
          %v2311 = vmul.f32 %v1068, %v1991
          %v2312 = vmul.f32 %v1069, %v1992
          %v2313 = vmul.f32 %v1070, %v1993
          %v2314 = vmul.f32 %v1071, %v1994
          %v2315 = vmul.f32 %v1072, %v1995
          %v2316 = vmul.f32 %v1073, %v1996
          %v2317 = vmul.f32 %v1074, %v1997
          %v2318 = vmul.f32 %v1075, %v1998
          %v2319 = vmul.f32 %v1076, %v1999
          %v2320 = vmul.f32 %v1077, %v2000
          %v2321 = vmul.f32 %v1078, %v2001
          %v2322 = vmul.f32 %v1079, %v2002
          %v2323 = vmul.f32 %v1080, %v2003
          %v2324 = vmul.f32 %v1081, %v2004
          %v2325 = vmul.f32 %v1082, %v2005
          %v2326 = vmul.f32 %v1083, %v2006
          %v2327 = vmul.f32 %v1084, %v2007
          %v2328 = vmul.f32 %v1085, %v2008
          %v2329 = vmul.f32 %v1086, %v2009
          %v2330 = vmul.f32 %v1087, %v2010
          %v2331 = vmul.f32 %v1088, %v2011
          %v2332 = vmul.f32 %v1089, %v2012
          %v2333 = vmul.f32 %v1090, %v2013
          %v2334 = vmul.f32 %v1091, %v2014
          %v2335 = vmul.f32 %v1092, %v2015
          %v2336 = vmul.f32 %v1093, %v2016
          %v2337 = vmul.f32 %v1094, %v2017
          %v2338 = vmul.f32 %v1095, %v2018
          %v2339 = vmul.f32 %v1096, %v2019
          %v2340 = vmul.f32 %v1097, %v2020
          %v2341 = vmul.f32 %v1098, %v2021
          %v2342 = vmul.f32 %v1099, %v2022
          %v2343 = vmul.f32 %v1100, %v2023
          %v2344 = vmul.f32 %v1101, %v2024
          %v2345 = vmul.f32 %v1102, %v2025
          %v2346 = vmul.f32 %v1103, %v2026
          %v2347 = vmul.f32 %v1104, %v2027
          %v2348 = vmul.f32 %v1105, %v2028
          %v2349 = vmul.f32 %v1106, %v2029
          %v2350 = vmul.f32 %v1107, %v2030
          %v2351 = vmul.f32 %v1108, %v2031
          %v2352 = vmul.f32 %v1109, %v2032
          %v2353 = vmul.f32 %v1110, %v2033
          %v2354 = vmul.f32 %v1111, %v2034
          %v2355 = vmul.f32 %v1112, %v2035
          %v2356 = vmul.f32 %v1113, %v2036
          %v2357 = vmul.f32 %v1114, %v2037
          %v2358 = vmul.f32 %v1115, %v2038
          %v2359 = vmul.f32 %v1116, %v2039
          %v2360 = vmul.f32 %v1117, %v2040
          %v2361 = vmul.f32 %v1118, %v2041
          %v2362 = vmul.f32 %v1119, %v2042
          %v2363 = vmul.f32 %v1120, %v2043
          %v2364 = vmul.f32 %v1121, %v2044
          %v2365 = vmul.f32 %v1122, %v2045
          %v2366 = vmul.f32 %v1123, %v2046
          %v2367 = vmul.f32 %v1124, %v2047
          %v2368 = vmul.f32 %v1125, %v2048
          %v2369 = vmul.f32 %v1126, %v2049
          %v2370 = vmul.f32 %v1127, %v2050
          %v2371 = vmul.f32 %v1128, %v2051
          %v2372 = vmul.f32 %v1129, %v2052
          %v2373 = vmul.f32 %v1130, %v2053
          %v2374 = vmul.f32 %v1131, %v2054
          %v2375 = vmul.f32 %v1132, %v2055
          %v2376 = vmul.f32 %v1133, %v2056
          %v2377 = vmul.f32 %v1134, %v2057
          %v2378 = vmul.f32 %v1135, %v2058
          %v2379 = vmul.f32 %v1136, %v2059
          %v2380 = vmul.f32 %v1137, %v2060
          %v2381 = vmul.f32 %v1138, %v2061
          %v2382 = vmul.f32 %v1139, %v2062
          %v2383 = vmul.f32 %v1140, %v2063
          %v2384 = vmul.f32 %v1141, %v2064
          %v2385 = vmul.f32 %v1142, %v2065
          %v2386 = vmul.f32 %v1143, %v2066
          %v2387 = vmul.f32 %v1144, %v2067
          %v2388 = vmul.f32 %v1145, %v2068
          %v2389 = vmul.f32 %v1146, %v2069
          %v2390 = vmul.f32 %v1147, %v2070
          %v2391 = vmul.f32 %v1148, %v2071
          %v2392 = vmul.f32 %v1149, %v2072
          %v2393 = vmul.f32 %v1150, %v2073
          %v2394 = vmul.f32 %v1151, %v2074
          %v2395 = vmul.f32 %v1152, %v2075
          %v2396 = vmul.f32 %v1153, %v2076
          %v2397 = vmul.f32 %v1154, %v2077
          %v2398 = vmul.f32 %v1155, %v2078
          %v2399 = vmul.f32 %v1156, %v2079
          %v2400 = vmul.f32 %v1157, %v2080
          %v2401 = vmul.f32 %v1158, %v2081
          %v2402 = vmul.f32 %v1159, %v2082
          %v2403 = vmul.f32 %v1160, %v2083
          %v2404 = vmul.f32 %v1161, %v2084
          %v2405 = vmul.f32 %v1162, %v2085
          %v2406 = vmul.f32 %v1163, %v2086
          %v2407 = vmul.f32 %v1164, %v2087
          %v2408 = vmul.f32 %v1165, %v2088
          %v2409 = vmul.f32 %v1166, %v2089
          %v2410 = vmul.f32 %v1167, %v2090
          %v2411 = vmul.f32 %v1168, %v2091
          %v2412 = vmul.f32 %v1169, %v2092
          %v2413 = vmul.f32 %v1170, %v2093
          %v2414 = vmul.f32 %v1171, %v2094
          %v2415 = vmul.f32 %v1172, %v2095
          %v2416 = vmul.f32 %v1173, %v2096
          %v2417 = vmul.f32 %v1174, %v2097
          %v2418 = vmul.f32 %v1175, %v2098
          %v2419 = vmul.f32 %v1176, %v2099
          %v2420 = vmul.f32 %v1177, %v2100
          %v2421 = vmul.f32 %v1178, %v2101
          %v2422 = vmul.f32 %v1179, %v2102
          %v2423 = vmul.f32 %v1180, %v2103
          %v2424 = vmul.f32 %v1181, %v2104
          %v2425 = vmul.f32 %v1182, %v2105
          %v2426 = vmul.f32 %v1183, %v2106
          %v2427 = vmul.f32 %v1184, %v2107
          %v2428 = vmul.f32 %v1185, %v2108
          %v2429 = vmul.f32 %v1186, %v2109
          %v2430 = vmul.f32 %v1187, %v2110
          %v2431 = vmul.f32 %v1188, %v2111
          %v2432 = vmul.f32 %v1189, %v2112
          %v2433 = vmul.f32 %v1190, %v2113
          %v2434 = vmul.f32 %v1191, %v2114
          %v2435 = vmul.f32 %v1192, %v2115
          %v2436 = vmul.f32 %v1193, %v2116
          %v2437 = vmul.f32 %v1194, %v2117
          %v2438 = vmul.f32 %v1195, %v2118
          %v2439 = vmul.f32 %v1196, %v2119
          %v2440 = vmul.f32 %v1197, %v2120
          %v2441 = vmul.f32 %v1198, %v2121
          %v2442 = vmul.f32 %v1199, %v2122
          %v2443 = vmul.f32 %v1200, %v2123
          %v2444 = vmul.f32 %v1201, %v2124
          %v2445 = vmul.f32 %v1202, %v2125
          %v2446 = vmul.f32 %v1203, %v2126
          %v2447 = vmul.f32 %v1204, %v2127
          %v2448 = vmul.f32 %v1205, %v2128
          %v2449 = vmul.f32 %v1206, %v2129
          %v2450 = vmul.f32 %v1207, %v2130
          %v2451 = vmul.f32 %v1208, %v2131
          %v2452 = vmul.f32 %v1209, %v2132
          %v2453 = vmul.f32 %v1210, %v2133
          %v2454 = vmul.f32 %v1211, %v2134
          %v2455 = vmul.f32 %v1212, %v2135
          %v2456 = vmul.f32 %v1213, %v2136
          %v2457 = vmul.f32 %v1214, %v2137
          %v2458 = vadd.f32 %v2138, %v2298
          %v2459 = vadd.f32 %v2139, %v2299
          %v2460 = vadd.f32 %v2140, %v2300
          %v2461 = vadd.f32 %v2141, %v2301
          %v2462 = vadd.f32 %v2142, %v2302
          %v2463 = vadd.f32 %v2143, %v2303
          %v2464 = vadd.f32 %v2144, %v2304
          %v2465 = vadd.f32 %v2145, %v2305
          %v2466 = vadd.f32 %v2146, %v2306
          %v2467 = vadd.f32 %v2147, %v2307
          %v2468 = vadd.f32 %v2148, %v2308
          %v2469 = vadd.f32 %v2149, %v2309
          %v2470 = vadd.f32 %v2150, %v2310
          %v2471 = vadd.f32 %v2151, %v2311
          %v2472 = vadd.f32 %v2152, %v2312
          %v2473 = vadd.f32 %v2153, %v2313
          %v2474 = vadd.f32 %v2154, %v2314
          %v2475 = vadd.f32 %v2155, %v2315
          %v2476 = vadd.f32 %v2156, %v2316
          %v2477 = vadd.f32 %v2157, %v2317
          %v2478 = vadd.f32 %v2158, %v2318
          %v2479 = vadd.f32 %v2159, %v2319
          %v2480 = vadd.f32 %v2160, %v2320
          %v2481 = vadd.f32 %v2161, %v2321
          %v2482 = vadd.f32 %v2162, %v2322
          %v2483 = vadd.f32 %v2163, %v2323
          %v2484 = vadd.f32 %v2164, %v2324
          %v2485 = vadd.f32 %v2165, %v2325
          %v2486 = vadd.f32 %v2166, %v2326
          %v2487 = vadd.f32 %v2167, %v2327
          %v2488 = vadd.f32 %v2168, %v2328
          %v2489 = vadd.f32 %v2169, %v2329
          %v2490 = vadd.f32 %v2170, %v2330
          %v2491 = vadd.f32 %v2171, %v2331
          %v2492 = vadd.f32 %v2172, %v2332
          %v2493 = vadd.f32 %v2173, %v2333
          %v2494 = vadd.f32 %v2174, %v2334
          %v2495 = vadd.f32 %v2175, %v2335
          %v2496 = vadd.f32 %v2176, %v2336
          %v2497 = vadd.f32 %v2177, %v2337
          %v2498 = vadd.f32 %v2178, %v2338
          %v2499 = vadd.f32 %v2179, %v2339
          %v2500 = vadd.f32 %v2180, %v2340
          %v2501 = vadd.f32 %v2181, %v2341
          %v2502 = vadd.f32 %v2182, %v2342
          %v2503 = vadd.f32 %v2183, %v2343
          %v2504 = vadd.f32 %v2184, %v2344
          %v2505 = vadd.f32 %v2185, %v2345
          %v2506 = vadd.f32 %v2186, %v2346
          %v2507 = vadd.f32 %v2187, %v2347
          %v2508 = vadd.f32 %v2188, %v2348
          %v2509 = vadd.f32 %v2189, %v2349
          %v2510 = vadd.f32 %v2190, %v2350
          %v2511 = vadd.f32 %v2191, %v2351
          %v2512 = vadd.f32 %v2192, %v2352
          %v2513 = vadd.f32 %v2193, %v2353
          %v2514 = vadd.f32 %v2194, %v2354
          %v2515 = vadd.f32 %v2195, %v2355
          %v2516 = vadd.f32 %v2196, %v2356
          %v2517 = vadd.f32 %v2197, %v2357
          %v2518 = vadd.f32 %v2198, %v2358
          %v2519 = vadd.f32 %v2199, %v2359
          %v2520 = vadd.f32 %v2200, %v2360
          %v2521 = vadd.f32 %v2201, %v2361
          %v2522 = vadd.f32 %v2202, %v2362
          %v2523 = vadd.f32 %v2203, %v2363
          %v2524 = vadd.f32 %v2204, %v2364
          %v2525 = vadd.f32 %v2205, %v2365
          %v2526 = vadd.f32 %v2206, %v2366
          %v2527 = vadd.f32 %v2207, %v2367
          %v2528 = vadd.f32 %v2208, %v2368
          %v2529 = vadd.f32 %v2209, %v2369
          %v2530 = vadd.f32 %v2210, %v2370
          %v2531 = vadd.f32 %v2211, %v2371
          %v2532 = vadd.f32 %v2212, %v2372
          %v2533 = vadd.f32 %v2213, %v2373
          %v2534 = vadd.f32 %v2214, %v2374
          %v2535 = vadd.f32 %v2215, %v2375
          %v2536 = vadd.f32 %v2216, %v2376
          %v2537 = vadd.f32 %v2217, %v2377
          %v2538 = vadd.f32 %v2218, %v2378
          %v2539 = vadd.f32 %v2219, %v2379
          %v2540 = vadd.f32 %v2220, %v2380
          %v2541 = vadd.f32 %v2221, %v2381
          %v2542 = vadd.f32 %v2222, %v2382
          %v2543 = vadd.f32 %v2223, %v2383
          %v2544 = vadd.f32 %v2224, %v2384
          %v2545 = vadd.f32 %v2225, %v2385
          %v2546 = vadd.f32 %v2226, %v2386
          %v2547 = vadd.f32 %v2227, %v2387
          %v2548 = vadd.f32 %v2228, %v2388
          %v2549 = vadd.f32 %v2229, %v2389
          %v2550 = vadd.f32 %v2230, %v2390
          %v2551 = vadd.f32 %v2231, %v2391
          %v2552 = vadd.f32 %v2232, %v2392
          %v2553 = vadd.f32 %v2233, %v2393
          %v2554 = vadd.f32 %v2234, %v2394
          %v2555 = vadd.f32 %v2235, %v2395
          %v2556 = vadd.f32 %v2236, %v2396
          %v2557 = vadd.f32 %v2237, %v2397
          %v2558 = vadd.f32 %v2238, %v2398
          %v2559 = vadd.f32 %v2239, %v2399
          %v2560 = vadd.f32 %v2240, %v2400
          %v2561 = vadd.f32 %v2241, %v2401
          %v2562 = vadd.f32 %v2242, %v2402
          %v2563 = vadd.f32 %v2243, %v2403
          %v2564 = vadd.f32 %v2244, %v2404
          %v2565 = vadd.f32 %v2245, %v2405
          %v2566 = vadd.f32 %v2246, %v2406
          %v2567 = vadd.f32 %v2247, %v2407
          %v2568 = vadd.f32 %v2248, %v2408
          %v2569 = vadd.f32 %v2249, %v2409
          %v2570 = vadd.f32 %v2250, %v2410
          %v2571 = vadd.f32 %v2251, %v2411
          %v2572 = vadd.f32 %v2252, %v2412
          %v2573 = vadd.f32 %v2253, %v2413
          %v2574 = vadd.f32 %v2254, %v2414
          %v2575 = vadd.f32 %v2255, %v2415
          %v2576 = vadd.f32 %v2256, %v2416
          %v2577 = vadd.f32 %v2257, %v2417
          %v2578 = vadd.f32 %v2258, %v2418
          %v2579 = vadd.f32 %v2259, %v2419
          %v2580 = vadd.f32 %v2260, %v2420
          %v2581 = vadd.f32 %v2261, %v2421
          %v2582 = vadd.f32 %v2262, %v2422
          %v2583 = vadd.f32 %v2263, %v2423
          %v2584 = vadd.f32 %v2264, %v2424
          %v2585 = vadd.f32 %v2265, %v2425
          %v2586 = vadd.f32 %v2266, %v2426
          %v2587 = vadd.f32 %v2267, %v2427
          %v2588 = vadd.f32 %v2268, %v2428
          %v2589 = vadd.f32 %v2269, %v2429
          %v2590 = vadd.f32 %v2270, %v2430
          %v2591 = vadd.f32 %v2271, %v2431
          %v2592 = vadd.f32 %v2272, %v2432
          %v2593 = vadd.f32 %v2273, %v2433
          %v2594 = vadd.f32 %v2274, %v2434
          %v2595 = vadd.f32 %v2275, %v2435
          %v2596 = vadd.f32 %v2276, %v2436
          %v2597 = vadd.f32 %v2277, %v2437
          %v2598 = vadd.f32 %v2278, %v2438
          %v2599 = vadd.f32 %v2279, %v2439
          %v2600 = vadd.f32 %v2280, %v2440
          %v2601 = vadd.f32 %v2281, %v2441
          %v2602 = vadd.f32 %v2282, %v2442
          %v2603 = vadd.f32 %v2283, %v2443
          %v2604 = vadd.f32 %v2284, %v2444
          %v2605 = vadd.f32 %v2285, %v2445
          %v2606 = vadd.f32 %v2286, %v2446
          %v2607 = vadd.f32 %v2287, %v2447
          %v2608 = vadd.f32 %v2288, %v2448
          %v2609 = vadd.f32 %v2289, %v2449
          %v2610 = vadd.f32 %v2290, %v2450
          %v2611 = vadd.f32 %v2291, %v2451
          %v2612 = vadd.f32 %v2292, %v2452
          %v2613 = vadd.f32 %v2293, %v2453
          %v2614 = vadd.f32 %v2294, %v2454
          %v2615 = vadd.f32 %v2295, %v2455
          %v2616 = vadd.f32 %v2296, %v2456
          %v2617 = vadd.f32 %v2297, %v2457
          %s2618 = scalar_lea.vmem [#allocation8], 44
          %v2619 = vld [vmem:[%s2618] sm:$0x1]
          %v2620 = vld [vmem:[%s2618 + $0x1] sm:$0x1]
          %v2621 = vld [vmem:[%s2618 + $0x2] sm:$0x1]
          %v2622 = vld [vmem:[%s2618 + $0x3] sm:$0x1]
          %v2623 = vld [vmem:[%s2618 + $0x4] sm:$0x1]
          %v2624 = vld [vmem:[%s2618 + $0x5] sm:$0x1]
          %v2625 = vld [vmem:[%s2618 + $0x6] sm:$0x1]
          %v2626 = vld [vmem:[%s2618 + $0x7] sm:$0x1]
          %v2627 = vld [vmem:[%s2618 + $0x8] sm:$0x1]
          %s2628 = scalar_lea.vmem [#allocation8], 55
          %v2629 = vld [vmem:[%s2628] sm:$0x1]
          %v2630 = vld [vmem:[%s2628 + $0x1] sm:$0x1]
          %v2631 = vld [vmem:[%s2628 + $0x2] sm:$0x1]
          %v2632 = vld [vmem:[%s2628 + $0x3] sm:$0x1]
          %v2633 = vld [vmem:[%s2628 + $0x4] sm:$0x1]
          %v2634 = vld [vmem:[%s2628 + $0x5] sm:$0x1]
          %v2635 = vld [vmem:[%s2628 + $0x6] sm:$0x1]
          %v2636 = vld [vmem:[%s2628 + $0x7] sm:$0x1]
          %v2637 = vld [vmem:[%s2628 + $0x8] sm:$0x1]
          %s2638 = scalar_lea.vmem [#allocation8], 66
          %v2639 = vld [vmem:[%s2638] sm:$0x1]
          %v2640 = vld [vmem:[%s2638 + $0x1] sm:$0x1]
          %v2641 = vld [vmem:[%s2638 + $0x2] sm:$0x1]
          %v2642 = vld [vmem:[%s2638 + $0x3] sm:$0x1]
          %v2643 = vld [vmem:[%s2638 + $0x4] sm:$0x1]
          %v2644 = vld [vmem:[%s2638 + $0x5] sm:$0x1]
          %v2645 = vld [vmem:[%s2638 + $0x6] sm:$0x1]
          %v2646 = vld [vmem:[%s2638 + $0x7] sm:$0x1]
          %v2647 = vld [vmem:[%s2638 + $0x8] sm:$0x1]
          %s2648 = scalar_lea.vmem [#allocation8], 77
          %v2649 = vld [vmem:[%s2648] sm:$0x1]
          %v2650 = vld [vmem:[%s2648 + $0x1] sm:$0x1]
          %v2651 = vld [vmem:[%s2648 + $0x2] sm:$0x1]
          %v2652 = vld [vmem:[%s2648 + $0x3] sm:$0x1]
          %v2653 = vld [vmem:[%s2648 + $0x4] sm:$0x1]
          %v2654 = vld [vmem:[%s2648 + $0x5] sm:$0x1]
          %v2655 = vld [vmem:[%s2648 + $0x6] sm:$0x1]
          %v2656 = vld [vmem:[%s2648 + $0x7] sm:$0x1]
          %v2657 = vld [vmem:[%s2648 + $0x8] sm:$0x1]
          %v2667 = vlaneseq
          %v2668 = vshrl.u32 %v2667, 7
          %v2669 = vsub.s32 0, %v2668
          %v2670 = vrot.slane %v2619, %v2669
          %v2671 = vlaneseq
          %v2672 = vshrl.u32 %v2671, 7
          %v2673 = vsub.s32 0, %v2672
          %v2674 = vrot.slane %v2620, %v2673
          %v2675 = vlaneseq
          %v2676 = vshrl.u32 %v2675, 7
          %v2677 = vsub.s32 0, %v2676
          %v2678 = vrot.slane %v2621, %v2677
          %v2679 = vlaneseq
          %v2680 = vshrl.u32 %v2679, 7
          %v2681 = vsub.s32 0, %v2680
          %v2682 = vrot.slane %v2622, %v2681
          %v2683 = vlaneseq
          %v2684 = vshrl.u32 %v2683, 7
          %v2685 = vsub.s32 0, %v2684
          %v2686 = vrot.slane %v2623, %v2685
          %v2687 = vlaneseq
          %v2688 = vshrl.u32 %v2687, 7
          %v2689 = vsub.s32 0, %v2688
          %v2690 = vrot.slane %v2624, %v2689
          %v2691 = vlaneseq
          %v2692 = vshrl.u32 %v2691, 7
          %v2693 = vsub.s32 0, %v2692
          %v2694 = vrot.slane %v2625, %v2693
          %v2695 = vlaneseq
          %v2696 = vshrl.u32 %v2695, 7
          %v2697 = vsub.s32 0, %v2696
          %v2698 = vrot.slane %v2626, %v2697
          %v2699 = vlaneseq
          %v2700 = vshrl.u32 %v2699, 7
          %v2701 = vsub.s32 0, %v2700
          %v2702 = vrot.slane %v2627, %v2701
          %v2712 = vmul.f32 %v336, %v2670
          %v2713 = vmul.f32 %v337, %v2670
          %v2714 = vmul.f32 %v338, %v2670
          %v2715 = vmul.f32 %v339, %v2670
          %v2716 = vmul.f32 %v340, %v2670
          %v2717 = vmul.f32 %v341, %v2670
          %v2718 = vmul.f32 %v342, %v2670
          %v2719 = vmul.f32 %v343, %v2670
          %v2720 = vmul.f32 %v344, %v2670
          %v2721 = vmul.f32 %v345, %v2670
          %v2722 = vmul.f32 %v346, %v2670
          %v2723 = vmul.f32 %v347, %v2670
          %v2724 = vmul.f32 %v348, %v2670
          %v2725 = vmul.f32 %v349, %v2670
          %v2726 = vmul.f32 %v350, %v2670
          %v2727 = vmul.f32 %v351, %v2670
          %v2728 = vmul.f32 %v336, %v2674
          %v2729 = vmul.f32 %v337, %v2674
          %v2730 = vmul.f32 %v338, %v2674
          %v2731 = vmul.f32 %v339, %v2674
          %v2732 = vmul.f32 %v340, %v2674
          %v2733 = vmul.f32 %v341, %v2674
          %v2734 = vmul.f32 %v342, %v2674
          %v2735 = vmul.f32 %v343, %v2674
          %v2736 = vmul.f32 %v344, %v2674
          %v2737 = vmul.f32 %v345, %v2674
          %v2738 = vmul.f32 %v346, %v2674
          %v2739 = vmul.f32 %v347, %v2674
          %v2740 = vmul.f32 %v348, %v2674
          %v2741 = vmul.f32 %v349, %v2674
          %v2742 = vmul.f32 %v350, %v2674
          %v2743 = vmul.f32 %v351, %v2674
          %v2744 = vmul.f32 %v336, %v2678
          %v2745 = vmul.f32 %v337, %v2678
          %v2746 = vmul.f32 %v338, %v2678
          %v2747 = vmul.f32 %v339, %v2678
          %v2748 = vmul.f32 %v340, %v2678
          %v2749 = vmul.f32 %v341, %v2678
          %v2750 = vmul.f32 %v342, %v2678
          %v2751 = vmul.f32 %v343, %v2678
          %v2752 = vmul.f32 %v344, %v2678
          %v2753 = vmul.f32 %v345, %v2678
          %v2754 = vmul.f32 %v346, %v2678
          %v2755 = vmul.f32 %v347, %v2678
          %v2756 = vmul.f32 %v348, %v2678
          %v2757 = vmul.f32 %v349, %v2678
          %v2758 = vmul.f32 %v350, %v2678
          %v2759 = vmul.f32 %v351, %v2678
          %v2760 = vmul.f32 %v336, %v2682
          %v2761 = vmul.f32 %v337, %v2682
          %v2762 = vmul.f32 %v338, %v2682
          %v2763 = vmul.f32 %v339, %v2682
          %v2764 = vmul.f32 %v340, %v2682
          %v2765 = vmul.f32 %v341, %v2682
          %v2766 = vmul.f32 %v342, %v2682
          %v2767 = vmul.f32 %v343, %v2682
          %v2768 = vmul.f32 %v344, %v2682
          %v2769 = vmul.f32 %v345, %v2682
          %v2770 = vmul.f32 %v346, %v2682
          %v2771 = vmul.f32 %v347, %v2682
          %v2772 = vmul.f32 %v348, %v2682
          %v2773 = vmul.f32 %v349, %v2682
          %v2774 = vmul.f32 %v350, %v2682
          %v2775 = vmul.f32 %v351, %v2682
          %v2776 = vmul.f32 %v336, %v2686
          %v2777 = vmul.f32 %v337, %v2686
          %v2778 = vmul.f32 %v338, %v2686
          %v2779 = vmul.f32 %v339, %v2686
          %v2780 = vmul.f32 %v340, %v2686
          %v2781 = vmul.f32 %v341, %v2686
          %v2782 = vmul.f32 %v342, %v2686
          %v2783 = vmul.f32 %v343, %v2686
          %v2784 = vmul.f32 %v344, %v2686
          %v2785 = vmul.f32 %v345, %v2686
          %v2786 = vmul.f32 %v346, %v2686
          %v2787 = vmul.f32 %v347, %v2686
          %v2788 = vmul.f32 %v348, %v2686
          %v2789 = vmul.f32 %v349, %v2686
          %v2790 = vmul.f32 %v350, %v2686
          %v2791 = vmul.f32 %v351, %v2686
          %v2792 = vmul.f32 %v336, %v2690
          %v2793 = vmul.f32 %v337, %v2690
          %v2794 = vmul.f32 %v338, %v2690
          %v2795 = vmul.f32 %v339, %v2690
          %v2796 = vmul.f32 %v340, %v2690
          %v2797 = vmul.f32 %v341, %v2690
          %v2798 = vmul.f32 %v342, %v2690
          %v2799 = vmul.f32 %v343, %v2690
          %v2800 = vmul.f32 %v344, %v2690
          %v2801 = vmul.f32 %v345, %v2690
          %v2802 = vmul.f32 %v346, %v2690
          %v2803 = vmul.f32 %v347, %v2690
          %v2804 = vmul.f32 %v348, %v2690
          %v2805 = vmul.f32 %v349, %v2690
          %v2806 = vmul.f32 %v350, %v2690
          %v2807 = vmul.f32 %v351, %v2690
          %v2808 = vmul.f32 %v336, %v2694
          %v2809 = vmul.f32 %v337, %v2694
          %v2810 = vmul.f32 %v338, %v2694
          %v2811 = vmul.f32 %v339, %v2694
          %v2812 = vmul.f32 %v340, %v2694
          %v2813 = vmul.f32 %v341, %v2694
          %v2814 = vmul.f32 %v342, %v2694
          %v2815 = vmul.f32 %v343, %v2694
          %v2816 = vmul.f32 %v344, %v2694
          %v2817 = vmul.f32 %v345, %v2694
          %v2818 = vmul.f32 %v346, %v2694
          %v2819 = vmul.f32 %v347, %v2694
          %v2820 = vmul.f32 %v348, %v2694
          %v2821 = vmul.f32 %v349, %v2694
          %v2822 = vmul.f32 %v350, %v2694
          %v2823 = vmul.f32 %v351, %v2694
          %v2824 = vmul.f32 %v336, %v2698
          %v2825 = vmul.f32 %v337, %v2698
          %v2826 = vmul.f32 %v338, %v2698
          %v2827 = vmul.f32 %v339, %v2698
          %v2828 = vmul.f32 %v340, %v2698
          %v2829 = vmul.f32 %v341, %v2698
          %v2830 = vmul.f32 %v342, %v2698
          %v2831 = vmul.f32 %v343, %v2698
          %v2832 = vmul.f32 %v344, %v2698
          %v2833 = vmul.f32 %v345, %v2698
          %v2834 = vmul.f32 %v346, %v2698
          %v2835 = vmul.f32 %v347, %v2698
          %v2836 = vmul.f32 %v348, %v2698
          %v2837 = vmul.f32 %v349, %v2698
          %v2838 = vmul.f32 %v350, %v2698
          %v2839 = vmul.f32 %v351, %v2698
          %v2840 = vmul.f32 %v336, %v2702
          %v2841 = vmul.f32 %v337, %v2702
          %v2842 = vmul.f32 %v338, %v2702
          %v2843 = vmul.f32 %v339, %v2702
          %v2844 = vmul.f32 %v340, %v2702
          %v2845 = vmul.f32 %v341, %v2702
          %v2846 = vmul.f32 %v342, %v2702
          %v2847 = vmul.f32 %v343, %v2702
          %v2848 = vmul.f32 %v344, %v2702
          %v2849 = vmul.f32 %v345, %v2702
          %v2850 = vmul.f32 %v346, %v2702
          %v2851 = vmul.f32 %v347, %v2702
          %v2852 = vmul.f32 %v348, %v2702
          %v2853 = vmul.f32 %v349, %v2702
          %v2854 = vmul.f32 %v350, %v2702
          %v2855 = vmul.f32 %v351, %v2702
          %v2865 = vlaneseq
          %v2866 = vshrl.u32 %v2865, 7
          %v2867 = vsub.s32 0, %v2866
          %v2868 = vrot.slane %v2629, %v2867
          %v2869 = vlaneseq
          %v2870 = vshrl.u32 %v2869, 7
          %v2871 = vsub.s32 0, %v2870
          %v2872 = vrot.slane %v2630, %v2871
          %v2873 = vlaneseq
          %v2874 = vshrl.u32 %v2873, 7
          %v2875 = vsub.s32 0, %v2874
          %v2876 = vrot.slane %v2631, %v2875
          %v2877 = vlaneseq
          %v2878 = vshrl.u32 %v2877, 7
          %v2879 = vsub.s32 0, %v2878
          %v2880 = vrot.slane %v2632, %v2879
          %v2881 = vlaneseq
          %v2882 = vshrl.u32 %v2881, 7
          %v2883 = vsub.s32 0, %v2882
          %v2884 = vrot.slane %v2633, %v2883
          %v2885 = vlaneseq
          %v2886 = vshrl.u32 %v2885, 7
          %v2887 = vsub.s32 0, %v2886
          %v2888 = vrot.slane %v2634, %v2887
          %v2889 = vlaneseq
          %v2890 = vshrl.u32 %v2889, 7
          %v2891 = vsub.s32 0, %v2890
          %v2892 = vrot.slane %v2635, %v2891
          %v2893 = vlaneseq
          %v2894 = vshrl.u32 %v2893, 7
          %v2895 = vsub.s32 0, %v2894
          %v2896 = vrot.slane %v2636, %v2895
          %v2897 = vlaneseq
          %v2898 = vshrl.u32 %v2897, 7
          %v2899 = vsub.s32 0, %v2898
          %v2900 = vrot.slane %v2637, %v2899
          %v2910 = vsub.f32 %v2712, %v2868
          %v2911 = vsub.f32 %v2713, %v2868
          %v2912 = vsub.f32 %v2714, %v2868
          %v2913 = vsub.f32 %v2715, %v2868
          %v2914 = vsub.f32 %v2716, %v2868
          %v2915 = vsub.f32 %v2717, %v2868
          %v2916 = vsub.f32 %v2718, %v2868
          %v2917 = vsub.f32 %v2719, %v2868
          %v2918 = vsub.f32 %v2720, %v2868
          %v2919 = vsub.f32 %v2721, %v2868
          %v2920 = vsub.f32 %v2722, %v2868
          %v2921 = vsub.f32 %v2723, %v2868
          %v2922 = vsub.f32 %v2724, %v2868
          %v2923 = vsub.f32 %v2725, %v2868
          %v2924 = vsub.f32 %v2726, %v2868
          %v2925 = vsub.f32 %v2727, %v2868
          %v2926 = vsub.f32 %v2728, %v2872
          %v2927 = vsub.f32 %v2729, %v2872
          %v2928 = vsub.f32 %v2730, %v2872
          %v2929 = vsub.f32 %v2731, %v2872
          %v2930 = vsub.f32 %v2732, %v2872
          %v2931 = vsub.f32 %v2733, %v2872
          %v2932 = vsub.f32 %v2734, %v2872
          %v2933 = vsub.f32 %v2735, %v2872
          %v2934 = vsub.f32 %v2736, %v2872
          %v2935 = vsub.f32 %v2737, %v2872
          %v2936 = vsub.f32 %v2738, %v2872
          %v2937 = vsub.f32 %v2739, %v2872
          %v2938 = vsub.f32 %v2740, %v2872
          %v2939 = vsub.f32 %v2741, %v2872
          %v2940 = vsub.f32 %v2742, %v2872
          %v2941 = vsub.f32 %v2743, %v2872
          %v2942 = vsub.f32 %v2744, %v2876
          %v2943 = vsub.f32 %v2745, %v2876
          %v2944 = vsub.f32 %v2746, %v2876
          %v2945 = vsub.f32 %v2747, %v2876
          %v2946 = vsub.f32 %v2748, %v2876
          %v2947 = vsub.f32 %v2749, %v2876
          %v2948 = vsub.f32 %v2750, %v2876
          %v2949 = vsub.f32 %v2751, %v2876
          %v2950 = vsub.f32 %v2752, %v2876
          %v2951 = vsub.f32 %v2753, %v2876
          %v2952 = vsub.f32 %v2754, %v2876
          %v2953 = vsub.f32 %v2755, %v2876
          %v2954 = vsub.f32 %v2756, %v2876
          %v2955 = vsub.f32 %v2757, %v2876
          %v2956 = vsub.f32 %v2758, %v2876
          %v2957 = vsub.f32 %v2759, %v2876
          %v2958 = vsub.f32 %v2760, %v2880
          %v2959 = vsub.f32 %v2761, %v2880
          %v2960 = vsub.f32 %v2762, %v2880
          %v2961 = vsub.f32 %v2763, %v2880
          %v2962 = vsub.f32 %v2764, %v2880
          %v2963 = vsub.f32 %v2765, %v2880
          %v2964 = vsub.f32 %v2766, %v2880
          %v2965 = vsub.f32 %v2767, %v2880
          %v2966 = vsub.f32 %v2768, %v2880
          %v2967 = vsub.f32 %v2769, %v2880
          %v2968 = vsub.f32 %v2770, %v2880
          %v2969 = vsub.f32 %v2771, %v2880
          %v2970 = vsub.f32 %v2772, %v2880
          %v2971 = vsub.f32 %v2773, %v2880
          %v2972 = vsub.f32 %v2774, %v2880
          %v2973 = vsub.f32 %v2775, %v2880
          %v2974 = vsub.f32 %v2776, %v2884
          %v2975 = vsub.f32 %v2777, %v2884
          %v2976 = vsub.f32 %v2778, %v2884
          %v2977 = vsub.f32 %v2779, %v2884
          %v2978 = vsub.f32 %v2780, %v2884
          %v2979 = vsub.f32 %v2781, %v2884
          %v2980 = vsub.f32 %v2782, %v2884
          %v2981 = vsub.f32 %v2783, %v2884
          %v2982 = vsub.f32 %v2784, %v2884
          %v2983 = vsub.f32 %v2785, %v2884
          %v2984 = vsub.f32 %v2786, %v2884
          %v2985 = vsub.f32 %v2787, %v2884
          %v2986 = vsub.f32 %v2788, %v2884
          %v2987 = vsub.f32 %v2789, %v2884
          %v2988 = vsub.f32 %v2790, %v2884
          %v2989 = vsub.f32 %v2791, %v2884
          %v2990 = vsub.f32 %v2792, %v2888
          %v2991 = vsub.f32 %v2793, %v2888
          %v2992 = vsub.f32 %v2794, %v2888
          %v2993 = vsub.f32 %v2795, %v2888
          %v2994 = vsub.f32 %v2796, %v2888
          %v2995 = vsub.f32 %v2797, %v2888
          %v2996 = vsub.f32 %v2798, %v2888
          %v2997 = vsub.f32 %v2799, %v2888
          %v2998 = vsub.f32 %v2800, %v2888
          %v2999 = vsub.f32 %v2801, %v2888
          %v3000 = vsub.f32 %v2802, %v2888
          %v3001 = vsub.f32 %v2803, %v2888
          %v3002 = vsub.f32 %v2804, %v2888
          %v3003 = vsub.f32 %v2805, %v2888
          %v3004 = vsub.f32 %v2806, %v2888
          %v3005 = vsub.f32 %v2807, %v2888
          %v3006 = vsub.f32 %v2808, %v2892
          %v3007 = vsub.f32 %v2809, %v2892
          %v3008 = vsub.f32 %v2810, %v2892
          %v3009 = vsub.f32 %v2811, %v2892
          %v3010 = vsub.f32 %v2812, %v2892
          %v3011 = vsub.f32 %v2813, %v2892
          %v3012 = vsub.f32 %v2814, %v2892
          %v3013 = vsub.f32 %v2815, %v2892
          %v3014 = vsub.f32 %v2816, %v2892
          %v3015 = vsub.f32 %v2817, %v2892
          %v3016 = vsub.f32 %v2818, %v2892
          %v3017 = vsub.f32 %v2819, %v2892
          %v3018 = vsub.f32 %v2820, %v2892
          %v3019 = vsub.f32 %v2821, %v2892
          %v3020 = vsub.f32 %v2822, %v2892
          %v3021 = vsub.f32 %v2823, %v2892
          %v3022 = vsub.f32 %v2824, %v2896
          %v3023 = vsub.f32 %v2825, %v2896
          %v3024 = vsub.f32 %v2826, %v2896
          %v3025 = vsub.f32 %v2827, %v2896
          %v3026 = vsub.f32 %v2828, %v2896
          %v3027 = vsub.f32 %v2829, %v2896
          %v3028 = vsub.f32 %v2830, %v2896
          %v3029 = vsub.f32 %v2831, %v2896
          %v3030 = vsub.f32 %v2832, %v2896
          %v3031 = vsub.f32 %v2833, %v2896
          %v3032 = vsub.f32 %v2834, %v2896
          %v3033 = vsub.f32 %v2835, %v2896
          %v3034 = vsub.f32 %v2836, %v2896
          %v3035 = vsub.f32 %v2837, %v2896
          %v3036 = vsub.f32 %v2838, %v2896
          %v3037 = vsub.f32 %v2839, %v2896
          %v3038 = vsub.f32 %v2840, %v2900
          %v3039 = vsub.f32 %v2841, %v2900
          %v3040 = vsub.f32 %v2842, %v2900
          %v3041 = vsub.f32 %v2843, %v2900
          %v3042 = vsub.f32 %v2844, %v2900
          %v3043 = vsub.f32 %v2845, %v2900
          %v3044 = vsub.f32 %v2846, %v2900
          %v3045 = vsub.f32 %v2847, %v2900
          %v3046 = vsub.f32 %v2848, %v2900
          %v3047 = vsub.f32 %v2849, %v2900
          %v3048 = vsub.f32 %v2850, %v2900
          %v3049 = vsub.f32 %v2851, %v2900
          %v3050 = vsub.f32 %v2852, %v2900
          %v3051 = vsub.f32 %v2853, %v2900
          %v3052 = vsub.f32 %v2854, %v2900
          %v3053 = vsub.f32 %v2855, %v2900
          %v3063 = vlaneseq
          %v3064 = vshrl.u32 %v3063, 7
          %v3065 = vsub.s32 0, %v3064
          %v3066 = vrot.slane %v2639, %v3065
          %v3067 = vlaneseq
          %v3068 = vshrl.u32 %v3067, 7
          %v3069 = vsub.s32 0, %v3068
          %v3070 = vrot.slane %v2640, %v3069
          %v3071 = vlaneseq
          %v3072 = vshrl.u32 %v3071, 7
          %v3073 = vsub.s32 0, %v3072
          %v3074 = vrot.slane %v2641, %v3073
          %v3075 = vlaneseq
          %v3076 = vshrl.u32 %v3075, 7
          %v3077 = vsub.s32 0, %v3076
          %v3078 = vrot.slane %v2642, %v3077
          %v3079 = vlaneseq
          %v3080 = vshrl.u32 %v3079, 7
          %v3081 = vsub.s32 0, %v3080
          %v3082 = vrot.slane %v2643, %v3081
          %v3083 = vlaneseq
          %v3084 = vshrl.u32 %v3083, 7
          %v3085 = vsub.s32 0, %v3084
          %v3086 = vrot.slane %v2644, %v3085
          %v3087 = vlaneseq
          %v3088 = vshrl.u32 %v3087, 7
          %v3089 = vsub.s32 0, %v3088
          %v3090 = vrot.slane %v2645, %v3089
          %v3091 = vlaneseq
          %v3092 = vshrl.u32 %v3091, 7
          %v3093 = vsub.s32 0, %v3092
          %v3094 = vrot.slane %v2646, %v3093
          %v3095 = vlaneseq
          %v3096 = vshrl.u32 %v3095, 7
          %v3097 = vsub.s32 0, %v3096
          %v3098 = vrot.slane %v2647, %v3097
          %v3108 = vmul.f32 %v336, %v3066
          %v3109 = vmul.f32 %v337, %v3066
          %v3110 = vmul.f32 %v338, %v3066
          %v3111 = vmul.f32 %v339, %v3066
          %v3112 = vmul.f32 %v340, %v3066
          %v3113 = vmul.f32 %v341, %v3066
          %v3114 = vmul.f32 %v342, %v3066
          %v3115 = vmul.f32 %v343, %v3066
          %v3116 = vmul.f32 %v344, %v3066
          %v3117 = vmul.f32 %v345, %v3066
          %v3118 = vmul.f32 %v346, %v3066
          %v3119 = vmul.f32 %v347, %v3066
          %v3120 = vmul.f32 %v348, %v3066
          %v3121 = vmul.f32 %v349, %v3066
          %v3122 = vmul.f32 %v350, %v3066
          %v3123 = vmul.f32 %v351, %v3066
          %v3124 = vmul.f32 %v336, %v3070
          %v3125 = vmul.f32 %v337, %v3070
          %v3126 = vmul.f32 %v338, %v3070
          %v3127 = vmul.f32 %v339, %v3070
          %v3128 = vmul.f32 %v340, %v3070
          %v3129 = vmul.f32 %v341, %v3070
          %v3130 = vmul.f32 %v342, %v3070
          %v3131 = vmul.f32 %v343, %v3070
          %v3132 = vmul.f32 %v344, %v3070
          %v3133 = vmul.f32 %v345, %v3070
          %v3134 = vmul.f32 %v346, %v3070
          %v3135 = vmul.f32 %v347, %v3070
          %v3136 = vmul.f32 %v348, %v3070
          %v3137 = vmul.f32 %v349, %v3070
          %v3138 = vmul.f32 %v350, %v3070
          %v3139 = vmul.f32 %v351, %v3070
          %v3140 = vmul.f32 %v336, %v3074
          %v3141 = vmul.f32 %v337, %v3074
          %v3142 = vmul.f32 %v338, %v3074
          %v3143 = vmul.f32 %v339, %v3074
          %v3144 = vmul.f32 %v340, %v3074
          %v3145 = vmul.f32 %v341, %v3074
          %v3146 = vmul.f32 %v342, %v3074
          %v3147 = vmul.f32 %v343, %v3074
          %v3148 = vmul.f32 %v344, %v3074
          %v3149 = vmul.f32 %v345, %v3074
          %v3150 = vmul.f32 %v346, %v3074
          %v3151 = vmul.f32 %v347, %v3074
          %v3152 = vmul.f32 %v348, %v3074
          %v3153 = vmul.f32 %v349, %v3074
          %v3154 = vmul.f32 %v350, %v3074
          %v3155 = vmul.f32 %v351, %v3074
          %v3156 = vmul.f32 %v336, %v3078
          %v3157 = vmul.f32 %v337, %v3078
          %v3158 = vmul.f32 %v338, %v3078
          %v3159 = vmul.f32 %v339, %v3078
          %v3160 = vmul.f32 %v340, %v3078
          %v3161 = vmul.f32 %v341, %v3078
          %v3162 = vmul.f32 %v342, %v3078
          %v3163 = vmul.f32 %v343, %v3078
          %v3164 = vmul.f32 %v344, %v3078
          %v3165 = vmul.f32 %v345, %v3078
          %v3166 = vmul.f32 %v346, %v3078
          %v3167 = vmul.f32 %v347, %v3078
          %v3168 = vmul.f32 %v348, %v3078
          %v3169 = vmul.f32 %v349, %v3078
          %v3170 = vmul.f32 %v350, %v3078
          %v3171 = vmul.f32 %v351, %v3078
          %v3172 = vmul.f32 %v336, %v3082
          %v3173 = vmul.f32 %v337, %v3082
          %v3174 = vmul.f32 %v338, %v3082
          %v3175 = vmul.f32 %v339, %v3082
          %v3176 = vmul.f32 %v340, %v3082
          %v3177 = vmul.f32 %v341, %v3082
          %v3178 = vmul.f32 %v342, %v3082
          %v3179 = vmul.f32 %v343, %v3082
          %v3180 = vmul.f32 %v344, %v3082
          %v3181 = vmul.f32 %v345, %v3082
          %v3182 = vmul.f32 %v346, %v3082
          %v3183 = vmul.f32 %v347, %v3082
          %v3184 = vmul.f32 %v348, %v3082
          %v3185 = vmul.f32 %v349, %v3082
          %v3186 = vmul.f32 %v350, %v3082
          %v3187 = vmul.f32 %v351, %v3082
          %v3188 = vmul.f32 %v336, %v3086
          %v3189 = vmul.f32 %v337, %v3086
          %v3190 = vmul.f32 %v338, %v3086
          %v3191 = vmul.f32 %v339, %v3086
          %v3192 = vmul.f32 %v340, %v3086
          %v3193 = vmul.f32 %v341, %v3086
          %v3194 = vmul.f32 %v342, %v3086
          %v3195 = vmul.f32 %v343, %v3086
          %v3196 = vmul.f32 %v344, %v3086
          %v3197 = vmul.f32 %v345, %v3086
          %v3198 = vmul.f32 %v346, %v3086
          %v3199 = vmul.f32 %v347, %v3086
          %v3200 = vmul.f32 %v348, %v3086
          %v3201 = vmul.f32 %v349, %v3086
          %v3202 = vmul.f32 %v350, %v3086
          %v3203 = vmul.f32 %v351, %v3086
          %v3204 = vmul.f32 %v336, %v3090
          %v3205 = vmul.f32 %v337, %v3090
          %v3206 = vmul.f32 %v338, %v3090
          %v3207 = vmul.f32 %v339, %v3090
          %v3208 = vmul.f32 %v340, %v3090
          %v3209 = vmul.f32 %v341, %v3090
          %v3210 = vmul.f32 %v342, %v3090
          %v3211 = vmul.f32 %v343, %v3090
          %v3212 = vmul.f32 %v344, %v3090
          %v3213 = vmul.f32 %v345, %v3090
          %v3214 = vmul.f32 %v346, %v3090
          %v3215 = vmul.f32 %v347, %v3090
          %v3216 = vmul.f32 %v348, %v3090
          %v3217 = vmul.f32 %v349, %v3090
          %v3218 = vmul.f32 %v350, %v3090
          %v3219 = vmul.f32 %v351, %v3090
          %v3220 = vmul.f32 %v336, %v3094
          %v3221 = vmul.f32 %v337, %v3094
          %v3222 = vmul.f32 %v338, %v3094
          %v3223 = vmul.f32 %v339, %v3094
          %v3224 = vmul.f32 %v340, %v3094
          %v3225 = vmul.f32 %v341, %v3094
          %v3226 = vmul.f32 %v342, %v3094
          %v3227 = vmul.f32 %v343, %v3094
          %v3228 = vmul.f32 %v344, %v3094
          %v3229 = vmul.f32 %v345, %v3094
          %v3230 = vmul.f32 %v346, %v3094
          %v3231 = vmul.f32 %v347, %v3094
          %v3232 = vmul.f32 %v348, %v3094
          %v3233 = vmul.f32 %v349, %v3094
          %v3234 = vmul.f32 %v350, %v3094
          %v3235 = vmul.f32 %v351, %v3094
          %v3236 = vmul.f32 %v336, %v3098
          %v3237 = vmul.f32 %v337, %v3098
          %v3238 = vmul.f32 %v338, %v3098
          %v3239 = vmul.f32 %v339, %v3098
          %v3240 = vmul.f32 %v340, %v3098
          %v3241 = vmul.f32 %v341, %v3098
          %v3242 = vmul.f32 %v342, %v3098
          %v3243 = vmul.f32 %v343, %v3098
          %v3244 = vmul.f32 %v344, %v3098
          %v3245 = vmul.f32 %v345, %v3098
          %v3246 = vmul.f32 %v346, %v3098
          %v3247 = vmul.f32 %v347, %v3098
          %v3248 = vmul.f32 %v348, %v3098
          %v3249 = vmul.f32 %v349, %v3098
          %v3250 = vmul.f32 %v350, %v3098
          %v3251 = vmul.f32 %v351, %v3098
          %v3261 = vlaneseq
          %v3262 = vshrl.u32 %v3261, 7
          %v3263 = vsub.s32 0, %v3262
          %v3264 = vrot.slane %v2649, %v3263
          %v3265 = vlaneseq
          %v3266 = vshrl.u32 %v3265, 7
          %v3267 = vsub.s32 0, %v3266
          %v3268 = vrot.slane %v2650, %v3267
          %v3269 = vlaneseq
          %v3270 = vshrl.u32 %v3269, 7
          %v3271 = vsub.s32 0, %v3270
          %v3272 = vrot.slane %v2651, %v3271
          %v3273 = vlaneseq
          %v3274 = vshrl.u32 %v3273, 7
          %v3275 = vsub.s32 0, %v3274
          %v3276 = vrot.slane %v2652, %v3275
          %v3277 = vlaneseq
          %v3278 = vshrl.u32 %v3277, 7
          %v3279 = vsub.s32 0, %v3278
          %v3280 = vrot.slane %v2653, %v3279
          %v3281 = vlaneseq
          %v3282 = vshrl.u32 %v3281, 7
          %v3283 = vsub.s32 0, %v3282
          %v3284 = vrot.slane %v2654, %v3283
          %v3285 = vlaneseq
          %v3286 = vshrl.u32 %v3285, 7
          %v3287 = vsub.s32 0, %v3286
          %v3288 = vrot.slane %v2655, %v3287
          %v3289 = vlaneseq
          %v3290 = vshrl.u32 %v3289, 7
          %v3291 = vsub.s32 0, %v3290
          %v3292 = vrot.slane %v2656, %v3291
          %v3293 = vlaneseq
          %v3294 = vshrl.u32 %v3293, 7
          %v3295 = vsub.s32 0, %v3294
          %v3296 = vrot.slane %v2657, %v3295
          %v3306 = vsub.f32 %v3264, %v3108
          %v3307 = vsub.f32 %v3264, %v3109
          %v3308 = vsub.f32 %v3264, %v3110
          %v3309 = vsub.f32 %v3264, %v3111
          %v3310 = vsub.f32 %v3264, %v3112
          %v3311 = vsub.f32 %v3264, %v3113
          %v3312 = vsub.f32 %v3264, %v3114
          %v3313 = vsub.f32 %v3264, %v3115
          %v3314 = vsub.f32 %v3264, %v3116
          %v3315 = vsub.f32 %v3264, %v3117
          %v3316 = vsub.f32 %v3264, %v3118
          %v3317 = vsub.f32 %v3264, %v3119
          %v3318 = vsub.f32 %v3264, %v3120
          %v3319 = vsub.f32 %v3264, %v3121
          %v3320 = vsub.f32 %v3264, %v3122
          %v3321 = vsub.f32 %v3264, %v3123
          %v3322 = vsub.f32 %v3268, %v3124
          %v3323 = vsub.f32 %v3268, %v3125
          %v3324 = vsub.f32 %v3268, %v3126
          %v3325 = vsub.f32 %v3268, %v3127
          %v3326 = vsub.f32 %v3268, %v3128
          %v3327 = vsub.f32 %v3268, %v3129
          %v3328 = vsub.f32 %v3268, %v3130
          %v3329 = vsub.f32 %v3268, %v3131
          %v3330 = vsub.f32 %v3268, %v3132
          %v3331 = vsub.f32 %v3268, %v3133
          %v3332 = vsub.f32 %v3268, %v3134
          %v3333 = vsub.f32 %v3268, %v3135
          %v3334 = vsub.f32 %v3268, %v3136
          %v3335 = vsub.f32 %v3268, %v3137
          %v3336 = vsub.f32 %v3268, %v3138
          %v3337 = vsub.f32 %v3268, %v3139
          %v3338 = vsub.f32 %v3272, %v3140
          %v3339 = vsub.f32 %v3272, %v3141
          %v3340 = vsub.f32 %v3272, %v3142
          %v3341 = vsub.f32 %v3272, %v3143
          %v3342 = vsub.f32 %v3272, %v3144
          %v3343 = vsub.f32 %v3272, %v3145
          %v3344 = vsub.f32 %v3272, %v3146
          %v3345 = vsub.f32 %v3272, %v3147
          %v3346 = vsub.f32 %v3272, %v3148
          %v3347 = vsub.f32 %v3272, %v3149
          %v3348 = vsub.f32 %v3272, %v3150
          %v3349 = vsub.f32 %v3272, %v3151
          %v3350 = vsub.f32 %v3272, %v3152
          %v3351 = vsub.f32 %v3272, %v3153
          %v3352 = vsub.f32 %v3272, %v3154
          %v3353 = vsub.f32 %v3272, %v3155
          %v3354 = vsub.f32 %v3276, %v3156
          %v3355 = vsub.f32 %v3276, %v3157
          %v3356 = vsub.f32 %v3276, %v3158
          %v3357 = vsub.f32 %v3276, %v3159
          %v3358 = vsub.f32 %v3276, %v3160
          %v3359 = vsub.f32 %v3276, %v3161
          %v3360 = vsub.f32 %v3276, %v3162
          %v3361 = vsub.f32 %v3276, %v3163
          %v3362 = vsub.f32 %v3276, %v3164
          %v3363 = vsub.f32 %v3276, %v3165
          %v3364 = vsub.f32 %v3276, %v3166
          %v3365 = vsub.f32 %v3276, %v3167
          %v3366 = vsub.f32 %v3276, %v3168
          %v3367 = vsub.f32 %v3276, %v3169
          %v3368 = vsub.f32 %v3276, %v3170
          %v3369 = vsub.f32 %v3276, %v3171
          %v3370 = vsub.f32 %v3280, %v3172
          %v3371 = vsub.f32 %v3280, %v3173
          %v3372 = vsub.f32 %v3280, %v3174
          %v3373 = vsub.f32 %v3280, %v3175
          %v3374 = vsub.f32 %v3280, %v3176
          %v3375 = vsub.f32 %v3280, %v3177
          %v3376 = vsub.f32 %v3280, %v3178
          %v3377 = vsub.f32 %v3280, %v3179
          %v3378 = vsub.f32 %v3280, %v3180
          %v3379 = vsub.f32 %v3280, %v3181
          %v3380 = vsub.f32 %v3280, %v3182
          %v3381 = vsub.f32 %v3280, %v3183
          %v3382 = vsub.f32 %v3280, %v3184
          %v3383 = vsub.f32 %v3280, %v3185
          %v3384 = vsub.f32 %v3280, %v3186
          %v3385 = vsub.f32 %v3280, %v3187
          %v3386 = vsub.f32 %v3284, %v3188
          %v3387 = vsub.f32 %v3284, %v3189
          %v3388 = vsub.f32 %v3284, %v3190
          %v3389 = vsub.f32 %v3284, %v3191
          %v3390 = vsub.f32 %v3284, %v3192
          %v3391 = vsub.f32 %v3284, %v3193
          %v3392 = vsub.f32 %v3284, %v3194
          %v3393 = vsub.f32 %v3284, %v3195
          %v3394 = vsub.f32 %v3284, %v3196
          %v3395 = vsub.f32 %v3284, %v3197
          %v3396 = vsub.f32 %v3284, %v3198
          %v3397 = vsub.f32 %v3284, %v3199
          %v3398 = vsub.f32 %v3284, %v3200
          %v3399 = vsub.f32 %v3284, %v3201
          %v3400 = vsub.f32 %v3284, %v3202
          %v3401 = vsub.f32 %v3284, %v3203
          %v3402 = vsub.f32 %v3288, %v3204
          %v3403 = vsub.f32 %v3288, %v3205
          %v3404 = vsub.f32 %v3288, %v3206
          %v3405 = vsub.f32 %v3288, %v3207
          %v3406 = vsub.f32 %v3288, %v3208
          %v3407 = vsub.f32 %v3288, %v3209
          %v3408 = vsub.f32 %v3288, %v3210
          %v3409 = vsub.f32 %v3288, %v3211
          %v3410 = vsub.f32 %v3288, %v3212
          %v3411 = vsub.f32 %v3288, %v3213
          %v3412 = vsub.f32 %v3288, %v3214
          %v3413 = vsub.f32 %v3288, %v3215
          %v3414 = vsub.f32 %v3288, %v3216
          %v3415 = vsub.f32 %v3288, %v3217
          %v3416 = vsub.f32 %v3288, %v3218
          %v3417 = vsub.f32 %v3288, %v3219
          %v3418 = vsub.f32 %v3292, %v3220
          %v3419 = vsub.f32 %v3292, %v3221
          %v3420 = vsub.f32 %v3292, %v3222
          %v3421 = vsub.f32 %v3292, %v3223
          %v3422 = vsub.f32 %v3292, %v3224
          %v3423 = vsub.f32 %v3292, %v3225
          %v3424 = vsub.f32 %v3292, %v3226
          %v3425 = vsub.f32 %v3292, %v3227
          %v3426 = vsub.f32 %v3292, %v3228
          %v3427 = vsub.f32 %v3292, %v3229
          %v3428 = vsub.f32 %v3292, %v3230
          %v3429 = vsub.f32 %v3292, %v3231
          %v3430 = vsub.f32 %v3292, %v3232
          %v3431 = vsub.f32 %v3292, %v3233
          %v3432 = vsub.f32 %v3292, %v3234
          %v3433 = vsub.f32 %v3292, %v3235
          %v3434 = vsub.f32 %v3296, %v3236
          %v3435 = vsub.f32 %v3296, %v3237
          %v3436 = vsub.f32 %v3296, %v3238
          %v3437 = vsub.f32 %v3296, %v3239
          %v3438 = vsub.f32 %v3296, %v3240
          %v3439 = vsub.f32 %v3296, %v3241
          %v3440 = vsub.f32 %v3296, %v3242
          %v3441 = vsub.f32 %v3296, %v3243
          %v3442 = vsub.f32 %v3296, %v3244
          %v3443 = vsub.f32 %v3296, %v3245
          %v3444 = vsub.f32 %v3296, %v3246
          %v3445 = vsub.f32 %v3296, %v3247
          %v3446 = vsub.f32 %v3296, %v3248
          %v3447 = vsub.f32 %v3296, %v3249
          %v3448 = vsub.f32 %v3296, %v3250
          %v3449 = vsub.f32 %v3296, %v3251
          %v3450 = vmul.f32 %v2458, %v2910
          %v3451 = vmul.f32 %v2459, %v2911
          %v3452 = vmul.f32 %v2460, %v2912
          %v3453 = vmul.f32 %v2461, %v2913
          %v3454 = vmul.f32 %v2462, %v2914
          %v3455 = vmul.f32 %v2463, %v2915
          %v3456 = vmul.f32 %v2464, %v2916
          %v3457 = vmul.f32 %v2465, %v2917
          %v3458 = vmul.f32 %v2466, %v2918
          %v3459 = vmul.f32 %v2467, %v2919
          %v3460 = vmul.f32 %v2468, %v2920
          %v3461 = vmul.f32 %v2469, %v2921
          %v3462 = vmul.f32 %v2470, %v2922
          %v3463 = vmul.f32 %v2471, %v2923
          %v3464 = vmul.f32 %v2472, %v2924
          %v3465 = vmul.f32 %v2473, %v2925
          %v3466 = vmul.f32 %v2474, %v2926
          %v3467 = vmul.f32 %v2475, %v2927
          %v3468 = vmul.f32 %v2476, %v2928
          %v3469 = vmul.f32 %v2477, %v2929
          %v3470 = vmul.f32 %v2478, %v2930
          %v3471 = vmul.f32 %v2479, %v2931
          %v3472 = vmul.f32 %v2480, %v2932
          %v3473 = vmul.f32 %v2481, %v2933
          %v3474 = vmul.f32 %v2482, %v2934
          %v3475 = vmul.f32 %v2483, %v2935
          %v3476 = vmul.f32 %v2484, %v2936
          %v3477 = vmul.f32 %v2485, %v2937
          %v3478 = vmul.f32 %v2486, %v2938
          %v3479 = vmul.f32 %v2487, %v2939
          %v3480 = vmul.f32 %v2488, %v2940
          %v3481 = vmul.f32 %v2489, %v2941
          %v3482 = vmul.f32 %v2490, %v2942
          %v3483 = vmul.f32 %v2491, %v2943
          %v3484 = vmul.f32 %v2492, %v2944
          %v3485 = vmul.f32 %v2493, %v2945
          %v3486 = vmul.f32 %v2494, %v2946
          %v3487 = vmul.f32 %v2495, %v2947
          %v3488 = vmul.f32 %v2496, %v2948
          %v3489 = vmul.f32 %v2497, %v2949
          %v3490 = vmul.f32 %v2498, %v2950
          %v3491 = vmul.f32 %v2499, %v2951
          %v3492 = vmul.f32 %v2500, %v2952
          %v3493 = vmul.f32 %v2501, %v2953
          %v3494 = vmul.f32 %v2502, %v2954
          %v3495 = vmul.f32 %v2503, %v2955
          %v3496 = vmul.f32 %v2504, %v2956
          %v3497 = vmul.f32 %v2505, %v2957
          %v3498 = vmul.f32 %v2506, %v2958
          %v3499 = vmul.f32 %v2507, %v2959
          %v3500 = vmul.f32 %v2508, %v2960
          %v3501 = vmul.f32 %v2509, %v2961
          %v3502 = vmul.f32 %v2510, %v2962
          %v3503 = vmul.f32 %v2511, %v2963
          %v3504 = vmul.f32 %v2512, %v2964
          %v3505 = vmul.f32 %v2513, %v2965
          %v3506 = vmul.f32 %v2514, %v2966
          %v3507 = vmul.f32 %v2515, %v2967
          %v3508 = vmul.f32 %v2516, %v2968
          %v3509 = vmul.f32 %v2517, %v2969
          %v3510 = vmul.f32 %v2518, %v2970
          %v3511 = vmul.f32 %v2519, %v2971
          %v3512 = vmul.f32 %v2520, %v2972
          %v3513 = vmul.f32 %v2521, %v2973
          %v3514 = vmul.f32 %v2522, %v2974
          %v3515 = vmul.f32 %v2523, %v2975
          %v3516 = vmul.f32 %v2524, %v2976
          %v3517 = vmul.f32 %v2525, %v2977
          %v3518 = vmul.f32 %v2526, %v2978
          %v3519 = vmul.f32 %v2527, %v2979
          %v3520 = vmul.f32 %v2528, %v2980
          %v3521 = vmul.f32 %v2529, %v2981
          %v3522 = vmul.f32 %v2530, %v2982
          %v3523 = vmul.f32 %v2531, %v2983
          %v3524 = vmul.f32 %v2532, %v2984
          %v3525 = vmul.f32 %v2533, %v2985
          %v3526 = vmul.f32 %v2534, %v2986
          %v3527 = vmul.f32 %v2535, %v2987
          %v3528 = vmul.f32 %v2536, %v2988
          %v3529 = vmul.f32 %v2537, %v2989
          %v3530 = vmul.f32 %v2538, %v2990
          %v3531 = vmul.f32 %v2539, %v2991
          %v3532 = vmul.f32 %v2540, %v2992
          %v3533 = vmul.f32 %v2541, %v2993
          %v3534 = vmul.f32 %v2542, %v2994
          %v3535 = vmul.f32 %v2543, %v2995
          %v3536 = vmul.f32 %v2544, %v2996
          %v3537 = vmul.f32 %v2545, %v2997
          %v3538 = vmul.f32 %v2546, %v2998
          %v3539 = vmul.f32 %v2547, %v2999
          %v3540 = vmul.f32 %v2548, %v3000
          %v3541 = vmul.f32 %v2549, %v3001
          %v3542 = vmul.f32 %v2550, %v3002
          %v3543 = vmul.f32 %v2551, %v3003
          %v3544 = vmul.f32 %v2552, %v3004
          %v3545 = vmul.f32 %v2553, %v3005
          %v3546 = vmul.f32 %v2554, %v3006
          %v3547 = vmul.f32 %v2555, %v3007
          %v3548 = vmul.f32 %v2556, %v3008
          %v3549 = vmul.f32 %v2557, %v3009
          %v3550 = vmul.f32 %v2558, %v3010
          %v3551 = vmul.f32 %v2559, %v3011
          %v3552 = vmul.f32 %v2560, %v3012
          %v3553 = vmul.f32 %v2561, %v3013
          %v3554 = vmul.f32 %v2562, %v3014
          %v3555 = vmul.f32 %v2563, %v3015
          %v3556 = vmul.f32 %v2564, %v3016
          %v3557 = vmul.f32 %v2565, %v3017
          %v3558 = vmul.f32 %v2566, %v3018
          %v3559 = vmul.f32 %v2567, %v3019
          %v3560 = vmul.f32 %v2568, %v3020
          %v3561 = vmul.f32 %v2569, %v3021
          %v3562 = vmul.f32 %v2570, %v3022
          %v3563 = vmul.f32 %v2571, %v3023
          %v3564 = vmul.f32 %v2572, %v3024
          %v3565 = vmul.f32 %v2573, %v3025
          %v3566 = vmul.f32 %v2574, %v3026
          %v3567 = vmul.f32 %v2575, %v3027
          %v3568 = vmul.f32 %v2576, %v3028
          %v3569 = vmul.f32 %v2577, %v3029
          %v3570 = vmul.f32 %v2578, %v3030
          %v3571 = vmul.f32 %v2579, %v3031
          %v3572 = vmul.f32 %v2580, %v3032
          %v3573 = vmul.f32 %v2581, %v3033
          %v3574 = vmul.f32 %v2582, %v3034
          %v3575 = vmul.f32 %v2583, %v3035
          %v3576 = vmul.f32 %v2584, %v3036
          %v3577 = vmul.f32 %v2585, %v3037
          %v3578 = vmul.f32 %v2586, %v3038
          %v3579 = vmul.f32 %v2587, %v3039
          %v3580 = vmul.f32 %v2588, %v3040
          %v3581 = vmul.f32 %v2589, %v3041
          %v3582 = vmul.f32 %v2590, %v3042
          %v3583 = vmul.f32 %v2591, %v3043
          %v3584 = vmul.f32 %v2592, %v3044
          %v3585 = vmul.f32 %v2593, %v3045
          %v3586 = vmul.f32 %v2594, %v3046
          %v3587 = vmul.f32 %v2595, %v3047
          %v3588 = vmul.f32 %v2596, %v3048
          %v3589 = vmul.f32 %v2597, %v3049
          %v3590 = vmul.f32 %v2598, %v3050
          %v3591 = vmul.f32 %v2599, %v3051
          %v3592 = vmul.f32 %v2600, %v3052
          %v3593 = vmul.f32 %v2601, %v3053
          %v3594 = vmul.f32 %v2474, %v3306
          %v3595 = vmul.f32 %v2475, %v3307
          %v3596 = vmul.f32 %v2476, %v3308
          %v3597 = vmul.f32 %v2477, %v3309
          %v3598 = vmul.f32 %v2478, %v3310
          %v3599 = vmul.f32 %v2479, %v3311
          %v3600 = vmul.f32 %v2480, %v3312
          %v3601 = vmul.f32 %v2481, %v3313
          %v3602 = vmul.f32 %v2482, %v3314
          %v3603 = vmul.f32 %v2483, %v3315
          %v3604 = vmul.f32 %v2484, %v3316
          %v3605 = vmul.f32 %v2485, %v3317
          %v3606 = vmul.f32 %v2486, %v3318
          %v3607 = vmul.f32 %v2487, %v3319
          %v3608 = vmul.f32 %v2488, %v3320
          %v3609 = vmul.f32 %v2489, %v3321
          %v3610 = vmul.f32 %v2490, %v3322
          %v3611 = vmul.f32 %v2491, %v3323
          %v3612 = vmul.f32 %v2492, %v3324
          %v3613 = vmul.f32 %v2493, %v3325
          %v3614 = vmul.f32 %v2494, %v3326
          %v3615 = vmul.f32 %v2495, %v3327
          %v3616 = vmul.f32 %v2496, %v3328
          %v3617 = vmul.f32 %v2497, %v3329
          %v3618 = vmul.f32 %v2498, %v3330
          %v3619 = vmul.f32 %v2499, %v3331
          %v3620 = vmul.f32 %v2500, %v3332
          %v3621 = vmul.f32 %v2501, %v3333
          %v3622 = vmul.f32 %v2502, %v3334
          %v3623 = vmul.f32 %v2503, %v3335
          %v3624 = vmul.f32 %v2504, %v3336
          %v3625 = vmul.f32 %v2505, %v3337
          %v3626 = vmul.f32 %v2506, %v3338
          %v3627 = vmul.f32 %v2507, %v3339
          %v3628 = vmul.f32 %v2508, %v3340
          %v3629 = vmul.f32 %v2509, %v3341
          %v3630 = vmul.f32 %v2510, %v3342
          %v3631 = vmul.f32 %v2511, %v3343
          %v3632 = vmul.f32 %v2512, %v3344
          %v3633 = vmul.f32 %v2513, %v3345
          %v3634 = vmul.f32 %v2514, %v3346
          %v3635 = vmul.f32 %v2515, %v3347
          %v3636 = vmul.f32 %v2516, %v3348
          %v3637 = vmul.f32 %v2517, %v3349
          %v3638 = vmul.f32 %v2518, %v3350
          %v3639 = vmul.f32 %v2519, %v3351
          %v3640 = vmul.f32 %v2520, %v3352
          %v3641 = vmul.f32 %v2521, %v3353
          %v3642 = vmul.f32 %v2522, %v3354
          %v3643 = vmul.f32 %v2523, %v3355
          %v3644 = vmul.f32 %v2524, %v3356
          %v3645 = vmul.f32 %v2525, %v3357
          %v3646 = vmul.f32 %v2526, %v3358
          %v3647 = vmul.f32 %v2527, %v3359
          %v3648 = vmul.f32 %v2528, %v3360
          %v3649 = vmul.f32 %v2529, %v3361
          %v3650 = vmul.f32 %v2530, %v3362
          %v3651 = vmul.f32 %v2531, %v3363
          %v3652 = vmul.f32 %v2532, %v3364
          %v3653 = vmul.f32 %v2533, %v3365
          %v3654 = vmul.f32 %v2534, %v3366
          %v3655 = vmul.f32 %v2535, %v3367
          %v3656 = vmul.f32 %v2536, %v3368
          %v3657 = vmul.f32 %v2537, %v3369
          %v3658 = vmul.f32 %v2538, %v3370
          %v3659 = vmul.f32 %v2539, %v3371
          %v3660 = vmul.f32 %v2540, %v3372
          %v3661 = vmul.f32 %v2541, %v3373
          %v3662 = vmul.f32 %v2542, %v3374
          %v3663 = vmul.f32 %v2543, %v3375
          %v3664 = vmul.f32 %v2544, %v3376
          %v3665 = vmul.f32 %v2545, %v3377
          %v3666 = vmul.f32 %v2546, %v3378
          %v3667 = vmul.f32 %v2547, %v3379
          %v3668 = vmul.f32 %v2548, %v3380
          %v3669 = vmul.f32 %v2549, %v3381
          %v3670 = vmul.f32 %v2550, %v3382
          %v3671 = vmul.f32 %v2551, %v3383
          %v3672 = vmul.f32 %v2552, %v3384
          %v3673 = vmul.f32 %v2553, %v3385
          %v3674 = vmul.f32 %v2554, %v3386
          %v3675 = vmul.f32 %v2555, %v3387
          %v3676 = vmul.f32 %v2556, %v3388
          %v3677 = vmul.f32 %v2557, %v3389
          %v3678 = vmul.f32 %v2558, %v3390
          %v3679 = vmul.f32 %v2559, %v3391
          %v3680 = vmul.f32 %v2560, %v3392
          %v3681 = vmul.f32 %v2561, %v3393
          %v3682 = vmul.f32 %v2562, %v3394
          %v3683 = vmul.f32 %v2563, %v3395
          %v3684 = vmul.f32 %v2564, %v3396
          %v3685 = vmul.f32 %v2565, %v3397
          %v3686 = vmul.f32 %v2566, %v3398
          %v3687 = vmul.f32 %v2567, %v3399
          %v3688 = vmul.f32 %v2568, %v3400
          %v3689 = vmul.f32 %v2569, %v3401
          %v3690 = vmul.f32 %v2570, %v3402
          %v3691 = vmul.f32 %v2571, %v3403
          %v3692 = vmul.f32 %v2572, %v3404
          %v3693 = vmul.f32 %v2573, %v3405
          %v3694 = vmul.f32 %v2574, %v3406
          %v3695 = vmul.f32 %v2575, %v3407
          %v3696 = vmul.f32 %v2576, %v3408
          %v3697 = vmul.f32 %v2577, %v3409
          %v3698 = vmul.f32 %v2578, %v3410
          %v3699 = vmul.f32 %v2579, %v3411
          %v3700 = vmul.f32 %v2580, %v3412
          %v3701 = vmul.f32 %v2581, %v3413
          %v3702 = vmul.f32 %v2582, %v3414
          %v3703 = vmul.f32 %v2583, %v3415
          %v3704 = vmul.f32 %v2584, %v3416
          %v3705 = vmul.f32 %v2585, %v3417
          %v3706 = vmul.f32 %v2586, %v3418
          %v3707 = vmul.f32 %v2587, %v3419
          %v3708 = vmul.f32 %v2588, %v3420
          %v3709 = vmul.f32 %v2589, %v3421
          %v3710 = vmul.f32 %v2590, %v3422
          %v3711 = vmul.f32 %v2591, %v3423
          %v3712 = vmul.f32 %v2592, %v3424
          %v3713 = vmul.f32 %v2593, %v3425
          %v3714 = vmul.f32 %v2594, %v3426
          %v3715 = vmul.f32 %v2595, %v3427
          %v3716 = vmul.f32 %v2596, %v3428
          %v3717 = vmul.f32 %v2597, %v3429
          %v3718 = vmul.f32 %v2598, %v3430
          %v3719 = vmul.f32 %v2599, %v3431
          %v3720 = vmul.f32 %v2600, %v3432
          %v3721 = vmul.f32 %v2601, %v3433
          %v3722 = vmul.f32 %v2602, %v3434
          %v3723 = vmul.f32 %v2603, %v3435
          %v3724 = vmul.f32 %v2604, %v3436
          %v3725 = vmul.f32 %v2605, %v3437
          %v3726 = vmul.f32 %v2606, %v3438
          %v3727 = vmul.f32 %v2607, %v3439
          %v3728 = vmul.f32 %v2608, %v3440
          %v3729 = vmul.f32 %v2609, %v3441
          %v3730 = vmul.f32 %v2610, %v3442
          %v3731 = vmul.f32 %v2611, %v3443
          %v3732 = vmul.f32 %v2612, %v3444
          %v3733 = vmul.f32 %v2613, %v3445
          %v3734 = vmul.f32 %v2614, %v3446
          %v3735 = vmul.f32 %v2615, %v3447
          %v3736 = vmul.f32 %v2616, %v3448
          %v3737 = vmul.f32 %v2617, %v3449
          %v3738 = vadd.f32 %v3450, %v3594
          %v3739 = vadd.f32 %v3451, %v3595
          %v3740 = vadd.f32 %v3452, %v3596
          %v3741 = vadd.f32 %v3453, %v3597
          %v3742 = vadd.f32 %v3454, %v3598
          %v3743 = vadd.f32 %v3455, %v3599
          %v3744 = vadd.f32 %v3456, %v3600
          %v3745 = vadd.f32 %v3457, %v3601
          %v3746 = vadd.f32 %v3458, %v3602
          %v3747 = vadd.f32 %v3459, %v3603
          %v3748 = vadd.f32 %v3460, %v3604
          %v3749 = vadd.f32 %v3461, %v3605
          %v3750 = vadd.f32 %v3462, %v3606
          %v3751 = vadd.f32 %v3463, %v3607
          %v3752 = vadd.f32 %v3464, %v3608
          %v3753 = vadd.f32 %v3465, %v3609
          %v3754 = vadd.f32 %v3466, %v3610
          %v3755 = vadd.f32 %v3467, %v3611
          %v3756 = vadd.f32 %v3468, %v3612
          %v3757 = vadd.f32 %v3469, %v3613
          %v3758 = vadd.f32 %v3470, %v3614
          %v3759 = vadd.f32 %v3471, %v3615
          %v3760 = vadd.f32 %v3472, %v3616
          %v3761 = vadd.f32 %v3473, %v3617
          %v3762 = vadd.f32 %v3474, %v3618
          %v3763 = vadd.f32 %v3475, %v3619
          %v3764 = vadd.f32 %v3476, %v3620
          %v3765 = vadd.f32 %v3477, %v3621
          %v3766 = vadd.f32 %v3478, %v3622
          %v3767 = vadd.f32 %v3479, %v3623
          %v3768 = vadd.f32 %v3480, %v3624
          %v3769 = vadd.f32 %v3481, %v3625
          %v3770 = vadd.f32 %v3482, %v3626
          %v3771 = vadd.f32 %v3483, %v3627
          %v3772 = vadd.f32 %v3484, %v3628
          %v3773 = vadd.f32 %v3485, %v3629
          %v3774 = vadd.f32 %v3486, %v3630
          %v3775 = vadd.f32 %v3487, %v3631
          %v3776 = vadd.f32 %v3488, %v3632
          %v3777 = vadd.f32 %v3489, %v3633
          %v3778 = vadd.f32 %v3490, %v3634
          %v3779 = vadd.f32 %v3491, %v3635
          %v3780 = vadd.f32 %v3492, %v3636
          %v3781 = vadd.f32 %v3493, %v3637
          %v3782 = vadd.f32 %v3494, %v3638
          %v3783 = vadd.f32 %v3495, %v3639
          %v3784 = vadd.f32 %v3496, %v3640
          %v3785 = vadd.f32 %v3497, %v3641
          %v3786 = vadd.f32 %v3498, %v3642
          %v3787 = vadd.f32 %v3499, %v3643
          %v3788 = vadd.f32 %v3500, %v3644
          %v3789 = vadd.f32 %v3501, %v3645
          %v3790 = vadd.f32 %v3502, %v3646
          %v3791 = vadd.f32 %v3503, %v3647
          %v3792 = vadd.f32 %v3504, %v3648
          %v3793 = vadd.f32 %v3505, %v3649
          %v3794 = vadd.f32 %v3506, %v3650
          %v3795 = vadd.f32 %v3507, %v3651
          %v3796 = vadd.f32 %v3508, %v3652
          %v3797 = vadd.f32 %v3509, %v3653
          %v3798 = vadd.f32 %v3510, %v3654
          %v3799 = vadd.f32 %v3511, %v3655
          %v3800 = vadd.f32 %v3512, %v3656
          %v3801 = vadd.f32 %v3513, %v3657
          %v3802 = vadd.f32 %v3514, %v3658
          %v3803 = vadd.f32 %v3515, %v3659
          %v3804 = vadd.f32 %v3516, %v3660
          %v3805 = vadd.f32 %v3517, %v3661
          %v3806 = vadd.f32 %v3518, %v3662
          %v3807 = vadd.f32 %v3519, %v3663
          %v3808 = vadd.f32 %v3520, %v3664
          %v3809 = vadd.f32 %v3521, %v3665
          %v3810 = vadd.f32 %v3522, %v3666
          %v3811 = vadd.f32 %v3523, %v3667
          %v3812 = vadd.f32 %v3524, %v3668
          %v3813 = vadd.f32 %v3525, %v3669
          %v3814 = vadd.f32 %v3526, %v3670
          %v3815 = vadd.f32 %v3527, %v3671
          %v3816 = vadd.f32 %v3528, %v3672
          %v3817 = vadd.f32 %v3529, %v3673
          %v3818 = vadd.f32 %v3530, %v3674
          %v3819 = vadd.f32 %v3531, %v3675
          %v3820 = vadd.f32 %v3532, %v3676
          %v3821 = vadd.f32 %v3533, %v3677
          %v3822 = vadd.f32 %v3534, %v3678
          %v3823 = vadd.f32 %v3535, %v3679
          %v3824 = vadd.f32 %v3536, %v3680
          %v3825 = vadd.f32 %v3537, %v3681
          %v3826 = vadd.f32 %v3538, %v3682
          %v3827 = vadd.f32 %v3539, %v3683
          %v3828 = vadd.f32 %v3540, %v3684
          %v3829 = vadd.f32 %v3541, %v3685
          %v3830 = vadd.f32 %v3542, %v3686
          %v3831 = vadd.f32 %v3543, %v3687
          %v3832 = vadd.f32 %v3544, %v3688
          %v3833 = vadd.f32 %v3545, %v3689
          %v3834 = vadd.f32 %v3546, %v3690
          %v3835 = vadd.f32 %v3547, %v3691
          %v3836 = vadd.f32 %v3548, %v3692
          %v3837 = vadd.f32 %v3549, %v3693
          %v3838 = vadd.f32 %v3550, %v3694
          %v3839 = vadd.f32 %v3551, %v3695
          %v3840 = vadd.f32 %v3552, %v3696
          %v3841 = vadd.f32 %v3553, %v3697
          %v3842 = vadd.f32 %v3554, %v3698
          %v3843 = vadd.f32 %v3555, %v3699
          %v3844 = vadd.f32 %v3556, %v3700
          %v3845 = vadd.f32 %v3557, %v3701
          %v3846 = vadd.f32 %v3558, %v3702
          %v3847 = vadd.f32 %v3559, %v3703
          %v3848 = vadd.f32 %v3560, %v3704
          %v3849 = vadd.f32 %v3561, %v3705
          %v3850 = vadd.f32 %v3562, %v3706
          %v3851 = vadd.f32 %v3563, %v3707
          %v3852 = vadd.f32 %v3564, %v3708
          %v3853 = vadd.f32 %v3565, %v3709
          %v3854 = vadd.f32 %v3566, %v3710
          %v3855 = vadd.f32 %v3567, %v3711
          %v3856 = vadd.f32 %v3568, %v3712
          %v3857 = vadd.f32 %v3569, %v3713
          %v3858 = vadd.f32 %v3570, %v3714
          %v3859 = vadd.f32 %v3571, %v3715
          %v3860 = vadd.f32 %v3572, %v3716
          %v3861 = vadd.f32 %v3573, %v3717
          %v3862 = vadd.f32 %v3574, %v3718
          %v3863 = vadd.f32 %v3575, %v3719
          %v3864 = vadd.f32 %v3576, %v3720
          %v3865 = vadd.f32 %v3577, %v3721
          %v3866 = vadd.f32 %v3578, %v3722
          %v3867 = vadd.f32 %v3579, %v3723
          %v3868 = vadd.f32 %v3580, %v3724
          %v3869 = vadd.f32 %v3581, %v3725
          %v3870 = vadd.f32 %v3582, %v3726
          %v3871 = vadd.f32 %v3583, %v3727
          %v3872 = vadd.f32 %v3584, %v3728
          %v3873 = vadd.f32 %v3585, %v3729
          %v3874 = vadd.f32 %v3586, %v3730
          %v3875 = vadd.f32 %v3587, %v3731
          %v3876 = vadd.f32 %v3588, %v3732
          %v3877 = vadd.f32 %v3589, %v3733
          %v3878 = vadd.f32 %v3590, %v3734
          %v3879 = vadd.f32 %v3591, %v3735
          %v3880 = vadd.f32 %v3592, %v3736
          %v3881 = vadd.f32 %v3593, %v3737
          %s3882 = scalar_lea.vmem [#allocation8], 88
          %v3883 = vld [vmem:[%s3882] sm:$0x1]
          %v3884 = vld [vmem:[%s3882 + $0x1] sm:$0x1]
          %v3885 = vld [vmem:[%s3882 + $0x2] sm:$0x1]
          %v3886 = vld [vmem:[%s3882 + $0x3] sm:$0x1]
          %v3887 = vld [vmem:[%s3882 + $0x4] sm:$0x1]
          %v3888 = vld [vmem:[%s3882 + $0x5] sm:$0x1]
          %v3889 = vld [vmem:[%s3882 + $0x6] sm:$0x1]
          %v3890 = vld [vmem:[%s3882 + $0x7] sm:$0x1]
          %s3891 = scalar_lea.vmem [#allocation8], 99
          %v3892 = vld [vmem:[%s3891] sm:$0x1]
          %v3893 = vld [vmem:[%s3891 + $0x1] sm:$0x1]
          %v3894 = vld [vmem:[%s3891 + $0x2] sm:$0x1]
          %v3895 = vld [vmem:[%s3891 + $0x3] sm:$0x1]
          %v3896 = vld [vmem:[%s3891 + $0x4] sm:$0x1]
          %v3897 = vld [vmem:[%s3891 + $0x5] sm:$0x1]
          %v3898 = vld [vmem:[%s3891 + $0x6] sm:$0x1]
          %v3899 = vld [vmem:[%s3891 + $0x7] sm:$0x1]
          %s3900 = scalar_lea.vmem [#allocation8], 110
          %v3901 = vld [vmem:[%s3900] sm:$0x1]
          %v3902 = vld [vmem:[%s3900 + $0x1] sm:$0x1]
          %v3903 = vld [vmem:[%s3900 + $0x2] sm:$0x1]
          %v3904 = vld [vmem:[%s3900 + $0x3] sm:$0x1]
          %v3905 = vld [vmem:[%s3900 + $0x4] sm:$0x1]
          %v3906 = vld [vmem:[%s3900 + $0x5] sm:$0x1]
          %v3907 = vld [vmem:[%s3900 + $0x6] sm:$0x1]
          %v3908 = vld [vmem:[%s3900 + $0x7] sm:$0x1]
          %s3909 = scalar_lea.vmem [#allocation8], 121
          %v3910 = vld [vmem:[%s3909] sm:$0x1]
          %v3911 = vld [vmem:[%s3909 + $0x1] sm:$0x1]
          %v3912 = vld [vmem:[%s3909 + $0x2] sm:$0x1]
          %v3913 = vld [vmem:[%s3909 + $0x3] sm:$0x1]
          %v3914 = vld [vmem:[%s3909 + $0x4] sm:$0x1]
          %v3915 = vld [vmem:[%s3909 + $0x5] sm:$0x1]
          %v3916 = vld [vmem:[%s3909 + $0x6] sm:$0x1]
          %v3917 = vld [vmem:[%s3909 + $0x7] sm:$0x1]
          %v3926 = vlaneseq
          %v3927 = vshrl.u32 %v3926, 7
          %v3928 = vsub.s32 0, %v3927
          %v3929 = vrot.slane %v3883, %v3928
          %v3930 = vlaneseq
          %v3931 = vshrl.u32 %v3930, 7
          %v3932 = vsub.s32 0, %v3931
          %v3933 = vrot.slane %v3884, %v3932
          %v3934 = vlaneseq
          %v3935 = vshrl.u32 %v3934, 7
          %v3936 = vsub.s32 0, %v3935
          %v3937 = vrot.slane %v3885, %v3936
          %v3938 = vlaneseq
          %v3939 = vshrl.u32 %v3938, 7
          %v3940 = vsub.s32 0, %v3939
          %v3941 = vrot.slane %v3886, %v3940
          %v3942 = vlaneseq
          %v3943 = vshrl.u32 %v3942, 7
          %v3944 = vsub.s32 0, %v3943
          %v3945 = vrot.slane %v3887, %v3944
          %v3946 = vlaneseq
          %v3947 = vshrl.u32 %v3946, 7
          %v3948 = vsub.s32 0, %v3947
          %v3949 = vrot.slane %v3888, %v3948
          %v3950 = vlaneseq
          %v3951 = vshrl.u32 %v3950, 7
          %v3952 = vsub.s32 0, %v3951
          %v3953 = vrot.slane %v3889, %v3952
          %v3954 = vlaneseq
          %v3955 = vshrl.u32 %v3954, 7
          %v3956 = vsub.s32 0, %v3955
          %v3957 = vrot.slane %v3890, %v3956
          %v3966 = vmul.f32 %v336, %v3929
          %v3967 = vmul.f32 %v337, %v3929
          %v3968 = vmul.f32 %v338, %v3929
          %v3969 = vmul.f32 %v339, %v3929
          %v3970 = vmul.f32 %v340, %v3929
          %v3971 = vmul.f32 %v341, %v3929
          %v3972 = vmul.f32 %v342, %v3929
          %v3973 = vmul.f32 %v343, %v3929
          %v3974 = vmul.f32 %v344, %v3929
          %v3975 = vmul.f32 %v345, %v3929
          %v3976 = vmul.f32 %v346, %v3929
          %v3977 = vmul.f32 %v347, %v3929
          %v3978 = vmul.f32 %v348, %v3929
          %v3979 = vmul.f32 %v349, %v3929
          %v3980 = vmul.f32 %v350, %v3929
          %v3981 = vmul.f32 %v351, %v3929
          %v3982 = vmul.f32 %v336, %v3933
          %v3983 = vmul.f32 %v337, %v3933
          %v3984 = vmul.f32 %v338, %v3933
          %v3985 = vmul.f32 %v339, %v3933
          %v3986 = vmul.f32 %v340, %v3933
          %v3987 = vmul.f32 %v341, %v3933
          %v3988 = vmul.f32 %v342, %v3933
          %v3989 = vmul.f32 %v343, %v3933
          %v3990 = vmul.f32 %v344, %v3933
          %v3991 = vmul.f32 %v345, %v3933
          %v3992 = vmul.f32 %v346, %v3933
          %v3993 = vmul.f32 %v347, %v3933
          %v3994 = vmul.f32 %v348, %v3933
          %v3995 = vmul.f32 %v349, %v3933
          %v3996 = vmul.f32 %v350, %v3933
          %v3997 = vmul.f32 %v351, %v3933
          %v3998 = vmul.f32 %v336, %v3937
          %v3999 = vmul.f32 %v337, %v3937
          %v4000 = vmul.f32 %v338, %v3937
          %v4001 = vmul.f32 %v339, %v3937
          %v4002 = vmul.f32 %v340, %v3937
          %v4003 = vmul.f32 %v341, %v3937
          %v4004 = vmul.f32 %v342, %v3937
          %v4005 = vmul.f32 %v343, %v3937
          %v4006 = vmul.f32 %v344, %v3937
          %v4007 = vmul.f32 %v345, %v3937
          %v4008 = vmul.f32 %v346, %v3937
          %v4009 = vmul.f32 %v347, %v3937
          %v4010 = vmul.f32 %v348, %v3937
          %v4011 = vmul.f32 %v349, %v3937
          %v4012 = vmul.f32 %v350, %v3937
          %v4013 = vmul.f32 %v351, %v3937
          %v4014 = vmul.f32 %v336, %v3941
          %v4015 = vmul.f32 %v337, %v3941
          %v4016 = vmul.f32 %v338, %v3941
          %v4017 = vmul.f32 %v339, %v3941
          %v4018 = vmul.f32 %v340, %v3941
          %v4019 = vmul.f32 %v341, %v3941
          %v4020 = vmul.f32 %v342, %v3941
          %v4021 = vmul.f32 %v343, %v3941
          %v4022 = vmul.f32 %v344, %v3941
          %v4023 = vmul.f32 %v345, %v3941
          %v4024 = vmul.f32 %v346, %v3941
          %v4025 = vmul.f32 %v347, %v3941
          %v4026 = vmul.f32 %v348, %v3941
          %v4027 = vmul.f32 %v349, %v3941
          %v4028 = vmul.f32 %v350, %v3941
          %v4029 = vmul.f32 %v351, %v3941
          %v4030 = vmul.f32 %v336, %v3945
          %v4031 = vmul.f32 %v337, %v3945
          %v4032 = vmul.f32 %v338, %v3945
          %v4033 = vmul.f32 %v339, %v3945
          %v4034 = vmul.f32 %v340, %v3945
          %v4035 = vmul.f32 %v341, %v3945
          %v4036 = vmul.f32 %v342, %v3945
          %v4037 = vmul.f32 %v343, %v3945
          %v4038 = vmul.f32 %v344, %v3945
          %v4039 = vmul.f32 %v345, %v3945
          %v4040 = vmul.f32 %v346, %v3945
          %v4041 = vmul.f32 %v347, %v3945
          %v4042 = vmul.f32 %v348, %v3945
          %v4043 = vmul.f32 %v349, %v3945
          %v4044 = vmul.f32 %v350, %v3945
          %v4045 = vmul.f32 %v351, %v3945
          %v4046 = vmul.f32 %v336, %v3949
          %v4047 = vmul.f32 %v337, %v3949
          %v4048 = vmul.f32 %v338, %v3949
          %v4049 = vmul.f32 %v339, %v3949
          %v4050 = vmul.f32 %v340, %v3949
          %v4051 = vmul.f32 %v341, %v3949
          %v4052 = vmul.f32 %v342, %v3949
          %v4053 = vmul.f32 %v343, %v3949
          %v4054 = vmul.f32 %v344, %v3949
          %v4055 = vmul.f32 %v345, %v3949
          %v4056 = vmul.f32 %v346, %v3949
          %v4057 = vmul.f32 %v347, %v3949
          %v4058 = vmul.f32 %v348, %v3949
          %v4059 = vmul.f32 %v349, %v3949
          %v4060 = vmul.f32 %v350, %v3949
          %v4061 = vmul.f32 %v351, %v3949
          %v4062 = vmul.f32 %v336, %v3953
          %v4063 = vmul.f32 %v337, %v3953
          %v4064 = vmul.f32 %v338, %v3953
          %v4065 = vmul.f32 %v339, %v3953
          %v4066 = vmul.f32 %v340, %v3953
          %v4067 = vmul.f32 %v341, %v3953
          %v4068 = vmul.f32 %v342, %v3953
          %v4069 = vmul.f32 %v343, %v3953
          %v4070 = vmul.f32 %v344, %v3953
          %v4071 = vmul.f32 %v345, %v3953
          %v4072 = vmul.f32 %v346, %v3953
          %v4073 = vmul.f32 %v347, %v3953
          %v4074 = vmul.f32 %v348, %v3953
          %v4075 = vmul.f32 %v349, %v3953
          %v4076 = vmul.f32 %v350, %v3953
          %v4077 = vmul.f32 %v351, %v3953
          %v4078 = vmul.f32 %v336, %v3957
          %v4079 = vmul.f32 %v337, %v3957
          %v4080 = vmul.f32 %v338, %v3957
          %v4081 = vmul.f32 %v339, %v3957
          %v4082 = vmul.f32 %v340, %v3957
          %v4083 = vmul.f32 %v341, %v3957
          %v4084 = vmul.f32 %v342, %v3957
          %v4085 = vmul.f32 %v343, %v3957
          %v4086 = vmul.f32 %v344, %v3957
          %v4087 = vmul.f32 %v345, %v3957
          %v4088 = vmul.f32 %v346, %v3957
          %v4089 = vmul.f32 %v347, %v3957
          %v4090 = vmul.f32 %v348, %v3957
          %v4091 = vmul.f32 %v349, %v3957
          %v4092 = vmul.f32 %v350, %v3957
          %v4093 = vmul.f32 %v351, %v3957
          %v4102 = vlaneseq
          %v4103 = vshrl.u32 %v4102, 7
          %v4104 = vsub.s32 0, %v4103
          %v4105 = vrot.slane %v3892, %v4104
          %v4106 = vlaneseq
          %v4107 = vshrl.u32 %v4106, 7
          %v4108 = vsub.s32 0, %v4107
          %v4109 = vrot.slane %v3893, %v4108
          %v4110 = vlaneseq
          %v4111 = vshrl.u32 %v4110, 7
          %v4112 = vsub.s32 0, %v4111
          %v4113 = vrot.slane %v3894, %v4112
          %v4114 = vlaneseq
          %v4115 = vshrl.u32 %v4114, 7
          %v4116 = vsub.s32 0, %v4115
          %v4117 = vrot.slane %v3895, %v4116
          %v4118 = vlaneseq
          %v4119 = vshrl.u32 %v4118, 7
          %v4120 = vsub.s32 0, %v4119
          %v4121 = vrot.slane %v3896, %v4120
          %v4122 = vlaneseq
          %v4123 = vshrl.u32 %v4122, 7
          %v4124 = vsub.s32 0, %v4123
          %v4125 = vrot.slane %v3897, %v4124
          %v4126 = vlaneseq
          %v4127 = vshrl.u32 %v4126, 7
          %v4128 = vsub.s32 0, %v4127
          %v4129 = vrot.slane %v3898, %v4128
          %v4130 = vlaneseq
          %v4131 = vshrl.u32 %v4130, 7
          %v4132 = vsub.s32 0, %v4131
          %v4133 = vrot.slane %v3899, %v4132
          %v4142 = vsub.f32 %v3966, %v4105
          %v4143 = vsub.f32 %v3967, %v4105
          %v4144 = vsub.f32 %v3968, %v4105
          %v4145 = vsub.f32 %v3969, %v4105
          %v4146 = vsub.f32 %v3970, %v4105
          %v4147 = vsub.f32 %v3971, %v4105
          %v4148 = vsub.f32 %v3972, %v4105
          %v4149 = vsub.f32 %v3973, %v4105
          %v4150 = vsub.f32 %v3974, %v4105
          %v4151 = vsub.f32 %v3975, %v4105
          %v4152 = vsub.f32 %v3976, %v4105
          %v4153 = vsub.f32 %v3977, %v4105
          %v4154 = vsub.f32 %v3978, %v4105
          %v4155 = vsub.f32 %v3979, %v4105
          %v4156 = vsub.f32 %v3980, %v4105
          %v4157 = vsub.f32 %v3981, %v4105
          %v4158 = vsub.f32 %v3982, %v4109
          %v4159 = vsub.f32 %v3983, %v4109
          %v4160 = vsub.f32 %v3984, %v4109
          %v4161 = vsub.f32 %v3985, %v4109
          %v4162 = vsub.f32 %v3986, %v4109
          %v4163 = vsub.f32 %v3987, %v4109
          %v4164 = vsub.f32 %v3988, %v4109
          %v4165 = vsub.f32 %v3989, %v4109
          %v4166 = vsub.f32 %v3990, %v4109
          %v4167 = vsub.f32 %v3991, %v4109
          %v4168 = vsub.f32 %v3992, %v4109
          %v4169 = vsub.f32 %v3993, %v4109
          %v4170 = vsub.f32 %v3994, %v4109
          %v4171 = vsub.f32 %v3995, %v4109
          %v4172 = vsub.f32 %v3996, %v4109
          %v4173 = vsub.f32 %v3997, %v4109
          %v4174 = vsub.f32 %v3998, %v4113
          %v4175 = vsub.f32 %v3999, %v4113
          %v4176 = vsub.f32 %v4000, %v4113
          %v4177 = vsub.f32 %v4001, %v4113
          %v4178 = vsub.f32 %v4002, %v4113
          %v4179 = vsub.f32 %v4003, %v4113
          %v4180 = vsub.f32 %v4004, %v4113
          %v4181 = vsub.f32 %v4005, %v4113
          %v4182 = vsub.f32 %v4006, %v4113
          %v4183 = vsub.f32 %v4007, %v4113
          %v4184 = vsub.f32 %v4008, %v4113
          %v4185 = vsub.f32 %v4009, %v4113
          %v4186 = vsub.f32 %v4010, %v4113
          %v4187 = vsub.f32 %v4011, %v4113
          %v4188 = vsub.f32 %v4012, %v4113
          %v4189 = vsub.f32 %v4013, %v4113
          %v4190 = vsub.f32 %v4014, %v4117
          %v4191 = vsub.f32 %v4015, %v4117
          %v4192 = vsub.f32 %v4016, %v4117
          %v4193 = vsub.f32 %v4017, %v4117
          %v4194 = vsub.f32 %v4018, %v4117
          %v4195 = vsub.f32 %v4019, %v4117
          %v4196 = vsub.f32 %v4020, %v4117
          %v4197 = vsub.f32 %v4021, %v4117
          %v4198 = vsub.f32 %v4022, %v4117
          %v4199 = vsub.f32 %v4023, %v4117
          %v4200 = vsub.f32 %v4024, %v4117
          %v4201 = vsub.f32 %v4025, %v4117
          %v4202 = vsub.f32 %v4026, %v4117
          %v4203 = vsub.f32 %v4027, %v4117
          %v4204 = vsub.f32 %v4028, %v4117
          %v4205 = vsub.f32 %v4029, %v4117
          %v4206 = vsub.f32 %v4030, %v4121
          %v4207 = vsub.f32 %v4031, %v4121
          %v4208 = vsub.f32 %v4032, %v4121
          %v4209 = vsub.f32 %v4033, %v4121
          %v4210 = vsub.f32 %v4034, %v4121
          %v4211 = vsub.f32 %v4035, %v4121
          %v4212 = vsub.f32 %v4036, %v4121
          %v4213 = vsub.f32 %v4037, %v4121
          %v4214 = vsub.f32 %v4038, %v4121
          %v4215 = vsub.f32 %v4039, %v4121
          %v4216 = vsub.f32 %v4040, %v4121
          %v4217 = vsub.f32 %v4041, %v4121
          %v4218 = vsub.f32 %v4042, %v4121
          %v4219 = vsub.f32 %v4043, %v4121
          %v4220 = vsub.f32 %v4044, %v4121
          %v4221 = vsub.f32 %v4045, %v4121
          %v4222 = vsub.f32 %v4046, %v4125
          %v4223 = vsub.f32 %v4047, %v4125
          %v4224 = vsub.f32 %v4048, %v4125
          %v4225 = vsub.f32 %v4049, %v4125
          %v4226 = vsub.f32 %v4050, %v4125
          %v4227 = vsub.f32 %v4051, %v4125
          %v4228 = vsub.f32 %v4052, %v4125
          %v4229 = vsub.f32 %v4053, %v4125
          %v4230 = vsub.f32 %v4054, %v4125
          %v4231 = vsub.f32 %v4055, %v4125
          %v4232 = vsub.f32 %v4056, %v4125
          %v4233 = vsub.f32 %v4057, %v4125
          %v4234 = vsub.f32 %v4058, %v4125
          %v4235 = vsub.f32 %v4059, %v4125
          %v4236 = vsub.f32 %v4060, %v4125
          %v4237 = vsub.f32 %v4061, %v4125
          %v4238 = vsub.f32 %v4062, %v4129
          %v4239 = vsub.f32 %v4063, %v4129
          %v4240 = vsub.f32 %v4064, %v4129
          %v4241 = vsub.f32 %v4065, %v4129
          %v4242 = vsub.f32 %v4066, %v4129
          %v4243 = vsub.f32 %v4067, %v4129
          %v4244 = vsub.f32 %v4068, %v4129
          %v4245 = vsub.f32 %v4069, %v4129
          %v4246 = vsub.f32 %v4070, %v4129
          %v4247 = vsub.f32 %v4071, %v4129
          %v4248 = vsub.f32 %v4072, %v4129
          %v4249 = vsub.f32 %v4073, %v4129
          %v4250 = vsub.f32 %v4074, %v4129
          %v4251 = vsub.f32 %v4075, %v4129
          %v4252 = vsub.f32 %v4076, %v4129
          %v4253 = vsub.f32 %v4077, %v4129
          %v4254 = vsub.f32 %v4078, %v4133
          %v4255 = vsub.f32 %v4079, %v4133
          %v4256 = vsub.f32 %v4080, %v4133
          %v4257 = vsub.f32 %v4081, %v4133
          %v4258 = vsub.f32 %v4082, %v4133
          %v4259 = vsub.f32 %v4083, %v4133
          %v4260 = vsub.f32 %v4084, %v4133
          %v4261 = vsub.f32 %v4085, %v4133
          %v4262 = vsub.f32 %v4086, %v4133
          %v4263 = vsub.f32 %v4087, %v4133
          %v4264 = vsub.f32 %v4088, %v4133
          %v4265 = vsub.f32 %v4089, %v4133
          %v4266 = vsub.f32 %v4090, %v4133
          %v4267 = vsub.f32 %v4091, %v4133
          %v4268 = vsub.f32 %v4092, %v4133
          %v4269 = vsub.f32 %v4093, %v4133
          %v4278 = vlaneseq
          %v4279 = vshrl.u32 %v4278, 7
          %v4280 = vsub.s32 0, %v4279
          %v4281 = vrot.slane %v3901, %v4280
          %v4282 = vlaneseq
          %v4283 = vshrl.u32 %v4282, 7
          %v4284 = vsub.s32 0, %v4283
          %v4285 = vrot.slane %v3902, %v4284
          %v4286 = vlaneseq
          %v4287 = vshrl.u32 %v4286, 7
          %v4288 = vsub.s32 0, %v4287
          %v4289 = vrot.slane %v3903, %v4288
          %v4290 = vlaneseq
          %v4291 = vshrl.u32 %v4290, 7
          %v4292 = vsub.s32 0, %v4291
          %v4293 = vrot.slane %v3904, %v4292
          %v4294 = vlaneseq
          %v4295 = vshrl.u32 %v4294, 7
          %v4296 = vsub.s32 0, %v4295
          %v4297 = vrot.slane %v3905, %v4296
          %v4298 = vlaneseq
          %v4299 = vshrl.u32 %v4298, 7
          %v4300 = vsub.s32 0, %v4299
          %v4301 = vrot.slane %v3906, %v4300
          %v4302 = vlaneseq
          %v4303 = vshrl.u32 %v4302, 7
          %v4304 = vsub.s32 0, %v4303
          %v4305 = vrot.slane %v3907, %v4304
          %v4306 = vlaneseq
          %v4307 = vshrl.u32 %v4306, 7
          %v4308 = vsub.s32 0, %v4307
          %v4309 = vrot.slane %v3908, %v4308
          %v4318 = vmul.f32 %v336, %v4281
          %v4319 = vmul.f32 %v337, %v4281
          %v4320 = vmul.f32 %v338, %v4281
          %v4321 = vmul.f32 %v339, %v4281
          %v4322 = vmul.f32 %v340, %v4281
          %v4323 = vmul.f32 %v341, %v4281
          %v4324 = vmul.f32 %v342, %v4281
          %v4325 = vmul.f32 %v343, %v4281
          %v4326 = vmul.f32 %v344, %v4281
          %v4327 = vmul.f32 %v345, %v4281
          %v4328 = vmul.f32 %v346, %v4281
          %v4329 = vmul.f32 %v347, %v4281
          %v4330 = vmul.f32 %v348, %v4281
          %v4331 = vmul.f32 %v349, %v4281
          %v4332 = vmul.f32 %v350, %v4281
          %v4333 = vmul.f32 %v351, %v4281
          %v4334 = vmul.f32 %v336, %v4285
          %v4335 = vmul.f32 %v337, %v4285
          %v4336 = vmul.f32 %v338, %v4285
          %v4337 = vmul.f32 %v339, %v4285
          %v4338 = vmul.f32 %v340, %v4285
          %v4339 = vmul.f32 %v341, %v4285
          %v4340 = vmul.f32 %v342, %v4285
          %v4341 = vmul.f32 %v343, %v4285
          %v4342 = vmul.f32 %v344, %v4285
          %v4343 = vmul.f32 %v345, %v4285
          %v4344 = vmul.f32 %v346, %v4285
          %v4345 = vmul.f32 %v347, %v4285
          %v4346 = vmul.f32 %v348, %v4285
          %v4347 = vmul.f32 %v349, %v4285
          %v4348 = vmul.f32 %v350, %v4285
          %v4349 = vmul.f32 %v351, %v4285
          %v4350 = vmul.f32 %v336, %v4289
          %v4351 = vmul.f32 %v337, %v4289
          %v4352 = vmul.f32 %v338, %v4289
          %v4353 = vmul.f32 %v339, %v4289
          %v4354 = vmul.f32 %v340, %v4289
          %v4355 = vmul.f32 %v341, %v4289
          %v4356 = vmul.f32 %v342, %v4289
          %v4357 = vmul.f32 %v343, %v4289
          %v4358 = vmul.f32 %v344, %v4289
          %v4359 = vmul.f32 %v345, %v4289
          %v4360 = vmul.f32 %v346, %v4289
          %v4361 = vmul.f32 %v347, %v4289
          %v4362 = vmul.f32 %v348, %v4289
          %v4363 = vmul.f32 %v349, %v4289
          %v4364 = vmul.f32 %v350, %v4289
          %v4365 = vmul.f32 %v351, %v4289
          %v4366 = vmul.f32 %v336, %v4293
          %v4367 = vmul.f32 %v337, %v4293
          %v4368 = vmul.f32 %v338, %v4293
          %v4369 = vmul.f32 %v339, %v4293
          %v4370 = vmul.f32 %v340, %v4293
          %v4371 = vmul.f32 %v341, %v4293
          %v4372 = vmul.f32 %v342, %v4293
          %v4373 = vmul.f32 %v343, %v4293
          %v4374 = vmul.f32 %v344, %v4293
          %v4375 = vmul.f32 %v345, %v4293
          %v4376 = vmul.f32 %v346, %v4293
          %v4377 = vmul.f32 %v347, %v4293
          %v4378 = vmul.f32 %v348, %v4293
          %v4379 = vmul.f32 %v349, %v4293
          %v4380 = vmul.f32 %v350, %v4293
          %v4381 = vmul.f32 %v351, %v4293
          %v4382 = vmul.f32 %v336, %v4297
          %v4383 = vmul.f32 %v337, %v4297
          %v4384 = vmul.f32 %v338, %v4297
          %v4385 = vmul.f32 %v339, %v4297
          %v4386 = vmul.f32 %v340, %v4297
          %v4387 = vmul.f32 %v341, %v4297
          %v4388 = vmul.f32 %v342, %v4297
          %v4389 = vmul.f32 %v343, %v4297
          %v4390 = vmul.f32 %v344, %v4297
          %v4391 = vmul.f32 %v345, %v4297
          %v4392 = vmul.f32 %v346, %v4297
          %v4393 = vmul.f32 %v347, %v4297
          %v4394 = vmul.f32 %v348, %v4297
          %v4395 = vmul.f32 %v349, %v4297
          %v4396 = vmul.f32 %v350, %v4297
          %v4397 = vmul.f32 %v351, %v4297
          %v4398 = vmul.f32 %v336, %v4301
          %v4399 = vmul.f32 %v337, %v4301
          %v4400 = vmul.f32 %v338, %v4301
          %v4401 = vmul.f32 %v339, %v4301
          %v4402 = vmul.f32 %v340, %v4301
          %v4403 = vmul.f32 %v341, %v4301
          %v4404 = vmul.f32 %v342, %v4301
          %v4405 = vmul.f32 %v343, %v4301
          %v4406 = vmul.f32 %v344, %v4301
          %v4407 = vmul.f32 %v345, %v4301
          %v4408 = vmul.f32 %v346, %v4301
          %v4409 = vmul.f32 %v347, %v4301
          %v4410 = vmul.f32 %v348, %v4301
          %v4411 = vmul.f32 %v349, %v4301
          %v4412 = vmul.f32 %v350, %v4301
          %v4413 = vmul.f32 %v351, %v4301
          %v4414 = vmul.f32 %v336, %v4305
          %v4415 = vmul.f32 %v337, %v4305
          %v4416 = vmul.f32 %v338, %v4305
          %v4417 = vmul.f32 %v339, %v4305
          %v4418 = vmul.f32 %v340, %v4305
          %v4419 = vmul.f32 %v341, %v4305
          %v4420 = vmul.f32 %v342, %v4305
          %v4421 = vmul.f32 %v343, %v4305
          %v4422 = vmul.f32 %v344, %v4305
          %v4423 = vmul.f32 %v345, %v4305
          %v4424 = vmul.f32 %v346, %v4305
          %v4425 = vmul.f32 %v347, %v4305
          %v4426 = vmul.f32 %v348, %v4305
          %v4427 = vmul.f32 %v349, %v4305
          %v4428 = vmul.f32 %v350, %v4305
          %v4429 = vmul.f32 %v351, %v4305
          %v4430 = vmul.f32 %v336, %v4309
          %v4431 = vmul.f32 %v337, %v4309
          %v4432 = vmul.f32 %v338, %v4309
          %v4433 = vmul.f32 %v339, %v4309
          %v4434 = vmul.f32 %v340, %v4309
          %v4435 = vmul.f32 %v341, %v4309
          %v4436 = vmul.f32 %v342, %v4309
          %v4437 = vmul.f32 %v343, %v4309
          %v4438 = vmul.f32 %v344, %v4309
          %v4439 = vmul.f32 %v345, %v4309
          %v4440 = vmul.f32 %v346, %v4309
          %v4441 = vmul.f32 %v347, %v4309
          %v4442 = vmul.f32 %v348, %v4309
          %v4443 = vmul.f32 %v349, %v4309
          %v4444 = vmul.f32 %v350, %v4309
          %v4445 = vmul.f32 %v351, %v4309
          %v4454 = vlaneseq
          %v4455 = vshrl.u32 %v4454, 7
          %v4456 = vsub.s32 0, %v4455
          %v4457 = vrot.slane %v3910, %v4456
          %v4458 = vlaneseq
          %v4459 = vshrl.u32 %v4458, 7
          %v4460 = vsub.s32 0, %v4459
          %v4461 = vrot.slane %v3911, %v4460
          %v4462 = vlaneseq
          %v4463 = vshrl.u32 %v4462, 7
          %v4464 = vsub.s32 0, %v4463
          %v4465 = vrot.slane %v3912, %v4464
          %v4466 = vlaneseq
          %v4467 = vshrl.u32 %v4466, 7
          %v4468 = vsub.s32 0, %v4467
          %v4469 = vrot.slane %v3913, %v4468
          %v4470 = vlaneseq
          %v4471 = vshrl.u32 %v4470, 7
          %v4472 = vsub.s32 0, %v4471
          %v4473 = vrot.slane %v3914, %v4472
          %v4474 = vlaneseq
          %v4475 = vshrl.u32 %v4474, 7
          %v4476 = vsub.s32 0, %v4475
          %v4477 = vrot.slane %v3915, %v4476
          %v4478 = vlaneseq
          %v4479 = vshrl.u32 %v4478, 7
          %v4480 = vsub.s32 0, %v4479
          %v4481 = vrot.slane %v3916, %v4480
          %v4482 = vlaneseq
          %v4483 = vshrl.u32 %v4482, 7
          %v4484 = vsub.s32 0, %v4483
          %v4485 = vrot.slane %v3917, %v4484
          %v4494 = vsub.f32 %v4457, %v4318
          %v4495 = vsub.f32 %v4457, %v4319
          %v4496 = vsub.f32 %v4457, %v4320
          %v4497 = vsub.f32 %v4457, %v4321
          %v4498 = vsub.f32 %v4457, %v4322
          %v4499 = vsub.f32 %v4457, %v4323
          %v4500 = vsub.f32 %v4457, %v4324
          %v4501 = vsub.f32 %v4457, %v4325
          %v4502 = vsub.f32 %v4457, %v4326
          %v4503 = vsub.f32 %v4457, %v4327
          %v4504 = vsub.f32 %v4457, %v4328
          %v4505 = vsub.f32 %v4457, %v4329
          %v4506 = vsub.f32 %v4457, %v4330
          %v4507 = vsub.f32 %v4457, %v4331
          %v4508 = vsub.f32 %v4457, %v4332
          %v4509 = vsub.f32 %v4457, %v4333
          %v4510 = vsub.f32 %v4461, %v4334
          %v4511 = vsub.f32 %v4461, %v4335
          %v4512 = vsub.f32 %v4461, %v4336
          %v4513 = vsub.f32 %v4461, %v4337
          %v4514 = vsub.f32 %v4461, %v4338
          %v4515 = vsub.f32 %v4461, %v4339
          %v4516 = vsub.f32 %v4461, %v4340
          %v4517 = vsub.f32 %v4461, %v4341
          %v4518 = vsub.f32 %v4461, %v4342
          %v4519 = vsub.f32 %v4461, %v4343
          %v4520 = vsub.f32 %v4461, %v4344
          %v4521 = vsub.f32 %v4461, %v4345
          %v4522 = vsub.f32 %v4461, %v4346
          %v4523 = vsub.f32 %v4461, %v4347
          %v4524 = vsub.f32 %v4461, %v4348
          %v4525 = vsub.f32 %v4461, %v4349
          %v4526 = vsub.f32 %v4465, %v4350
          %v4527 = vsub.f32 %v4465, %v4351
          %v4528 = vsub.f32 %v4465, %v4352
          %v4529 = vsub.f32 %v4465, %v4353
          %v4530 = vsub.f32 %v4465, %v4354
          %v4531 = vsub.f32 %v4465, %v4355
          %v4532 = vsub.f32 %v4465, %v4356
          %v4533 = vsub.f32 %v4465, %v4357
          %v4534 = vsub.f32 %v4465, %v4358
          %v4535 = vsub.f32 %v4465, %v4359
          %v4536 = vsub.f32 %v4465, %v4360
          %v4537 = vsub.f32 %v4465, %v4361
          %v4538 = vsub.f32 %v4465, %v4362
          %v4539 = vsub.f32 %v4465, %v4363
          %v4540 = vsub.f32 %v4465, %v4364
          %v4541 = vsub.f32 %v4465, %v4365
          %v4542 = vsub.f32 %v4469, %v4366
          %v4543 = vsub.f32 %v4469, %v4367
          %v4544 = vsub.f32 %v4469, %v4368
          %v4545 = vsub.f32 %v4469, %v4369
          %v4546 = vsub.f32 %v4469, %v4370
          %v4547 = vsub.f32 %v4469, %v4371
          %v4548 = vsub.f32 %v4469, %v4372
          %v4549 = vsub.f32 %v4469, %v4373
          %v4550 = vsub.f32 %v4469, %v4374
          %v4551 = vsub.f32 %v4469, %v4375
          %v4552 = vsub.f32 %v4469, %v4376
          %v4553 = vsub.f32 %v4469, %v4377
          %v4554 = vsub.f32 %v4469, %v4378
          %v4555 = vsub.f32 %v4469, %v4379
          %v4556 = vsub.f32 %v4469, %v4380
          %v4557 = vsub.f32 %v4469, %v4381
          %v4558 = vsub.f32 %v4473, %v4382
          %v4559 = vsub.f32 %v4473, %v4383
          %v4560 = vsub.f32 %v4473, %v4384
          %v4561 = vsub.f32 %v4473, %v4385
          %v4562 = vsub.f32 %v4473, %v4386
          %v4563 = vsub.f32 %v4473, %v4387
          %v4564 = vsub.f32 %v4473, %v4388
          %v4565 = vsub.f32 %v4473, %v4389
          %v4566 = vsub.f32 %v4473, %v4390
          %v4567 = vsub.f32 %v4473, %v4391
          %v4568 = vsub.f32 %v4473, %v4392
          %v4569 = vsub.f32 %v4473, %v4393
          %v4570 = vsub.f32 %v4473, %v4394
          %v4571 = vsub.f32 %v4473, %v4395
          %v4572 = vsub.f32 %v4473, %v4396
          %v4573 = vsub.f32 %v4473, %v4397
          %v4574 = vsub.f32 %v4477, %v4398
          %v4575 = vsub.f32 %v4477, %v4399
          %v4576 = vsub.f32 %v4477, %v4400
          %v4577 = vsub.f32 %v4477, %v4401
          %v4578 = vsub.f32 %v4477, %v4402
          %v4579 = vsub.f32 %v4477, %v4403
          %v4580 = vsub.f32 %v4477, %v4404
          %v4581 = vsub.f32 %v4477, %v4405
          %v4582 = vsub.f32 %v4477, %v4406
          %v4583 = vsub.f32 %v4477, %v4407
          %v4584 = vsub.f32 %v4477, %v4408
          %v4585 = vsub.f32 %v4477, %v4409
          %v4586 = vsub.f32 %v4477, %v4410
          %v4587 = vsub.f32 %v4477, %v4411
          %v4588 = vsub.f32 %v4477, %v4412
          %v4589 = vsub.f32 %v4477, %v4413
          %v4590 = vsub.f32 %v4481, %v4414
          %v4591 = vsub.f32 %v4481, %v4415
          %v4592 = vsub.f32 %v4481, %v4416
          %v4593 = vsub.f32 %v4481, %v4417
          %v4594 = vsub.f32 %v4481, %v4418
          %v4595 = vsub.f32 %v4481, %v4419
          %v4596 = vsub.f32 %v4481, %v4420
          %v4597 = vsub.f32 %v4481, %v4421
          %v4598 = vsub.f32 %v4481, %v4422
          %v4599 = vsub.f32 %v4481, %v4423
          %v4600 = vsub.f32 %v4481, %v4424
          %v4601 = vsub.f32 %v4481, %v4425
          %v4602 = vsub.f32 %v4481, %v4426
          %v4603 = vsub.f32 %v4481, %v4427
          %v4604 = vsub.f32 %v4481, %v4428
          %v4605 = vsub.f32 %v4481, %v4429
          %v4606 = vsub.f32 %v4485, %v4430
          %v4607 = vsub.f32 %v4485, %v4431
          %v4608 = vsub.f32 %v4485, %v4432
          %v4609 = vsub.f32 %v4485, %v4433
          %v4610 = vsub.f32 %v4485, %v4434
          %v4611 = vsub.f32 %v4485, %v4435
          %v4612 = vsub.f32 %v4485, %v4436
          %v4613 = vsub.f32 %v4485, %v4437
          %v4614 = vsub.f32 %v4485, %v4438
          %v4615 = vsub.f32 %v4485, %v4439
          %v4616 = vsub.f32 %v4485, %v4440
          %v4617 = vsub.f32 %v4485, %v4441
          %v4618 = vsub.f32 %v4485, %v4442
          %v4619 = vsub.f32 %v4485, %v4443
          %v4620 = vsub.f32 %v4485, %v4444
          %v4621 = vsub.f32 %v4485, %v4445
          %v4622 = vmul.f32 %v3738, %v4142
          %v4623 = vmul.f32 %v3739, %v4143
          %v4624 = vmul.f32 %v3740, %v4144
          %v4625 = vmul.f32 %v3741, %v4145
          %v4626 = vmul.f32 %v3742, %v4146
          %v4627 = vmul.f32 %v3743, %v4147
          %v4628 = vmul.f32 %v3744, %v4148
          %v4629 = vmul.f32 %v3745, %v4149
          %v4630 = vmul.f32 %v3746, %v4150
          %v4631 = vmul.f32 %v3747, %v4151
          %v4632 = vmul.f32 %v3748, %v4152
          %v4633 = vmul.f32 %v3749, %v4153
          %v4634 = vmul.f32 %v3750, %v4154
          %v4635 = vmul.f32 %v3751, %v4155
          %v4636 = vmul.f32 %v3752, %v4156
          %v4637 = vmul.f32 %v3753, %v4157
          %v4638 = vmul.f32 %v3754, %v4158
          %v4639 = vmul.f32 %v3755, %v4159
          %v4640 = vmul.f32 %v3756, %v4160
          %v4641 = vmul.f32 %v3757, %v4161
          %v4642 = vmul.f32 %v3758, %v4162
          %v4643 = vmul.f32 %v3759, %v4163
          %v4644 = vmul.f32 %v3760, %v4164
          %v4645 = vmul.f32 %v3761, %v4165
          %v4646 = vmul.f32 %v3762, %v4166
          %v4647 = vmul.f32 %v3763, %v4167
          %v4648 = vmul.f32 %v3764, %v4168
          %v4649 = vmul.f32 %v3765, %v4169
          %v4650 = vmul.f32 %v3766, %v4170
          %v4651 = vmul.f32 %v3767, %v4171
          %v4652 = vmul.f32 %v3768, %v4172
          %v4653 = vmul.f32 %v3769, %v4173
          %v4654 = vmul.f32 %v3770, %v4174
          %v4655 = vmul.f32 %v3771, %v4175
          %v4656 = vmul.f32 %v3772, %v4176
          %v4657 = vmul.f32 %v3773, %v4177
          %v4658 = vmul.f32 %v3774, %v4178
          %v4659 = vmul.f32 %v3775, %v4179
          %v4660 = vmul.f32 %v3776, %v4180
          %v4661 = vmul.f32 %v3777, %v4181
          %v4662 = vmul.f32 %v3778, %v4182
          %v4663 = vmul.f32 %v3779, %v4183
          %v4664 = vmul.f32 %v3780, %v4184
          %v4665 = vmul.f32 %v3781, %v4185
          %v4666 = vmul.f32 %v3782, %v4186
          %v4667 = vmul.f32 %v3783, %v4187
          %v4668 = vmul.f32 %v3784, %v4188
          %v4669 = vmul.f32 %v3785, %v4189
          %v4670 = vmul.f32 %v3786, %v4190
          %v4671 = vmul.f32 %v3787, %v4191
          %v4672 = vmul.f32 %v3788, %v4192
          %v4673 = vmul.f32 %v3789, %v4193
          %v4674 = vmul.f32 %v3790, %v4194
          %v4675 = vmul.f32 %v3791, %v4195
          %v4676 = vmul.f32 %v3792, %v4196
          %v4677 = vmul.f32 %v3793, %v4197
          %v4678 = vmul.f32 %v3794, %v4198
          %v4679 = vmul.f32 %v3795, %v4199
          %v4680 = vmul.f32 %v3796, %v4200
          %v4681 = vmul.f32 %v3797, %v4201
          %v4682 = vmul.f32 %v3798, %v4202
          %v4683 = vmul.f32 %v3799, %v4203
          %v4684 = vmul.f32 %v3800, %v4204
          %v4685 = vmul.f32 %v3801, %v4205
          %v4686 = vmul.f32 %v3802, %v4206
          %v4687 = vmul.f32 %v3803, %v4207
          %v4688 = vmul.f32 %v3804, %v4208
          %v4689 = vmul.f32 %v3805, %v4209
          %v4690 = vmul.f32 %v3806, %v4210
          %v4691 = vmul.f32 %v3807, %v4211
          %v4692 = vmul.f32 %v3808, %v4212
          %v4693 = vmul.f32 %v3809, %v4213
          %v4694 = vmul.f32 %v3810, %v4214
          %v4695 = vmul.f32 %v3811, %v4215
          %v4696 = vmul.f32 %v3812, %v4216
          %v4697 = vmul.f32 %v3813, %v4217
          %v4698 = vmul.f32 %v3814, %v4218
          %v4699 = vmul.f32 %v3815, %v4219
          %v4700 = vmul.f32 %v3816, %v4220
          %v4701 = vmul.f32 %v3817, %v4221
          %v4702 = vmul.f32 %v3818, %v4222
          %v4703 = vmul.f32 %v3819, %v4223
          %v4704 = vmul.f32 %v3820, %v4224
          %v4705 = vmul.f32 %v3821, %v4225
          %v4706 = vmul.f32 %v3822, %v4226
          %v4707 = vmul.f32 %v3823, %v4227
          %v4708 = vmul.f32 %v3824, %v4228
          %v4709 = vmul.f32 %v3825, %v4229
          %v4710 = vmul.f32 %v3826, %v4230
          %v4711 = vmul.f32 %v3827, %v4231
          %v4712 = vmul.f32 %v3828, %v4232
          %v4713 = vmul.f32 %v3829, %v4233
          %v4714 = vmul.f32 %v3830, %v4234
          %v4715 = vmul.f32 %v3831, %v4235
          %v4716 = vmul.f32 %v3832, %v4236
          %v4717 = vmul.f32 %v3833, %v4237
          %v4718 = vmul.f32 %v3834, %v4238
          %v4719 = vmul.f32 %v3835, %v4239
          %v4720 = vmul.f32 %v3836, %v4240
          %v4721 = vmul.f32 %v3837, %v4241
          %v4722 = vmul.f32 %v3838, %v4242
          %v4723 = vmul.f32 %v3839, %v4243
          %v4724 = vmul.f32 %v3840, %v4244
          %v4725 = vmul.f32 %v3841, %v4245
          %v4726 = vmul.f32 %v3842, %v4246
          %v4727 = vmul.f32 %v3843, %v4247
          %v4728 = vmul.f32 %v3844, %v4248
          %v4729 = vmul.f32 %v3845, %v4249
          %v4730 = vmul.f32 %v3846, %v4250
          %v4731 = vmul.f32 %v3847, %v4251
          %v4732 = vmul.f32 %v3848, %v4252
          %v4733 = vmul.f32 %v3849, %v4253
          %v4734 = vmul.f32 %v3850, %v4254
          %v4735 = vmul.f32 %v3851, %v4255
          %v4736 = vmul.f32 %v3852, %v4256
          %v4737 = vmul.f32 %v3853, %v4257
          %v4738 = vmul.f32 %v3854, %v4258
          %v4739 = vmul.f32 %v3855, %v4259
          %v4740 = vmul.f32 %v3856, %v4260
          %v4741 = vmul.f32 %v3857, %v4261
          %v4742 = vmul.f32 %v3858, %v4262
          %v4743 = vmul.f32 %v3859, %v4263
          %v4744 = vmul.f32 %v3860, %v4264
          %v4745 = vmul.f32 %v3861, %v4265
          %v4746 = vmul.f32 %v3862, %v4266
          %v4747 = vmul.f32 %v3863, %v4267
          %v4748 = vmul.f32 %v3864, %v4268
          %v4749 = vmul.f32 %v3865, %v4269
          %v4750 = vmul.f32 %v3754, %v4494
          %v4751 = vmul.f32 %v3755, %v4495
          %v4752 = vmul.f32 %v3756, %v4496
          %v4753 = vmul.f32 %v3757, %v4497
          %v4754 = vmul.f32 %v3758, %v4498
          %v4755 = vmul.f32 %v3759, %v4499
          %v4756 = vmul.f32 %v3760, %v4500
          %v4757 = vmul.f32 %v3761, %v4501
          %v4758 = vmul.f32 %v3762, %v4502
          %v4759 = vmul.f32 %v3763, %v4503
          %v4760 = vmul.f32 %v3764, %v4504
          %v4761 = vmul.f32 %v3765, %v4505
          %v4762 = vmul.f32 %v3766, %v4506
          %v4763 = vmul.f32 %v3767, %v4507
          %v4764 = vmul.f32 %v3768, %v4508
          %v4765 = vmul.f32 %v3769, %v4509
          %v4766 = vmul.f32 %v3770, %v4510
          %v4767 = vmul.f32 %v3771, %v4511
          %v4768 = vmul.f32 %v3772, %v4512
          %v4769 = vmul.f32 %v3773, %v4513
          %v4770 = vmul.f32 %v3774, %v4514
          %v4771 = vmul.f32 %v3775, %v4515
          %v4772 = vmul.f32 %v3776, %v4516
          %v4773 = vmul.f32 %v3777, %v4517
          %v4774 = vmul.f32 %v3778, %v4518
          %v4775 = vmul.f32 %v3779, %v4519
          %v4776 = vmul.f32 %v3780, %v4520
          %v4777 = vmul.f32 %v3781, %v4521
          %v4778 = vmul.f32 %v3782, %v4522
          %v4779 = vmul.f32 %v3783, %v4523
          %v4780 = vmul.f32 %v3784, %v4524
          %v4781 = vmul.f32 %v3785, %v4525
          %v4782 = vmul.f32 %v3786, %v4526
          %v4783 = vmul.f32 %v3787, %v4527
          %v4784 = vmul.f32 %v3788, %v4528
          %v4785 = vmul.f32 %v3789, %v4529
          %v4786 = vmul.f32 %v3790, %v4530
          %v4787 = vmul.f32 %v3791, %v4531
          %v4788 = vmul.f32 %v3792, %v4532
          %v4789 = vmul.f32 %v3793, %v4533
          %v4790 = vmul.f32 %v3794, %v4534
          %v4791 = vmul.f32 %v3795, %v4535
          %v4792 = vmul.f32 %v3796, %v4536
          %v4793 = vmul.f32 %v3797, %v4537
          %v4794 = vmul.f32 %v3798, %v4538
          %v4795 = vmul.f32 %v3799, %v4539
          %v4796 = vmul.f32 %v3800, %v4540
          %v4797 = vmul.f32 %v3801, %v4541
          %v4798 = vmul.f32 %v3802, %v4542
          %v4799 = vmul.f32 %v3803, %v4543
          %v4800 = vmul.f32 %v3804, %v4544
          %v4801 = vmul.f32 %v3805, %v4545
          %v4802 = vmul.f32 %v3806, %v4546
          %v4803 = vmul.f32 %v3807, %v4547
          %v4804 = vmul.f32 %v3808, %v4548
          %v4805 = vmul.f32 %v3809, %v4549
          %v4806 = vmul.f32 %v3810, %v4550
          %v4807 = vmul.f32 %v3811, %v4551
          %v4808 = vmul.f32 %v3812, %v4552
          %v4809 = vmul.f32 %v3813, %v4553
          %v4810 = vmul.f32 %v3814, %v4554
          %v4811 = vmul.f32 %v3815, %v4555
          %v4812 = vmul.f32 %v3816, %v4556
          %v4813 = vmul.f32 %v3817, %v4557
          %v4814 = vmul.f32 %v3818, %v4558
          %v4815 = vmul.f32 %v3819, %v4559
          %v4816 = vmul.f32 %v3820, %v4560
          %v4817 = vmul.f32 %v3821, %v4561
          %v4818 = vmul.f32 %v3822, %v4562
          %v4819 = vmul.f32 %v3823, %v4563
          %v4820 = vmul.f32 %v3824, %v4564
          %v4821 = vmul.f32 %v3825, %v4565
          %v4822 = vmul.f32 %v3826, %v4566
          %v4823 = vmul.f32 %v3827, %v4567
          %v4824 = vmul.f32 %v3828, %v4568
          %v4825 = vmul.f32 %v3829, %v4569
          %v4826 = vmul.f32 %v3830, %v4570
          %v4827 = vmul.f32 %v3831, %v4571
          %v4828 = vmul.f32 %v3832, %v4572
          %v4829 = vmul.f32 %v3833, %v4573
          %v4830 = vmul.f32 %v3834, %v4574
          %v4831 = vmul.f32 %v3835, %v4575
          %v4832 = vmul.f32 %v3836, %v4576
          %v4833 = vmul.f32 %v3837, %v4577
          %v4834 = vmul.f32 %v3838, %v4578
          %v4835 = vmul.f32 %v3839, %v4579
          %v4836 = vmul.f32 %v3840, %v4580
          %v4837 = vmul.f32 %v3841, %v4581
          %v4838 = vmul.f32 %v3842, %v4582
          %v4839 = vmul.f32 %v3843, %v4583
          %v4840 = vmul.f32 %v3844, %v4584
          %v4841 = vmul.f32 %v3845, %v4585
          %v4842 = vmul.f32 %v3846, %v4586
          %v4843 = vmul.f32 %v3847, %v4587
          %v4844 = vmul.f32 %v3848, %v4588
          %v4845 = vmul.f32 %v3849, %v4589
          %v4846 = vmul.f32 %v3850, %v4590
          %v4847 = vmul.f32 %v3851, %v4591
          %v4848 = vmul.f32 %v3852, %v4592
          %v4849 = vmul.f32 %v3853, %v4593
          %v4850 = vmul.f32 %v3854, %v4594
          %v4851 = vmul.f32 %v3855, %v4595
          %v4852 = vmul.f32 %v3856, %v4596
          %v4853 = vmul.f32 %v3857, %v4597
          %v4854 = vmul.f32 %v3858, %v4598
          %v4855 = vmul.f32 %v3859, %v4599
          %v4856 = vmul.f32 %v3860, %v4600
          %v4857 = vmul.f32 %v3861, %v4601
          %v4858 = vmul.f32 %v3862, %v4602
          %v4859 = vmul.f32 %v3863, %v4603
          %v4860 = vmul.f32 %v3864, %v4604
          %v4861 = vmul.f32 %v3865, %v4605
          %v4862 = vmul.f32 %v3866, %v4606
          %v4863 = vmul.f32 %v3867, %v4607
          %v4864 = vmul.f32 %v3868, %v4608
          %v4865 = vmul.f32 %v3869, %v4609
          %v4866 = vmul.f32 %v3870, %v4610
          %v4867 = vmul.f32 %v3871, %v4611
          %v4868 = vmul.f32 %v3872, %v4612
          %v4869 = vmul.f32 %v3873, %v4613
          %v4870 = vmul.f32 %v3874, %v4614
          %v4871 = vmul.f32 %v3875, %v4615
          %v4872 = vmul.f32 %v3876, %v4616
          %v4873 = vmul.f32 %v3877, %v4617
          %v4874 = vmul.f32 %v3878, %v4618
          %v4875 = vmul.f32 %v3879, %v4619
          %v4876 = vmul.f32 %v3880, %v4620
          %v4877 = vmul.f32 %v3881, %v4621
          %v4878 = vadd.f32 %v4622, %v4750
          %v4879 = vadd.f32 %v4623, %v4751
          %v4880 = vadd.f32 %v4624, %v4752
          %v4881 = vadd.f32 %v4625, %v4753
          %v4882 = vadd.f32 %v4626, %v4754
          %v4883 = vadd.f32 %v4627, %v4755
          %v4884 = vadd.f32 %v4628, %v4756
          %v4885 = vadd.f32 %v4629, %v4757
          %v4886 = vadd.f32 %v4630, %v4758
          %v4887 = vadd.f32 %v4631, %v4759
          %v4888 = vadd.f32 %v4632, %v4760
          %v4889 = vadd.f32 %v4633, %v4761
          %v4890 = vadd.f32 %v4634, %v4762
          %v4891 = vadd.f32 %v4635, %v4763
          %v4892 = vadd.f32 %v4636, %v4764
          %v4893 = vadd.f32 %v4637, %v4765
          %v4894 = vadd.f32 %v4638, %v4766
          %v4895 = vadd.f32 %v4639, %v4767
          %v4896 = vadd.f32 %v4640, %v4768
          %v4897 = vadd.f32 %v4641, %v4769
          %v4898 = vadd.f32 %v4642, %v4770
          %v4899 = vadd.f32 %v4643, %v4771
          %v4900 = vadd.f32 %v4644, %v4772
          %v4901 = vadd.f32 %v4645, %v4773
          %v4902 = vadd.f32 %v4646, %v4774
          %v4903 = vadd.f32 %v4647, %v4775
          %v4904 = vadd.f32 %v4648, %v4776
          %v4905 = vadd.f32 %v4649, %v4777
          %v4906 = vadd.f32 %v4650, %v4778
          %v4907 = vadd.f32 %v4651, %v4779
          %v4908 = vadd.f32 %v4652, %v4780
          %v4909 = vadd.f32 %v4653, %v4781
          %v4910 = vadd.f32 %v4654, %v4782
          %v4911 = vadd.f32 %v4655, %v4783
          %v4912 = vadd.f32 %v4656, %v4784
          %v4913 = vadd.f32 %v4657, %v4785
          %v4914 = vadd.f32 %v4658, %v4786
          %v4915 = vadd.f32 %v4659, %v4787
          %v4916 = vadd.f32 %v4660, %v4788
          %v4917 = vadd.f32 %v4661, %v4789
          %v4918 = vadd.f32 %v4662, %v4790
          %v4919 = vadd.f32 %v4663, %v4791
          %v4920 = vadd.f32 %v4664, %v4792
          %v4921 = vadd.f32 %v4665, %v4793
          %v4922 = vadd.f32 %v4666, %v4794
          %v4923 = vadd.f32 %v4667, %v4795
          %v4924 = vadd.f32 %v4668, %v4796
          %v4925 = vadd.f32 %v4669, %v4797
          %v4926 = vadd.f32 %v4670, %v4798
          %v4927 = vadd.f32 %v4671, %v4799
          %v4928 = vadd.f32 %v4672, %v4800
          %v4929 = vadd.f32 %v4673, %v4801
          %v4930 = vadd.f32 %v4674, %v4802
          %v4931 = vadd.f32 %v4675, %v4803
          %v4932 = vadd.f32 %v4676, %v4804
          %v4933 = vadd.f32 %v4677, %v4805
          %v4934 = vadd.f32 %v4678, %v4806
          %v4935 = vadd.f32 %v4679, %v4807
          %v4936 = vadd.f32 %v4680, %v4808
          %v4937 = vadd.f32 %v4681, %v4809
          %v4938 = vadd.f32 %v4682, %v4810
          %v4939 = vadd.f32 %v4683, %v4811
          %v4940 = vadd.f32 %v4684, %v4812
          %v4941 = vadd.f32 %v4685, %v4813
          %v4942 = vadd.f32 %v4686, %v4814
          %v4943 = vadd.f32 %v4687, %v4815
          %v4944 = vadd.f32 %v4688, %v4816
          %v4945 = vadd.f32 %v4689, %v4817
          %v4946 = vadd.f32 %v4690, %v4818
          %v4947 = vadd.f32 %v4691, %v4819
          %v4948 = vadd.f32 %v4692, %v4820
          %v4949 = vadd.f32 %v4693, %v4821
          %v4950 = vadd.f32 %v4694, %v4822
          %v4951 = vadd.f32 %v4695, %v4823
          %v4952 = vadd.f32 %v4696, %v4824
          %v4953 = vadd.f32 %v4697, %v4825
          %v4954 = vadd.f32 %v4698, %v4826
          %v4955 = vadd.f32 %v4699, %v4827
          %v4956 = vadd.f32 %v4700, %v4828
          %v4957 = vadd.f32 %v4701, %v4829
          %v4958 = vadd.f32 %v4702, %v4830
          %v4959 = vadd.f32 %v4703, %v4831
          %v4960 = vadd.f32 %v4704, %v4832
          %v4961 = vadd.f32 %v4705, %v4833
          %v4962 = vadd.f32 %v4706, %v4834
          %v4963 = vadd.f32 %v4707, %v4835
          %v4964 = vadd.f32 %v4708, %v4836
          %v4965 = vadd.f32 %v4709, %v4837
          %v4966 = vadd.f32 %v4710, %v4838
          %v4967 = vadd.f32 %v4711, %v4839
          %v4968 = vadd.f32 %v4712, %v4840
          %v4969 = vadd.f32 %v4713, %v4841
          %v4970 = vadd.f32 %v4714, %v4842
          %v4971 = vadd.f32 %v4715, %v4843
          %v4972 = vadd.f32 %v4716, %v4844
          %v4973 = vadd.f32 %v4717, %v4845
          %v4974 = vadd.f32 %v4718, %v4846
          %v4975 = vadd.f32 %v4719, %v4847
          %v4976 = vadd.f32 %v4720, %v4848
          %v4977 = vadd.f32 %v4721, %v4849
          %v4978 = vadd.f32 %v4722, %v4850
          %v4979 = vadd.f32 %v4723, %v4851
          %v4980 = vadd.f32 %v4724, %v4852
          %v4981 = vadd.f32 %v4725, %v4853
          %v4982 = vadd.f32 %v4726, %v4854
          %v4983 = vadd.f32 %v4727, %v4855
          %v4984 = vadd.f32 %v4728, %v4856
          %v4985 = vadd.f32 %v4729, %v4857
          %v4986 = vadd.f32 %v4730, %v4858
          %v4987 = vadd.f32 %v4731, %v4859
          %v4988 = vadd.f32 %v4732, %v4860
          %v4989 = vadd.f32 %v4733, %v4861
          %v4990 = vadd.f32 %v4734, %v4862
          %v4991 = vadd.f32 %v4735, %v4863
          %v4992 = vadd.f32 %v4736, %v4864
          %v4993 = vadd.f32 %v4737, %v4865
          %v4994 = vadd.f32 %v4738, %v4866
          %v4995 = vadd.f32 %v4739, %v4867
          %v4996 = vadd.f32 %v4740, %v4868
          %v4997 = vadd.f32 %v4741, %v4869
          %v4998 = vadd.f32 %v4742, %v4870
          %v4999 = vadd.f32 %v4743, %v4871
          %v5000 = vadd.f32 %v4744, %v4872
          %v5001 = vadd.f32 %v4745, %v4873
          %v5002 = vadd.f32 %v4746, %v4874
          %v5003 = vadd.f32 %v4747, %v4875
          %v5004 = vadd.f32 %v4748, %v4876
          %v5005 = vadd.f32 %v4749, %v4877
          %5006 = vst [vmem:[#allocation2] sm:$0xff] %v4878
          %5007 = vst [vmem:[#allocation2 + $0x40] sm:$0xff] %v4879
          %5008 = vst [vmem:[#allocation2 + $0x80] sm:$0xff] %v4880
          %5009 = vst [vmem:[#allocation2 + $0xc0] sm:$0xff] %v4881
          %5010 = vst [vmem:[#allocation2 + $0x100] sm:$0xff] %v4882
          %5011 = vst [vmem:[#allocation2 + $0x140] sm:$0xff] %v4883
          %5012 = vst [vmem:[#allocation2 + $0x180] sm:$0xff] %v4884
          %5013 = vst [vmem:[#allocation2 + $0x1c0] sm:$0xff] %v4885
          %5014 = vst [vmem:[#allocation2 + $0x200] sm:$0xff] %v4886
          %5015 = vst [vmem:[#allocation2 + $0x240] sm:$0xff] %v4887
          %5016 = vst [vmem:[#allocation2 + $0x280] sm:$0xff] %v4888
          %5017 = vst [vmem:[#allocation2 + $0x2c0] sm:$0xff] %v4889
          %5018 = vst [vmem:[#allocation2 + $0x300] sm:$0xff] %v4890
          %5019 = vst [vmem:[#allocation2 + $0x340] sm:$0xff] %v4891
          %5020 = vst [vmem:[#allocation2 + $0x380] sm:$0xff] %v4892
          %5021 = vst [vmem:[#allocation2 + $0x3c0] sm:$0xff] %v4893
          %5022 = vst [vmem:[#allocation2 + $0x8] sm:$0xff] %v4894
          %5023 = vst [vmem:[#allocation2 + $0x48] sm:$0xff] %v4895
          %5024 = vst [vmem:[#allocation2 + $0x88] sm:$0xff] %v4896
          %5025 = vst [vmem:[#allocation2 + $0xc8] sm:$0xff] %v4897
          %5026 = vst [vmem:[#allocation2 + $0x108] sm:$0xff] %v4898
          %5027 = vst [vmem:[#allocation2 + $0x148] sm:$0xff] %v4899
          %5028 = vst [vmem:[#allocation2 + $0x188] sm:$0xff] %v4900
          %5029 = vst [vmem:[#allocation2 + $0x1c8] sm:$0xff] %v4901
          %5030 = vst [vmem:[#allocation2 + $0x208] sm:$0xff] %v4902
          %5031 = vst [vmem:[#allocation2 + $0x248] sm:$0xff] %v4903
          %5032 = vst [vmem:[#allocation2 + $0x288] sm:$0xff] %v4904
          %5033 = vst [vmem:[#allocation2 + $0x2c8] sm:$0xff] %v4905
          %5034 = vst [vmem:[#allocation2 + $0x308] sm:$0xff] %v4906
          %5035 = vst [vmem:[#allocation2 + $0x348] sm:$0xff] %v4907
          %5036 = vst [vmem:[#allocation2 + $0x388] sm:$0xff] %v4908
          %5037 = vst [vmem:[#allocation2 + $0x3c8] sm:$0xff] %v4909
          %5038 = vst [vmem:[#allocation2 + $0x10] sm:$0xff] %v4910
          %5039 = vst [vmem:[#allocation2 + $0x50] sm:$0xff] %v4911
          %5040 = vst [vmem:[#allocation2 + $0x90] sm:$0xff] %v4912
          %5041 = vst [vmem:[#allocation2 + $0xd0] sm:$0xff] %v4913
          %5042 = vst [vmem:[#allocation2 + $0x110] sm:$0xff] %v4914
          %5043 = vst [vmem:[#allocation2 + $0x150] sm:$0xff] %v4915
          %5044 = vst [vmem:[#allocation2 + $0x190] sm:$0xff] %v4916
          %5045 = vst [vmem:[#allocation2 + $0x1d0] sm:$0xff] %v4917
          %5046 = vst [vmem:[#allocation2 + $0x210] sm:$0xff] %v4918
          %5047 = vst [vmem:[#allocation2 + $0x250] sm:$0xff] %v4919
          %5048 = vst [vmem:[#allocation2 + $0x290] sm:$0xff] %v4920
          %5049 = vst [vmem:[#allocation2 + $0x2d0] sm:$0xff] %v4921
          %5050 = vst [vmem:[#allocation2 + $0x310] sm:$0xff] %v4922
          %5051 = vst [vmem:[#allocation2 + $0x350] sm:$0xff] %v4923
          %5052 = vst [vmem:[#allocation2 + $0x390] sm:$0xff] %v4924
          %5053 = vst [vmem:[#allocation2 + $0x3d0] sm:$0xff] %v4925
          %5054 = vst [vmem:[#allocation2 + $0x18] sm:$0xff] %v4926
          %5055 = vst [vmem:[#allocation2 + $0x58] sm:$0xff] %v4927
          %5056 = vst [vmem:[#allocation2 + $0x98] sm:$0xff] %v4928
          %5057 = vst [vmem:[#allocation2 + $0xd8] sm:$0xff] %v4929
          %5058 = vst [vmem:[#allocation2 + $0x118] sm:$0xff] %v4930
          %5059 = vst [vmem:[#allocation2 + $0x158] sm:$0xff] %v4931
          %5060 = vst [vmem:[#allocation2 + $0x198] sm:$0xff] %v4932
          %5061 = vst [vmem:[#allocation2 + $0x1d8] sm:$0xff] %v4933
          %5062 = vst [vmem:[#allocation2 + $0x218] sm:$0xff] %v4934
          %5063 = vst [vmem:[#allocation2 + $0x258] sm:$0xff] %v4935
          %5064 = vst [vmem:[#allocation2 + $0x298] sm:$0xff] %v4936
          %5065 = vst [vmem:[#allocation2 + $0x2d8] sm:$0xff] %v4937
          %5066 = vst [vmem:[#allocation2 + $0x318] sm:$0xff] %v4938
          %5067 = vst [vmem:[#allocation2 + $0x358] sm:$0xff] %v4939
          %5068 = vst [vmem:[#allocation2 + $0x398] sm:$0xff] %v4940
          %5069 = vst [vmem:[#allocation2 + $0x3d8] sm:$0xff] %v4941
          %5070 = vst [vmem:[#allocation2 + $0x20] sm:$0xff] %v4942
          %5071 = vst [vmem:[#allocation2 + $0x60] sm:$0xff] %v4943
          %5072 = vst [vmem:[#allocation2 + $0xa0] sm:$0xff] %v4944
          %5073 = vst [vmem:[#allocation2 + $0xe0] sm:$0xff] %v4945
          %5074 = vst [vmem:[#allocation2 + $0x120] sm:$0xff] %v4946
          %5075 = vst [vmem:[#allocation2 + $0x160] sm:$0xff] %v4947
          %5076 = vst [vmem:[#allocation2 + $0x1a0] sm:$0xff] %v4948
          %5077 = vst [vmem:[#allocation2 + $0x1e0] sm:$0xff] %v4949
          %5078 = vst [vmem:[#allocation2 + $0x220] sm:$0xff] %v4950
          %5079 = vst [vmem:[#allocation2 + $0x260] sm:$0xff] %v4951
          %5080 = vst [vmem:[#allocation2 + $0x2a0] sm:$0xff] %v4952
          %5081 = vst [vmem:[#allocation2 + $0x2e0] sm:$0xff] %v4953
          %5082 = vst [vmem:[#allocation2 + $0x320] sm:$0xff] %v4954
          %5083 = vst [vmem:[#allocation2 + $0x360] sm:$0xff] %v4955
          %5084 = vst [vmem:[#allocation2 + $0x3a0] sm:$0xff] %v4956
          %5085 = vst [vmem:[#allocation2 + $0x3e0] sm:$0xff] %v4957
          %5086 = vst [vmem:[#allocation2 + $0x28] sm:$0xff] %v4958
          %5087 = vst [vmem:[#allocation2 + $0x68] sm:$0xff] %v4959
          %5088 = vst [vmem:[#allocation2 + $0xa8] sm:$0xff] %v4960
          %5089 = vst [vmem:[#allocation2 + $0xe8] sm:$0xff] %v4961
          %5090 = vst [vmem:[#allocation2 + $0x128] sm:$0xff] %v4962
          %5091 = vst [vmem:[#allocation2 + $0x168] sm:$0xff] %v4963
          %5092 = vst [vmem:[#allocation2 + $0x1a8] sm:$0xff] %v4964
          %5093 = vst [vmem:[#allocation2 + $0x1e8] sm:$0xff] %v4965
          %5094 = vst [vmem:[#allocation2 + $0x228] sm:$0xff] %v4966
          %5095 = vst [vmem:[#allocation2 + $0x268] sm:$0xff] %v4967
          %5096 = vst [vmem:[#allocation2 + $0x2a8] sm:$0xff] %v4968
          %5097 = vst [vmem:[#allocation2 + $0x2e8] sm:$0xff] %v4969
          %5098 = vst [vmem:[#allocation2 + $0x328] sm:$0xff] %v4970
          %5099 = vst [vmem:[#allocation2 + $0x368] sm:$0xff] %v4971
          %5100 = vst [vmem:[#allocation2 + $0x3a8] sm:$0xff] %v4972
          %5101 = vst [vmem:[#allocation2 + $0x3e8] sm:$0xff] %v4973
          %5102 = vst [vmem:[#allocation2 + $0x30] sm:$0xff] %v4974
          %5103 = vst [vmem:[#allocation2 + $0x70] sm:$0xff] %v4975
          %5104 = vst [vmem:[#allocation2 + $0xb0] sm:$0xff] %v4976
          %5105 = vst [vmem:[#allocation2 + $0xf0] sm:$0xff] %v4977
          %5106 = vst [vmem:[#allocation2 + $0x130] sm:$0xff] %v4978
          %5107 = vst [vmem:[#allocation2 + $0x170] sm:$0xff] %v4979
          %5108 = vst [vmem:[#allocation2 + $0x1b0] sm:$0xff] %v4980
          %5109 = vst [vmem:[#allocation2 + $0x1f0] sm:$0xff] %v4981
          %5110 = vst [vmem:[#allocation2 + $0x230] sm:$0xff] %v4982
          %5111 = vst [vmem:[#allocation2 + $0x270] sm:$0xff] %v4983
          %5112 = vst [vmem:[#allocation2 + $0x2b0] sm:$0xff] %v4984
          %5113 = vst [vmem:[#allocation2 + $0x2f0] sm:$0xff] %v4985
          %5114 = vst [vmem:[#allocation2 + $0x330] sm:$0xff] %v4986
          %5115 = vst [vmem:[#allocation2 + $0x370] sm:$0xff] %v4987
          %5116 = vst [vmem:[#allocation2 + $0x3b0] sm:$0xff] %v4988
          %5117 = vst [vmem:[#allocation2 + $0x3f0] sm:$0xff] %v4989
          %5118 = vst [vmem:[#allocation2 + $0x38] sm:$0xff] %v4990
          %5119 = vst [vmem:[#allocation2 + $0x78] sm:$0xff] %v4991
          %5120 = vst [vmem:[#allocation2 + $0xb8] sm:$0xff] %v4992
          %5121 = vst [vmem:[#allocation2 + $0xf8] sm:$0xff] %v4993
          %5122 = vst [vmem:[#allocation2 + $0x138] sm:$0xff] %v4994
          %5123 = vst [vmem:[#allocation2 + $0x178] sm:$0xff] %v4995
          %5124 = vst [vmem:[#allocation2 + $0x1b8] sm:$0xff] %v4996
          %5125 = vst [vmem:[#allocation2 + $0x1f8] sm:$0xff] %v4997
          %5126 = vst [vmem:[#allocation2 + $0x238] sm:$0xff] %v4998
          %5127 = vst [vmem:[#allocation2 + $0x278] sm:$0xff] %v4999
          %5128 = vst [vmem:[#allocation2 + $0x2b8] sm:$0xff] %v5000
          %5129 = vst [vmem:[#allocation2 + $0x2f8] sm:$0xff] %v5001
          %5130 = vst [vmem:[#allocation2 + $0x338] sm:$0xff] %v5002
          %5131 = vst [vmem:[#allocation2 + $0x378] sm:$0xff] %v5003
          %5132 = vst [vmem:[#allocation2 + $0x3b8] sm:$0xff] %v5004
          %5133 = vst [vmem:[#allocation2 + $0x3f8] sm:$0xff] %v5005
        $region64: #{tpu_custom_call.1} parent=39 // pred_fallthru
          _
        %v5134 = vld [vmem:[#allocation9] sm:$0xff]
        %v5135 = vld [vmem:[#allocation9 + $0x8] sm:$0xff]
        %v5136 = vld [vmem:[#allocation9 + $0x10] sm:$0xff]
        %v5137 = vld [vmem:[#allocation9 + $0x18] sm:$0xff]
        %v5138 = vld [vmem:[#allocation9 + $0x20] sm:$0xff]
        %v5139 = vld [vmem:[#allocation9 + $0x28] sm:$0xff]
        %v5140 = vld [vmem:[#allocation9 + $0x30] sm:$0xff]
        %v5141 = vld [vmem:[#allocation9 + $0x38] sm:$0xff]
        %v5142 = vld [vmem:[#allocation9 + $0x40] sm:$0xff]
        %v5143 = vld [vmem:[#allocation9 + $0x48] sm:$0xff]
        %v5144 = vld [vmem:[#allocation9 + $0x50] sm:$0xff]
        %v5145 = vld [vmem:[#allocation9 + $0x58] sm:$0xff]
        %v5146 = vld [vmem:[#allocation9 + $0x60] sm:$0xff]
        %v5147 = vld [vmem:[#allocation9 + $0x68] sm:$0xff]
        %v5148 = vld [vmem:[#allocation9 + $0x70] sm:$0xff]
        %v5149 = vld [vmem:[#allocation9 + $0x78] sm:$0xff]
        %v5150 = vld [vmem:[#allocation9 + $0x80] sm:$0xff]
        %v5151 = vld [vmem:[#allocation9 + $0x88] sm:$0xff]
        %v5152 = vld [vmem:[#allocation9 + $0x90] sm:$0xff]
        %v5153 = vld [vmem:[#allocation9 + $0x98] sm:$0xff]
        %v5154 = vld [vmem:[#allocation9 + $0xa0] sm:$0xff]
        %v5155 = vld [vmem:[#allocation9 + $0xa8] sm:$0xff]
        %v5156 = vld [vmem:[#allocation9 + $0xb0] sm:$0xff]
        %v5157 = vld [vmem:[#allocation9 + $0xb8] sm:$0xff]
        %v5158 = vld [vmem:[#allocation9 + $0xc0] sm:$0xff]
        %v5159 = vld [vmem:[#allocation9 + $0xc8] sm:$0xff]
        %v5160 = vld [vmem:[#allocation9 + $0xd0] sm:$0xff]
        %v5161 = vld [vmem:[#allocation9 + $0xd8] sm:$0xff]
        %v5162 = vld [vmem:[#allocation9 + $0xe0] sm:$0xff]
        %v5163 = vld [vmem:[#allocation9 + $0xe8] sm:$0xff]
        %v5164 = vld [vmem:[#allocation9 + $0xf0] sm:$0xff]
        %v5165 = vld [vmem:[#allocation9 + $0xf8] sm:$0xff]
        %5166 = vmatprep.subr.mxu0 %v5135
        %5167 = vmatpush1.msra.mxu0 %v5134
        %5168 = vmatprep.subr.mxu0 %v5137
        %5169 = vmatpush1.msra.mxu0 %v5136
        %5170 = vmatprep.subr.mxu0 %v5139
        %5171 = vmatpush1.msra.mxu0 %v5138
        %5172 = vmatprep.subr.mxu0 %v5141
        %5173 = vmatpush1.msra.mxu0 %v5140
        %5174 = vmatprep.subr.mxu0 %v5143
        %5175 = vmatpush1.msra.mxu0 %v5142
        %5176 = vmatprep.subr.mxu0 %v5145
        %5177 = vmatpush1.msra.mxu0 %v5144
        %5178 = vmatprep.subr.mxu0 %v5147
        %5179 = vmatpush1.msra.mxu0 %v5146
        %5180 = vmatprep.subr.mxu0 %v5149
        %5181 = vmatpush1.msra.mxu0 %v5148
        %5182 = vmatprep.subr.mxu0 %v5151
        %5183 = vmatpush1.msra.mxu0 %v5150
        %5184 = vmatprep.subr.mxu0 %v5153
        %5185 = vmatpush1.msra.mxu0 %v5152
        %5186 = vmatprep.subr.mxu0 %v5155
        %5187 = vmatpush1.msra.mxu0 %v5154
        %5188 = vmatprep.subr.mxu0 %v5157
        %5189 = vmatpush1.msra.mxu0 %v5156
        %5190 = vmatprep.subr.mxu0 %v5159
        %5191 = vmatpush1.msra.mxu0 %v5158
        %5192 = vmatprep.subr.mxu0 %v5161
        %5193 = vmatpush1.msra.mxu0 %v5160
        %5194 = vmatprep.subr.mxu0 %v5163
        %5195 = vmatpush1.msra.mxu0 %v5162
        %5196 = vmatprep.subr.mxu0 %v5165
        %5197 = vmatpush1.msra.mxu0 %v5164
        %5198 = vmatprep.subr.mxu0 0.0
        %5199 = vmatpush1.msra.mxu0 0.0
        %5200 = vmatprep.subr.mxu0 0.0
        %5201 = vmatpush1.msra.mxu0 0.0
        %5202 = vmatprep.subr.mxu0 0.0
        %5203 = vmatpush1.msra.mxu0 0.0
        %5204 = vmatprep.subr.mxu0 0.0
        %5205 = vmatpush1.msra.mxu0 0.0
        %5206 = vmatprep.subr.mxu0 0.0
        %5207 = vmatpush1.msra.mxu0 0.0
        %5208 = vmatprep.subr.mxu0 0.0
        %5209 = vmatpush1.msra.mxu0 0.0
        %5210 = vmatprep.subr.mxu0 0.0
        %5211 = vmatpush1.msra.mxu0 0.0
        %5212 = vmatprep.subr.mxu0 0.0
        %5213 = vmatpush1.msra.mxu0 0.0
        %5214 = vmatprep.subr.mxu0 0.0
        %5215 = vmatpush1.msra.mxu0 0.0
        %5216 = vmatprep.subr.mxu0 0.0
        %5217 = vmatpush1.msra.mxu0 0.0
        %5218 = vmatprep.subr.mxu0 0.0
        %5219 = vmatpush1.msra.mxu0 0.0
        %5220 = vmatprep.subr.mxu0 0.0
        %5221 = vmatpush1.msra.mxu0 0.0
        %5222 = vmatprep.subr.mxu0 0.0
        %5223 = vmatpush1.msra.mxu0 0.0
        %5224 = vmatprep.subr.mxu0 0.0
        %5225 = vmatpush1.msra.mxu0 0.0
        %5226 = vmatprep.subr.mxu0 0.0
        %5227 = vmatpush1.msra.mxu0 0.0
        %5228 = vmatprep.subr.mxu0 0.0
        %5229 = vmatpush1.msra.mxu0 0.0
        %5230 = vmatprep.mubr.f32.mxu0 0.0
        %5231 = vmatmul.mubr.f32.gmra.mrb[0].mxu0 %v336
        %v5232 = vpop.f32.mrb[0].mxu0
        %v5233 = vadd.f32 0.0, %v5232
        %v5234 = vpop.f32.mrb[0].mxu0
        %v5235 = vadd.f32 0.0, %v5234
        %5236 = vmatprep.mubr.f32.mxu0 0.0
        %5237 = vmatmul.mubr.f32.gmra.mrb[0].mxu0 %v337
        %v5238 = vpop.f32.mrb[0].mxu0
        %v5239 = vadd.f32 0.0, %v5238
        %v5240 = vpop.f32.mrb[0].mxu0
        %v5241 = vadd.f32 0.0, %v5240
        %5242 = vmatprep.mubr.f32.mxu0 0.0
        %5243 = vmatmul.mubr.f32.gmra.mrb[0].mxu0 %v338
        %v5244 = vpop.f32.mrb[0].mxu0
        %v5245 = vadd.f32 0.0, %v5244
        %v5246 = vpop.f32.mrb[0].mxu0
        %v5247 = vadd.f32 0.0, %v5246
        %5248 = vmatprep.mubr.f32.mxu0 0.0
        %5249 = vmatmul.mubr.f32.gmra.mrb[0].mxu0 %v339
        %v5250 = vpop.f32.mrb[0].mxu0
        %v5251 = vadd.f32 0.0, %v5250
        %v5252 = vpop.f32.mrb[0].mxu0
        %v5253 = vadd.f32 0.0, %v5252
        %5254 = vmatprep.mubr.f32.mxu0 0.0
        %5255 = vmatmul.mubr.f32.gmra.mrb[0].mxu0 %v340
        %v5256 = vpop.f32.mrb[0].mxu0
        %v5257 = vadd.f32 0.0, %v5256
        %v5258 = vpop.f32.mrb[0].mxu0
        %v5259 = vadd.f32 0.0, %v5258
        %5260 = vmatprep.mubr.f32.mxu0 0.0
        %5261 = vmatmul.mubr.f32.gmra.mrb[0].mxu0 %v341
        %v5262 = vpop.f32.mrb[0].mxu0
        %v5263 = vadd.f32 0.0, %v5262
        %v5264 = vpop.f32.mrb[0].mxu0
        %v5265 = vadd.f32 0.0, %v5264
        %5266 = vmatprep.mubr.f32.mxu0 0.0
        %5267 = vmatmul.mubr.f32.gmra.mrb[0].mxu0 %v342
        %v5268 = vpop.f32.mrb[0].mxu0
        %v5269 = vadd.f32 0.0, %v5268
        %v5270 = vpop.f32.mrb[0].mxu0
        %v5271 = vadd.f32 0.0, %v5270
        %5272 = vmatprep.mubr.f32.mxu0 0.0
        %5273 = vmatmul.mubr.f32.gmra.mrb[0].mxu0 %v343
        %v5274 = vpop.f32.mrb[0].mxu0
        %v5275 = vadd.f32 0.0, %v5274
        %v5276 = vpop.f32.mrb[0].mxu0
        %v5277 = vadd.f32 0.0, %v5276
        %5278 = vmatprep.mubr.f32.mxu0 0.0
        %5279 = vmatmul.mubr.f32.gmra.mrb[0].mxu0 %v344
        %v5280 = vpop.f32.mrb[0].mxu0
        %v5281 = vadd.f32 0.0, %v5280
        %v5282 = vpop.f32.mrb[0].mxu0
        %v5283 = vadd.f32 0.0, %v5282
        %5284 = vmatprep.mubr.f32.mxu0 0.0
        %5285 = vmatmul.mubr.f32.gmra.mrb[0].mxu0 %v345
        %v5286 = vpop.f32.mrb[0].mxu0
        %v5287 = vadd.f32 0.0, %v5286
        %v5288 = vpop.f32.mrb[0].mxu0
        %v5289 = vadd.f32 0.0, %v5288
        %5290 = vmatprep.mubr.f32.mxu0 0.0
        %5291 = vmatmul.mubr.f32.gmra.mrb[0].mxu0 %v346
        %v5292 = vpop.f32.mrb[0].mxu0
        %v5293 = vadd.f32 0.0, %v5292
        %v5294 = vpop.f32.mrb[0].mxu0
        %v5295 = vadd.f32 0.0, %v5294
        %5296 = vmatprep.mubr.f32.mxu0 0.0
        %5297 = vmatmul.mubr.f32.gmra.mrb[0].mxu0 %v347
        %v5298 = vpop.f32.mrb[0].mxu0
        %v5299 = vadd.f32 0.0, %v5298
        %v5300 = vpop.f32.mrb[0].mxu0
        %v5301 = vadd.f32 0.0, %v5300
        %5302 = vmatprep.mubr.f32.mxu0 0.0
        %5303 = vmatmul.mubr.f32.gmra.mrb[0].mxu0 %v348
        %v5304 = vpop.f32.mrb[0].mxu0
        %v5305 = vadd.f32 0.0, %v5304
        %v5306 = vpop.f32.mrb[0].mxu0
        %v5307 = vadd.f32 0.0, %v5306
        %5308 = vmatprep.mubr.f32.mxu0 0.0
        %5309 = vmatmul.mubr.f32.gmra.mrb[0].mxu0 %v349
        %v5310 = vpop.f32.mrb[0].mxu0
        %v5311 = vadd.f32 0.0, %v5310
        %v5312 = vpop.f32.mrb[0].mxu0
        %v5313 = vadd.f32 0.0, %v5312
        %5314 = vmatprep.mubr.f32.mxu0 0.0
        %5315 = vmatmul.mubr.f32.gmra.mrb[0].mxu0 %v350
        %v5316 = vpop.f32.mrb[0].mxu0
        %v5317 = vadd.f32 0.0, %v5316
        %v5318 = vpop.f32.mrb[0].mxu0
        %v5319 = vadd.f32 0.0, %v5318
        %5320 = vmatprep.mubr.f32.mxu0 0.0
        %5321 = vmatmul.mubr.f32.gmra.mrb[0].mxu0 %v351
        %v5322 = vpop.f32.mrb[0].mxu0
        %v5323 = vadd.f32 0.0, %v5322
        %v5324 = vpop.f32.mrb[0].mxu0
        %v5325 = vadd.f32 0.0, %v5324
        %5326 = vdwg.mxu0
        %v5327 = vsub.f32 0.0, %v5233
        %v5328 = vsub.f32 0.0, %v5235
        %v5329 = vsub.f32 0.0, %v5239
        %v5330 = vsub.f32 0.0, %v5241
        %v5331 = vsub.f32 0.0, %v5245
        %v5332 = vsub.f32 0.0, %v5247
        %v5333 = vsub.f32 0.0, %v5251
        %v5334 = vsub.f32 0.0, %v5253
        %v5335 = vsub.f32 0.0, %v5257
        %v5336 = vsub.f32 0.0, %v5259
        %v5337 = vsub.f32 0.0, %v5263
        %v5338 = vsub.f32 0.0, %v5265
        %v5339 = vsub.f32 0.0, %v5269
        %v5340 = vsub.f32 0.0, %v5271
        %v5341 = vsub.f32 0.0, %v5275
        %v5342 = vsub.f32 0.0, %v5277
        %v5343 = vsub.f32 0.0, %v5281
        %v5344 = vsub.f32 0.0, %v5283
        %v5345 = vsub.f32 0.0, %v5287
        %v5346 = vsub.f32 0.0, %v5289
        %v5347 = vsub.f32 0.0, %v5293
        %v5348 = vsub.f32 0.0, %v5295
        %v5349 = vsub.f32 0.0, %v5299
        %v5350 = vsub.f32 0.0, %v5301
        %v5351 = vsub.f32 0.0, %v5305
        %v5352 = vsub.f32 0.0, %v5307
        %v5353 = vsub.f32 0.0, %v5311
        %v5354 = vsub.f32 0.0, %v5313
        %v5355 = vsub.f32 0.0, %v5317
        %v5356 = vsub.f32 0.0, %v5319
        %v5357 = vsub.f32 0.0, %v5323
        %v5358 = vsub.f32 0.0, %v5325
        %v5359 = vmul.f32 %v5327, 1.442695
        %v5360 = vpow.pop %v5359
        %v5361 = vmul.f32 %v5328, 1.442695
        %v5362 = vpow.pop %v5361
        %v5363 = vmul.f32 %v5329, 1.442695
        %v5364 = vpow.pop %v5363
        %v5365 = vmul.f32 %v5330, 1.442695
        %v5366 = vpow.pop %v5365
        %v5367 = vmul.f32 %v5331, 1.442695
        %v5368 = vpow.pop %v5367
        %v5369 = vmul.f32 %v5332, 1.442695
        %v5370 = vpow.pop %v5369
        %v5371 = vmul.f32 %v5333, 1.442695
        %v5372 = vpow.pop %v5371
        %v5373 = vmul.f32 %v5334, 1.442695
        %v5374 = vpow.pop %v5373
        %v5375 = vmul.f32 %v5335, 1.442695
        %v5376 = vpow.pop %v5375
        %v5377 = vmul.f32 %v5336, 1.442695
        %v5378 = vpow.pop %v5377
        %v5379 = vmul.f32 %v5337, 1.442695
        %v5380 = vpow.pop %v5379
        %v5381 = vmul.f32 %v5338, 1.442695
        %v5382 = vpow.pop %v5381
        %v5383 = vmul.f32 %v5339, 1.442695
        %v5384 = vpow.pop %v5383
        %v5385 = vmul.f32 %v5340, 1.442695
        %v5386 = vpow.pop %v5385
        %v5387 = vmul.f32 %v5341, 1.442695
        %v5388 = vpow.pop %v5387
        %v5389 = vmul.f32 %v5342, 1.442695
        %v5390 = vpow.pop %v5389
        %v5391 = vmul.f32 %v5343, 1.442695
        %v5392 = vpow.pop %v5391
        %v5393 = vmul.f32 %v5344, 1.442695
        %v5394 = vpow.pop %v5393
        %v5395 = vmul.f32 %v5345, 1.442695
        %v5396 = vpow.pop %v5395
        %v5397 = vmul.f32 %v5346, 1.442695
        %v5398 = vpow.pop %v5397
        %v5399 = vmul.f32 %v5347, 1.442695
        %v5400 = vpow.pop %v5399
        %v5401 = vmul.f32 %v5348, 1.442695
        %v5402 = vpow.pop %v5401
        %v5403 = vmul.f32 %v5349, 1.442695
        %v5404 = vpow.pop %v5403
        %v5405 = vmul.f32 %v5350, 1.442695
        %v5406 = vpow.pop %v5405
        %v5407 = vmul.f32 %v5351, 1.442695
        %v5408 = vpow.pop %v5407
        %v5409 = vmul.f32 %v5352, 1.442695
        %v5410 = vpow.pop %v5409
        %v5411 = vmul.f32 %v5353, 1.442695
        %v5412 = vpow.pop %v5411
        %v5413 = vmul.f32 %v5354, 1.442695
        %v5414 = vpow.pop %v5413
        %v5415 = vmul.f32 %v5355, 1.442695
        %v5416 = vpow.pop %v5415
        %v5417 = vmul.f32 %v5356, 1.442695
        %v5418 = vpow.pop %v5417
        %v5419 = vmul.f32 %v5357, 1.442695
        %v5420 = vpow.pop %v5419
        %v5421 = vmul.f32 %v5358, 1.442695
        %v5422 = vpow.pop %v5421
        %v5423 = vadd.f32 %v5360, 1.0
        %v5424 = vadd.f32 %v5362, 1.0
        %v5425 = vadd.f32 %v5364, 1.0
        %v5426 = vadd.f32 %v5366, 1.0
        %v5427 = vadd.f32 %v5368, 1.0
        %v5428 = vadd.f32 %v5370, 1.0
        %v5429 = vadd.f32 %v5372, 1.0
        %v5430 = vadd.f32 %v5374, 1.0
        %v5431 = vadd.f32 %v5376, 1.0
        %v5432 = vadd.f32 %v5378, 1.0
        %v5433 = vadd.f32 %v5380, 1.0
        %v5434 = vadd.f32 %v5382, 1.0
        %v5435 = vadd.f32 %v5384, 1.0
        %v5436 = vadd.f32 %v5386, 1.0
        %v5437 = vadd.f32 %v5388, 1.0
        %v5438 = vadd.f32 %v5390, 1.0
        %v5439 = vadd.f32 %v5392, 1.0
        %v5440 = vadd.f32 %v5394, 1.0
        %v5441 = vadd.f32 %v5396, 1.0
        %v5442 = vadd.f32 %v5398, 1.0
        %v5443 = vadd.f32 %v5400, 1.0
        %v5444 = vadd.f32 %v5402, 1.0
        %v5445 = vadd.f32 %v5404, 1.0
        %v5446 = vadd.f32 %v5406, 1.0
        %v5447 = vadd.f32 %v5408, 1.0
        %v5448 = vadd.f32 %v5410, 1.0
        %v5449 = vadd.f32 %v5412, 1.0
        %v5450 = vadd.f32 %v5414, 1.0
        %v5451 = vadd.f32 %v5416, 1.0
        %v5452 = vadd.f32 %v5418, 1.0
        %v5453 = vadd.f32 %v5420, 1.0
        %v5454 = vadd.f32 %v5422, 1.0
        %v5455 = vrcp.pop %v5423
        %v5456 = vrcp.pop %v5424
        %v5457 = vrcp.pop %v5425
        %v5458 = vrcp.pop %v5426
        %v5459 = vrcp.pop %v5427
        %v5460 = vrcp.pop %v5428
        %v5461 = vrcp.pop %v5429
        %v5462 = vrcp.pop %v5430
        %v5463 = vrcp.pop %v5431
        %v5464 = vrcp.pop %v5432
        %v5465 = vrcp.pop %v5433
        %v5466 = vrcp.pop %v5434
        %v5467 = vrcp.pop %v5435
        %v5468 = vrcp.pop %v5436
        %v5469 = vrcp.pop %v5437
        %v5470 = vrcp.pop %v5438
        %v5471 = vrcp.pop %v5439
        %v5472 = vrcp.pop %v5440
        %v5473 = vrcp.pop %v5441
        %v5474 = vrcp.pop %v5442
        %v5475 = vrcp.pop %v5443
        %v5476 = vrcp.pop %v5444
        %v5477 = vrcp.pop %v5445
        %v5478 = vrcp.pop %v5446
        %v5479 = vrcp.pop %v5447
        %v5480 = vrcp.pop %v5448
        %v5481 = vrcp.pop %v5449
        %v5482 = vrcp.pop %v5450
        %v5483 = vrcp.pop %v5451
        %v5484 = vrcp.pop %v5452
        %v5485 = vrcp.pop %v5453
        %v5486 = vrcp.pop %v5454
        %v5487 = vmul.f32 %v5233, %v5455
        %v5488 = vmul.f32 %v5235, %v5456
        %v5489 = vmul.f32 %v5239, %v5457
        %v5490 = vmul.f32 %v5241, %v5458
        %v5491 = vmul.f32 %v5245, %v5459
        %v5492 = vmul.f32 %v5247, %v5460
        %v5493 = vmul.f32 %v5251, %v5461
        %v5494 = vmul.f32 %v5253, %v5462
        %v5495 = vmul.f32 %v5257, %v5463
        %v5496 = vmul.f32 %v5259, %v5464
        %v5497 = vmul.f32 %v5263, %v5465
        %v5498 = vmul.f32 %v5265, %v5466
        %v5499 = vmul.f32 %v5269, %v5467
        %v5500 = vmul.f32 %v5271, %v5468
        %v5501 = vmul.f32 %v5275, %v5469
        %v5502 = vmul.f32 %v5277, %v5470
        %v5503 = vmul.f32 %v5281, %v5471
        %v5504 = vmul.f32 %v5283, %v5472
        %v5505 = vmul.f32 %v5287, %v5473
        %v5506 = vmul.f32 %v5289, %v5474
        %v5507 = vmul.f32 %v5293, %v5475
        %v5508 = vmul.f32 %v5295, %v5476
        %v5509 = vmul.f32 %v5299, %v5477
        %v5510 = vmul.f32 %v5301, %v5478
        %v5511 = vmul.f32 %v5305, %v5479
        %v5512 = vmul.f32 %v5307, %v5480
        %v5513 = vmul.f32 %v5311, %v5481
        %v5514 = vmul.f32 %v5313, %v5482
        %v5515 = vmul.f32 %v5317, %v5483
        %v5516 = vmul.f32 %v5319, %v5484
        %v5517 = vmul.f32 %v5323, %v5485
        %v5518 = vmul.f32 %v5325, %v5486
        %v5519 = vld [vmem:[#allocation2] sm:$0xff]
        %v5520 = vld [vmem:[#allocation2 + $0x8] sm:$0xff]
        %v5521 = vld [vmem:[#allocation2 + $0x10] sm:$0xff]
        %v5522 = vld [vmem:[#allocation2 + $0x18] sm:$0xff]
        %v5523 = vld [vmem:[#allocation2 + $0x20] sm:$0xff]
        %v5524 = vld [vmem:[#allocation2 + $0x28] sm:$0xff]
        %v5525 = vld [vmem:[#allocation2 + $0x30] sm:$0xff]
        %v5526 = vld [vmem:[#allocation2 + $0x38] sm:$0xff]
        %v5527 = vld [vmem:[#allocation2 + $0x40] sm:$0xff]
        %v5528 = vld [vmem:[#allocation2 + $0x48] sm:$0xff]
        %v5529 = vld [vmem:[#allocation2 + $0x50] sm:$0xff]
        %v5530 = vld [vmem:[#allocation2 + $0x58] sm:$0xff]
        %v5531 = vld [vmem:[#allocation2 + $0x60] sm:$0xff]
        %v5532 = vld [vmem:[#allocation2 + $0x68] sm:$0xff]
        %v5533 = vld [vmem:[#allocation2 + $0x70] sm:$0xff]
        %v5534 = vld [vmem:[#allocation2 + $0x78] sm:$0xff]
        %v5535 = vld [vmem:[#allocation2 + $0x80] sm:$0xff]
        %v5536 = vld [vmem:[#allocation2 + $0x88] sm:$0xff]
        %v5537 = vld [vmem:[#allocation2 + $0x90] sm:$0xff]
        %v5538 = vld [vmem:[#allocation2 + $0x98] sm:$0xff]
        %v5539 = vld [vmem:[#allocation2 + $0xa0] sm:$0xff]
        %v5540 = vld [vmem:[#allocation2 + $0xa8] sm:$0xff]
        %v5541 = vld [vmem:[#allocation2 + $0xb0] sm:$0xff]
        %v5542 = vld [vmem:[#allocation2 + $0xb8] sm:$0xff]
        %v5543 = vld [vmem:[#allocation2 + $0xc0] sm:$0xff]
        %v5544 = vld [vmem:[#allocation2 + $0xc8] sm:$0xff]
        %v5545 = vld [vmem:[#allocation2 + $0xd0] sm:$0xff]
        %v5546 = vld [vmem:[#allocation2 + $0xd8] sm:$0xff]
        %v5547 = vld [vmem:[#allocation2 + $0xe0] sm:$0xff]
        %v5548 = vld [vmem:[#allocation2 + $0xe8] sm:$0xff]
        %v5549 = vld [vmem:[#allocation2 + $0xf0] sm:$0xff]
        %v5550 = vld [vmem:[#allocation2 + $0xf8] sm:$0xff]
        %v5551 = vld [vmem:[#allocation2 + $0x100] sm:$0xff]
        %v5552 = vld [vmem:[#allocation2 + $0x108] sm:$0xff]
        %v5553 = vld [vmem:[#allocation2 + $0x110] sm:$0xff]
        %v5554 = vld [vmem:[#allocation2 + $0x118] sm:$0xff]
        %v5555 = vld [vmem:[#allocation2 + $0x120] sm:$0xff]
        %v5556 = vld [vmem:[#allocation2 + $0x128] sm:$0xff]
        %v5557 = vld [vmem:[#allocation2 + $0x130] sm:$0xff]
        %v5558 = vld [vmem:[#allocation2 + $0x138] sm:$0xff]
        %v5559 = vld [vmem:[#allocation2 + $0x140] sm:$0xff]
        %v5560 = vld [vmem:[#allocation2 + $0x148] sm:$0xff]
        %v5561 = vld [vmem:[#allocation2 + $0x150] sm:$0xff]
        %v5562 = vld [vmem:[#allocation2 + $0x158] sm:$0xff]
        %v5563 = vld [vmem:[#allocation2 + $0x160] sm:$0xff]
        %v5564 = vld [vmem:[#allocation2 + $0x168] sm:$0xff]
        %v5565 = vld [vmem:[#allocation2 + $0x170] sm:$0xff]
        %v5566 = vld [vmem:[#allocation2 + $0x178] sm:$0xff]
        %v5567 = vld [vmem:[#allocation2 + $0x180] sm:$0xff]
        %v5568 = vld [vmem:[#allocation2 + $0x188] sm:$0xff]
        %v5569 = vld [vmem:[#allocation2 + $0x190] sm:$0xff]
        %v5570 = vld [vmem:[#allocation2 + $0x198] sm:$0xff]
        %v5571 = vld [vmem:[#allocation2 + $0x1a0] sm:$0xff]
        %v5572 = vld [vmem:[#allocation2 + $0x1a8] sm:$0xff]
        %v5573 = vld [vmem:[#allocation2 + $0x1b0] sm:$0xff]
        %v5574 = vld [vmem:[#allocation2 + $0x1b8] sm:$0xff]
        %v5575 = vld [vmem:[#allocation2 + $0x1c0] sm:$0xff]
        %v5576 = vld [vmem:[#allocation2 + $0x1c8] sm:$0xff]
        %v5577 = vld [vmem:[#allocation2 + $0x1d0] sm:$0xff]
        %v5578 = vld [vmem:[#allocation2 + $0x1d8] sm:$0xff]
        %v5579 = vld [vmem:[#allocation2 + $0x1e0] sm:$0xff]
        %v5580 = vld [vmem:[#allocation2 + $0x1e8] sm:$0xff]
        %v5581 = vld [vmem:[#allocation2 + $0x1f0] sm:$0xff]
        %v5582 = vld [vmem:[#allocation2 + $0x1f8] sm:$0xff]
        %v5583 = vld [vmem:[#allocation2 + $0x200] sm:$0xff]
        %v5584 = vld [vmem:[#allocation2 + $0x208] sm:$0xff]
        %v5585 = vld [vmem:[#allocation2 + $0x210] sm:$0xff]
        %v5586 = vld [vmem:[#allocation2 + $0x218] sm:$0xff]
        %v5587 = vld [vmem:[#allocation2 + $0x220] sm:$0xff]
        %v5588 = vld [vmem:[#allocation2 + $0x228] sm:$0xff]
        %v5589 = vld [vmem:[#allocation2 + $0x230] sm:$0xff]
        %v5590 = vld [vmem:[#allocation2 + $0x238] sm:$0xff]
        %v5591 = vld [vmem:[#allocation2 + $0x240] sm:$0xff]
        %v5592 = vld [vmem:[#allocation2 + $0x248] sm:$0xff]
        %v5593 = vld [vmem:[#allocation2 + $0x250] sm:$0xff]
        %v5594 = vld [vmem:[#allocation2 + $0x258] sm:$0xff]
        %v5595 = vld [vmem:[#allocation2 + $0x260] sm:$0xff]
        %v5596 = vld [vmem:[#allocation2 + $0x268] sm:$0xff]
        %v5597 = vld [vmem:[#allocation2 + $0x270] sm:$0xff]
        %v5598 = vld [vmem:[#allocation2 + $0x278] sm:$0xff]
        %v5599 = vld [vmem:[#allocation2 + $0x280] sm:$0xff]
        %v5600 = vld [vmem:[#allocation2 + $0x288] sm:$0xff]
        %v5601 = vld [vmem:[#allocation2 + $0x290] sm:$0xff]
        %v5602 = vld [vmem:[#allocation2 + $0x298] sm:$0xff]
        %v5603 = vld [vmem:[#allocation2 + $0x2a0] sm:$0xff]
        %v5604 = vld [vmem:[#allocation2 + $0x2a8] sm:$0xff]
        %v5605 = vld [vmem:[#allocation2 + $0x2b0] sm:$0xff]
        %v5606 = vld [vmem:[#allocation2 + $0x2b8] sm:$0xff]
        %v5607 = vld [vmem:[#allocation2 + $0x2c0] sm:$0xff]
        %v5608 = vld [vmem:[#allocation2 + $0x2c8] sm:$0xff]
        %v5609 = vld [vmem:[#allocation2 + $0x2d0] sm:$0xff]
        %v5610 = vld [vmem:[#allocation2 + $0x2d8] sm:$0xff]
        %v5611 = vld [vmem:[#allocation2 + $0x2e0] sm:$0xff]
        %v5612 = vld [vmem:[#allocation2 + $0x2e8] sm:$0xff]
        %v5613 = vld [vmem:[#allocation2 + $0x2f0] sm:$0xff]
        %v5614 = vld [vmem:[#allocation2 + $0x2f8] sm:$0xff]
        %v5615 = vld [vmem:[#allocation2 + $0x300] sm:$0xff]
        %v5616 = vld [vmem:[#allocation2 + $0x308] sm:$0xff]
        %v5617 = vld [vmem:[#allocation2 + $0x310] sm:$0xff]
        %v5618 = vld [vmem:[#allocation2 + $0x318] sm:$0xff]
        %v5619 = vld [vmem:[#allocation2 + $0x320] sm:$0xff]
        %v5620 = vld [vmem:[#allocation2 + $0x328] sm:$0xff]
        %v5621 = vld [vmem:[#allocation2 + $0x330] sm:$0xff]
        %v5622 = vld [vmem:[#allocation2 + $0x338] sm:$0xff]
        %v5623 = vld [vmem:[#allocation2 + $0x340] sm:$0xff]
        %v5624 = vld [vmem:[#allocation2 + $0x348] sm:$0xff]
        %v5625 = vld [vmem:[#allocation2 + $0x350] sm:$0xff]
        %v5626 = vld [vmem:[#allocation2 + $0x358] sm:$0xff]
        %v5627 = vld [vmem:[#allocation2 + $0x360] sm:$0xff]
        %v5628 = vld [vmem:[#allocation2 + $0x368] sm:$0xff]
        %v5629 = vld [vmem:[#allocation2 + $0x370] sm:$0xff]
        %v5630 = vld [vmem:[#allocation2 + $0x378] sm:$0xff]
        %v5631 = vld [vmem:[#allocation2 + $0x380] sm:$0xff]
        %v5632 = vld [vmem:[#allocation2 + $0x388] sm:$0xff]
        %v5633 = vld [vmem:[#allocation2 + $0x390] sm:$0xff]
        %v5634 = vld [vmem:[#allocation2 + $0x398] sm:$0xff]
        %v5635 = vld [vmem:[#allocation2 + $0x3a0] sm:$0xff]
        %v5636 = vld [vmem:[#allocation2 + $0x3a8] sm:$0xff]
        %v5637 = vld [vmem:[#allocation2 + $0x3b0] sm:$0xff]
        %v5638 = vld [vmem:[#allocation2 + $0x3b8] sm:$0xff]
        %v5639 = vld [vmem:[#allocation2 + $0x3c0] sm:$0xff]
        %v5640 = vld [vmem:[#allocation2 + $0x3c8] sm:$0xff]
        %v5641 = vld [vmem:[#allocation2 + $0x3d0] sm:$0xff]
        %v5642 = vld [vmem:[#allocation2 + $0x3d8] sm:$0xff]
        %v5643 = vld [vmem:[#allocation2 + $0x3e0] sm:$0xff]
        %v5644 = vld [vmem:[#allocation2 + $0x3e8] sm:$0xff]
        %v5645 = vld [vmem:[#allocation2 + $0x3f0] sm:$0xff]
        %v5646 = vld [vmem:[#allocation2 + $0x3f8] sm:$0xff]
        %v5647 = vld [vmem:[#allocation11] sm:$0xff]
        %v5648 = vld [vmem:[#allocation11 + $0x8] sm:$0xff]
        %v5649 = vld [vmem:[#allocation11 + $0x10] sm:$0xff]
        %v5650 = vld [vmem:[#allocation11 + $0x18] sm:$0xff]
        %v5651 = vld [vmem:[#allocation11 + $0x20] sm:$0xff]
        %v5652 = vld [vmem:[#allocation11 + $0x28] sm:$0xff]
        %v5653 = vld [vmem:[#allocation11 + $0x30] sm:$0xff]
        %v5654 = vld [vmem:[#allocation11 + $0x38] sm:$0xff]
        %v5655 = vld [vmem:[#allocation11 + $0x40] sm:$0xff]
        %v5656 = vld [vmem:[#allocation11 + $0x48] sm:$0xff]
        %v5657 = vld [vmem:[#allocation11 + $0x50] sm:$0xff]
        %v5658 = vld [vmem:[#allocation11 + $0x58] sm:$0xff]
        %v5659 = vld [vmem:[#allocation11 + $0x60] sm:$0xff]
        %v5660 = vld [vmem:[#allocation11 + $0x68] sm:$0xff]
        %v5661 = vld [vmem:[#allocation11 + $0x70] sm:$0xff]
        %v5662 = vld [vmem:[#allocation11 + $0x78] sm:$0xff]
        %v5663 = vld [vmem:[#allocation11 + $0x80] sm:$0xff]
        %v5664 = vld [vmem:[#allocation11 + $0x88] sm:$0xff]
        %v5665 = vld [vmem:[#allocation11 + $0x90] sm:$0xff]
        %v5666 = vld [vmem:[#allocation11 + $0x98] sm:$0xff]
        %v5667 = vld [vmem:[#allocation11 + $0xa0] sm:$0xff]
        %v5668 = vld [vmem:[#allocation11 + $0xa8] sm:$0xff]
        %v5669 = vld [vmem:[#allocation11 + $0xb0] sm:$0xff]
        %v5670 = vld [vmem:[#allocation11 + $0xb8] sm:$0xff]
        %v5671 = vld [vmem:[#allocation11 + $0xc0] sm:$0xff]
        %v5672 = vld [vmem:[#allocation11 + $0xc8] sm:$0xff]
        %v5673 = vld [vmem:[#allocation11 + $0xd0] sm:$0xff]
        %v5674 = vld [vmem:[#allocation11 + $0xd8] sm:$0xff]
        %v5675 = vld [vmem:[#allocation11 + $0xe0] sm:$0xff]
        %v5676 = vld [vmem:[#allocation11 + $0xe8] sm:$0xff]
        %v5677 = vld [vmem:[#allocation11 + $0xf0] sm:$0xff]
        %v5678 = vld [vmem:[#allocation11 + $0xf8] sm:$0xff]
        %v5679 = vld [vmem:[#allocation11 + $0x100] sm:$0xff]
        %v5680 = vld [vmem:[#allocation11 + $0x108] sm:$0xff]
        %v5681 = vld [vmem:[#allocation11 + $0x110] sm:$0xff]
        %v5682 = vld [vmem:[#allocation11 + $0x118] sm:$0xff]
        %v5683 = vld [vmem:[#allocation11 + $0x120] sm:$0xff]
        %v5684 = vld [vmem:[#allocation11 + $0x128] sm:$0xff]
        %v5685 = vld [vmem:[#allocation11 + $0x130] sm:$0xff]
        %v5686 = vld [vmem:[#allocation11 + $0x138] sm:$0xff]
        %v5687 = vld [vmem:[#allocation11 + $0x140] sm:$0xff]
        %v5688 = vld [vmem:[#allocation11 + $0x148] sm:$0xff]
        %v5689 = vld [vmem:[#allocation11 + $0x150] sm:$0xff]
        %v5690 = vld [vmem:[#allocation11 + $0x158] sm:$0xff]
        %v5691 = vld [vmem:[#allocation11 + $0x160] sm:$0xff]
        %v5692 = vld [vmem:[#allocation11 + $0x168] sm:$0xff]
        %v5693 = vld [vmem:[#allocation11 + $0x170] sm:$0xff]
        %v5694 = vld [vmem:[#allocation11 + $0x178] sm:$0xff]
        %v5695 = vld [vmem:[#allocation11 + $0x180] sm:$0xff]
        %v5696 = vld [vmem:[#allocation11 + $0x188] sm:$0xff]
        %v5697 = vld [vmem:[#allocation11 + $0x190] sm:$0xff]
        %v5698 = vld [vmem:[#allocation11 + $0x198] sm:$0xff]
        %v5699 = vld [vmem:[#allocation11 + $0x1a0] sm:$0xff]
        %v5700 = vld [vmem:[#allocation11 + $0x1a8] sm:$0xff]
        %v5701 = vld [vmem:[#allocation11 + $0x1b0] sm:$0xff]
        %v5702 = vld [vmem:[#allocation11 + $0x1b8] sm:$0xff]
        %v5703 = vld [vmem:[#allocation11 + $0x1c0] sm:$0xff]
        %v5704 = vld [vmem:[#allocation11 + $0x1c8] sm:$0xff]
        %v5705 = vld [vmem:[#allocation11 + $0x1d0] sm:$0xff]
        %v5706 = vld [vmem:[#allocation11 + $0x1d8] sm:$0xff]
        %v5707 = vld [vmem:[#allocation11 + $0x1e0] sm:$0xff]
        %v5708 = vld [vmem:[#allocation11 + $0x1e8] sm:$0xff]
        %v5709 = vld [vmem:[#allocation11 + $0x1f0] sm:$0xff]
        %v5710 = vld [vmem:[#allocation11 + $0x1f8] sm:$0xff]
        %v5711 = vld [vmem:[#allocation11 + $0x200] sm:$0xff]
        %v5712 = vld [vmem:[#allocation11 + $0x208] sm:$0xff]
        %v5713 = vld [vmem:[#allocation11 + $0x210] sm:$0xff]
        %v5714 = vld [vmem:[#allocation11 + $0x218] sm:$0xff]
        %v5715 = vld [vmem:[#allocation11 + $0x220] sm:$0xff]
        %v5716 = vld [vmem:[#allocation11 + $0x228] sm:$0xff]
        %v5717 = vld [vmem:[#allocation11 + $0x230] sm:$0xff]
        %v5718 = vld [vmem:[#allocation11 + $0x238] sm:$0xff]
        %v5719 = vld [vmem:[#allocation11 + $0x240] sm:$0xff]
        %v5720 = vld [vmem:[#allocation11 + $0x248] sm:$0xff]
        %v5721 = vld [vmem:[#allocation11 + $0x250] sm:$0xff]
        %v5722 = vld [vmem:[#allocation11 + $0x258] sm:$0xff]
        %v5723 = vld [vmem:[#allocation11 + $0x260] sm:$0xff]
        %v5724 = vld [vmem:[#allocation11 + $0x268] sm:$0xff]
        %v5725 = vld [vmem:[#allocation11 + $0x270] sm:$0xff]
        %v5726 = vld [vmem:[#allocation11 + $0x278] sm:$0xff]
        %v5727 = vld [vmem:[#allocation11 + $0x280] sm:$0xff]
        %v5728 = vld [vmem:[#allocation11 + $0x288] sm:$0xff]
        %v5729 = vld [vmem:[#allocation11 + $0x290] sm:$0xff]
        %v5730 = vld [vmem:[#allocation11 + $0x298] sm:$0xff]
        %v5731 = vld [vmem:[#allocation11 + $0x2a0] sm:$0xff]
        %v5732 = vld [vmem:[#allocation11 + $0x2a8] sm:$0xff]
        %v5733 = vld [vmem:[#allocation11 + $0x2b0] sm:$0xff]
        %v5734 = vld [vmem:[#allocation11 + $0x2b8] sm:$0xff]
        %v5735 = vld [vmem:[#allocation11 + $0x2c0] sm:$0xff]
        %v5736 = vld [vmem:[#allocation11 + $0x2c8] sm:$0xff]
        %v5737 = vld [vmem:[#allocation11 + $0x2d0] sm:$0xff]
        %v5738 = vld [vmem:[#allocation11 + $0x2d8] sm:$0xff]
        %v5739 = vld [vmem:[#allocation11 + $0x2e0] sm:$0xff]
        %v5740 = vld [vmem:[#allocation11 + $0x2e8] sm:$0xff]
        %v5741 = vld [vmem:[#allocation11 + $0x2f0] sm:$0xff]
        %v5742 = vld [vmem:[#allocation11 + $0x2f8] sm:$0xff]
        %v5743 = vld [vmem:[#allocation11 + $0x300] sm:$0xff]
        %v5744 = vld [vmem:[#allocation11 + $0x308] sm:$0xff]
        %v5745 = vld [vmem:[#allocation11 + $0x310] sm:$0xff]
        %v5746 = vld [vmem:[#allocation11 + $0x318] sm:$0xff]
        %v5747 = vld [vmem:[#allocation11 + $0x320] sm:$0xff]
        %v5748 = vld [vmem:[#allocation11 + $0x328] sm:$0xff]
        %v5749 = vld [vmem:[#allocation11 + $0x330] sm:$0xff]
        %v5750 = vld [vmem:[#allocation11 + $0x338] sm:$0xff]
        %v5751 = vld [vmem:[#allocation11 + $0x340] sm:$0xff]
        %v5752 = vld [vmem:[#allocation11 + $0x348] sm:$0xff]
        %v5753 = vld [vmem:[#allocation11 + $0x350] sm:$0xff]
        %v5754 = vld [vmem:[#allocation11 + $0x358] sm:$0xff]
        %v5755 = vld [vmem:[#allocation11 + $0x360] sm:$0xff]
        %v5756 = vld [vmem:[#allocation11 + $0x368] sm:$0xff]
        %v5757 = vld [vmem:[#allocation11 + $0x370] sm:$0xff]
        %v5758 = vld [vmem:[#allocation11 + $0x378] sm:$0xff]
        %v5759 = vld [vmem:[#allocation11 + $0x380] sm:$0xff]
        %v5760 = vld [vmem:[#allocation11 + $0x388] sm:$0xff]
        %v5761 = vld [vmem:[#allocation11 + $0x390] sm:$0xff]
        %v5762 = vld [vmem:[#allocation11 + $0x398] sm:$0xff]
        %v5763 = vld [vmem:[#allocation11 + $0x3a0] sm:$0xff]
        %v5764 = vld [vmem:[#allocation11 + $0x3a8] sm:$0xff]
        %v5765 = vld [vmem:[#allocation11 + $0x3b0] sm:$0xff]
        %v5766 = vld [vmem:[#allocation11 + $0x3b8] sm:$0xff]
        %v5767 = vld [vmem:[#allocation11 + $0x3c0] sm:$0xff]
        %v5768 = vld [vmem:[#allocation11 + $0x3c8] sm:$0xff]
        %v5769 = vld [vmem:[#allocation11 + $0x3d0] sm:$0xff]
        %v5770 = vld [vmem:[#allocation11 + $0x3d8] sm:$0xff]
        %v5771 = vld [vmem:[#allocation11 + $0x3e0] sm:$0xff]
        %v5772 = vld [vmem:[#allocation11 + $0x3e8] sm:$0xff]
        %v5773 = vld [vmem:[#allocation11 + $0x3f0] sm:$0xff]
        %v5774 = vld [vmem:[#allocation11 + $0x3f8] sm:$0xff]
        %v5775 = vld [vmem:[#allocation11 + $0x400] sm:$0xff]
        %v5776 = vld [vmem:[#allocation11 + $0x408] sm:$0xff]
        %v5777 = vld [vmem:[#allocation11 + $0x410] sm:$0xff]
        %v5778 = vld [vmem:[#allocation11 + $0x418] sm:$0xff]
        %v5779 = vld [vmem:[#allocation11 + $0x420] sm:$0xff]
        %v5780 = vld [vmem:[#allocation11 + $0x428] sm:$0xff]
        %v5781 = vld [vmem:[#allocation11 + $0x430] sm:$0xff]
        %v5782 = vld [vmem:[#allocation11 + $0x438] sm:$0xff]
        %v5783 = vld [vmem:[#allocation11 + $0x440] sm:$0xff]
        %v5784 = vld [vmem:[#allocation11 + $0x448] sm:$0xff]
        %v5785 = vld [vmem:[#allocation11 + $0x450] sm:$0xff]
        %v5786 = vld [vmem:[#allocation11 + $0x458] sm:$0xff]
        %v5787 = vld [vmem:[#allocation11 + $0x460] sm:$0xff]
        %v5788 = vld [vmem:[#allocation11 + $0x468] sm:$0xff]
        %v5789 = vld [vmem:[#allocation11 + $0x470] sm:$0xff]
        %v5790 = vld [vmem:[#allocation11 + $0x478] sm:$0xff]
        %v5791 = vld [vmem:[#allocation11 + $0x480] sm:$0xff]
        %v5792 = vld [vmem:[#allocation11 + $0x488] sm:$0xff]
        %v5793 = vld [vmem:[#allocation11 + $0x490] sm:$0xff]
        %v5794 = vld [vmem:[#allocation11 + $0x498] sm:$0xff]
        %v5795 = vld [vmem:[#allocation11 + $0x4a0] sm:$0xff]
        %v5796 = vld [vmem:[#allocation11 + $0x4a8] sm:$0xff]
        %v5797 = vld [vmem:[#allocation11 + $0x4b0] sm:$0xff]
        %v5798 = vld [vmem:[#allocation11 + $0x4b8] sm:$0xff]
        %v5799 = vld [vmem:[#allocation11 + $0x4c0] sm:$0xff]
        %v5800 = vld [vmem:[#allocation11 + $0x4c8] sm:$0xff]
        %v5801 = vld [vmem:[#allocation11 + $0x4d0] sm:$0xff]
        %v5802 = vld [vmem:[#allocation11 + $0x4d8] sm:$0xff]
        %v5803 = vld [vmem:[#allocation11 + $0x4e0] sm:$0xff]
        %v5804 = vld [vmem:[#allocation11 + $0x4e8] sm:$0xff]
        %v5805 = vld [vmem:[#allocation11 + $0x4f0] sm:$0xff]
        %v5806 = vld [vmem:[#allocation11 + $0x4f8] sm:$0xff]
        %v5807 = vld [vmem:[#allocation11 + $0x500] sm:$0xff]
        %v5808 = vld [vmem:[#allocation11 + $0x508] sm:$0xff]
        %v5809 = vld [vmem:[#allocation11 + $0x510] sm:$0xff]
        %v5810 = vld [vmem:[#allocation11 + $0x518] sm:$0xff]
        %v5811 = vld [vmem:[#allocation11 + $0x520] sm:$0xff]
        %v5812 = vld [vmem:[#allocation11 + $0x528] sm:$0xff]
        %v5813 = vld [vmem:[#allocation11 + $0x530] sm:$0xff]
        %v5814 = vld [vmem:[#allocation11 + $0x538] sm:$0xff]
        %v5815 = vld [vmem:[#allocation11 + $0x540] sm:$0xff]
        %v5816 = vld [vmem:[#allocation11 + $0x548] sm:$0xff]
        %v5817 = vld [vmem:[#allocation11 + $0x550] sm:$0xff]
        %v5818 = vld [vmem:[#allocation11 + $0x558] sm:$0xff]
        %v5819 = vld [vmem:[#allocation11 + $0x560] sm:$0xff]
        %v5820 = vld [vmem:[#allocation11 + $0x568] sm:$0xff]
        %v5821 = vld [vmem:[#allocation11 + $0x570] sm:$0xff]
        %v5822 = vld [vmem:[#allocation11 + $0x578] sm:$0xff]
        %v5823 = vld [vmem:[#allocation11 + $0x580] sm:$0xff]
        %v5824 = vld [vmem:[#allocation11 + $0x588] sm:$0xff]
        %v5825 = vld [vmem:[#allocation11 + $0x590] sm:$0xff]
        %v5826 = vld [vmem:[#allocation11 + $0x598] sm:$0xff]
        %v5827 = vld [vmem:[#allocation11 + $0x5a0] sm:$0xff]
        %v5828 = vld [vmem:[#allocation11 + $0x5a8] sm:$0xff]
        %v5829 = vld [vmem:[#allocation11 + $0x5b0] sm:$0xff]
        %v5830 = vld [vmem:[#allocation11 + $0x5b8] sm:$0xff]
        %v5831 = vld [vmem:[#allocation11 + $0x5c0] sm:$0xff]
        %v5832 = vld [vmem:[#allocation11 + $0x5c8] sm:$0xff]
        %v5833 = vld [vmem:[#allocation11 + $0x5d0] sm:$0xff]
        %v5834 = vld [vmem:[#allocation11 + $0x5d8] sm:$0xff]
        %v5835 = vld [vmem:[#allocation11 + $0x5e0] sm:$0xff]
        %v5836 = vld [vmem:[#allocation11 + $0x5e8] sm:$0xff]
        %v5837 = vld [vmem:[#allocation11 + $0x5f0] sm:$0xff]
        %v5838 = vld [vmem:[#allocation11 + $0x5f8] sm:$0xff]
        %v5839 = vld [vmem:[#allocation11 + $0x600] sm:$0xff]
        %v5840 = vld [vmem:[#allocation11 + $0x608] sm:$0xff]
        %v5841 = vld [vmem:[#allocation11 + $0x610] sm:$0xff]
        %v5842 = vld [vmem:[#allocation11 + $0x618] sm:$0xff]
        %v5843 = vld [vmem:[#allocation11 + $0x620] sm:$0xff]
        %v5844 = vld [vmem:[#allocation11 + $0x628] sm:$0xff]
        %v5845 = vld [vmem:[#allocation11 + $0x630] sm:$0xff]
        %v5846 = vld [vmem:[#allocation11 + $0x638] sm:$0xff]
        %v5847 = vld [vmem:[#allocation11 + $0x640] sm:$0xff]
        %v5848 = vld [vmem:[#allocation11 + $0x648] sm:$0xff]
        %v5849 = vld [vmem:[#allocation11 + $0x650] sm:$0xff]
        %v5850 = vld [vmem:[#allocation11 + $0x658] sm:$0xff]
        %v5851 = vld [vmem:[#allocation11 + $0x660] sm:$0xff]
        %v5852 = vld [vmem:[#allocation11 + $0x668] sm:$0xff]
        %v5853 = vld [vmem:[#allocation11 + $0x670] sm:$0xff]
        %v5854 = vld [vmem:[#allocation11 + $0x678] sm:$0xff]
        %v5855 = vld [vmem:[#allocation11 + $0x680] sm:$0xff]
        %v5856 = vld [vmem:[#allocation11 + $0x688] sm:$0xff]
        %v5857 = vld [vmem:[#allocation11 + $0x690] sm:$0xff]
        %v5858 = vld [vmem:[#allocation11 + $0x698] sm:$0xff]
        %v5859 = vld [vmem:[#allocation11 + $0x6a0] sm:$0xff]
        %v5860 = vld [vmem:[#allocation11 + $0x6a8] sm:$0xff]
        %v5861 = vld [vmem:[#allocation11 + $0x6b0] sm:$0xff]
        %v5862 = vld [vmem:[#allocation11 + $0x6b8] sm:$0xff]
        %v5863 = vld [vmem:[#allocation11 + $0x6c0] sm:$0xff]
        %v5864 = vld [vmem:[#allocation11 + $0x6c8] sm:$0xff]
        %v5865 = vld [vmem:[#allocation11 + $0x6d0] sm:$0xff]
        %v5866 = vld [vmem:[#allocation11 + $0x6d8] sm:$0xff]
        %v5867 = vld [vmem:[#allocation11 + $0x6e0] sm:$0xff]
        %v5868 = vld [vmem:[#allocation11 + $0x6e8] sm:$0xff]
        %v5869 = vld [vmem:[#allocation11 + $0x6f0] sm:$0xff]
        %v5870 = vld [vmem:[#allocation11 + $0x6f8] sm:$0xff]
        %v5871 = vld [vmem:[#allocation11 + $0x700] sm:$0xff]
        %v5872 = vld [vmem:[#allocation11 + $0x708] sm:$0xff]
        %v5873 = vld [vmem:[#allocation11 + $0x710] sm:$0xff]
        %v5874 = vld [vmem:[#allocation11 + $0x718] sm:$0xff]
        %v5875 = vld [vmem:[#allocation11 + $0x720] sm:$0xff]
        %v5876 = vld [vmem:[#allocation11 + $0x728] sm:$0xff]
        %v5877 = vld [vmem:[#allocation11 + $0x730] sm:$0xff]
        %v5878 = vld [vmem:[#allocation11 + $0x738] sm:$0xff]
        %v5879 = vld [vmem:[#allocation11 + $0x740] sm:$0xff]
        %v5880 = vld [vmem:[#allocation11 + $0x748] sm:$0xff]
        %v5881 = vld [vmem:[#allocation11 + $0x750] sm:$0xff]
        %v5882 = vld [vmem:[#allocation11 + $0x758] sm:$0xff]
        %v5883 = vld [vmem:[#allocation11 + $0x760] sm:$0xff]
        %v5884 = vld [vmem:[#allocation11 + $0x768] sm:$0xff]
        %v5885 = vld [vmem:[#allocation11 + $0x770] sm:$0xff]
        %v5886 = vld [vmem:[#allocation11 + $0x778] sm:$0xff]
        %v5887 = vld [vmem:[#allocation11 + $0x780] sm:$0xff]
        %v5888 = vld [vmem:[#allocation11 + $0x788] sm:$0xff]
        %v5889 = vld [vmem:[#allocation11 + $0x790] sm:$0xff]
        %v5890 = vld [vmem:[#allocation11 + $0x798] sm:$0xff]
        %v5891 = vld [vmem:[#allocation11 + $0x7a0] sm:$0xff]
        %v5892 = vld [vmem:[#allocation11 + $0x7a8] sm:$0xff]
        %v5893 = vld [vmem:[#allocation11 + $0x7b0] sm:$0xff]
        %v5894 = vld [vmem:[#allocation11 + $0x7b8] sm:$0xff]
        %v5895 = vld [vmem:[#allocation11 + $0x7c0] sm:$0xff]
        %v5896 = vld [vmem:[#allocation11 + $0x7c8] sm:$0xff]
        %v5897 = vld [vmem:[#allocation11 + $0x7d0] sm:$0xff]
        %v5898 = vld [vmem:[#allocation11 + $0x7d8] sm:$0xff]
        %v5899 = vld [vmem:[#allocation11 + $0x7e0] sm:$0xff]
        %v5900 = vld [vmem:[#allocation11 + $0x7e8] sm:$0xff]
        %v5901 = vld [vmem:[#allocation11 + $0x7f0] sm:$0xff]
        %v5902 = vld [vmem:[#allocation11 + $0x7f8] sm:$0xff]
        %5903 = vmatprep.subr.mxu0 %v5648
        %5904 = vmatpush1.msra.mxu0 %v5647
        %5905 = vmatprep.subr.mxu0 %v5650
        %5906 = vmatpush1.msra.mxu0 %v5649
        %5907 = vmatprep.subr.mxu0 %v5652
        %5908 = vmatpush1.msra.mxu0 %v5651
        %5909 = vmatprep.subr.mxu0 %v5654
        %5910 = vmatpush1.msra.mxu0 %v5653
        %5911 = vmatprep.subr.mxu0 %v5656
        %5912 = vmatpush1.msra.mxu0 %v5655
        %5913 = vmatprep.subr.mxu0 %v5658
        %5914 = vmatpush1.msra.mxu0 %v5657
        %5915 = vmatprep.subr.mxu0 %v5660
        %5916 = vmatpush1.msra.mxu0 %v5659
        %5917 = vmatprep.subr.mxu0 %v5662
        %5918 = vmatpush1.msra.mxu0 %v5661
        %5919 = vmatprep.subr.mxu0 %v5664
        %5920 = vmatpush1.msra.mxu0 %v5663
        %5921 = vmatprep.subr.mxu0 %v5666
        %5922 = vmatpush1.msra.mxu0 %v5665
        %5923 = vmatprep.subr.mxu0 %v5668
        %5924 = vmatpush1.msra.mxu0 %v5667
        %5925 = vmatprep.subr.mxu0 %v5670
        %5926 = vmatpush1.msra.mxu0 %v5669
        %5927 = vmatprep.subr.mxu0 %v5672
        %5928 = vmatpush1.msra.mxu0 %v5671
        %5929 = vmatprep.subr.mxu0 %v5674
        %5930 = vmatpush1.msra.mxu0 %v5673
        %5931 = vmatprep.subr.mxu0 %v5676
        %5932 = vmatpush1.msra.mxu0 %v5675
        %5933 = vmatprep.subr.mxu0 %v5678
        %5934 = vmatpush1.msra.mxu0 %v5677
        %5935 = vmatprep.subr.mxu0 %v5680
        %5936 = vmatpush1.msra.mxu0 %v5679
        %5937 = vmatprep.subr.mxu0 %v5682
        %5938 = vmatpush1.msra.mxu0 %v5681
        %5939 = vmatprep.subr.mxu0 %v5684
        %5940 = vmatpush1.msra.mxu0 %v5683
        %5941 = vmatprep.subr.mxu0 %v5686
        %5942 = vmatpush1.msra.mxu0 %v5685
        %5943 = vmatprep.subr.mxu0 %v5688
        %5944 = vmatpush1.msra.mxu0 %v5687
        %5945 = vmatprep.subr.mxu0 %v5690
        %5946 = vmatpush1.msra.mxu0 %v5689
        %5947 = vmatprep.subr.mxu0 %v5692
        %5948 = vmatpush1.msra.mxu0 %v5691
        %5949 = vmatprep.subr.mxu0 %v5694
        %5950 = vmatpush1.msra.mxu0 %v5693
        %5951 = vmatprep.subr.mxu0 %v5696
        %5952 = vmatpush1.msra.mxu0 %v5695
        %5953 = vmatprep.subr.mxu0 %v5698
        %5954 = vmatpush1.msra.mxu0 %v5697
        %5955 = vmatprep.subr.mxu0 %v5700
        %5956 = vmatpush1.msra.mxu0 %v5699
        %5957 = vmatprep.subr.mxu0 %v5702
        %5958 = vmatpush1.msra.mxu0 %v5701
        %5959 = vmatprep.subr.mxu0 %v5704
        %5960 = vmatpush1.msra.mxu0 %v5703
        %5961 = vmatprep.subr.mxu0 %v5706
        %5962 = vmatpush1.msra.mxu0 %v5705
        %5963 = vmatprep.subr.mxu0 %v5708
        %5964 = vmatpush1.msra.mxu0 %v5707
        %5965 = vmatprep.subr.mxu0 %v5710
        %5966 = vmatpush1.msra.mxu0 %v5709
        %5967 = vmatprep.mubr.f32.mxu0 %v5520
        %5968 = vmatmul.mubr.f32.gmra.mrb[0].mxu0 %v5519
        %v5969 = vpop.f32.mrb[0].mxu0
        %v5970 = vadd.f32 0.0, %v5969
        %v5971 = vpop.f32.mrb[0].mxu0
        %v5972 = vadd.f32 0.0, %v5971
        %5973 = vmatprep.mubr.f32.mxu0 %v5528
        %5974 = vmatmul.mubr.f32.gmra.mrb[0].mxu0 %v5527
        %v5975 = vpop.f32.mrb[0].mxu0
        %v5976 = vadd.f32 0.0, %v5975
        %v5977 = vpop.f32.mrb[0].mxu0
        %v5978 = vadd.f32 0.0, %v5977
        %5979 = vmatprep.mubr.f32.mxu0 %v5536
        %5980 = vmatmul.mubr.f32.gmra.mrb[0].mxu0 %v5535
        %v5981 = vpop.f32.mrb[0].mxu0
        %v5982 = vadd.f32 0.0, %v5981
        %v5983 = vpop.f32.mrb[0].mxu0
        %v5984 = vadd.f32 0.0, %v5983
        %5985 = vmatprep.mubr.f32.mxu0 %v5544
        %5986 = vmatmul.mubr.f32.gmra.mrb[0].mxu0 %v5543
        %v5987 = vpop.f32.mrb[0].mxu0
        %v5988 = vadd.f32 0.0, %v5987
        %v5989 = vpop.f32.mrb[0].mxu0
        %v5990 = vadd.f32 0.0, %v5989
        %5991 = vmatprep.mubr.f32.mxu0 %v5552
        %5992 = vmatmul.mubr.f32.gmra.mrb[0].mxu0 %v5551
        %v5993 = vpop.f32.mrb[0].mxu0
        %v5994 = vadd.f32 0.0, %v5993
        %v5995 = vpop.f32.mrb[0].mxu0
        %v5996 = vadd.f32 0.0, %v5995
        %5997 = vmatprep.mubr.f32.mxu0 %v5560
        %5998 = vmatmul.mubr.f32.gmra.mrb[0].mxu0 %v5559
        %v5999 = vpop.f32.mrb[0].mxu0
        %v6000 = vadd.f32 0.0, %v5999
        %v6001 = vpop.f32.mrb[0].mxu0
        %v6002 = vadd.f32 0.0, %v6001
        %6003 = vmatprep.mubr.f32.mxu0 %v5568
        %6004 = vmatmul.mubr.f32.gmra.mrb[0].mxu0 %v5567
        %v6005 = vpop.f32.mrb[0].mxu0
        %v6006 = vadd.f32 0.0, %v6005
        %v6007 = vpop.f32.mrb[0].mxu0
        %v6008 = vadd.f32 0.0, %v6007
        %6009 = vmatprep.mubr.f32.mxu0 %v5576
        %6010 = vmatmul.mubr.f32.gmra.mrb[0].mxu0 %v5575
        %v6011 = vpop.f32.mrb[0].mxu0
        %v6012 = vadd.f32 0.0, %v6011
        %v6013 = vpop.f32.mrb[0].mxu0
        %v6014 = vadd.f32 0.0, %v6013
        %6015 = vmatprep.mubr.f32.mxu0 %v5584
        %6016 = vmatmul.mubr.f32.gmra.mrb[0].mxu0 %v5583
        %v6017 = vpop.f32.mrb[0].mxu0
        %v6018 = vadd.f32 0.0, %v6017
        %v6019 = vpop.f32.mrb[0].mxu0
        %v6020 = vadd.f32 0.0, %v6019
        %6021 = vmatprep.mubr.f32.mxu0 %v5592
        %6022 = vmatmul.mubr.f32.gmra.mrb[0].mxu0 %v5591
        %v6023 = vpop.f32.mrb[0].mxu0
        %v6024 = vadd.f32 0.0, %v6023
        %v6025 = vpop.f32.mrb[0].mxu0
        %v6026 = vadd.f32 0.0, %v6025
        %6027 = vmatprep.mubr.f32.mxu0 %v5600
        %6028 = vmatmul.mubr.f32.gmra.mrb[0].mxu0 %v5599
        %v6029 = vpop.f32.mrb[0].mxu0
        %v6030 = vadd.f32 0.0, %v6029
        %v6031 = vpop.f32.mrb[0].mxu0
        %v6032 = vadd.f32 0.0, %v6031
        %6033 = vmatprep.mubr.f32.mxu0 %v5608
        %6034 = vmatmul.mubr.f32.gmra.mrb[0].mxu0 %v5607
        %v6035 = vpop.f32.mrb[0].mxu0
        %v6036 = vadd.f32 0.0, %v6035
        %v6037 = vpop.f32.mrb[0].mxu0
        %v6038 = vadd.f32 0.0, %v6037
        %6039 = vmatprep.mubr.f32.mxu0 %v5616
        %6040 = vmatmul.mubr.f32.gmra.mrb[0].mxu0 %v5615
        %v6041 = vpop.f32.mrb[0].mxu0
        %v6042 = vadd.f32 0.0, %v6041
        %v6043 = vpop.f32.mrb[0].mxu0
        %v6044 = vadd.f32 0.0, %v6043
        %6045 = vmatprep.mubr.f32.mxu0 %v5624
        %6046 = vmatmul.mubr.f32.gmra.mrb[0].mxu0 %v5623
        %v6047 = vpop.f32.mrb[0].mxu0
        %v6048 = vadd.f32 0.0, %v6047
        %v6049 = vpop.f32.mrb[0].mxu0
        %v6050 = vadd.f32 0.0, %v6049
        %6051 = vmatprep.mubr.f32.mxu0 %v5632
        %6052 = vmatmul.mubr.f32.gmra.mrb[0].mxu0 %v5631
        %v6053 = vpop.f32.mrb[0].mxu0
        %v6054 = vadd.f32 0.0, %v6053
        %v6055 = vpop.f32.mrb[0].mxu0
        %v6056 = vadd.f32 0.0, %v6055
        %6057 = vmatprep.mubr.f32.mxu0 %v5640
        %6058 = vmatmul.mubr.f32.gmra.mrb[0].mxu0 %v5639
        %v6059 = vpop.f32.mrb[0].mxu0
        %v6060 = vadd.f32 0.0, %v6059
        %v6061 = vpop.f32.mrb[0].mxu0
        %v6062 = vadd.f32 0.0, %v6061
        %6063 = vdwg.mxu0
        %6064 = vmatprep.subr.mxu0 %v5712
        %6065 = vmatpush1.msra.mxu0 %v5711
        %6066 = vmatprep.subr.mxu0 %v5714
        %6067 = vmatpush1.msra.mxu0 %v5713
        %6068 = vmatprep.subr.mxu0 %v5716
        %6069 = vmatpush1.msra.mxu0 %v5715
        %6070 = vmatprep.subr.mxu0 %v5718
        %6071 = vmatpush1.msra.mxu0 %v5717
        %6072 = vmatprep.subr.mxu0 %v5720
        %6073 = vmatpush1.msra.mxu0 %v5719
        %6074 = vmatprep.subr.mxu0 %v5722
        %6075 = vmatpush1.msra.mxu0 %v5721
        %6076 = vmatprep.subr.mxu0 %v5724
        %6077 = vmatpush1.msra.mxu0 %v5723
        %6078 = vmatprep.subr.mxu0 %v5726
        %6079 = vmatpush1.msra.mxu0 %v5725
        %6080 = vmatprep.subr.mxu0 %v5728
        %6081 = vmatpush1.msra.mxu0 %v5727
        %6082 = vmatprep.subr.mxu0 %v5730
        %6083 = vmatpush1.msra.mxu0 %v5729
        %6084 = vmatprep.subr.mxu0 %v5732
        %6085 = vmatpush1.msra.mxu0 %v5731
        %6086 = vmatprep.subr.mxu0 %v5734
        %6087 = vmatpush1.msra.mxu0 %v5733
        %6088 = vmatprep.subr.mxu0 %v5736
        %6089 = vmatpush1.msra.mxu0 %v5735
        %6090 = vmatprep.subr.mxu0 %v5738
        %6091 = vmatpush1.msra.mxu0 %v5737
        %6092 = vmatprep.subr.mxu0 %v5740
        %6093 = vmatpush1.msra.mxu0 %v5739
        %6094 = vmatprep.subr.mxu0 %v5742
        %6095 = vmatpush1.msra.mxu0 %v5741
        %6096 = vmatprep.subr.mxu0 %v5744
        %6097 = vmatpush1.msra.mxu0 %v5743
        %6098 = vmatprep.subr.mxu0 %v5746
        %6099 = vmatpush1.msra.mxu0 %v5745
        %6100 = vmatprep.subr.mxu0 %v5748
        %6101 = vmatpush1.msra.mxu0 %v5747
        %6102 = vmatprep.subr.mxu0 %v5750
        %6103 = vmatpush1.msra.mxu0 %v5749
        %6104 = vmatprep.subr.mxu0 %v5752
        %6105 = vmatpush1.msra.mxu0 %v5751
        %6106 = vmatprep.subr.mxu0 %v5754
        %6107 = vmatpush1.msra.mxu0 %v5753
        %6108 = vmatprep.subr.mxu0 %v5756
        %6109 = vmatpush1.msra.mxu0 %v5755
        %6110 = vmatprep.subr.mxu0 %v5758
        %6111 = vmatpush1.msra.mxu0 %v5757
        %6112 = vmatprep.subr.mxu0 %v5760
        %6113 = vmatpush1.msra.mxu0 %v5759
        %6114 = vmatprep.subr.mxu0 %v5762
        %6115 = vmatpush1.msra.mxu0 %v5761
        %6116 = vmatprep.subr.mxu0 %v5764
        %6117 = vmatpush1.msra.mxu0 %v5763
        %6118 = vmatprep.subr.mxu0 %v5766
        %6119 = vmatpush1.msra.mxu0 %v5765
        %6120 = vmatprep.subr.mxu0 %v5768
        %6121 = vmatpush1.msra.mxu0 %v5767
        %6122 = vmatprep.subr.mxu0 %v5770
        %6123 = vmatpush1.msra.mxu0 %v5769
        %6124 = vmatprep.subr.mxu0 %v5772
        %6125 = vmatpush1.msra.mxu0 %v5771
        %6126 = vmatprep.subr.mxu0 %v5774
        %6127 = vmatpush1.msra.mxu0 %v5773
        %6128 = vmatprep.mubr.f32.mxu0 %v5522
        %6129 = vmatmul.mubr.f32.gmra.mrb[0].mxu0 %v5521
        %v6130 = vpop.f32.mrb[0].mxu0
        %v6131 = vadd.f32 %v5970, %v6130
        %v6132 = vpop.f32.mrb[0].mxu0
        %v6133 = vadd.f32 %v5972, %v6132
        %6134 = vmatprep.mubr.f32.mxu0 %v5530
        %6135 = vmatmul.mubr.f32.gmra.mrb[0].mxu0 %v5529
        %v6136 = vpop.f32.mrb[0].mxu0
        %v6137 = vadd.f32 %v5976, %v6136
        %v6138 = vpop.f32.mrb[0].mxu0
        %v6139 = vadd.f32 %v5978, %v6138
        %6140 = vmatprep.mubr.f32.mxu0 %v5538
        %6141 = vmatmul.mubr.f32.gmra.mrb[0].mxu0 %v5537
        %v6142 = vpop.f32.mrb[0].mxu0
        %v6143 = vadd.f32 %v5982, %v6142
        %v6144 = vpop.f32.mrb[0].mxu0
        %v6145 = vadd.f32 %v5984, %v6144
        %6146 = vmatprep.mubr.f32.mxu0 %v5546
        %6147 = vmatmul.mubr.f32.gmra.mrb[0].mxu0 %v5545
        %v6148 = vpop.f32.mrb[0].mxu0
        %v6149 = vadd.f32 %v5988, %v6148
        %v6150 = vpop.f32.mrb[0].mxu0
        %v6151 = vadd.f32 %v5990, %v6150
        %6152 = vmatprep.mubr.f32.mxu0 %v5554
        %6153 = vmatmul.mubr.f32.gmra.mrb[0].mxu0 %v5553
        %v6154 = vpop.f32.mrb[0].mxu0
        %v6155 = vadd.f32 %v5994, %v6154
        %v6156 = vpop.f32.mrb[0].mxu0
        %v6157 = vadd.f32 %v5996, %v6156
        %6158 = vmatprep.mubr.f32.mxu0 %v5562
        %6159 = vmatmul.mubr.f32.gmra.mrb[0].mxu0 %v5561
        %v6160 = vpop.f32.mrb[0].mxu0
        %v6161 = vadd.f32 %v6000, %v6160
        %v6162 = vpop.f32.mrb[0].mxu0
        %v6163 = vadd.f32 %v6002, %v6162
        %6164 = vmatprep.mubr.f32.mxu0 %v5570
        %6165 = vmatmul.mubr.f32.gmra.mrb[0].mxu0 %v5569
        %v6166 = vpop.f32.mrb[0].mxu0
        %v6167 = vadd.f32 %v6006, %v6166
        %v6168 = vpop.f32.mrb[0].mxu0
        %v6169 = vadd.f32 %v6008, %v6168
        %6170 = vmatprep.mubr.f32.mxu0 %v5578
        %6171 = vmatmul.mubr.f32.gmra.mrb[0].mxu0 %v5577
        %v6172 = vpop.f32.mrb[0].mxu0
        %v6173 = vadd.f32 %v6012, %v6172
        %v6174 = vpop.f32.mrb[0].mxu0
        %v6175 = vadd.f32 %v6014, %v6174
        %6176 = vmatprep.mubr.f32.mxu0 %v5586
        %6177 = vmatmul.mubr.f32.gmra.mrb[0].mxu0 %v5585
        %v6178 = vpop.f32.mrb[0].mxu0
        %v6179 = vadd.f32 %v6018, %v6178
        %v6180 = vpop.f32.mrb[0].mxu0
        %v6181 = vadd.f32 %v6020, %v6180
        %6182 = vmatprep.mubr.f32.mxu0 %v5594
        %6183 = vmatmul.mubr.f32.gmra.mrb[0].mxu0 %v5593
        %v6184 = vpop.f32.mrb[0].mxu0
        %v6185 = vadd.f32 %v6024, %v6184
        %v6186 = vpop.f32.mrb[0].mxu0
        %v6187 = vadd.f32 %v6026, %v6186
        %6188 = vmatprep.mubr.f32.mxu0 %v5602
        %6189 = vmatmul.mubr.f32.gmra.mrb[0].mxu0 %v5601
        %v6190 = vpop.f32.mrb[0].mxu0
        %v6191 = vadd.f32 %v6030, %v6190
        %v6192 = vpop.f32.mrb[0].mxu0
        %v6193 = vadd.f32 %v6032, %v6192
        %6194 = vmatprep.mubr.f32.mxu0 %v5610
        %6195 = vmatmul.mubr.f32.gmra.mrb[0].mxu0 %v5609
        %v6196 = vpop.f32.mrb[0].mxu0
        %v6197 = vadd.f32 %v6036, %v6196
        %v6198 = vpop.f32.mrb[0].mxu0
        %v6199 = vadd.f32 %v6038, %v6198
        %6200 = vmatprep.mubr.f32.mxu0 %v5618
        %6201 = vmatmul.mubr.f32.gmra.mrb[0].mxu0 %v5617
        %v6202 = vpop.f32.mrb[0].mxu0
        %v6203 = vadd.f32 %v6042, %v6202
        %v6204 = vpop.f32.mrb[0].mxu0
        %v6205 = vadd.f32 %v6044, %v6204
        %6206 = vmatprep.mubr.f32.mxu0 %v5626
        %6207 = vmatmul.mubr.f32.gmra.mrb[0].mxu0 %v5625
        %v6208 = vpop.f32.mrb[0].mxu0
        %v6209 = vadd.f32 %v6048, %v6208
        %v6210 = vpop.f32.mrb[0].mxu0
        %v6211 = vadd.f32 %v6050, %v6210
        %6212 = vmatprep.mubr.f32.mxu0 %v5634
        %6213 = vmatmul.mubr.f32.gmra.mrb[0].mxu0 %v5633
        %v6214 = vpop.f32.mrb[0].mxu0
        %v6215 = vadd.f32 %v6054, %v6214
        %v6216 = vpop.f32.mrb[0].mxu0
        %v6217 = vadd.f32 %v6056, %v6216
        %6218 = vmatprep.mubr.f32.mxu0 %v5642
        %6219 = vmatmul.mubr.f32.gmra.mrb[0].mxu0 %v5641
        %v6220 = vpop.f32.mrb[0].mxu0
        %v6221 = vadd.f32 %v6060, %v6220
        %v6222 = vpop.f32.mrb[0].mxu0
        %v6223 = vadd.f32 %v6062, %v6222
        %6224 = vdwg.mxu0
        %6225 = vmatprep.subr.mxu0 %v5776
        %6226 = vmatpush1.msra.mxu0 %v5775
        %6227 = vmatprep.subr.mxu0 %v5778
        %6228 = vmatpush1.msra.mxu0 %v5777
        %6229 = vmatprep.subr.mxu0 %v5780
        %6230 = vmatpush1.msra.mxu0 %v5779
        %6231 = vmatprep.subr.mxu0 %v5782
        %6232 = vmatpush1.msra.mxu0 %v5781
        %6233 = vmatprep.subr.mxu0 %v5784
        %6234 = vmatpush1.msra.mxu0 %v5783
        %6235 = vmatprep.subr.mxu0 %v5786
        %6236 = vmatpush1.msra.mxu0 %v5785
        %6237 = vmatprep.subr.mxu0 %v5788
        %6238 = vmatpush1.msra.mxu0 %v5787
        %6239 = vmatprep.subr.mxu0 %v5790
        %6240 = vmatpush1.msra.mxu0 %v5789
        %6241 = vmatprep.subr.mxu0 %v5792
        %6242 = vmatpush1.msra.mxu0 %v5791
        %6243 = vmatprep.subr.mxu0 %v5794
        %6244 = vmatpush1.msra.mxu0 %v5793
        %6245 = vmatprep.subr.mxu0 %v5796
        %6246 = vmatpush1.msra.mxu0 %v5795
        %6247 = vmatprep.subr.mxu0 %v5798
        %6248 = vmatpush1.msra.mxu0 %v5797
        %6249 = vmatprep.subr.mxu0 %v5800
        %6250 = vmatpush1.msra.mxu0 %v5799
        %6251 = vmatprep.subr.mxu0 %v5802
        %6252 = vmatpush1.msra.mxu0 %v5801
        %6253 = vmatprep.subr.mxu0 %v5804
        %6254 = vmatpush1.msra.mxu0 %v5803
        %6255 = vmatprep.subr.mxu0 %v5806
        %6256 = vmatpush1.msra.mxu0 %v5805
        %6257 = vmatprep.subr.mxu0 %v5808
        %6258 = vmatpush1.msra.mxu0 %v5807
        %6259 = vmatprep.subr.mxu0 %v5810
        %6260 = vmatpush1.msra.mxu0 %v5809
        %6261 = vmatprep.subr.mxu0 %v5812
        %6262 = vmatpush1.msra.mxu0 %v5811
        %6263 = vmatprep.subr.mxu0 %v5814
        %6264 = vmatpush1.msra.mxu0 %v5813
        %6265 = vmatprep.subr.mxu0 %v5816
        %6266 = vmatpush1.msra.mxu0 %v5815
        %6267 = vmatprep.subr.mxu0 %v5818
        %6268 = vmatpush1.msra.mxu0 %v5817
        %6269 = vmatprep.subr.mxu0 %v5820
        %6270 = vmatpush1.msra.mxu0 %v5819
        %6271 = vmatprep.subr.mxu0 %v5822
        %6272 = vmatpush1.msra.mxu0 %v5821
        %6273 = vmatprep.subr.mxu0 %v5824
        %6274 = vmatpush1.msra.mxu0 %v5823
        %6275 = vmatprep.subr.mxu0 %v5826
        %6276 = vmatpush1.msra.mxu0 %v5825
        %6277 = vmatprep.subr.mxu0 %v5828
        %6278 = vmatpush1.msra.mxu0 %v5827
        %6279 = vmatprep.subr.mxu0 %v5830
        %6280 = vmatpush1.msra.mxu0 %v5829
        %6281 = vmatprep.subr.mxu0 %v5832
        %6282 = vmatpush1.msra.mxu0 %v5831
        %6283 = vmatprep.subr.mxu0 %v5834
        %6284 = vmatpush1.msra.mxu0 %v5833
        %6285 = vmatprep.subr.mxu0 %v5836
        %6286 = vmatpush1.msra.mxu0 %v5835
        %6287 = vmatprep.subr.mxu0 %v5838
        %6288 = vmatpush1.msra.mxu0 %v5837
        %6289 = vmatprep.mubr.f32.mxu0 %v5524
        %6290 = vmatmul.mubr.f32.gmra.mrb[0].mxu0 %v5523
        %v6291 = vpop.f32.mrb[0].mxu0
        %v6292 = vadd.f32 %v6131, %v6291
        %v6293 = vpop.f32.mrb[0].mxu0
        %v6294 = vadd.f32 %v6133, %v6293
        %6295 = vmatprep.mubr.f32.mxu0 %v5532
        %6296 = vmatmul.mubr.f32.gmra.mrb[0].mxu0 %v5531
        %v6297 = vpop.f32.mrb[0].mxu0
        %v6298 = vadd.f32 %v6137, %v6297
        %v6299 = vpop.f32.mrb[0].mxu0
        %v6300 = vadd.f32 %v6139, %v6299
        %6301 = vmatprep.mubr.f32.mxu0 %v5540
        %6302 = vmatmul.mubr.f32.gmra.mrb[0].mxu0 %v5539
        %v6303 = vpop.f32.mrb[0].mxu0
        %v6304 = vadd.f32 %v6143, %v6303
        %v6305 = vpop.f32.mrb[0].mxu0
        %v6306 = vadd.f32 %v6145, %v6305
        %6307 = vmatprep.mubr.f32.mxu0 %v5548
        %6308 = vmatmul.mubr.f32.gmra.mrb[0].mxu0 %v5547
        %v6309 = vpop.f32.mrb[0].mxu0
        %v6310 = vadd.f32 %v6149, %v6309
        %v6311 = vpop.f32.mrb[0].mxu0
        %v6312 = vadd.f32 %v6151, %v6311
        %6313 = vmatprep.mubr.f32.mxu0 %v5556
        %6314 = vmatmul.mubr.f32.gmra.mrb[0].mxu0 %v5555
        %v6315 = vpop.f32.mrb[0].mxu0
        %v6316 = vadd.f32 %v6155, %v6315
        %v6317 = vpop.f32.mrb[0].mxu0
        %v6318 = vadd.f32 %v6157, %v6317
        %6319 = vmatprep.mubr.f32.mxu0 %v5564
        %6320 = vmatmul.mubr.f32.gmra.mrb[0].mxu0 %v5563
        %v6321 = vpop.f32.mrb[0].mxu0
        %v6322 = vadd.f32 %v6161, %v6321
        %v6323 = vpop.f32.mrb[0].mxu0
        %v6324 = vadd.f32 %v6163, %v6323
        %6325 = vmatprep.mubr.f32.mxu0 %v5572
        %6326 = vmatmul.mubr.f32.gmra.mrb[0].mxu0 %v5571
        %v6327 = vpop.f32.mrb[0].mxu0
        %v6328 = vadd.f32 %v6167, %v6327
        %v6329 = vpop.f32.mrb[0].mxu0
        %v6330 = vadd.f32 %v6169, %v6329
        %6331 = vmatprep.mubr.f32.mxu0 %v5580
        %6332 = vmatmul.mubr.f32.gmra.mrb[0].mxu0 %v5579
        %v6333 = vpop.f32.mrb[0].mxu0
        %v6334 = vadd.f32 %v6173, %v6333
        %v6335 = vpop.f32.mrb[0].mxu0
        %v6336 = vadd.f32 %v6175, %v6335
        %6337 = vmatprep.mubr.f32.mxu0 %v5588
        %6338 = vmatmul.mubr.f32.gmra.mrb[0].mxu0 %v5587
        %v6339 = vpop.f32.mrb[0].mxu0
        %v6340 = vadd.f32 %v6179, %v6339
        %v6341 = vpop.f32.mrb[0].mxu0
        %v6342 = vadd.f32 %v6181, %v6341
        %6343 = vmatprep.mubr.f32.mxu0 %v5596
        %6344 = vmatmul.mubr.f32.gmra.mrb[0].mxu0 %v5595
        %v6345 = vpop.f32.mrb[0].mxu0
        %v6346 = vadd.f32 %v6185, %v6345
        %v6347 = vpop.f32.mrb[0].mxu0
        %v6348 = vadd.f32 %v6187, %v6347
        %6349 = vmatprep.mubr.f32.mxu0 %v5604
        %6350 = vmatmul.mubr.f32.gmra.mrb[0].mxu0 %v5603
        %v6351 = vpop.f32.mrb[0].mxu0
        %v6352 = vadd.f32 %v6191, %v6351
        %v6353 = vpop.f32.mrb[0].mxu0
        %v6354 = vadd.f32 %v6193, %v6353
        %6355 = vmatprep.mubr.f32.mxu0 %v5612
        %6356 = vmatmul.mubr.f32.gmra.mrb[0].mxu0 %v5611
        %v6357 = vpop.f32.mrb[0].mxu0
        %v6358 = vadd.f32 %v6197, %v6357
        %v6359 = vpop.f32.mrb[0].mxu0
        %v6360 = vadd.f32 %v6199, %v6359
        %6361 = vmatprep.mubr.f32.mxu0 %v5620
        %6362 = vmatmul.mubr.f32.gmra.mrb[0].mxu0 %v5619
        %v6363 = vpop.f32.mrb[0].mxu0
        %v6364 = vadd.f32 %v6203, %v6363
        %v6365 = vpop.f32.mrb[0].mxu0
        %v6366 = vadd.f32 %v6205, %v6365
        %6367 = vmatprep.mubr.f32.mxu0 %v5628
        %6368 = vmatmul.mubr.f32.gmra.mrb[0].mxu0 %v5627
        %v6369 = vpop.f32.mrb[0].mxu0
        %v6370 = vadd.f32 %v6209, %v6369
        %v6371 = vpop.f32.mrb[0].mxu0
        %v6372 = vadd.f32 %v6211, %v6371
        %6373 = vmatprep.mubr.f32.mxu0 %v5636
        %6374 = vmatmul.mubr.f32.gmra.mrb[0].mxu0 %v5635
        %v6375 = vpop.f32.mrb[0].mxu0
        %v6376 = vadd.f32 %v6215, %v6375
        %v6377 = vpop.f32.mrb[0].mxu0
        %v6378 = vadd.f32 %v6217, %v6377
        %6379 = vmatprep.mubr.f32.mxu0 %v5644
        %6380 = vmatmul.mubr.f32.gmra.mrb[0].mxu0 %v5643
        %v6381 = vpop.f32.mrb[0].mxu0
        %v6382 = vadd.f32 %v6221, %v6381
        %v6383 = vpop.f32.mrb[0].mxu0
        %v6384 = vadd.f32 %v6223, %v6383
        %6385 = vdwg.mxu0
        %6386 = vmatprep.subr.mxu0 %v5840
        %6387 = vmatpush1.msra.mxu0 %v5839
        %6388 = vmatprep.subr.mxu0 %v5842
        %6389 = vmatpush1.msra.mxu0 %v5841
        %6390 = vmatprep.subr.mxu0 %v5844
        %6391 = vmatpush1.msra.mxu0 %v5843
        %6392 = vmatprep.subr.mxu0 %v5846
        %6393 = vmatpush1.msra.mxu0 %v5845
        %6394 = vmatprep.subr.mxu0 %v5848
        %6395 = vmatpush1.msra.mxu0 %v5847
        %6396 = vmatprep.subr.mxu0 %v5850
        %6397 = vmatpush1.msra.mxu0 %v5849
        %6398 = vmatprep.subr.mxu0 %v5852
        %6399 = vmatpush1.msra.mxu0 %v5851
        %6400 = vmatprep.subr.mxu0 %v5854
        %6401 = vmatpush1.msra.mxu0 %v5853
        %6402 = vmatprep.subr.mxu0 %v5856
        %6403 = vmatpush1.msra.mxu0 %v5855
        %6404 = vmatprep.subr.mxu0 %v5858
        %6405 = vmatpush1.msra.mxu0 %v5857
        %6406 = vmatprep.subr.mxu0 %v5860
        %6407 = vmatpush1.msra.mxu0 %v5859
        %6408 = vmatprep.subr.mxu0 %v5862
        %6409 = vmatpush1.msra.mxu0 %v5861
        %6410 = vmatprep.subr.mxu0 %v5864
        %6411 = vmatpush1.msra.mxu0 %v5863
        %6412 = vmatprep.subr.mxu0 %v5866
        %6413 = vmatpush1.msra.mxu0 %v5865
        %6414 = vmatprep.subr.mxu0 %v5868
        %6415 = vmatpush1.msra.mxu0 %v5867
        %6416 = vmatprep.subr.mxu0 %v5870
        %6417 = vmatpush1.msra.mxu0 %v5869
        %6418 = vmatprep.subr.mxu0 %v5872
        %6419 = vmatpush1.msra.mxu0 %v5871
        %6420 = vmatprep.subr.mxu0 %v5874
        %6421 = vmatpush1.msra.mxu0 %v5873
        %6422 = vmatprep.subr.mxu0 %v5876
        %6423 = vmatpush1.msra.mxu0 %v5875
        %6424 = vmatprep.subr.mxu0 %v5878
        %6425 = vmatpush1.msra.mxu0 %v5877
        %6426 = vmatprep.subr.mxu0 %v5880
        %6427 = vmatpush1.msra.mxu0 %v5879
        %6428 = vmatprep.subr.mxu0 %v5882
        %6429 = vmatpush1.msra.mxu0 %v5881
        %6430 = vmatprep.subr.mxu0 %v5884
        %6431 = vmatpush1.msra.mxu0 %v5883
        %6432 = vmatprep.subr.mxu0 %v5886
        %6433 = vmatpush1.msra.mxu0 %v5885
        %6434 = vmatprep.subr.mxu0 %v5888
        %6435 = vmatpush1.msra.mxu0 %v5887
        %6436 = vmatprep.subr.mxu0 %v5890
        %6437 = vmatpush1.msra.mxu0 %v5889
        %6438 = vmatprep.subr.mxu0 %v5892
        %6439 = vmatpush1.msra.mxu0 %v5891
        %6440 = vmatprep.subr.mxu0 %v5894
        %6441 = vmatpush1.msra.mxu0 %v5893
        %6442 = vmatprep.subr.mxu0 %v5896
        %6443 = vmatpush1.msra.mxu0 %v5895
        %6444 = vmatprep.subr.mxu0 %v5898
        %6445 = vmatpush1.msra.mxu0 %v5897
        %6446 = vmatprep.subr.mxu0 %v5900
        %6447 = vmatpush1.msra.mxu0 %v5899
        %6448 = vmatprep.subr.mxu0 %v5902
        %6449 = vmatpush1.msra.mxu0 %v5901
        %6450 = vmatprep.mubr.f32.mxu0 %v5526
        %6451 = vmatmul.mubr.f32.gmra.mrb[0].mxu0 %v5525
        %v6452 = vpop.f32.mrb[0].mxu0
        %v6453 = vadd.f32 %v6292, %v6452
        %v6454 = vpop.f32.mrb[0].mxu0
        %v6455 = vadd.f32 %v6294, %v6454
        %6456 = vmatprep.mubr.f32.mxu0 %v5534
        %6457 = vmatmul.mubr.f32.gmra.mrb[0].mxu0 %v5533
        %v6458 = vpop.f32.mrb[0].mxu0
        %v6459 = vadd.f32 %v6298, %v6458
        %v6460 = vpop.f32.mrb[0].mxu0
        %v6461 = vadd.f32 %v6300, %v6460
        %6462 = vmatprep.mubr.f32.mxu0 %v5542
        %6463 = vmatmul.mubr.f32.gmra.mrb[0].mxu0 %v5541
        %v6464 = vpop.f32.mrb[0].mxu0
        %v6465 = vadd.f32 %v6304, %v6464
        %v6466 = vpop.f32.mrb[0].mxu0
        %v6467 = vadd.f32 %v6306, %v6466
        %6468 = vmatprep.mubr.f32.mxu0 %v5550
        %6469 = vmatmul.mubr.f32.gmra.mrb[0].mxu0 %v5549
        %v6470 = vpop.f32.mrb[0].mxu0
        %v6471 = vadd.f32 %v6310, %v6470
        %v6472 = vpop.f32.mrb[0].mxu0
        %v6473 = vadd.f32 %v6312, %v6472
        %6474 = vmatprep.mubr.f32.mxu0 %v5558
        %6475 = vmatmul.mubr.f32.gmra.mrb[0].mxu0 %v5557
        %v6476 = vpop.f32.mrb[0].mxu0
        %v6477 = vadd.f32 %v6316, %v6476
        %v6478 = vpop.f32.mrb[0].mxu0
        %v6479 = vadd.f32 %v6318, %v6478
        %6480 = vmatprep.mubr.f32.mxu0 %v5566
        %6481 = vmatmul.mubr.f32.gmra.mrb[0].mxu0 %v5565
        %v6482 = vpop.f32.mrb[0].mxu0
        %v6483 = vadd.f32 %v6322, %v6482
        %v6484 = vpop.f32.mrb[0].mxu0
        %v6485 = vadd.f32 %v6324, %v6484
        %6486 = vmatprep.mubr.f32.mxu0 %v5574
        %6487 = vmatmul.mubr.f32.gmra.mrb[0].mxu0 %v5573
        %v6488 = vpop.f32.mrb[0].mxu0
        %v6489 = vadd.f32 %v6328, %v6488
        %v6490 = vpop.f32.mrb[0].mxu0
        %v6491 = vadd.f32 %v6330, %v6490
        %6492 = vmatprep.mubr.f32.mxu0 %v5582
        %6493 = vmatmul.mubr.f32.gmra.mrb[0].mxu0 %v5581
        %v6494 = vpop.f32.mrb[0].mxu0
        %v6495 = vadd.f32 %v6334, %v6494
        %v6496 = vpop.f32.mrb[0].mxu0
        %v6497 = vadd.f32 %v6336, %v6496
        %6498 = vmatprep.mubr.f32.mxu0 %v5590
        %6499 = vmatmul.mubr.f32.gmra.mrb[0].mxu0 %v5589
        %v6500 = vpop.f32.mrb[0].mxu0
        %v6501 = vadd.f32 %v6340, %v6500
        %v6502 = vpop.f32.mrb[0].mxu0
        %v6503 = vadd.f32 %v6342, %v6502
        %6504 = vmatprep.mubr.f32.mxu0 %v5598
        %6505 = vmatmul.mubr.f32.gmra.mrb[0].mxu0 %v5597
        %v6506 = vpop.f32.mrb[0].mxu0
        %v6507 = vadd.f32 %v6346, %v6506
        %v6508 = vpop.f32.mrb[0].mxu0
        %v6509 = vadd.f32 %v6348, %v6508
        %6510 = vmatprep.mubr.f32.mxu0 %v5606
        %6511 = vmatmul.mubr.f32.gmra.mrb[0].mxu0 %v5605
        %v6512 = vpop.f32.mrb[0].mxu0
        %v6513 = vadd.f32 %v6352, %v6512
        %v6514 = vpop.f32.mrb[0].mxu0
        %v6515 = vadd.f32 %v6354, %v6514
        %6516 = vmatprep.mubr.f32.mxu0 %v5614
        %6517 = vmatmul.mubr.f32.gmra.mrb[0].mxu0 %v5613
        %v6518 = vpop.f32.mrb[0].mxu0
        %v6519 = vadd.f32 %v6358, %v6518
        %v6520 = vpop.f32.mrb[0].mxu0
        %v6521 = vadd.f32 %v6360, %v6520
        %6522 = vmatprep.mubr.f32.mxu0 %v5622
        %6523 = vmatmul.mubr.f32.gmra.mrb[0].mxu0 %v5621
        %v6524 = vpop.f32.mrb[0].mxu0
        %v6525 = vadd.f32 %v6364, %v6524
        %v6526 = vpop.f32.mrb[0].mxu0
        %v6527 = vadd.f32 %v6366, %v6526
        %6528 = vmatprep.mubr.f32.mxu0 %v5630
        %6529 = vmatmul.mubr.f32.gmra.mrb[0].mxu0 %v5629
        %v6530 = vpop.f32.mrb[0].mxu0
        %v6531 = vadd.f32 %v6370, %v6530
        %v6532 = vpop.f32.mrb[0].mxu0
        %v6533 = vadd.f32 %v6372, %v6532
        %6534 = vmatprep.mubr.f32.mxu0 %v5638
        %6535 = vmatmul.mubr.f32.gmra.mrb[0].mxu0 %v5637
        %v6536 = vpop.f32.mrb[0].mxu0
        %v6537 = vadd.f32 %v6376, %v6536
        %v6538 = vpop.f32.mrb[0].mxu0
        %v6539 = vadd.f32 %v6378, %v6538
        %6540 = vmatprep.mubr.f32.mxu0 %v5646
        %6541 = vmatmul.mubr.f32.gmra.mrb[0].mxu0 %v5645
        %v6542 = vpop.f32.mrb[0].mxu0
        %v6543 = vadd.f32 %v6382, %v6542
        %v6544 = vpop.f32.mrb[0].mxu0
        %v6545 = vadd.f32 %v6384, %v6544
        %6546 = vdwg.mxu0
        %v6547 = vadd.f32 %v5487, %v6453
        %v6548 = vadd.f32 %v5488, %v6455
        %v6549 = vadd.f32 %v5489, %v6459
        %v6550 = vadd.f32 %v5490, %v6461
        %v6551 = vadd.f32 %v5491, %v6465
        %v6552 = vadd.f32 %v5492, %v6467
        %v6553 = vadd.f32 %v5493, %v6471
        %v6554 = vadd.f32 %v5494, %v6473
        %v6555 = vadd.f32 %v5495, %v6477
        %v6556 = vadd.f32 %v5496, %v6479
        %v6557 = vadd.f32 %v5497, %v6483
        %v6558 = vadd.f32 %v5498, %v6485
        %v6559 = vadd.f32 %v5499, %v6489
        %v6560 = vadd.f32 %v5500, %v6491
        %v6561 = vadd.f32 %v5501, %v6495
        %v6562 = vadd.f32 %v5502, %v6497
        %v6563 = vadd.f32 %v5503, %v6501
        %v6564 = vadd.f32 %v5504, %v6503
        %v6565 = vadd.f32 %v5505, %v6507
        %v6566 = vadd.f32 %v5506, %v6509
        %v6567 = vadd.f32 %v5507, %v6513
        %v6568 = vadd.f32 %v5508, %v6515
        %v6569 = vadd.f32 %v5509, %v6519
        %v6570 = vadd.f32 %v5510, %v6521
        %v6571 = vadd.f32 %v5511, %v6525
        %v6572 = vadd.f32 %v5512, %v6527
        %v6573 = vadd.f32 %v5513, %v6531
        %v6574 = vadd.f32 %v5514, %v6533
        %v6575 = vadd.f32 %v5515, %v6537
        %v6576 = vadd.f32 %v5516, %v6539
        %v6577 = vadd.f32 %v5517, %v6543
        %v6578 = vadd.f32 %v5518, %v6545
        %6579 = vst [vmem:[%s330] sm:$0xff] %v6547
        %6580 = vst [vmem:[%s330 + $0x8] sm:$0xff] %v6548
        %6581 = vst [vmem:[%s330 + $0x10] sm:$0xff] %v6549
        %6582 = vst [vmem:[%s330 + $0x18] sm:$0xff] %v6550
        %6583 = vst [vmem:[%s330 + $0x20] sm:$0xff] %v6551
        %6584 = vst [vmem:[%s330 + $0x28] sm:$0xff] %v6552
        %6585 = vst [vmem:[%s330 + $0x30] sm:$0xff] %v6553
        %6586 = vst [vmem:[%s330 + $0x38] sm:$0xff] %v6554
        %6587 = vst [vmem:[%s330 + $0x40] sm:$0xff] %v6555
        %6588 = vst [vmem:[%s330 + $0x48] sm:$0xff] %v6556
        %6589 = vst [vmem:[%s330 + $0x50] sm:$0xff] %v6557
        %6590 = vst [vmem:[%s330 + $0x58] sm:$0xff] %v6558
        %6591 = vst [vmem:[%s330 + $0x60] sm:$0xff] %v6559
        %6592 = vst [vmem:[%s330 + $0x68] sm:$0xff] %v6560
        %6593 = vst [vmem:[%s330 + $0x70] sm:$0xff] %v6561
        %6594 = vst [vmem:[%s330 + $0x78] sm:$0xff] %v6562
        %6595 = vst [vmem:[%s330 + $0x80] sm:$0xff] %v6563
        %6596 = vst [vmem:[%s330 + $0x88] sm:$0xff] %v6564
        %6597 = vst [vmem:[%s330 + $0x90] sm:$0xff] %v6565
        %6598 = vst [vmem:[%s330 + $0x98] sm:$0xff] %v6566
        %6599 = vst [vmem:[%s330 + $0xa0] sm:$0xff] %v6567
        %6600 = vst [vmem:[%s330 + $0xa8] sm:$0xff] %v6568
        %6601 = vst [vmem:[%s330 + $0xb0] sm:$0xff] %v6569
        %6602 = vst [vmem:[%s330 + $0xb8] sm:$0xff] %v6570
        %6603 = vst [vmem:[%s330 + $0xc0] sm:$0xff] %v6571
        %6604 = vst [vmem:[%s330 + $0xc8] sm:$0xff] %v6572
        %6605 = vst [vmem:[%s330 + $0xd0] sm:$0xff] %v6573
        %6606 = vst [vmem:[%s330 + $0xd8] sm:$0xff] %v6574
        %6607 = vst [vmem:[%s330 + $0xe0] sm:$0xff] %v6575
        %6608 = vst [vmem:[%s330 + $0xe8] sm:$0xff] %v6576
        %6609 = vst [vmem:[%s330 + $0xf0] sm:$0xff] %v6577
        %6610 = vst [vmem:[%s330 + $0xf8] sm:$0xff] %v6578
        %s6611 = sand.u32 %s166, 1
        %s6612 = scalar_lea.sflag [#allocation5], %s6611
        %s6613 = sand.u32 %s166, 1
        %s6614 = smul.addr %s6613, 256
        %s6615 = scalar_lea.vmem [#allocation12], %s6614
        // Predicated region
        $region65: #{tpu_custom_call.1} parent=39 // pred_check
          %p6616 = pneg %p176
        $region66: #{tpu_custom_call.1} parent=39 // pred_check_branch
          %6618 = sbr.rel (%p6616) target = $region68
        $region67: #{tpu_custom_call.1} parent=39 // pred_region
          %s6619 = smul.u32 16, %s28
          %s6620 = smul.u32 2, %s29
          %s6622 = ssub.s32 4096, 4096
          %6623 = vsyncadd %s6612, %s6622
          %s6624 = smul.addr %s6619, 2
          %s6625 = sadd.s32 %s6620, %s6624
          %s6626 = smul.addr %s6625, 128
          %s6627 = scalar_lea.hbm %s5, %s6626
          %s6628 = sshll.u32 %s6615, 4
          %s6629 = int_to_ptr.vmem [resolvable:$true] %s6628
          %6634 = dma.vmem_to_hbm [thread:$0]  %s6629, 4096, %s6627, %s6612, 256, 256, 16
        $region68: #{tpu_custom_call.1} parent=39 // pred_fallthru
          _
      $region40: #{tpu_custom_call.1} parent=5 // pred_fallthru
        _
      %p6635 = scmp.le.s32.totalorder 2, %s19
      // Predicated region
      $region69: #{tpu_custom_call.1} parent=5 // pred_check
        %p6636 = pneg %p6635
      $region70: #{tpu_custom_call.1} parent=5 // pred_check_branch
        %6638 = sbr.rel (%p6636) target = $region72
      $region71: #{tpu_custom_call.1} parent=5 // pred_region
        %s6639 = ssub.s32 %s19, 2
        // Predicated region
        $region73: #{tpu_custom_call.1} parent=71 // pred_check
          %p6640 = pneg %p182
        $region74: #{tpu_custom_call.1} parent=71 // pred_check_branch
          %6642 = sbr.rel (%p6640) target = $region76
        $region75: #{tpu_custom_call.1} parent=71 // pred_region
          %s6643 = sand.u32 %s167, 1
          %s6644 = scalar_lea.sflag [#allocation5], %s6643
          %s6645 = sand.u32 %s167, 1
          %s6646 = smul.addr %s6645, 256
          %s6647 = scalar_lea.vmem [#allocation12], %s6646
          %6648 = dma.done %s6644, 4096
        $region76: #{tpu_custom_call.1} parent=71 // pred_fallthru
          _
      $region72: #{tpu_custom_call.1} parent=5 // pred_fallthru
        _
    $region6: #{tpu_custom_call.1} parent=1 // loop_footer
      %s23 = sadd.s32 1, %s19
    $region7: #{tpu_custom_call.1} parent=1 // loop_footer_branch
      %18 = sbr.rel target = $region3
    $region8: #{tpu_custom_call.1} parent=1 // loop_exit
      _
    %6649 = vsyncpa [#allocation4], 1
    %s6650 = scalar_lea.sflag [#allocation4], 1
    %6651 = vsyncpa %s6650, 1
    %6652 = vsyncpa [#allocation7], 1
    %6653 = vsyncpa [#allocation10], 1
    %6654 = vsyncpa [#allocation5], 1
    %s6655 = scalar_lea.sflag [#allocation5], 1
    %6656 = vsyncpa %s6655, 1

</llo_original>
